<compile_context>
chip_gen: v7x
topology: tpu7x:2x2x1
jax: 0.10.0
libtpu: 0.0.40
codegen_flags: <defaults>
</compile_context>

<pallas_src>
import functools

import numpy as np

import jax
import jax.numpy as jnp
from jax import lax
from jax.experimental import pallas as pl
from jax.experimental.pallas import tpu as pltpu


def _round_up(x, m):
    return ((x + m - 1) // m) * m


def _cdiv(a, b):
    return (a + b - 1) // b


# ---------------------------------------------------------------------------
# Pallas kernel: fused 4x4/s2 conv (as 2x2 taps on space-to-depth input)
#                + bias + optional LeakyReLU, f32 accumulation.
# ---------------------------------------------------------------------------
def _conv4x4s2_kernel(xa_ref, xb_ref, w_ref, b_ref, o_ref, xw_ref,
                      *, toh, owp, negative_slope):
    # xa_ref: (toh, rwp, c4)  s2d rows [i*toh, (i+1)*toh) of image n (bf16)
    # xb_ref: (1,   rwp, c4)  s2d row  (i+1)*toh  (1-row halo)
    # w_ref : (4, c4, oc)     taps (a, b) flattened as 2*a + b (bf16)
    # b_ref : (1, oc)         bias (f32)
    # o_ref : (toh, owp, oc)  output band
    # xw_ref: (toh+1, rwp, c4) VMEM scratch: stitched working set
    c4 = xw_ref.shape[-1]
    oc = o_ref.shape[-1]

    # Stitch band + halo row (plane-granular copies, cheap in VMEM).
    xw_ref[0:toh, :, :] = xa_ref[...]
    xw_ref[toh:toh + 1, :, :] = xb_ref[...]

    # Bias folded into the accumulator init (f32).
    acc = jnp.broadcast_to(b_ref[...], (toh * owp, oc))

    # out[r, c] = sum_{a,b in {0,1}} xs2d[r+a, c+b, :] @ W2[a, b]
    for a in range(2):
        for b in range(2):
            patch = xw_ref[a:a + toh, b:b + owp, :].reshape(toh * owp, c4)
            acc = acc + jnp.dot(patch, w_ref[2 * a + b],
                                preferred_element_type=jnp.float32)

    if negative_slope is not None:
        acc = jnp.where(acc >= 0.0, acc, negative_slope * acc)

    o_ref[...] = acc.reshape(toh, owp, oc).astype(o_ref.dtype)


def _band_rows(oh, owp, rwp, c4, oc, out_itemsize, n_batch):
    """Output rows per grid step: biggest band that keeps the working set small."""
    in_row = rwp * c4 * 2            # bf16 input band bytes / output row
    acc_row = owp * oc * 4           # f32 accumulator bytes / output row
    out_row = owp * oc * out_itemsize
    toh = min(oh,
              max(1, (3 << 20) // in_row),
              max(1, (3 << 20) // acc_row),
              max(1, (2 << 20) // out_row))
    # Expose at least two parallel grid blocks (megacore) if batch alone doesn't.
    if n_batch * _cdiv(oh, toh) < 2 and oh > 1:
        toh = _cdiv(oh, 2)
    return max(1, toh)


def conv4x4_s2(x_nhwc, w_packed, bias_packed, *, negative_slope, out_dtype):
    """Fused Conv2d(k=4, s=2, p=1) + bias + optional LeakyReLU.

    x_nhwc:      (N, H, W, C) bf16, H and W even.
    w_packed:    (4, 4*C, OC) bf16 -- taps (a, b) x s2d channels (ph, pw, ci).
    bias_packed: (1, OC) f32.
    """
    n, h, w, c = x_nhwc.shape
    assert h % 2 == 0 and w % 2 == 0, (h, w)
    oh, ow = h // 2, w // 2
    owp = _round_up(ow, 8)           # keeps in-kernel (rows, owp) merges tile-aligned
    c4 = 4 * c
    oc = w_packed.shape[-1]
    assert w_packed.shape == (4, c4, oc)

    # pad=1 then space-to-depth (stride-2 phase split): a pure permutation, so
    # the kernel's A-operand HBM traffic is ~1x the activation (vs im2col's ~4x).
    xp = jnp.pad(x_nhwc, ((0, 0), (1, 1), (1, 1), (0, 0)))
    rh, rw = oh + 1, ow + 1
    xs = xp.reshape(n, rh, 2, rw, 2, c).transpose(0, 1, 3, 2, 4, 5)
    xs = xs.reshape(n, rh, rw, c4)

    out_itemsize = jnp.dtype(out_dtype).itemsize
    toh = _band_rows(oh, owp, owp + 1, c4, oc, out_itemsize, n)
    n_bands = _cdiv(oh, toh)
    ohp = n_bands * toh
    rhp, rwp = ohp + 1, owp + 1
    xs = jnp.pad(xs, ((0, 0), (0, rhp - rh), (0, rwp - rw), (0, 0)))

    kernel = functools.partial(_conv4x4s2_kernel, toh=toh, owp=owp,
                               negative_slope=negative_slope)
    cost = pl.CostEstimate(
        flops=2 * n * ohp * owp * (4 * c4) * oc,
        transcendentals=0,
        bytes_accessed=(n * rhp * rwp * c4 * 2          # band stream (read ~once)
                        + 4 * c4 * oc * 2 + 4 * oc      # weights + bias
                        + n * ohp * owp * oc * out_itemsize),
    )

    out = pl.pallas_call(
        kernel,
        out_shape=jax.ShapeDtypeStruct((n, ohp, owp, oc), out_dtype),
        grid_spec=pltpu.PrefetchScalarGridSpec(
            num_scalar_prefetch=0,
            grid=(n, n_bands),
            in_specs=[
                # band of s2d rows [i*toh, (i+1)*toh)
                pl.BlockSpec((None, toh, rwp, c4), lambda nb, ib: (nb, ib, 0, 0)),
                # 1-row halo: s2d row (i+1)*toh (block size 1 -> element index)
                pl.BlockSpec((None, 1, rwp, c4),
                             lambda nb, ib: (nb, (ib + 1) * toh, 0, 0)),
                pl.BlockSpec((4, c4, oc), lambda nb, ib: (0, 0, 0)),
                pl.BlockSpec((1, oc), lambda nb, ib: (0, 0)),
            ],
            out_specs=pl.BlockSpec((None, toh, owp, oc),
                                   lambda nb, ib: (nb, ib, 0, 0)),
            scratch_shapes=[pltpu.VMEM((toh + 1, rwp, c4), xs.dtype)],
        ),
        compiler_params=pltpu.CompilerParams(
            dimension_semantics=("parallel", "parallel"),
            vmem_limit_bytes=32 * 1024 * 1024,
        ),
        cost_estimate=cost,
    )(xs, xs, w_packed, bias_packed)

    return out[:, :oh, :ow, :]


# ---------------------------------------------------------------------------
# FCDiscriminator: params, one-time packing, forward
# ---------------------------------------------------------------------------
def init_params(key, ndf):
    """PyTorch-layout Conv2d params: list of (w (OC, IC, 4, 4) f32, b (OC,) f32)."""
    shapes = [
        (ndf, 2, 4, 4),
        (ndf * 2, ndf, 4, 4),
        (ndf * 4, ndf * 2, 4, 4),
        (ndf * 8, ndf * 4, 4, 4),
        (1, ndf * 8, 4, 4),
    ]
    params = []
    for i, s in enumerate(shapes):
        kw_key, kb_key = jax.random.split(jax.random.fold_in(key, i))
        fan_in = s[1] * s[2] * s[3]
        bound = 1.0 / float(fan_in) ** 0.5   # matches torch default uniform bound
        w = jax.random.uniform(kw_key, s, jnp.float32, -bound, bound)
        b = jax.random.uniform(kb_key, (s[0],), jnp.float32, -bound, bound)
        params.append((w, b))
    return params


def pack_params(params):
    """One-time weight packing, done OUTSIDE the jitted forward.

    (OC, IC, 4, 4) -> (4 taps [a,b], 4*IC s2d channels [ph,pw,ic], OC) bf16.
    """
    packed = []
    for w, b in params:
        oc, ic, kh, kw = w.shape
        assert kh == 4 and kw == 4
        wt = jnp.transpose(w, (2, 3, 1, 0))                # (KH, KW, IC, OC)
        wt = wt.reshape(2, 2, 2, 2, ic, oc)                # (a, ph, b, pw, IC, OC)
        wt = wt.transpose(0, 2, 1, 3, 4, 5).reshape(4, 4 * ic, oc)
        packed.append((wt.astype(jnp.bfloat16),
                       b.astype(jnp.float32).reshape(1, oc)))
    return packed


def fc_discriminator(x_nchw, packed_params):
    """NCHW f32 in -> NCHW f32 out; bf16 NHWC internally."""
    x = jnp.transpose(x_nchw, (0, 2, 3, 1)).astype(jnp.bfloat16)
    n_layers = len(packed_params)
    for i, (w2, b2) in enumerate(packed_params):
        last = i == n_layers - 1
        x = conv4x4_s2(x, w2, b2,
                       negative_slope=None if last else 0.2,   # classifier: no act
                       out_dtype=jnp.float32 if last else jnp.bfloat16)
    return jnp.transpose(x, (0, 3, 1, 2))


def reference_forward(x_nchw, params):
    """Pure-JAX reference at matched (bf16 MXU / f32 accum) precision."""
    x = jnp.transpose(x_nchw, (0, 2, 3, 1)).astype(jnp.bfloat16)
    n_layers = len(params)
    for i, (w, b) in enumerate(params):
        y = lax.conv_general_dilated(
            x, w.astype(jnp.bfloat16),
            window_strides=(2, 2), padding=((1, 1), (1, 1)),
            dimension_numbers=("NHWC", "OIHW", "NHWC"),
            preferred_element_type=jnp.float32)
        y = y + b.astype(jnp.float32)[None, None, None, :]
        if i < n_layers - 1:
            x = jnp.where(y >= 0, y, 0.2 * y).astype(jnp.bfloat16)
        else:
            x = y
    return jnp.transpose(x, (0, 3, 1, 2))


if __name__ == "__main__":
    key = jax.random.PRNGKey(0)
    ndf = 8                                      # small ndf (module default is 64)
    params = init_params(jax.random.fold_in(key, 1), ndf)
    packed = pack_params(params)                 # packed once, outside the jit

    # Input: batch=2, channels=2 (fixed by conv1), spatial=32 -> output (2, 1, 1, 1)
    x = jax.random.normal(jax.random.fold_in(key, 2), (2, 2, 32, 32), jnp.float32)

    fwd = jax.jit(fc_discriminator)
    out = jax.block_until_ready(fwd(x, packed))
    assert out.shape == (2, 1, 1, 1), out.shape
    assert out.dtype == jnp.float32, out.dtype

    # Correctness check vs a matched-precision pure-JAX reference.
    ref = jax.block_until_ready(jax.jit(reference_forward)(x, params))
    np.testing.assert_allclose(np.asarray(out), np.asarray(ref),
                               rtol=5e-2, atol=5e-3)
    print("KERNEL_OK")
</pallas_src>

<mosaic_0001>
module attributes {stable_mosaic.version = 11 : i64} {
  func.func @_conv4x4s2_kernel(%arg0: i32, %arg1: i32, %arg2: memref<1x16x17x8xbf16, #tpu.memory_space<vmem>>, %arg3: memref<1x1x17x8xbf16, #tpu.memory_space<vmem>>, %arg4: memref<4x8x8xbf16, #tpu.memory_space<vmem>>, %arg5: memref<1x8xf32, #tpu.memory_space<vmem>>, %arg6: memref<1x16x16x8xbf16, #tpu.memory_space<vmem>>, %arg7: memref<17x17x8xbf16, #tpu.memory_space<vmem>>) attributes {dimension_semantics = [#tpu.dimension_semantics<parallel>, #tpu.dimension_semantics<parallel>], iteration_bounds = array<i64: 2, 1>, scalar_prefetch = 0 : i64, scratch_operands = 1 : i64, tpu.core_type = #tpu.core_type<tc>, window_params = [{transform_indices = @transform_0, window_bounds = array<i64: 1, 16, 17, 8>}, {transform_indices = @transform_1, window_bounds = array<i64: 1, 1, 17, 8>}, {pipeline_mode = #tpu.pipeline_mode<synchronous>, transform_indices = @transform_2, window_bounds = array<i64: 4, 8, 8>}, {pipeline_mode = #tpu.pipeline_mode<synchronous>, transform_indices = @transform_3, window_bounds = array<i64: 1, 8>}, {transform_indices = @transform_4, window_bounds = array<i64: 1, 16, 16, 8>}]} {
    %c0 = arith.constant 0 : index
    %c0_0 = arith.constant 0 : index
    %c0_1 = arith.constant 0 : index
    %c0_2 = arith.constant 0 : index
    %0 = vector.load %arg2[%c0, %c0_0, %c0_1, %c0_2] : memref<1x16x17x8xbf16, #tpu.memory_space<vmem>>, vector<1x16x17x8xbf16>
    %1 = vector.shape_cast %0 : vector<1x16x17x8xbf16> to vector<16x17x8xbf16>
    %c0_3 = arith.constant 0 : index
    %c0_4 = arith.constant 0 : index
    %c0_5 = arith.constant 0 : index
    %2 = vector.load %arg7[%c0_3, %c0_4, %c0_5] : memref<17x17x8xbf16, #tpu.memory_space<vmem>>, vector<16x17x8xbf16>
    tpu.vector_store %arg7[%c0_3, %c0_4, %c0_5], %1 {strides = array<i32>} : memref<17x17x8xbf16, #tpu.memory_space<vmem>>, vector<16x17x8xbf16>,
    %c0_6 = arith.constant 0 : index
    %c0_7 = arith.constant 0 : index
    %c0_8 = arith.constant 0 : index
    %c0_9 = arith.constant 0 : index
    %3 = vector.load %arg3[%c0_6, %c0_7, %c0_8, %c0_9] : memref<1x1x17x8xbf16, #tpu.memory_space<vmem>>, vector<1x1x17x8xbf16>
    %4 = vector.shape_cast %3 : vector<1x1x17x8xbf16> to vector<1x17x8xbf16>
    %c16 = arith.constant 16 : index
    %c0_10 = arith.constant 0 : index
    %c0_11 = arith.constant 0 : index
    %5 = vector.load %arg7[%c16, %c0_10, %c0_11] : memref<17x17x8xbf16, #tpu.memory_space<vmem>>, vector<1x17x8xbf16>
    tpu.vector_store %arg7[%c16, %c0_10, %c0_11], %4 {strides = array<i32>} : memref<17x17x8xbf16, #tpu.memory_space<vmem>>, vector<1x17x8xbf16>,
    %c0_12 = arith.constant 0 : index
    %c0_13 = arith.constant 0 : index
    %6 = vector.load %arg5[%c0_12, %c0_13] : memref<1x8xf32, #tpu.memory_space<vmem>>, vector<1x8xf32>
    %7 = vector.shape_cast %6 : vector<1x8xf32> to vector<1x8xf32>
    %8 = vector.broadcast %7 : vector<1x8xf32> to vector<256x8xf32>
    %c0_14 = arith.constant 0 : index
    %c0_15 = arith.constant 0 : index
    %c0_16 = arith.constant 0 : index
    %9 = vector.load %arg7[%c0_14, %c0_15, %c0_16] : memref<17x17x8xbf16, #tpu.memory_space<vmem>>, vector<16x16x8xbf16>
    %10 = vector.shape_cast %9 : vector<16x16x8xbf16> to vector<256x8xbf16>
    %c0_17 = arith.constant 0 : index
    %c0_18 = arith.constant 0 : index
    %c0_19 = arith.constant 0 : index
    %11 = vector.load %arg4[%c0_17, %c0_18, %c0_19] : memref<4x8x8xbf16, #tpu.memory_space<vmem>>, vector<1x8x8xbf16>
    %12 = vector.shape_cast %11 : vector<1x8x8xbf16> to vector<8x8xbf16>
    %cst = arith.constant dense<0.000000e+00> : vector<256x8xf32>
    %13 = tpu.matmul %10, %12, %cst {dimension_numbers = #tpu.dot_dimension_numbers<[1], [0], [0], [1], [0, 0, 1, 1], [], []>} : vector<256x8xbf16>, vector<8x8xbf16>, vector<256x8xf32> -> vector<256x8xf32>
    %14 = arith.addf %8, %13 : vector<256x8xf32>
    %c0_20 = arith.constant 0 : index
    %c1 = arith.constant 1 : index
    %c0_21 = arith.constant 0 : index
    %15 = vector.load %arg7[%c0_20, %c1, %c0_21] : memref<17x17x8xbf16, #tpu.memory_space<vmem>>, vector<16x16x8xbf16>
    %16 = vector.shape_cast %15 : vector<16x16x8xbf16> to vector<256x8xbf16>
    %c1_22 = arith.constant 1 : index
    %c0_23 = arith.constant 0 : index
    %c0_24 = arith.constant 0 : index
    %17 = vector.load %arg4[%c1_22, %c0_23, %c0_24] : memref<4x8x8xbf16, #tpu.memory_space<vmem>>, vector<1x8x8xbf16>
    %18 = vector.shape_cast %17 : vector<1x8x8xbf16> to vector<8x8xbf16>
    %cst_25 = arith.constant dense<0.000000e+00> : vector<256x8xf32>
    %19 = tpu.matmul %16, %18, %cst_25 {dimension_numbers = #tpu.dot_dimension_numbers<[1], [0], [0], [1], [0, 0, 1, 1], [], []>} : vector<256x8xbf16>, vector<8x8xbf16>, vector<256x8xf32> -> vector<256x8xf32>
    %20 = arith.addf %14, %19 : vector<256x8xf32>
    %c1_26 = arith.constant 1 : index
    %c0_27 = arith.constant 0 : index
    %c0_28 = arith.constant 0 : index
    %21 = vector.load %arg7[%c1_26, %c0_27, %c0_28] : memref<17x17x8xbf16, #tpu.memory_space<vmem>>, vector<16x16x8xbf16>
    %22 = vector.shape_cast %21 : vector<16x16x8xbf16> to vector<256x8xbf16>
    %c2 = arith.constant 2 : index
    %c0_29 = arith.constant 0 : index
    %c0_30 = arith.constant 0 : index
    %23 = vector.load %arg4[%c2, %c0_29, %c0_30] : memref<4x8x8xbf16, #tpu.memory_space<vmem>>, vector<1x8x8xbf16>
    %24 = vector.shape_cast %23 : vector<1x8x8xbf16> to vector<8x8xbf16>
    %cst_31 = arith.constant dense<0.000000e+00> : vector<256x8xf32>
    %25 = tpu.matmul %22, %24, %cst_31 {dimension_numbers = #tpu.dot_dimension_numbers<[1], [0], [0], [1], [0, 0, 1, 1], [], []>} : vector<256x8xbf16>, vector<8x8xbf16>, vector<256x8xf32> -> vector<256x8xf32>
    %26 = arith.addf %20, %25 : vector<256x8xf32>
    %c1_32 = arith.constant 1 : index
    %c1_33 = arith.constant 1 : index
    %c0_34 = arith.constant 0 : index
    %27 = vector.load %arg7[%c1_32, %c1_33, %c0_34] : memref<17x17x8xbf16, #tpu.memory_space<vmem>>, vector<16x16x8xbf16>
    %28 = vector.shape_cast %27 : vector<16x16x8xbf16> to vector<256x8xbf16>
    %c3 = arith.constant 3 : index
    %c0_35 = arith.constant 0 : index
    %c0_36 = arith.constant 0 : index
    %29 = vector.load %arg4[%c3, %c0_35, %c0_36] : memref<4x8x8xbf16, #tpu.memory_space<vmem>>, vector<1x8x8xbf16>
    %30 = vector.shape_cast %29 : vector<1x8x8xbf16> to vector<8x8xbf16>
    %cst_37 = arith.constant dense<0.000000e+00> : vector<256x8xf32>
    %31 = tpu.matmul %28, %30, %cst_37 {dimension_numbers = #tpu.dot_dimension_numbers<[1], [0], [0], [1], [0, 0, 1, 1], [], []>} : vector<256x8xbf16>, vector<8x8xbf16>, vector<256x8xf32> -> vector<256x8xf32>
    %32 = arith.addf %26, %31 : vector<256x8xf32>
    %cst_38 = arith.constant 0.000000e+00 : f32
    %33 = vector.broadcast %cst_38 : f32 to vector<256x8xf32>
    %34 = arith.cmpf oge, %32, %33 : vector<256x8xf32>
    %cst_39 = arith.constant 2.000000e-01 : f32
    %35 = vector.broadcast %cst_39 : f32 to vector<256x8xf32>
    %36 = arith.mulf %35, %32 : vector<256x8xf32>
    %37 = arith.select %34, %32, %36 : vector<256x8xi1>, vector<256x8xf32>
    %38 = vector.shape_cast %37 : vector<256x8xf32> to vector<16x16x8xf32>
    %39 = arith.truncf %38 : vector<16x16x8xf32> to vector<16x16x8xbf16>
    %c0_40 = arith.constant 0 : index
    %c0_41 = arith.constant 0 : index
    %c0_42 = arith.constant 0 : index
    %c0_43 = arith.constant 0 : index
    %40 = vector.load %arg6[%c0_40, %c0_41, %c0_42, %c0_43] : memref<1x16x16x8xbf16, #tpu.memory_space<vmem>>, vector<1x16x16x8xbf16>
    %41 = vector.shape_cast %40 : vector<1x16x16x8xbf16> to vector<16x16x8xbf16>
    %42 = vector.shape_cast %39 : vector<16x16x8xbf16> to vector<1x16x16x8xbf16>
    tpu.vector_store %arg6[%c0_40, %c0_41, %c0_42, %c0_43], %42 {strides = array<i32>} : memref<1x16x16x8xbf16, #tpu.memory_space<vmem>>, vector<1x16x16x8xbf16>,
    return
  }
  func.func @transform_0(%arg0: i32, %arg1: i32) -> (i32, i32, i32, i32) {
    %c0_i32 = arith.constant 0 : i32
    %c0_i32_0 = arith.constant 0 : i32
    %c0_i32_1 = arith.constant 0 : i32
    return %arg0, %arg1, %c0_i32, %c0_i32_0 : i32, i32, i32, i32
  }
  func.func @transform_1(%arg0: i32, %arg1: i32) -> (i32, i32, i32, i32) {
    %c1_i32 = arith.constant 1 : i32
    %0 = arith.addi %arg1, %c1_i32 : i32
    %c16_i32 = arith.constant 16 : i32
    %1 = arith.muli %0, %c16_i32 : i32
    %c0_i32 = arith.constant 0 : i32
    %c0_i32_0 = arith.constant 0 : i32
    %c0_i32_1 = arith.constant 0 : i32
    return %arg0, %1, %c0_i32, %c0_i32_0 : i32, i32, i32, i32
  }
  func.func @transform_2(%arg0: i32, %arg1: i32) -> (i32, i32, i32) {
    %c0_i32 = arith.constant 0 : i32
    %c0_i32_0 = arith.constant 0 : i32
    %c0_i32_1 = arith.constant 0 : i32
    %c0_i32_2 = arith.constant 0 : i32
    return %c0_i32, %c0_i32_0, %c0_i32_1 : i32, i32, i32
  }
  func.func @transform_3(%arg0: i32, %arg1: i32) -> (i32, i32) {
    %c0_i32 = arith.constant 0 : i32
    %c0_i32_0 = arith.constant 0 : i32
    %c0_i32_1 = arith.constant 0 : i32
    return %c0_i32, %c0_i32_0 : i32, i32
  }
  func.func @transform_4(%arg0: i32, %arg1: i32) -> (i32, i32, i32, i32) {
    %c0_i32 = arith.constant 0 : i32
    %c0_i32_0 = arith.constant 0 : i32
    %c0_i32_1 = arith.constant 0 : i32
    return %arg0, %arg1, %c0_i32, %c0_i32_0 : i32, i32, i32, i32
  }
}

module attributes {stable_mosaic.version = 11 : i64} {
  func.func @_conv4x4s2_kernel(%arg0: i32, %arg1: i32, %arg2: memref<1x8x9x32xbf16, #tpu.memory_space<vmem>>, %arg3: memref<1x1x9x32xbf16, #tpu.memory_space<vmem>>, %arg4: memref<4x32x16xbf16, #tpu.memory_space<vmem>>, %arg5: memref<1x16xf32, #tpu.memory_space<vmem>>, %arg6: memref<1x8x8x16xbf16, #tpu.memory_space<vmem>>, %arg7: memref<9x9x32xbf16, #tpu.memory_space<vmem>>) attributes {dimension_semantics = [#tpu.dimension_semantics<parallel>, #tpu.dimension_semantics<parallel>], iteration_bounds = array<i64: 2, 1>, scalar_prefetch = 0 : i64, scratch_operands = 1 : i64, tpu.core_type = #tpu.core_type<tc>, window_params = [{transform_indices = @transform_0, window_bounds = array<i64: 1, 8, 9, 32>}, {transform_indices = @transform_1, window_bounds = array<i64: 1, 1, 9, 32>}, {pipeline_mode = #tpu.pipeline_mode<synchronous>, transform_indices = @transform_2, window_bounds = array<i64: 4, 32, 16>}, {pipeline_mode = #tpu.pipeline_mode<synchronous>, transform_indices = @transform_3, window_bounds = array<i64: 1, 16>}, {transform_indices = @transform_4, window_bounds = array<i64: 1, 8, 8, 16>}]} {
    %c0 = arith.constant 0 : index
    %c0_0 = arith.constant 0 : index
    %c0_1 = arith.constant 0 : index
    %c0_2 = arith.constant 0 : index
    %0 = vector.load %arg2[%c0, %c0_0, %c0_1, %c0_2] : memref<1x8x9x32xbf16, #tpu.memory_space<vmem>>, vector<1x8x9x32xbf16>
    %1 = vector.shape_cast %0 : vector<1x8x9x32xbf16> to vector<8x9x32xbf16>
    %c0_3 = arith.constant 0 : index
    %c0_4 = arith.constant 0 : index
    %c0_5 = arith.constant 0 : index
    %2 = vector.load %arg7[%c0_3, %c0_4, %c0_5] : memref<9x9x32xbf16, #tpu.memory_space<vmem>>, vector<8x9x32xbf16>
    tpu.vector_store %arg7[%c0_3, %c0_4, %c0_5], %1 {strides = array<i32>} : memref<9x9x32xbf16, #tpu.memory_space<vmem>>, vector<8x9x32xbf16>,
    %c0_6 = arith.constant 0 : index
    %c0_7 = arith.constant 0 : index
    %c0_8 = arith.constant 0 : index
    %c0_9 = arith.constant 0 : index
    %3 = vector.load %arg3[%c0_6, %c0_7, %c0_8, %c0_9] : memref<1x1x9x32xbf16, #tpu.memory_space<vmem>>, vector<1x1x9x32xbf16>
    %4 = vector.shape_cast %3 : vector<1x1x9x32xbf16> to vector<1x9x32xbf16>
    %c8 = arith.constant 8 : index
    %c0_10 = arith.constant 0 : index
    %c0_11 = arith.constant 0 : index
    %5 = vector.load %arg7[%c8, %c0_10, %c0_11] : memref<9x9x32xbf16, #tpu.memory_space<vmem>>, vector<1x9x32xbf16>
    tpu.vector_store %arg7[%c8, %c0_10, %c0_11], %4 {strides = array<i32>} : memref<9x9x32xbf16, #tpu.memory_space<vmem>>, vector<1x9x32xbf16>,
    %c0_12 = arith.constant 0 : index
    %c0_13 = arith.constant 0 : index
    %6 = vector.load %arg5[%c0_12, %c0_13] : memref<1x16xf32, #tpu.memory_space<vmem>>, vector<1x16xf32>
    %7 = vector.shape_cast %6 : vector<1x16xf32> to vector<1x16xf32>
    %8 = vector.broadcast %7 : vector<1x16xf32> to vector<64x16xf32>
    %c0_14 = arith.constant 0 : index
    %c0_15 = arith.constant 0 : index
    %c0_16 = arith.constant 0 : index
    %9 = vector.load %arg7[%c0_14, %c0_15, %c0_16] : memref<9x9x32xbf16, #tpu.memory_space<vmem>>, vector<8x8x32xbf16>
    %10 = vector.shape_cast %9 : vector<8x8x32xbf16> to vector<64x32xbf16>
    %c0_17 = arith.constant 0 : index
    %c0_18 = arith.constant 0 : index
    %c0_19 = arith.constant 0 : index
    %11 = vector.load %arg4[%c0_17, %c0_18, %c0_19] : memref<4x32x16xbf16, #tpu.memory_space<vmem>>, vector<1x32x16xbf16>
    %12 = vector.shape_cast %11 : vector<1x32x16xbf16> to vector<32x16xbf16>
    %cst = arith.constant dense<0.000000e+00> : vector<64x16xf32>
    %13 = tpu.matmul %10, %12, %cst {dimension_numbers = #tpu.dot_dimension_numbers<[1], [0], [0], [1], [0, 0, 1, 1], [], []>} : vector<64x32xbf16>, vector<32x16xbf16>, vector<64x16xf32> -> vector<64x16xf32>
    %14 = arith.addf %8, %13 : vector<64x16xf32>
    %c0_20 = arith.constant 0 : index
    %c1 = arith.constant 1 : index
    %c0_21 = arith.constant 0 : index
    %15 = vector.load %arg7[%c0_20, %c1, %c0_21] : memref<9x9x32xbf16, #tpu.memory_space<vmem>>, vector<8x8x32xbf16>
    %16 = vector.shape_cast %15 : vector<8x8x32xbf16> to vector<64x32xbf16>
    %c1_22 = arith.constant 1 : index
    %c0_23 = arith.constant 0 : index
    %c0_24 = arith.constant 0 : index
    %17 = vector.load %arg4[%c1_22, %c0_23, %c0_24] : memref<4x32x16xbf16, #tpu.memory_space<vmem>>, vector<1x32x16xbf16>
    %18 = vector.shape_cast %17 : vector<1x32x16xbf16> to vector<32x16xbf16>
    %cst_25 = arith.constant dense<0.000000e+00> : vector<64x16xf32>
    %19 = tpu.matmul %16, %18, %cst_25 {dimension_numbers = #tpu.dot_dimension_numbers<[1], [0], [0], [1], [0, 0, 1, 1], [], []>} : vector<64x32xbf16>, vector<32x16xbf16>, vector<64x16xf32> -> vector<64x16xf32>
    %20 = arith.addf %14, %19 : vector<64x16xf32>
    %c1_26 = arith.constant 1 : index
    %c0_27 = arith.constant 0 : index
    %c0_28 = arith.constant 0 : index
    %21 = vector.load %arg7[%c1_26, %c0_27, %c0_28] : memref<9x9x32xbf16, #tpu.memory_space<vmem>>, vector<8x8x32xbf16>
    %22 = vector.shape_cast %21 : vector<8x8x32xbf16> to vector<64x32xbf16>
    %c2 = arith.constant 2 : index
    %c0_29 = arith.constant 0 : index
    %c0_30 = arith.constant 0 : index
    %23 = vector.load %arg4[%c2, %c0_29, %c0_30] : memref<4x32x16xbf16, #tpu.memory_space<vmem>>, vector<1x32x16xbf16>
    %24 = vector.shape_cast %23 : vector<1x32x16xbf16> to vector<32x16xbf16>
    %cst_31 = arith.constant dense<0.000000e+00> : vector<64x16xf32>
    %25 = tpu.matmul %22, %24, %cst_31 {dimension_numbers = #tpu.dot_dimension_numbers<[1], [0], [0], [1], [0, 0, 1, 1], [], []>} : vector<64x32xbf16>, vector<32x16xbf16>, vector<64x16xf32> -> vector<64x16xf32>
    %26 = arith.addf %20, %25 : vector<64x16xf32>
    %c1_32 = arith.constant 1 : index
    %c1_33 = arith.constant 1 : index
    %c0_34 = arith.constant 0 : index
    %27 = vector.load %arg7[%c1_32, %c1_33, %c0_34] : memref<9x9x32xbf16, #tpu.memory_space<vmem>>, vector<8x8x32xbf16>
    %28 = vector.shape_cast %27 : vector<8x8x32xbf16> to vector<64x32xbf16>
    %c3 = arith.constant 3 : index
    %c0_35 = arith.constant 0 : index
    %c0_36 = arith.constant 0 : index
    %29 = vector.load %arg4[%c3, %c0_35, %c0_36] : memref<4x32x16xbf16, #tpu.memory_space<vmem>>, vector<1x32x16xbf16>
    %30 = vector.shape_cast %29 : vector<1x32x16xbf16> to vector<32x16xbf16>
    %cst_37 = arith.constant dense<0.000000e+00> : vector<64x16xf32>
    %31 = tpu.matmul %28, %30, %cst_37 {dimension_numbers = #tpu.dot_dimension_numbers<[1], [0], [0], [1], [0, 0, 1, 1], [], []>} : vector<64x32xbf16>, vector<32x16xbf16>, vector<64x16xf32> -> vector<64x16xf32>
    %32 = arith.addf %26, %31 : vector<64x16xf32>
    %cst_38 = arith.constant 0.000000e+00 : f32
    %33 = vector.broadcast %cst_38 : f32 to vector<64x16xf32>
    %34 = arith.cmpf oge, %32, %33 : vector<64x16xf32>
    %cst_39 = arith.constant 2.000000e-01 : f32
    %35 = vector.broadcast %cst_39 : f32 to vector<64x16xf32>
    %36 = arith.mulf %35, %32 : vector<64x16xf32>
    %37 = arith.select %34, %32, %36 : vector<64x16xi1>, vector<64x16xf32>
    %38 = vector.shape_cast %37 : vector<64x16xf32> to vector<8x8x16xf32>
    %39 = arith.truncf %38 : vector<8x8x16xf32> to vector<8x8x16xbf16>
    %c0_40 = arith.constant 0 : index
    %c0_41 = arith.constant 0 : index
    %c0_42 = arith.constant 0 : index
    %c0_43 = arith.constant 0 : index
    %40 = vector.load %arg6[%c0_40, %c0_41, %c0_42, %c0_43] : memref<1x8x8x16xbf16, #tpu.memory_space<vmem>>, vector<1x8x8x16xbf16>
    %41 = vector.shape_cast %40 : vector<1x8x8x16xbf16> to vector<8x8x16xbf16>
    %42 = vector.shape_cast %39 : vector<8x8x16xbf16> to vector<1x8x8x16xbf16>
    tpu.vector_store %arg6[%c0_40, %c0_41, %c0_42, %c0_43], %42 {strides = array<i32>} : memref<1x8x8x16xbf16, #tpu.memory_space<vmem>>, vector<1x8x8x16xbf16>,
    return
  }
  func.func @transform_0(%arg0: i32, %arg1: i32) -> (i32, i32, i32, i32) {
    %c0_i32 = arith.constant 0 : i32
    %c0_i32_0 = arith.constant 0 : i32
    %c0_i32_1 = arith.constant 0 : i32
    return %arg0, %arg1, %c0_i32, %c0_i32_0 : i32, i32, i32, i32
  }
  func.func @transform_1(%arg0: i32, %arg1: i32) -> (i32, i32, i32, i32) {
    %c1_i32 = arith.constant 1 : i32
    %0 = arith.addi %arg1, %c1_i32 : i32
    %c8_i32 = arith.constant 8 : i32
    %1 = arith.muli %0, %c8_i32 : i32
    %c0_i32 = arith.constant 0 : i32
    %c0_i32_0 = arith.constant 0 : i32
    %c0_i32_1 = arith.constant 0 : i32
    return %arg0, %1, %c0_i32, %c0_i32_0 : i32, i32, i32, i32
  }
  func.func @transform_2(%arg0: i32, %arg1: i32) -> (i32, i32, i32) {
    %c0_i32 = arith.constant 0 : i32
    %c0_i32_0 = arith.constant 0 : i32
    %c0_i32_1 = arith.constant 0 : i32
    %c0_i32_2 = arith.constant 0 : i32
    return %c0_i32, %c0_i32_0, %c0_i32_1 : i32, i32, i32
  }
  func.func @transform_3(%arg0: i32, %arg1: i32) -> (i32, i32) {
    %c0_i32 = arith.constant 0 : i32
    %c0_i32_0 = arith.constant 0 : i32
    %c0_i32_1 = arith.constant 0 : i32
    return %c0_i32, %c0_i32_0 : i32, i32
  }
  func.func @transform_4(%arg0: i32, %arg1: i32) -> (i32, i32, i32, i32) {
    %c0_i32 = arith.constant 0 : i32
    %c0_i32_0 = arith.constant 0 : i32
    %c0_i32_1 = arith.constant 0 : i32
    return %arg0, %arg1, %c0_i32, %c0_i32_0 : i32, i32, i32, i32
  }
}

module attributes {stable_mosaic.version = 11 : i64} {
  func.func @_conv4x4s2_kernel(%arg0: i32, %arg1: i32, %arg2: memref<1x4x9x64xbf16, #tpu.memory_space<vmem>>, %arg3: memref<1x1x9x64xbf16, #tpu.memory_space<vmem>>, %arg4: memref<4x64x32xbf16, #tpu.memory_space<vmem>>, %arg5: memref<1x32xf32, #tpu.memory_space<vmem>>, %arg6: memref<1x4x8x32xbf16, #tpu.memory_space<vmem>>, %arg7: memref<5x9x64xbf16, #tpu.memory_space<vmem>>) attributes {dimension_semantics = [#tpu.dimension_semantics<parallel>, #tpu.dimension_semantics<parallel>], iteration_bounds = array<i64: 2, 1>, scalar_prefetch = 0 : i64, scratch_operands = 1 : i64, tpu.core_type = #tpu.core_type<tc>, window_params = [{transform_indices = @transform_0, window_bounds = array<i64: 1, 4, 9, 64>}, {transform_indices = @transform_1, window_bounds = array<i64: 1, 1, 9, 64>}, {pipeline_mode = #tpu.pipeline_mode<synchronous>, transform_indices = @transform_2, window_bounds = array<i64: 4, 64, 32>}, {pipeline_mode = #tpu.pipeline_mode<synchronous>, transform_indices = @transform_3, window_bounds = array<i64: 1, 32>}, {transform_indices = @transform_4, window_bounds = array<i64: 1, 4, 8, 32>}]} {
    %c0 = arith.constant 0 : index
    %c0_0 = arith.constant 0 : index
    %c0_1 = arith.constant 0 : index
    %c0_2 = arith.constant 0 : index
    %0 = vector.load %arg2[%c0, %c0_0, %c0_1, %c0_2] : memref<1x4x9x64xbf16, #tpu.memory_space<vmem>>, vector<1x4x9x64xbf16>
    %1 = vector.shape_cast %0 : vector<1x4x9x64xbf16> to vector<4x9x64xbf16>
    %c0_3 = arith.constant 0 : index
    %c0_4 = arith.constant 0 : index
    %c0_5 = arith.constant 0 : index
    %2 = vector.load %arg7[%c0_3, %c0_4, %c0_5] : memref<5x9x64xbf16, #tpu.memory_space<vmem>>, vector<4x9x64xbf16>
    tpu.vector_store %arg7[%c0_3, %c0_4, %c0_5], %1 {strides = array<i32>} : memref<5x9x64xbf16, #tpu.memory_space<vmem>>, vector<4x9x64xbf16>,
    %c0_6 = arith.constant 0 : index
    %c0_7 = arith.constant 0 : index
    %c0_8 = arith.constant 0 : index
    %c0_9 = arith.constant 0 : index
    %3 = vector.load %arg3[%c0_6, %c0_7, %c0_8, %c0_9] : memref<1x1x9x64xbf16, #tpu.memory_space<vmem>>, vector<1x1x9x64xbf16>
    %4 = vector.shape_cast %3 : vector<1x1x9x64xbf16> to vector<1x9x64xbf16>
    %c4 = arith.constant 4 : index
    %c0_10 = arith.constant 0 : index
    %c0_11 = arith.constant 0 : index
    %5 = vector.load %arg7[%c4, %c0_10, %c0_11] : memref<5x9x64xbf16, #tpu.memory_space<vmem>>, vector<1x9x64xbf16>
    tpu.vector_store %arg7[%c4, %c0_10, %c0_11], %4 {strides = array<i32>} : memref<5x9x64xbf16, #tpu.memory_space<vmem>>, vector<1x9x64xbf16>,
    %c0_12 = arith.constant 0 : index
    %c0_13 = arith.constant 0 : index
    %6 = vector.load %arg5[%c0_12, %c0_13] : memref<1x32xf32, #tpu.memory_space<vmem>>, vector<1x32xf32>
    %7 = vector.shape_cast %6 : vector<1x32xf32> to vector<1x32xf32>
    %8 = vector.broadcast %7 : vector<1x32xf32> to vector<32x32xf32>
    %c0_14 = arith.constant 0 : index
    %c0_15 = arith.constant 0 : index
    %c0_16 = arith.constant 0 : index
    %9 = vector.load %arg7[%c0_14, %c0_15, %c0_16] : memref<5x9x64xbf16, #tpu.memory_space<vmem>>, vector<4x8x64xbf16>
    %10 = vector.shape_cast %9 : vector<4x8x64xbf16> to vector<32x64xbf16>
    %c0_17 = arith.constant 0 : index
    %c0_18 = arith.constant 0 : index
    %c0_19 = arith.constant 0 : index
    %11 = vector.load %arg4[%c0_17, %c0_18, %c0_19] : memref<4x64x32xbf16, #tpu.memory_space<vmem>>, vector<1x64x32xbf16>
    %12 = vector.shape_cast %11 : vector<1x64x32xbf16> to vector<64x32xbf16>
    %cst = arith.constant dense<0.000000e+00> : vector<32x32xf32>
    %13 = tpu.matmul %10, %12, %cst {dimension_numbers = #tpu.dot_dimension_numbers<[1], [0], [0], [1], [0, 0, 1, 1], [], []>} : vector<32x64xbf16>, vector<64x32xbf16>, vector<32x32xf32> -> vector<32x32xf32>
    %14 = arith.addf %8, %13 : vector<32x32xf32>
    %c0_20 = arith.constant 0 : index
    %c1 = arith.constant 1 : index
    %c0_21 = arith.constant 0 : index
    %15 = vector.load %arg7[%c0_20, %c1, %c0_21] : memref<5x9x64xbf16, #tpu.memory_space<vmem>>, vector<4x8x64xbf16>
    %16 = vector.shape_cast %15 : vector<4x8x64xbf16> to vector<32x64xbf16>
    %c1_22 = arith.constant 1 : index
    %c0_23 = arith.constant 0 : index
    %c0_24 = arith.constant 0 : index
    %17 = vector.load %arg4[%c1_22, %c0_23, %c0_24] : memref<4x64x32xbf16, #tpu.memory_space<vmem>>, vector<1x64x32xbf16>
    %18 = vector.shape_cast %17 : vector<1x64x32xbf16> to vector<64x32xbf16>
    %cst_25 = arith.constant dense<0.000000e+00> : vector<32x32xf32>
    %19 = tpu.matmul %16, %18, %cst_25 {dimension_numbers = #tpu.dot_dimension_numbers<[1], [0], [0], [1], [0, 0, 1, 1], [], []>} : vector<32x64xbf16>, vector<64x32xbf16>, vector<32x32xf32> -> vector<32x32xf32>
    %20 = arith.addf %14, %19 : vector<32x32xf32>
    %c1_26 = arith.constant 1 : index
    %c0_27 = arith.constant 0 : index
    %c0_28 = arith.constant 0 : index
    %21 = vector.load %arg7[%c1_26, %c0_27, %c0_28] : memref<5x9x64xbf16, #tpu.memory_space<vmem>>, vector<4x8x64xbf16>
    %22 = vector.shape_cast %21 : vector<4x8x64xbf16> to vector<32x64xbf16>
    %c2 = arith.constant 2 : index
    %c0_29 = arith.constant 0 : index
    %c0_30 = arith.constant 0 : index
    %23 = vector.load %arg4[%c2, %c0_29, %c0_30] : memref<4x64x32xbf16, #tpu.memory_space<vmem>>, vector<1x64x32xbf16>
    %24 = vector.shape_cast %23 : vector<1x64x32xbf16> to vector<64x32xbf16>
    %cst_31 = arith.constant dense<0.000000e+00> : vector<32x32xf32>
    %25 = tpu.matmul %22, %24, %cst_31 {dimension_numbers = #tpu.dot_dimension_numbers<[1], [0], [0], [1], [0, 0, 1, 1], [], []>} : vector<32x64xbf16>, vector<64x32xbf16>, vector<32x32xf32> -> vector<32x32xf32>
    %26 = arith.addf %20, %25 : vector<32x32xf32>
    %c1_32 = arith.constant 1 : index
    %c1_33 = arith.constant 1 : index
    %c0_34 = arith.constant 0 : index
    %27 = vector.load %arg7[%c1_32, %c1_33, %c0_34] : memref<5x9x64xbf16, #tpu.memory_space<vmem>>, vector<4x8x64xbf16>
    %28 = vector.shape_cast %27 : vector<4x8x64xbf16> to vector<32x64xbf16>
    %c3 = arith.constant 3 : index
    %c0_35 = arith.constant 0 : index
    %c0_36 = arith.constant 0 : index
    %29 = vector.load %arg4[%c3, %c0_35, %c0_36] : memref<4x64x32xbf16, #tpu.memory_space<vmem>>, vector<1x64x32xbf16>
    %30 = vector.shape_cast %29 : vector<1x64x32xbf16> to vector<64x32xbf16>
    %cst_37 = arith.constant dense<0.000000e+00> : vector<32x32xf32>
    %31 = tpu.matmul %28, %30, %cst_37 {dimension_numbers = #tpu.dot_dimension_numbers<[1], [0], [0], [1], [0, 0, 1, 1], [], []>} : vector<32x64xbf16>, vector<64x32xbf16>, vector<32x32xf32> -> vector<32x32xf32>
    %32 = arith.addf %26, %31 : vector<32x32xf32>
    %cst_38 = arith.constant 0.000000e+00 : f32
    %33 = vector.broadcast %cst_38 : f32 to vector<32x32xf32>
    %34 = arith.cmpf oge, %32, %33 : vector<32x32xf32>
    %cst_39 = arith.constant 2.000000e-01 : f32
    %35 = vector.broadcast %cst_39 : f32 to vector<32x32xf32>
    %36 = arith.mulf %35, %32 : vector<32x32xf32>
    %37 = arith.select %34, %32, %36 : vector<32x32xi1>, vector<32x32xf32>
    %38 = vector.shape_cast %37 : vector<32x32xf32> to vector<4x8x32xf32>
    %39 = arith.truncf %38 : vector<4x8x32xf32> to vector<4x8x32xbf16>
    %c0_40 = arith.constant 0 : index
    %c0_41 = arith.constant 0 : index
    %c0_42 = arith.constant 0 : index
    %c0_43 = arith.constant 0 : index
    %40 = vector.load %arg6[%c0_40, %c0_41, %c0_42, %c0_43] : memref<1x4x8x32xbf16, #tpu.memory_space<vmem>>, vector<1x4x8x32xbf16>
    %41 = vector.shape_cast %40 : vector<1x4x8x32xbf16> to vector<4x8x32xbf16>
    %42 = vector.shape_cast %39 : vector<4x8x32xbf16> to vector<1x4x8x32xbf16>
    tpu.vector_store %arg6[%c0_40, %c0_41, %c0_42, %c0_43], %42 {strides = array<i32>} : memref<1x4x8x32xbf16, #tpu.memory_space<vmem>>, vector<1x4x8x32xbf16>,
    return
  }
  func.func @transform_0(%arg0: i32, %arg1: i32) -> (i32, i32, i32, i32) {
    %c0_i32 = arith.constant 0 : i32
    %c0_i32_0 = arith.constant 0 : i32
    %c0_i32_1 = arith.constant 0 : i32
    return %arg0, %arg1, %c0_i32, %c0_i32_0 : i32, i32, i32, i32
  }
  func.func @transform_1(%arg0: i32, %arg1: i32) -> (i32, i32, i32, i32) {
    %c1_i32 = arith.constant 1 : i32
    %0 = arith.addi %arg1, %c1_i32 : i32
    %c4_i32 = arith.constant 4 : i32
    %1 = arith.muli %0, %c4_i32 : i32
    %c0_i32 = arith.constant 0 : i32
    %c0_i32_0 = arith.constant 0 : i32
    %c0_i32_1 = arith.constant 0 : i32
    return %arg0, %1, %c0_i32, %c0_i32_0 : i32, i32, i32, i32
  }
  func.func @transform_2(%arg0: i32, %arg1: i32) -> (i32, i32, i32) {
    %c0_i32 = arith.constant 0 : i32
    %c0_i32_0 = arith.constant 0 : i32
    %c0_i32_1 = arith.constant 0 : i32
    %c0_i32_2 = arith.constant 0 : i32
    return %c0_i32, %c0_i32_0, %c0_i32_1 : i32, i32, i32
  }
  func.func @transform_3(%arg0: i32, %arg1: i32) -> (i32, i32) {
    %c0_i32 = arith.constant 0 : i32
    %c0_i32_0 = arith.constant 0 : i32
    %c0_i32_1 = arith.constant 0 : i32
    return %c0_i32, %c0_i32_0 : i32, i32
  }
  func.func @transform_4(%arg0: i32, %arg1: i32) -> (i32, i32, i32, i32) {
    %c0_i32 = arith.constant 0 : i32
    %c0_i32_0 = arith.constant 0 : i32
    %c0_i32_1 = arith.constant 0 : i32
    return %arg0, %arg1, %c0_i32, %c0_i32_0 : i32, i32, i32, i32
  }
}

module attributes {stable_mosaic.version = 11 : i64} {
  func.func @_conv4x4s2_kernel(%arg0: i32, %arg1: i32, %arg2: memref<1x2x9x128xbf16, #tpu.memory_space<vmem>>, %arg3: memref<1x1x9x128xbf16, #tpu.memory_space<vmem>>, %arg4: memref<4x128x64xbf16, #tpu.memory_space<vmem>>, %arg5: memref<1x64xf32, #tpu.memory_space<vmem>>, %arg6: memref<1x2x8x64xbf16, #tpu.memory_space<vmem>>, %arg7: memref<3x9x128xbf16, #tpu.memory_space<vmem>>) attributes {dimension_semantics = [#tpu.dimension_semantics<parallel>, #tpu.dimension_semantics<parallel>], iteration_bounds = array<i64: 2, 1>, scalar_prefetch = 0 : i64, scratch_operands = 1 : i64, tpu.core_type = #tpu.core_type<tc>, window_params = [{transform_indices = @transform_0, window_bounds = array<i64: 1, 2, 9, 128>}, {transform_indices = @transform_1, window_bounds = array<i64: 1, 1, 9, 128>}, {pipeline_mode = #tpu.pipeline_mode<synchronous>, transform_indices = @transform_2, window_bounds = array<i64: 4, 128, 64>}, {pipeline_mode = #tpu.pipeline_mode<synchronous>, transform_indices = @transform_3, window_bounds = array<i64: 1, 64>}, {transform_indices = @transform_4, window_bounds = array<i64: 1, 2, 8, 64>}]} {
    %c0 = arith.constant 0 : index
    %c0_0 = arith.constant 0 : index
    %c0_1 = arith.constant 0 : index
    %c0_2 = arith.constant 0 : index
    %0 = vector.load %arg2[%c0, %c0_0, %c0_1, %c0_2] : memref<1x2x9x128xbf16, #tpu.memory_space<vmem>>, vector<1x2x9x128xbf16>
    %1 = vector.shape_cast %0 : vector<1x2x9x128xbf16> to vector<2x9x128xbf16>
    %c0_3 = arith.constant 0 : index
    %c0_4 = arith.constant 0 : index
    %c0_5 = arith.constant 0 : index
    %2 = vector.load %arg7[%c0_3, %c0_4, %c0_5] : memref<3x9x128xbf16, #tpu.memory_space<vmem>>, vector<2x9x128xbf16>
    tpu.vector_store %arg7[%c0_3, %c0_4, %c0_5], %1 {strides = array<i32>} : memref<3x9x128xbf16, #tpu.memory_space<vmem>>, vector<2x9x128xbf16>,
    %c0_6 = arith.constant 0 : index
    %c0_7 = arith.constant 0 : index
    %c0_8 = arith.constant 0 : index
    %c0_9 = arith.constant 0 : index
    %3 = vector.load %arg3[%c0_6, %c0_7, %c0_8, %c0_9] : memref<1x1x9x128xbf16, #tpu.memory_space<vmem>>, vector<1x1x9x128xbf16>
    %4 = vector.shape_cast %3 : vector<1x1x9x128xbf16> to vector<1x9x128xbf16>
    %c2 = arith.constant 2 : index
    %c0_10 = arith.constant 0 : index
    %c0_11 = arith.constant 0 : index
    %5 = vector.load %arg7[%c2, %c0_10, %c0_11] : memref<3x9x128xbf16, #tpu.memory_space<vmem>>, vector<1x9x128xbf16>
    tpu.vector_store %arg7[%c2, %c0_10, %c0_11], %4 {strides = array<i32>} : memref<3x9x128xbf16, #tpu.memory_space<vmem>>, vector<1x9x128xbf16>,
    %c0_12 = arith.constant 0 : index
    %c0_13 = arith.constant 0 : index
    %6 = vector.load %arg5[%c0_12, %c0_13] : memref<1x64xf32, #tpu.memory_space<vmem>>, vector<1x64xf32>
    %7 = vector.shape_cast %6 : vector<1x64xf32> to vector<1x64xf32>
    %8 = vector.broadcast %7 : vector<1x64xf32> to vector<16x64xf32>
    %c0_14 = arith.constant 0 : index
    %c0_15 = arith.constant 0 : index
    %c0_16 = arith.constant 0 : index
    %9 = vector.load %arg7[%c0_14, %c0_15, %c0_16] : memref<3x9x128xbf16, #tpu.memory_space<vmem>>, vector<2x8x128xbf16>
    %10 = vector.shape_cast %9 : vector<2x8x128xbf16> to vector<16x128xbf16>
    %c0_17 = arith.constant 0 : index
    %c0_18 = arith.constant 0 : index
    %c0_19 = arith.constant 0 : index
    %11 = vector.load %arg4[%c0_17, %c0_18, %c0_19] : memref<4x128x64xbf16, #tpu.memory_space<vmem>>, vector<1x128x64xbf16>
    %12 = vector.shape_cast %11 : vector<1x128x64xbf16> to vector<128x64xbf16>
    %cst = arith.constant dense<0.000000e+00> : vector<16x64xf32>
    %13 = tpu.matmul %10, %12, %cst {dimension_numbers = #tpu.dot_dimension_numbers<[1], [0], [0], [1], [0, 0, 1, 1], [], []>} : vector<16x128xbf16>, vector<128x64xbf16>, vector<16x64xf32> -> vector<16x64xf32>
    %14 = arith.addf %8, %13 : vector<16x64xf32>
    %c0_20 = arith.constant 0 : index
    %c1 = arith.constant 1 : index
    %c0_21 = arith.constant 0 : index
    %15 = vector.load %arg7[%c0_20, %c1, %c0_21] : memref<3x9x128xbf16, #tpu.memory_space<vmem>>, vector<2x8x128xbf16>
    %16 = vector.shape_cast %15 : vector<2x8x128xbf16> to vector<16x128xbf16>
    %c1_22 = arith.constant 1 : index
    %c0_23 = arith.constant 0 : index
    %c0_24 = arith.constant 0 : index
    %17 = vector.load %arg4[%c1_22, %c0_23, %c0_24] : memref<4x128x64xbf16, #tpu.memory_space<vmem>>, vector<1x128x64xbf16>
    %18 = vector.shape_cast %17 : vector<1x128x64xbf16> to vector<128x64xbf16>
    %cst_25 = arith.constant dense<0.000000e+00> : vector<16x64xf32>
    %19 = tpu.matmul %16, %18, %cst_25 {dimension_numbers = #tpu.dot_dimension_numbers<[1], [0], [0], [1], [0, 0, 1, 1], [], []>} : vector<16x128xbf16>, vector<128x64xbf16>, vector<16x64xf32> -> vector<16x64xf32>
    %20 = arith.addf %14, %19 : vector<16x64xf32>
    %c1_26 = arith.constant 1 : index
    %c0_27 = arith.constant 0 : index
    %c0_28 = arith.constant 0 : index
    %21 = vector.load %arg7[%c1_26, %c0_27, %c0_28] : memref<3x9x128xbf16, #tpu.memory_space<vmem>>, vector<2x8x128xbf16>
    %22 = vector.shape_cast %21 : vector<2x8x128xbf16> to vector<16x128xbf16>
    %c2_29 = arith.constant 2 : index
    %c0_30 = arith.constant 0 : index
    %c0_31 = arith.constant 0 : index
    %23 = vector.load %arg4[%c2_29, %c0_30, %c0_31] : memref<4x128x64xbf16, #tpu.memory_space<vmem>>, vector<1x128x64xbf16>
    %24 = vector.shape_cast %23 : vector<1x128x64xbf16> to vector<128x64xbf16>
    %cst_32 = arith.constant dense<0.000000e+00> : vector<16x64xf32>
    %25 = tpu.matmul %22, %24, %cst_32 {dimension_numbers = #tpu.dot_dimension_numbers<[1], [0], [0], [1], [0, 0, 1, 1], [], []>} : vector<16x128xbf16>, vector<128x64xbf16>, vector<16x64xf32> -> vector<16x64xf32>
    %26 = arith.addf %20, %25 : vector<16x64xf32>
    %c1_33 = arith.constant 1 : index
    %c1_34 = arith.constant 1 : index
    %c0_35 = arith.constant 0 : index
    %27 = vector.load %arg7[%c1_33, %c1_34, %c0_35] : memref<3x9x128xbf16, #tpu.memory_space<vmem>>, vector<2x8x128xbf16>
    %28 = vector.shape_cast %27 : vector<2x8x128xbf16> to vector<16x128xbf16>
    %c3 = arith.constant 3 : index
    %c0_36 = arith.constant 0 : index
    %c0_37 = arith.constant 0 : index
    %29 = vector.load %arg4[%c3, %c0_36, %c0_37] : memref<4x128x64xbf16, #tpu.memory_space<vmem>>, vector<1x128x64xbf16>
    %30 = vector.shape_cast %29 : vector<1x128x64xbf16> to vector<128x64xbf16>
    %cst_38 = arith.constant dense<0.000000e+00> : vector<16x64xf32>
    %31 = tpu.matmul %28, %30, %cst_38 {dimension_numbers = #tpu.dot_dimension_numbers<[1], [0], [0], [1], [0, 0, 1, 1], [], []>} : vector<16x128xbf16>, vector<128x64xbf16>, vector<16x64xf32> -> vector<16x64xf32>
    %32 = arith.addf %26, %31 : vector<16x64xf32>
    %cst_39 = arith.constant 0.000000e+00 : f32
    %33 = vector.broadcast %cst_39 : f32 to vector<16x64xf32>
    %34 = arith.cmpf oge, %32, %33 : vector<16x64xf32>
    %cst_40 = arith.constant 2.000000e-01 : f32
    %35 = vector.broadcast %cst_40 : f32 to vector<16x64xf32>
    %36 = arith.mulf %35, %32 : vector<16x64xf32>
    %37 = arith.select %34, %32, %36 : vector<16x64xi1>, vector<16x64xf32>
    %38 = vector.shape_cast %37 : vector<16x64xf32> to vector<2x8x64xf32>
    %39 = arith.truncf %38 : vector<2x8x64xf32> to vector<2x8x64xbf16>
    %c0_41 = arith.constant 0 : index
    %c0_42 = arith.constant 0 : index
    %c0_43 = arith.constant 0 : index
    %c0_44 = arith.constant 0 : index
    %40 = vector.load %arg6[%c0_41, %c0_42, %c0_43, %c0_44] : memref<1x2x8x64xbf16, #tpu.memory_space<vmem>>, vector<1x2x8x64xbf16>
    %41 = vector.shape_cast %40 : vector<1x2x8x64xbf16> to vector<2x8x64xbf16>
    %42 = vector.shape_cast %39 : vector<2x8x64xbf16> to vector<1x2x8x64xbf16>
    tpu.vector_store %arg6[%c0_41, %c0_42, %c0_43, %c0_44], %42 {strides = array<i32>} : memref<1x2x8x64xbf16, #tpu.memory_space<vmem>>, vector<1x2x8x64xbf16>,
    return
  }
  func.func @transform_0(%arg0: i32, %arg1: i32) -> (i32, i32, i32, i32) {
    %c0_i32 = arith.constant 0 : i32
    %c0_i32_0 = arith.constant 0 : i32
    %c0_i32_1 = arith.constant 0 : i32
    return %arg0, %arg1, %c0_i32, %c0_i32_0 : i32, i32, i32, i32
  }
  func.func @transform_1(%arg0: i32, %arg1: i32) -> (i32, i32, i32, i32) {
    %c1_i32 = arith.constant 1 : i32
    %0 = arith.addi %arg1, %c1_i32 : i32
    %c2_i32 = arith.constant 2 : i32
    %1 = arith.muli %0, %c2_i32 : i32
    %c0_i32 = arith.constant 0 : i32
    %c0_i32_0 = arith.constant 0 : i32
    %c0_i32_1 = arith.constant 0 : i32
    return %arg0, %1, %c0_i32, %c0_i32_0 : i32, i32, i32, i32
  }
  func.func @transform_2(%arg0: i32, %arg1: i32) -> (i32, i32, i32) {
    %c0_i32 = arith.constant 0 : i32
    %c0_i32_0 = arith.constant 0 : i32
    %c0_i32_1 = arith.constant 0 : i32
    %c0_i32_2 = arith.constant 0 : i32
    return %c0_i32, %c0_i32_0, %c0_i32_1 : i32, i32, i32
  }
  func.func @transform_3(%arg0: i32, %arg1: i32) -> (i32, i32) {
    %c0_i32 = arith.constant 0 : i32
    %c0_i32_0 = arith.constant 0 : i32
    %c0_i32_1 = arith.constant 0 : i32
    return %c0_i32, %c0_i32_0 : i32, i32
  }
  func.func @transform_4(%arg0: i32, %arg1: i32) -> (i32, i32, i32, i32) {
    %c0_i32 = arith.constant 0 : i32
    %c0_i32_0 = arith.constant 0 : i32
    %c0_i32_1 = arith.constant 0 : i32
    return %arg0, %arg1, %c0_i32, %c0_i32_0 : i32, i32, i32, i32
  }
}

module attributes {stable_mosaic.version = 11 : i64} {
  func.func @_conv4x4s2_kernel(%arg0: i32, %arg1: i32, %arg2: memref<1x1x9x256xbf16, #tpu.memory_space<vmem>>, %arg3: memref<1x1x9x256xbf16, #tpu.memory_space<vmem>>, %arg4: memref<4x256x1xbf16, #tpu.memory_space<vmem>>, %arg5: memref<1x1xf32, #tpu.memory_space<vmem>>, %arg6: memref<1x1x8x1xf32, #tpu.memory_space<vmem>>, %arg7: memref<2x9x256xbf16, #tpu.memory_space<vmem>>) attributes {dimension_semantics = [#tpu.dimension_semantics<parallel>, #tpu.dimension_semantics<parallel>], iteration_bounds = array<i64: 2, 1>, scalar_prefetch = 0 : i64, scratch_operands = 1 : i64, tpu.core_type = #tpu.core_type<tc>, window_params = [{transform_indices = @transform_0, window_bounds = array<i64: 1, 1, 9, 256>}, {transform_indices = @transform_1, window_bounds = array<i64: 1, 1, 9, 256>}, {pipeline_mode = #tpu.pipeline_mode<synchronous>, transform_indices = @transform_2, window_bounds = array<i64: 4, 256, 1>}, {pipeline_mode = #tpu.pipeline_mode<synchronous>, transform_indices = @transform_3, window_bounds = array<i64: 1, 1>}, {transform_indices = @transform_4, window_bounds = array<i64: 1, 1, 8, 1>}]} {
    %c0 = arith.constant 0 : index
    %c0_0 = arith.constant 0 : index
    %c0_1 = arith.constant 0 : index
    %c0_2 = arith.constant 0 : index
    %0 = vector.load %arg2[%c0, %c0_0, %c0_1, %c0_2] : memref<1x1x9x256xbf16, #tpu.memory_space<vmem>>, vector<1x1x9x256xbf16>
    %1 = vector.shape_cast %0 : vector<1x1x9x256xbf16> to vector<1x9x256xbf16>
    %c0_3 = arith.constant 0 : index
    %c0_4 = arith.constant 0 : index
    %c0_5 = arith.constant 0 : index
    %2 = vector.load %arg7[%c0_3, %c0_4, %c0_5] : memref<2x9x256xbf16, #tpu.memory_space<vmem>>, vector<1x9x256xbf16>
    tpu.vector_store %arg7[%c0_3, %c0_4, %c0_5], %1 {strides = array<i32>} : memref<2x9x256xbf16, #tpu.memory_space<vmem>>, vector<1x9x256xbf16>,
    %c0_6 = arith.constant 0 : index
    %c0_7 = arith.constant 0 : index
    %c0_8 = arith.constant 0 : index
    %c0_9 = arith.constant 0 : index
    %3 = vector.load %arg3[%c0_6, %c0_7, %c0_8, %c0_9] : memref<1x1x9x256xbf16, #tpu.memory_space<vmem>>, vector<1x1x9x256xbf16>
    %4 = vector.shape_cast %3 : vector<1x1x9x256xbf16> to vector<1x9x256xbf16>
    %c1 = arith.constant 1 : index
    %c0_10 = arith.constant 0 : index
    %c0_11 = arith.constant 0 : index
    %5 = vector.load %arg7[%c1, %c0_10, %c0_11] : memref<2x9x256xbf16, #tpu.memory_space<vmem>>, vector<1x9x256xbf16>
    tpu.vector_store %arg7[%c1, %c0_10, %c0_11], %4 {strides = array<i32>} : memref<2x9x256xbf16, #tpu.memory_space<vmem>>, vector<1x9x256xbf16>,
    %c0_12 = arith.constant 0 : index
    %c0_13 = arith.constant 0 : index
    %6 = vector.load %arg5[%c0_12, %c0_13] : memref<1x1xf32, #tpu.memory_space<vmem>>, vector<1x1xf32>
    %7 = vector.shape_cast %6 : vector<1x1xf32> to vector<1x1xf32>
    %8 = vector.broadcast %7 : vector<1x1xf32> to vector<8x1xf32>
    %c0_14 = arith.constant 0 : index
    %c0_15 = arith.constant 0 : index
    %c0_16 = arith.constant 0 : index
    %9 = vector.load %arg7[%c0_14, %c0_15, %c0_16] : memref<2x9x256xbf16, #tpu.memory_space<vmem>>, vector<1x8x256xbf16>
    %10 = vector.shape_cast %9 : vector<1x8x256xbf16> to vector<8x256xbf16>
    %c0_17 = arith.constant 0 : index
    %c0_18 = arith.constant 0 : index
    %c0_19 = arith.constant 0 : index
    %11 = vector.load %arg4[%c0_17, %c0_18, %c0_19] : memref<4x256x1xbf16, #tpu.memory_space<vmem>>, vector<1x256x1xbf16>
    %12 = vector.shape_cast %11 : vector<1x256x1xbf16> to vector<256x1xbf16>
    %cst = arith.constant dense<0.000000e+00> : vector<8x1xf32>
    %13 = tpu.matmul %10, %12, %cst {dimension_numbers = #tpu.dot_dimension_numbers<[1], [0], [0], [1], [0, 0, 1, 1], [], []>} : vector<8x256xbf16>, vector<256x1xbf16>, vector<8x1xf32> -> vector<8x1xf32>
    %14 = arith.addf %8, %13 : vector<8x1xf32>
    %c0_20 = arith.constant 0 : index
    %c1_21 = arith.constant 1 : index
    %c0_22 = arith.constant 0 : index
    %15 = vector.load %arg7[%c0_20, %c1_21, %c0_22] : memref<2x9x256xbf16, #tpu.memory_space<vmem>>, vector<1x8x256xbf16>
    %16 = vector.shape_cast %15 : vector<1x8x256xbf16> to vector<8x256xbf16>
    %c1_23 = arith.constant 1 : index
    %c0_24 = arith.constant 0 : index
    %c0_25 = arith.constant 0 : index
    %17 = vector.load %arg4[%c1_23, %c0_24, %c0_25] : memref<4x256x1xbf16, #tpu.memory_space<vmem>>, vector<1x256x1xbf16>
    %18 = vector.shape_cast %17 : vector<1x256x1xbf16> to vector<256x1xbf16>
    %cst_26 = arith.constant dense<0.000000e+00> : vector<8x1xf32>
    %19 = tpu.matmul %16, %18, %cst_26 {dimension_numbers = #tpu.dot_dimension_numbers<[1], [0], [0], [1], [0, 0, 1, 1], [], []>} : vector<8x256xbf16>, vector<256x1xbf16>, vector<8x1xf32> -> vector<8x1xf32>
    %20 = arith.addf %14, %19 : vector<8x1xf32>
    %c1_27 = arith.constant 1 : index
    %c0_28 = arith.constant 0 : index
    %c0_29 = arith.constant 0 : index
    %21 = vector.load %arg7[%c1_27, %c0_28, %c0_29] : memref<2x9x256xbf16, #tpu.memory_space<vmem>>, vector<1x8x256xbf16>
    %22 = vector.shape_cast %21 : vector<1x8x256xbf16> to vector<8x256xbf16>
    %c2 = arith.constant 2 : index
    %c0_30 = arith.constant 0 : index
    %c0_31 = arith.constant 0 : index
    %23 = vector.load %arg4[%c2, %c0_30, %c0_31] : memref<4x256x1xbf16, #tpu.memory_space<vmem>>, vector<1x256x1xbf16>
    %24 = vector.shape_cast %23 : vector<1x256x1xbf16> to vector<256x1xbf16>
    %cst_32 = arith.constant dense<0.000000e+00> : vector<8x1xf32>
    %25 = tpu.matmul %22, %24, %cst_32 {dimension_numbers = #tpu.dot_dimension_numbers<[1], [0], [0], [1], [0, 0, 1, 1], [], []>} : vector<8x256xbf16>, vector<256x1xbf16>, vector<8x1xf32> -> vector<8x1xf32>
    %26 = arith.addf %20, %25 : vector<8x1xf32>
    %c1_33 = arith.constant 1 : index
    %c1_34 = arith.constant 1 : index
    %c0_35 = arith.constant 0 : index
    %27 = vector.load %arg7[%c1_33, %c1_34, %c0_35] : memref<2x9x256xbf16, #tpu.memory_space<vmem>>, vector<1x8x256xbf16>
    %28 = vector.shape_cast %27 : vector<1x8x256xbf16> to vector<8x256xbf16>
    %c3 = arith.constant 3 : index
    %c0_36 = arith.constant 0 : index
    %c0_37 = arith.constant 0 : index
    %29 = vector.load %arg4[%c3, %c0_36, %c0_37] : memref<4x256x1xbf16, #tpu.memory_space<vmem>>, vector<1x256x1xbf16>
    %30 = vector.shape_cast %29 : vector<1x256x1xbf16> to vector<256x1xbf16>
    %cst_38 = arith.constant dense<0.000000e+00> : vector<8x1xf32>
    %31 = tpu.matmul %28, %30, %cst_38 {dimension_numbers = #tpu.dot_dimension_numbers<[1], [0], [0], [1], [0, 0, 1, 1], [], []>} : vector<8x256xbf16>, vector<256x1xbf16>, vector<8x1xf32> -> vector<8x1xf32>
    %32 = arith.addf %26, %31 : vector<8x1xf32>
    %33 = vector.shape_cast %32 : vector<8x1xf32> to vector<1x8x1xf32>
    %c0_39 = arith.constant 0 : index
    %c0_40 = arith.constant 0 : index
    %c0_41 = arith.constant 0 : index
    %c0_42 = arith.constant 0 : index
    %34 = vector.load %arg6[%c0_39, %c0_40, %c0_41, %c0_42] : memref<1x1x8x1xf32, #tpu.memory_space<vmem>>, vector<1x1x8x1xf32>
    %35 = vector.shape_cast %34 : vector<1x1x8x1xf32> to vector<1x8x1xf32>
    %36 = vector.shape_cast %33 : vector<1x8x1xf32> to vector<1x1x8x1xf32>
    tpu.vector_store %arg6[%c0_39, %c0_40, %c0_41, %c0_42], %36 {strides = array<i32>} : memref<1x1x8x1xf32, #tpu.memory_space<vmem>>, vector<1x1x8x1xf32>,
    return
  }
  func.func @transform_0(%arg0: i32, %arg1: i32) -> (i32, i32, i32, i32) {
    %c0_i32 = arith.constant 0 : i32
    %c0_i32_0 = arith.constant 0 : i32
    %c0_i32_1 = arith.constant 0 : i32
    return %arg0, %arg1, %c0_i32, %c0_i32_0 : i32, i32, i32, i32
  }
  func.func @transform_1(%arg0: i32, %arg1: i32) -> (i32, i32, i32, i32) {
    %c1_i32 = arith.constant 1 : i32
    %0 = arith.addi %arg1, %c1_i32 : i32
    %c1_i32_0 = arith.constant 1 : i32
    %1 = arith.muli %0, %c1_i32_0 : i32
    %c0_i32 = arith.constant 0 : i32
    %c0_i32_1 = arith.constant 0 : i32
    %c0_i32_2 = arith.constant 0 : i32
    return %arg0, %1, %c0_i32, %c0_i32_1 : i32, i32, i32, i32
  }
  func.func @transform_2(%arg0: i32, %arg1: i32) -> (i32, i32, i32) {
    %c0_i32 = arith.constant 0 : i32
    %c0_i32_0 = arith.constant 0 : i32
    %c0_i32_1 = arith.constant 0 : i32
    %c0_i32_2 = arith.constant 0 : i32
    return %c0_i32, %c0_i32_0, %c0_i32_1 : i32, i32, i32
  }
  func.func @transform_3(%arg0: i32, %arg1: i32) -> (i32, i32) {
    %c0_i32 = arith.constant 0 : i32
    %c0_i32_0 = arith.constant 0 : i32
    %c0_i32_1 = arith.constant 0 : i32
    return %c0_i32, %c0_i32_0 : i32, i32
  }
  func.func @transform_4(%arg0: i32, %arg1: i32) -> (i32, i32, i32, i32) {
    %c0_i32 = arith.constant 0 : i32
    %c0_i32_0 = arith.constant 0 : i32
    %c0_i32_1 = arith.constant 0 : i32
    return %arg0, %arg1, %c0_i32, %c0_i32_0 : i32, i32, i32, i32
  }
}

</mosaic_0001>

<llo_original>
// kernel: fc_discriminator.5
$region0: #{fc_discriminator.5}
  #allocation0 [shape = 'u32[]', space=smem, size = 0x4, offset = 0x4, fixed_abs, tag = 'smem constant byte address 0x4 - core index']
  #allocation1 [shape = 'u32[144,128]{1,0:T(1,128)}', space=vmem, size = 0x12000, scoped, tag = 'internal scratch']
  #allocation2 [shape = 'bf16[17,17,8]{2,1,0:T(8,128)(2,1)}', space=vmem, size = 0x19800, scoped, tag = 'scratch operand']
  %s0 = inlined_call_operand.vmem [shape: bf16[2,17,17,8], index: 0, kind: input, shape index: {}, may-alias: {0,1}]
  %s1 = inlined_call_operand.vmem [shape: bf16[2,17,17,8], index: 1, kind: input, shape index: {}, may-alias: {0,1}]
  %s2 = inlined_call_operand.vmem [shape: bf16[4,8,8], index: 2, kind: input, shape index: {}]
  %s3 = inlined_call_operand.vmem [shape: f32[1,8], index: 3, kind: input, shape index: {}]
  %s4 = inlined_call_operand.vmem [shape: bf16[2,16,16,8], index: 4, kind: output, shape index: {}]
  %s5 = sld [smem:[#allocation0]]
  $region49: #{fc_discriminator.5} parent=0
    _
  %s7 = ssub.s32 1, %s5
  %s8 = scalar_select 0, %s7, %s5
  loop: start=0, step=1, limit=4
  $region2: #{fc_discriminator.5} parent=0 // loop_pre_header
    _
  $region3: #{fc_discriminator.5} parent=0 // loop_header
    %s10 = sphi 0, %s14
    %p11 = scmp.ge.s32.totalorder %s10, 4
    %s17 = sphi 0, %s29
    %s18 = sphi 0, %s25
    %s19 = sphi 0, %s17
    %s20 = sphi 0, %s18
    %s21 = sphi 0, %s19
    %s22 = sphi 0, %s20
    %s34 = sphi 0, %s36
    %s37 = sphi 0, %s34
    %s38 = sphi 0, %s37
    %s54 = sphi 0, %s38
    %s66 = sphi 0, %s68
    %s69 = sphi 0, %s66
    %s70 = sphi 0, %s69
    %s86 = sphi 0, %s70
    %s90 = sphi 0, %s90
    %s92 = sphi 0, %s90
    %s93 = sphi 0, %s92
    %s107 = sphi 0, %s93
    %s111 = sphi 0, %s111
    %s113 = sphi 0, %s111
    %s114 = sphi 0, %s113
    %s128 = sphi 0, %s114
    %s136 = sphi 0, %s138
    %s139 = sphi 0, %s136
    %s140 = sphi 0, %s139
    %s156 = sphi 0, %s140
  $region4: #{fc_discriminator.5} parent=0 // loop_header_branch
    %13 = sbr.rel (%p11) target = $region8
  $region5: #{fc_discriminator.5} parent=0 // loop_body
    %s15 = ssub.s32 %s10, 1
    %s16 = ssub.s32 %s10, 2
    %s23 = sadd.s32 1, %s18
    %p24 = scmp.ge.s32.totalorder %s23, 1
    %s25 = scalar_select %p24, 0, %s23
    %s26 = sadd.s32 1, %s17
    %s27 = scalar_select %p24, %s26, %s17
    %p28 = scmp.ge.s32.totalorder %s27, 2
    %s29 = scalar_select %p28, 0, %s27
    %s30 = ssub.s32 %s17, %s29
    %s31 = ssub.s32 %s18, %s25
    %s32 = sor.u32 %s30, %s31
    %p33 = scmp.eq.s32.totalorder %s32, 0
    %s35 = sadd.s32 %s34, 1
    %s36 = scalar_select %p33, %s34, %s35
    %p39 = pneg %p33
    %p40 = scmp.eq.s32.totalorder %s10, 1
    %p41 = por %p39, %p40
    %p42 = scmp.ne.s32.totalorder %s34, %s37
    %p43 = scmp.eq.s32.totalorder %s10, 0
    %p44 = por %p42, %p43
    %p45 = scmp.ne.s32.totalorder %s34, %s37
    %p46 = scmp.eq.s32.totalorder %s15, 1
    %p47 = por %p45, %p46
    %p48 = scmp.ne.s32.totalorder %s37, %s38
    %p49 = scmp.eq.s32.totalorder %s15, 0
    %p50 = por %p48, %p49
    %p51 = scmp.ne.s32.totalorder %s37, %s38
    %p52 = scmp.eq.s32.totalorder %s16, 1
    %p53 = por %p51, %p52
    %p55 = scmp.ne.s32.totalorder %s38, %s54
    %p56 = scmp.eq.s32.totalorder %s16, 0
    %p57 = por %p55, %p56
    %s58 = sadd.s32 %s18, 1
    %s59 = smul.u32 %s58, 16
    %s60 = sadd.s32 %s25, 1
    %s61 = smul.u32 %s60, 16
    %s62 = ssub.s32 %s17, %s29
    %s63 = ssub.s32 %s59, %s61
    %s64 = sor.u32 %s62, %s63
    %p65 = scmp.eq.s32.totalorder %s64, 0
    %s67 = sadd.s32 %s66, 1
    %s68 = scalar_select %p65, %s66, %s67
    %p71 = pneg %p65
    %p72 = scmp.eq.s32.totalorder %s10, 1
    %p73 = por %p71, %p72
    %p74 = scmp.ne.s32.totalorder %s66, %s69
    %p75 = scmp.eq.s32.totalorder %s10, 0
    %p76 = por %p74, %p75
    %p77 = scmp.ne.s32.totalorder %s66, %s69
    %p78 = scmp.eq.s32.totalorder %s15, 1
    %p79 = por %p77, %p78
    %p80 = scmp.ne.s32.totalorder %s69, %s70
    %p81 = scmp.eq.s32.totalorder %s15, 0
    %p82 = por %p80, %p81
    %p83 = scmp.ne.s32.totalorder %s69, %s70
    %p84 = scmp.eq.s32.totalorder %s16, 1
    %p85 = por %p83, %p84
    %p87 = scmp.ne.s32.totalorder %s70, %s86
    %p88 = scmp.eq.s32.totalorder %s16, 0
    %p89 = por %p87, %p88
    %s91 = sadd.s32 %s90, 1
    %p94 = scmp.eq.s32.totalorder %s10, 1
    %p95 = scmp.ne.s32.totalorder %s90, %s92
    %p96 = scmp.eq.s32.totalorder %s10, 0
    %p97 = por %p95, %p96
    %p98 = scmp.ne.s32.totalorder %s90, %s92
    %p99 = scmp.eq.s32.totalorder %s15, 1
    %p100 = por %p98, %p99
    %p101 = scmp.ne.s32.totalorder %s92, %s93
    %p102 = scmp.eq.s32.totalorder %s15, 0
    %p103 = por %p101, %p102
    %p104 = scmp.ne.s32.totalorder %s92, %s93
    %p105 = scmp.eq.s32.totalorder %s16, 1
    %p106 = por %p104, %p105
    %p108 = scmp.ne.s32.totalorder %s93, %s107
    %p109 = scmp.eq.s32.totalorder %s16, 0
    %p110 = por %p108, %p109
    %s112 = sadd.s32 %s111, 1
    %p115 = scmp.eq.s32.totalorder %s10, 1
    %p116 = scmp.ne.s32.totalorder %s111, %s113
    %p117 = scmp.eq.s32.totalorder %s10, 0
    %p118 = por %p116, %p117
    %p119 = scmp.ne.s32.totalorder %s111, %s113
    %p120 = scmp.eq.s32.totalorder %s15, 1
    %p121 = por %p119, %p120
    %p122 = scmp.ne.s32.totalorder %s113, %s114
    %p123 = scmp.eq.s32.totalorder %s15, 0
    %p124 = por %p122, %p123
    %p125 = scmp.ne.s32.totalorder %s113, %s114
    %p126 = scmp.eq.s32.totalorder %s16, 1
    %p127 = por %p125, %p126
    %p129 = scmp.ne.s32.totalorder %s114, %s128
    %p130 = scmp.eq.s32.totalorder %s16, 0
    %p131 = por %p129, %p130
    %s132 = ssub.s32 %s17, %s29
    %s133 = ssub.s32 %s18, %s25
    %s134 = sor.u32 %s132, %s133
    %p135 = scmp.eq.s32.totalorder %s134, 0
    %s137 = sadd.s32 %s136, 1
    %s138 = scalar_select %p135, %s136, %s137
    %p141 = pneg %p135
    %p142 = scmp.eq.s32.totalorder %s10, 1
    %p143 = por %p141, %p142
    %p144 = scmp.ne.s32.totalorder %s136, %s139
    %p145 = scmp.eq.s32.totalorder %s10, 0
    %p146 = por %p144, %p145
    %p147 = scmp.ne.s32.totalorder %s136, %s139
    %p148 = scmp.eq.s32.totalorder %s15, 1
    %p149 = por %p147, %p148
    %p150 = scmp.ne.s32.totalorder %s139, %s140
    %p151 = scmp.eq.s32.totalorder %s15, 0
    %p152 = por %p150, %p151
    %p153 = scmp.ne.s32.totalorder %s139, %s140
    %p154 = scmp.eq.s32.totalorder %s16, 1
    %p155 = por %p153, %p154
    %p157 = scmp.ne.s32.totalorder %s140, %s156
    %p158 = scmp.eq.s32.totalorder %s16, 0
    %p159 = por %p157, %p158
    %p160 = scmp.le.s32.totalorder 1, %s10
    %p161 = scmp.lt.s32.totalorder %s10, 3
    %p162 = pnand %p160, %p161
    %p163 = pneg %p162
    // Predicated region
    $region9: #{fc_discriminator.5} parent=5 // pred_check
      _
    $region10: #{fc_discriminator.5} parent=5 // pred_check_branch
      %165 = sbr.rel (%p162) target = $region12
    $region11: #{fc_discriminator.5} parent=5 // pred_region
      %s166 = ssub.s32 %s10, 1
      // Predicated region
      $region13: #{fc_discriminator.5} parent=11 // pred_check
        %p167 = pneg %p103
      $region14: #{fc_discriminator.5} parent=11 // pred_check_branch
        %169 = sbr.rel (%p167) target = $region16
      $region15: #{fc_discriminator.5} parent=11 // pred_region
        _
      $region16: #{fc_discriminator.5} parent=11 // pred_fallthru
        _
      // Predicated region
      $region17: #{fc_discriminator.5} parent=11 // pred_check
        %p170 = pneg %p124
      $region18: #{fc_discriminator.5} parent=11 // pred_check_branch
        %172 = sbr.rel (%p170) target = $region20
      $region19: #{fc_discriminator.5} parent=11 // pred_region
        _
      $region20: #{fc_discriminator.5} parent=11 // pred_fallthru
        _
    $region12: #{fc_discriminator.5} parent=5 // pred_fallthru
      _
    %p173 = scmp.lt.s32.totalorder %s10, 2
    // Predicated region
    $region21: #{fc_discriminator.5} parent=5 // pred_check
      %p174 = pneg %p173
    $region22: #{fc_discriminator.5} parent=5 // pred_check_branch
      %176 = sbr.rel (%p174) target = $region24
    $region23: #{fc_discriminator.5} parent=5 // pred_region
      // Predicated region
      $region25: #{fc_discriminator.5} parent=23 // pred_check
        %p177 = pneg %p44
      $region26: #{fc_discriminator.5} parent=23 // pred_check_branch
        %179 = sbr.rel (%p177) target = $region28
      $region27: #{fc_discriminator.5} parent=23 // pred_region
        %s180 = smul.u32 16, %s18
        %s181 = ssub.s32 17, %s180
        %p182 = scmp.lt.s32.totalorder %s181, 16
        %s183 = scalar_select %p182, %s181, 16
        %s184 = smul.u32 64, %s183
        %s185 = smul.u32 %s184, 3
        %p186 = scmp.lt.s32.totalorder %s17, 1
        %s187 = scalar_select %p186, %s17, 1
        %p188 = scmp.lt.s32.totalorder %s180, 16
        %s189 = scalar_select %p188, %s180, 16
        %s190 = smul.addr %s189, 3
        %s191 = smul.addr %s187, 51
        %s192 = sadd.s32 %s190, %s191
        %s193 = smul.addr %s192, 4
        %s194 = scalar_lea.vmem %s0, %s193
        %s195 = smul.u32 16, %s18
        %s196 = ssub.s32 17, %s195
        %p197 = scmp.lt.s32.totalorder %s196, 16
        %s198 = scalar_select %p197, %s196, 16
        %s199 = smul.u32 64, %s198
        %s200 = smul.u32 %s199, 3
      $region28: #{fc_discriminator.5} parent=23 // pred_fallthru
        _
      // Predicated region
      $region29: #{fc_discriminator.5} parent=23 // pred_check
        %p201 = pneg %p76
      $region30: #{fc_discriminator.5} parent=23 // pred_check_branch
        %203 = sbr.rel (%p201) target = $region32
      $region31: #{fc_discriminator.5} parent=23 // pred_region
        %s204 = sadd.s32 %s18, 1
        %s205 = smul.u32 %s204, 16
        %p206 = scmp.lt.s32.totalorder %s17, 1
        %s207 = scalar_select %p206, %s17, 1
        %p208 = scmp.lt.s32.totalorder %s205, 16
        %s209 = scalar_select %p208, %s205, 16
        %s210 = smul.addr %s209, 3
        %s211 = smul.addr %s207, 51
        %s212 = sadd.s32 %s210, %s211
        %s213 = smul.addr %s212, 4
        %s214 = scalar_lea.vmem %s1, %s213
        %s215 = sadd.s32 %s18, 1
        %s216 = smul.u32 %s215, 16
      $region32: #{fc_discriminator.5} parent=23 // pred_fallthru
        _
    $region24: #{fc_discriminator.5} parent=5 // pred_fallthru
      _
    %p217 = scmp.le.s32.totalorder 1, %s10
    %p218 = scmp.lt.s32.totalorder %s10, 3
    %p219 = pnand %p217, %p218
    %p220 = pneg %p219
    // Predicated region
    $region33: #{fc_discriminator.5} parent=5 // pred_check
      _
    $region34: #{fc_discriminator.5} parent=5 // pred_check_branch
      %222 = sbr.rel (%p219) target = $region36
    $region35: #{fc_discriminator.5} parent=5 // pred_region
      %s223 = ssub.s32 %s10, 1
      %s224 = smul.u32 16, %s20
      %s225 = ssub.s32 17, %s224
      %p226 = scmp.lt.s32.totalorder %s225, 16
      %s227 = scalar_select %p226, %s225, 16
      %s228 = smul.u32 64, %s227
      %s229 = smul.u32 %s228, 3
      %p230 = scmp.lt.s32.totalorder %s19, 1
      %s231 = scalar_select %p230, %s19, 1
      %p232 = scmp.lt.s32.totalorder %s224, 16
      %s233 = scalar_select %p232, %s224, 16
      %s234 = smul.addr %s233, 3
      %s235 = smul.addr %s231, 51
      %s236 = sadd.s32 %s234, %s235
      %s237 = smul.addr %s236, 4
      %s238 = scalar_lea.vmem %s0, %s237
      %p239 = pneg %p50
      %p240 = pneg %p47
      %s241 = sadd.s32 %s20, 1
      %s242 = smul.u32 %s241, 16
      %p243 = scmp.lt.s32.totalorder %s19, 1
      %s244 = scalar_select %p243, %s19, 1
      %p245 = scmp.lt.s32.totalorder %s242, 16
      %s246 = scalar_select %p245, %s242, 16
      %s247 = smul.addr %s246, 3
      %s248 = smul.addr %s244, 51
      %s249 = sadd.s32 %s247, %s248
      %s250 = smul.addr %s249, 4
      %s251 = scalar_lea.vmem %s1, %s250
      %p252 = pneg %p82
      %p253 = pneg %p79
      %p254 = pneg %p103
      %p255 = pneg %p100
      %p256 = pneg %p124
      %p257 = pneg %p121
      %p258 = pneg %p152
      %p259 = pneg %p149
      %s260 = smul.u32 16, %s20
      %p261 = scmp.lt.s32.totalorder %s19, 1
      %s262 = scalar_select %p261, %s19, 1
      %p263 = scmp.lt.s32.totalorder %s260, 15
      %s264 = scalar_select %p263, %s260, 15
      %s265 = smul.addr %s264, 2
      %s266 = smul.addr %s262, 32
      %s267 = sadd.s32 %s265, %s266
      %s268 = smul.addr %s267, 4
      %s269 = scalar_lea.vmem %s4, %s268
      %s270 = smul.u32 16, %s20
      %s271 = ssub.s32 17, %s270
      %p272 = scmp.lt.s32.totalorder %s271, 16
      %s273 = scalar_select %p272, %s271, 16
      %s274 = smul.u32 64, %s273
      %s275 = smul.u32 %s274, 3
      %p276 = scmp.lt.s32.totalorder %s19, 1
      %s277 = scalar_select %p276, %s19, 1
      %p278 = scmp.lt.s32.totalorder %s270, 16
      %s279 = scalar_select %p278, %s270, 16
      %s280 = smul.addr %s279, 3
      %s281 = smul.addr %s277, 51
      %s282 = sadd.s32 %s280, %s281
      %s283 = smul.addr %s282, 4
      %s284 = scalar_lea.vmem %s0, %s283
      %s285 = smul.u32 16, %s20
      %s286 = ssub.s32 17, %s285
      %p287 = scmp.lt.s32.totalorder %s286, 16
      %s288 = scalar_select %p287, %s286, 16
      %s289 = smul.u32 64, %s288
      %s290 = smul.u32 %s289, 3
      %s291 = sadd.s32 %s20, 1
      %s292 = smul.u32 %s291, 16
      %p293 = scmp.lt.s32.totalorder %s19, 1
      %s294 = scalar_select %p293, %s19, 1
      %p295 = scmp.lt.s32.totalorder %s292, 16
      %s296 = scalar_select %p295, %s292, 16
      %s297 = smul.addr %s296, 3
      %s298 = smul.addr %s294, 51
      %s299 = sadd.s32 %s297, %s298
      %s300 = smul.addr %s299, 4
      %s301 = scalar_lea.vmem %s1, %s300
      %s302 = sadd.s32 %s20, 1
      %s303 = smul.u32 %s302, 16
      %s304 = smul.u32 16, %s20
      %p305 = scmp.lt.s32.totalorder %s19, 1
      %s306 = scalar_select %p305, %s19, 1
      %p307 = scmp.lt.s32.totalorder %s304, 15
      %s308 = scalar_select %p307, %s304, 15
      %s309 = smul.addr %s308, 2
      %s310 = smul.addr %s306, 32
      %s311 = sadd.s32 %s309, %s310
      %s312 = smul.addr %s311, 4
      %s313 = scalar_lea.vmem %s4, %s312
      %s314 = smul.u32 16, %s20
      %v316 = vld [vmem:[%s284] sm:$0xf]
      %v317 = vld [vmem:[%s284 + $0x4] sm:$0xf]
      %v318 = vld [vmem:[%s284 + $0x8] sm:$0x1]
      %v319 = vld [vmem:[%s284 + $0xc] sm:$0xf]
      %v320 = vld [vmem:[%s284 + $0x10] sm:$0xf]
      %v321 = vld [vmem:[%s284 + $0x14] sm:$0x1]
      %v322 = vld [vmem:[%s284 + $0x18] sm:$0xf]
      %v323 = vld [vmem:[%s284 + $0x1c] sm:$0xf]
      %v324 = vld [vmem:[%s284 + $0x20] sm:$0x1]
      %v325 = vld [vmem:[%s284 + $0x24] sm:$0xf]
      %v326 = vld [vmem:[%s284 + $0x28] sm:$0xf]
      %v327 = vld [vmem:[%s284 + $0x2c] sm:$0x1]
      %v328 = vld [vmem:[%s284 + $0x30] sm:$0xf]
      %v329 = vld [vmem:[%s284 + $0x34] sm:$0xf]
      %v330 = vld [vmem:[%s284 + $0x38] sm:$0x1]
      %v331 = vld [vmem:[%s284 + $0x3c] sm:$0xf]
      %v332 = vld [vmem:[%s284 + $0x40] sm:$0xf]
      %v333 = vld [vmem:[%s284 + $0x44] sm:$0x1]
      %v334 = vld [vmem:[%s284 + $0x48] sm:$0xf]
      %v335 = vld [vmem:[%s284 + $0x4c] sm:$0xf]
      %v336 = vld [vmem:[%s284 + $0x50] sm:$0x1]
      %v337 = vld [vmem:[%s284 + $0x54] sm:$0xf]
      %v338 = vld [vmem:[%s284 + $0x58] sm:$0xf]
      %v339 = vld [vmem:[%s284 + $0x5c] sm:$0x1]
      %v340 = vld [vmem:[%s284 + $0x60] sm:$0xf]
      %v341 = vld [vmem:[%s284 + $0x64] sm:$0xf]
      %v342 = vld [vmem:[%s284 + $0x68] sm:$0x1]
      %v343 = vld [vmem:[%s284 + $0x6c] sm:$0xf]
      %v344 = vld [vmem:[%s284 + $0x70] sm:$0xf]
      %v345 = vld [vmem:[%s284 + $0x74] sm:$0x1]
      %v346 = vld [vmem:[%s284 + $0x78] sm:$0xf]
      %v347 = vld [vmem:[%s284 + $0x7c] sm:$0xf]
      %v348 = vld [vmem:[%s284 + $0x80] sm:$0x1]
      %v349 = vld [vmem:[%s284 + $0x84] sm:$0xf]
      %v350 = vld [vmem:[%s284 + $0x88] sm:$0xf]
      %v351 = vld [vmem:[%s284 + $0x8c] sm:$0x1]
      %v352 = vld [vmem:[%s284 + $0x90] sm:$0xf]
      %v353 = vld [vmem:[%s284 + $0x94] sm:$0xf]
      %v354 = vld [vmem:[%s284 + $0x98] sm:$0x1]
      %v355 = vld [vmem:[%s284 + $0x9c] sm:$0xf]
      %v356 = vld [vmem:[%s284 + $0xa0] sm:$0xf]
      %v357 = vld [vmem:[%s284 + $0xa4] sm:$0x1]
      %v358 = vld [vmem:[%s284 + $0xa8] sm:$0xf]
      %v359 = vld [vmem:[%s284 + $0xac] sm:$0xf]
      %v360 = vld [vmem:[%s284 + $0xb0] sm:$0x1]
      %v361 = vld [vmem:[%s284 + $0xb4] sm:$0xf]
      %v362 = vld [vmem:[%s284 + $0xb8] sm:$0xf]
      %v363 = vld [vmem:[%s284 + $0xbc] sm:$0x1]
      %vm364 = vcmask 60416
      %365 = vst.msk [vmem:[#allocation2] sm:$0xf] %vm364, %v316
      %366 = vst.msk [vmem:[#allocation2 + $0x4] sm:$0xf] %vm364, %v317
      %vm367 = vcmask 57344
      %vm368 = vsmask.f32 256
      %vm369 = vmand %vm367, %vm368
      %v370 = vld [vmem:[#allocation2 + $0x8] sm:$0x1]
      %v371 = vsel %vm369, %v318, %v370
      %372 = vst [vmem:[#allocation2 + $0x8] sm:$0x1] %v371
      %373 = vst.msk [vmem:[#allocation2 + $0xc] sm:$0xf] %vm364, %v319
      %374 = vst.msk [vmem:[#allocation2 + $0x10] sm:$0xf] %vm364, %v320
      %v375 = vld [vmem:[#allocation2 + $0x14] sm:$0x1]
      %v376 = vsel %vm369, %v321, %v375
      %377 = vst [vmem:[#allocation2 + $0x14] sm:$0x1] %v376
      %378 = vst.msk [vmem:[#allocation2 + $0x18] sm:$0xf] %vm364, %v322
      %379 = vst.msk [vmem:[#allocation2 + $0x1c] sm:$0xf] %vm364, %v323
      %v380 = vld [vmem:[#allocation2 + $0x20] sm:$0x1]
      %v381 = vsel %vm369, %v324, %v380
      %382 = vst [vmem:[#allocation2 + $0x20] sm:$0x1] %v381
      %383 = vst.msk [vmem:[#allocation2 + $0x24] sm:$0xf] %vm364, %v325
      %384 = vst.msk [vmem:[#allocation2 + $0x28] sm:$0xf] %vm364, %v326
      %v385 = vld [vmem:[#allocation2 + $0x2c] sm:$0x1]
      %v386 = vsel %vm369, %v327, %v385
      %387 = vst [vmem:[#allocation2 + $0x2c] sm:$0x1] %v386
      %388 = vst.msk [vmem:[#allocation2 + $0x30] sm:$0xf] %vm364, %v328
      %389 = vst.msk [vmem:[#allocation2 + $0x34] sm:$0xf] %vm364, %v329
      %v390 = vld [vmem:[#allocation2 + $0x38] sm:$0x1]
      %v391 = vsel %vm369, %v330, %v390
      %392 = vst [vmem:[#allocation2 + $0x38] sm:$0x1] %v391
      %393 = vst.msk [vmem:[#allocation2 + $0x3c] sm:$0xf] %vm364, %v331
      %394 = vst.msk [vmem:[#allocation2 + $0x40] sm:$0xf] %vm364, %v332
      %v395 = vld [vmem:[#allocation2 + $0x44] sm:$0x1]
      %v396 = vsel %vm369, %v333, %v395
      %397 = vst [vmem:[#allocation2 + $0x44] sm:$0x1] %v396
      %398 = vst.msk [vmem:[#allocation2 + $0x48] sm:$0xf] %vm364, %v334
      %399 = vst.msk [vmem:[#allocation2 + $0x4c] sm:$0xf] %vm364, %v335
      %v400 = vld [vmem:[#allocation2 + $0x50] sm:$0x1]
      %v401 = vsel %vm369, %v336, %v400
      %402 = vst [vmem:[#allocation2 + $0x50] sm:$0x1] %v401
      %403 = vst.msk [vmem:[#allocation2 + $0x54] sm:$0xf] %vm364, %v337
      %404 = vst.msk [vmem:[#allocation2 + $0x58] sm:$0xf] %vm364, %v338
      %v405 = vld [vmem:[#allocation2 + $0x5c] sm:$0x1]
      %v406 = vsel %vm369, %v339, %v405
      %407 = vst [vmem:[#allocation2 + $0x5c] sm:$0x1] %v406
      %408 = vst.msk [vmem:[#allocation2 + $0x60] sm:$0xf] %vm364, %v340
      %409 = vst.msk [vmem:[#allocation2 + $0x64] sm:$0xf] %vm364, %v341
      %v410 = vld [vmem:[#allocation2 + $0x68] sm:$0x1]
      %v411 = vsel %vm369, %v342, %v410
      %412 = vst [vmem:[#allocation2 + $0x68] sm:$0x1] %v411
      %413 = vst.msk [vmem:[#allocation2 + $0x6c] sm:$0xf] %vm364, %v343
      %414 = vst.msk [vmem:[#allocation2 + $0x70] sm:$0xf] %vm364, %v344
      %v415 = vld [vmem:[#allocation2 + $0x74] sm:$0x1]
      %v416 = vsel %vm369, %v345, %v415
      %417 = vst [vmem:[#allocation2 + $0x74] sm:$0x1] %v416
      %418 = vst.msk [vmem:[#allocation2 + $0x78] sm:$0xf] %vm364, %v346
      %419 = vst.msk [vmem:[#allocation2 + $0x7c] sm:$0xf] %vm364, %v347
      %v420 = vld [vmem:[#allocation2 + $0x80] sm:$0x1]
      %v421 = vsel %vm369, %v348, %v420
      %422 = vst [vmem:[#allocation2 + $0x80] sm:$0x1] %v421
      %423 = vst.msk [vmem:[#allocation2 + $0x84] sm:$0xf] %vm364, %v349
      %424 = vst.msk [vmem:[#allocation2 + $0x88] sm:$0xf] %vm364, %v350
      %v425 = vld [vmem:[#allocation2 + $0x8c] sm:$0x1]
      %v426 = vsel %vm369, %v351, %v425
      %427 = vst [vmem:[#allocation2 + $0x8c] sm:$0x1] %v426
      %428 = vst.msk [vmem:[#allocation2 + $0x90] sm:$0xf] %vm364, %v352
      %429 = vst.msk [vmem:[#allocation2 + $0x94] sm:$0xf] %vm364, %v353
      %v430 = vld [vmem:[#allocation2 + $0x98] sm:$0x1]
      %v431 = vsel %vm369, %v354, %v430
      %432 = vst [vmem:[#allocation2 + $0x98] sm:$0x1] %v431
      %433 = vst.msk [vmem:[#allocation2 + $0x9c] sm:$0xf] %vm364, %v355
      %434 = vst.msk [vmem:[#allocation2 + $0xa0] sm:$0xf] %vm364, %v356
      %v435 = vld [vmem:[#allocation2 + $0xa4] sm:$0x1]
      %v436 = vsel %vm369, %v357, %v435
      %437 = vst [vmem:[#allocation2 + $0xa4] sm:$0x1] %v436
      %438 = vst.msk [vmem:[#allocation2 + $0xa8] sm:$0xf] %vm364, %v358
      %439 = vst.msk [vmem:[#allocation2 + $0xac] sm:$0xf] %vm364, %v359
      %v440 = vld [vmem:[#allocation2 + $0xb0] sm:$0x1]
      %v441 = vsel %vm369, %v360, %v440
      %442 = vst [vmem:[#allocation2 + $0xb0] sm:$0x1] %v441
      %443 = vst.msk [vmem:[#allocation2 + $0xb4] sm:$0xf] %vm364, %v361
      %444 = vst.msk [vmem:[#allocation2 + $0xb8] sm:$0xf] %vm364, %v362
      %v445 = vld [vmem:[#allocation2 + $0xbc] sm:$0x1]
      %v446 = vsel %vm369, %v363, %v445
      %447 = vst [vmem:[#allocation2 + $0xbc] sm:$0x1] %v446
      %v448 = vld [vmem:[%s301] sm:$0xf]
      %v449 = vld [vmem:[%s301 + $0x4] sm:$0xf]
      %v450 = vld [vmem:[%s301 + $0x8] sm:$0x1]
      %s451 = scalar_lea.vmem [#allocation2], 192
      %452 = vst.msk [vmem:[%s451] sm:$0xf] %vm364, %v448
      %453 = vst.msk [vmem:[%s451 + $0x4] sm:$0xf] %vm364, %v449
      %v454 = vld [vmem:[%s451 + $0x8] sm:$0x1]
      %v455 = vsel %vm369, %v450, %v454
      %456 = vst [vmem:[%s451 + $0x8] sm:$0x1] %v455
      %v457 = vld [vmem:[%s3] sm:$0x1]
      %v459 = vlaneseq
      %v460 = vshrl.u32 %v459, 7
      %v461 = vsub.s32 0, %v460
      %v462 = vrot.slane %v457, %v461
      %v464 = vld [vmem:[#allocation2] sm:$0xf]
      %v465 = vld [vmem:[#allocation2 + $0x4] sm:$0xf]
      %v466 = vld [vmem:[#allocation2 + $0xc] sm:$0xf]
      %v467 = vld [vmem:[#allocation2 + $0x10] sm:$0xf]
      %v468 = vld [vmem:[#allocation2 + $0x18] sm:$0xf]
      %v469 = vld [vmem:[#allocation2 + $0x1c] sm:$0xf]
      %v470 = vld [vmem:[#allocation2 + $0x24] sm:$0xf]
      %v471 = vld [vmem:[#allocation2 + $0x28] sm:$0xf]
      %v472 = vld [vmem:[#allocation2 + $0x30] sm:$0xf]
      %v473 = vld [vmem:[#allocation2 + $0x34] sm:$0xf]
      %v474 = vld [vmem:[#allocation2 + $0x3c] sm:$0xf]
      %v475 = vld [vmem:[#allocation2 + $0x40] sm:$0xf]
      %v476 = vld [vmem:[#allocation2 + $0x48] sm:$0xf]
      %v477 = vld [vmem:[#allocation2 + $0x4c] sm:$0xf]
      %v478 = vld [vmem:[#allocation2 + $0x54] sm:$0xf]
      %v479 = vld [vmem:[#allocation2 + $0x58] sm:$0xf]
      %v480 = vld [vmem:[#allocation2 + $0x60] sm:$0xf]
      %v481 = vld [vmem:[#allocation2 + $0x64] sm:$0xf]
      %v482 = vld [vmem:[#allocation2 + $0x6c] sm:$0xf]
      %v483 = vld [vmem:[#allocation2 + $0x70] sm:$0xf]
      %v484 = vld [vmem:[#allocation2 + $0x78] sm:$0xf]
      %v485 = vld [vmem:[#allocation2 + $0x7c] sm:$0xf]
      %v486 = vld [vmem:[#allocation2 + $0x84] sm:$0xf]
      %v487 = vld [vmem:[#allocation2 + $0x88] sm:$0xf]
      %v488 = vld [vmem:[#allocation2 + $0x90] sm:$0xf]
      %v489 = vld [vmem:[#allocation2 + $0x94] sm:$0xf]
      %v490 = vld [vmem:[#allocation2 + $0x9c] sm:$0xf]
      %v491 = vld [vmem:[#allocation2 + $0xa0] sm:$0xf]
      %v492 = vld [vmem:[#allocation2 + $0xa8] sm:$0xf]
      %v493 = vld [vmem:[#allocation2 + $0xac] sm:$0xf]
      %v494 = vld [vmem:[#allocation2 + $0xb4] sm:$0xf]
      %v495 = vld [vmem:[#allocation2 + $0xb8] sm:$0xf]
      %v496 = vld [vmem:[%s2] sm:$0xf]
      %v529 = vunpack.c.l.b16 %v464
      %v530 = vunpack.c.l.b16 %v465
      %v531 = vunpack.c.l.b16 %v466
      %v532 = vunpack.c.l.b16 %v467
      %v533 = vunpack.c.l.b16 %v468
      %v534 = vunpack.c.l.b16 %v469
      %v535 = vunpack.c.l.b16 %v470
      %v536 = vunpack.c.l.b16 %v471
      %v537 = vunpack.c.l.b16 %v472
      %v538 = vunpack.c.l.b16 %v473
      %v539 = vunpack.c.l.b16 %v474
      %v540 = vunpack.c.l.b16 %v475
      %v541 = vunpack.c.l.b16 %v476
      %v542 = vunpack.c.l.b16 %v477
      %v543 = vunpack.c.l.b16 %v478
      %v544 = vunpack.c.l.b16 %v479
      %v545 = vunpack.c.l.b16 %v480
      %v546 = vunpack.c.l.b16 %v481
      %v547 = vunpack.c.l.b16 %v482
      %v548 = vunpack.c.l.b16 %v483
      %v549 = vunpack.c.l.b16 %v484
      %v550 = vunpack.c.l.b16 %v485
      %v551 = vunpack.c.l.b16 %v486
      %v552 = vunpack.c.l.b16 %v487
      %v553 = vunpack.c.l.b16 %v488
      %v554 = vunpack.c.l.b16 %v489
      %v555 = vunpack.c.l.b16 %v490
      %v556 = vunpack.c.l.b16 %v491
      %v557 = vunpack.c.l.b16 %v492
      %v558 = vunpack.c.l.b16 %v493
      %v559 = vunpack.c.l.b16 %v494
      %v560 = vunpack.c.l.b16 %v495
      %v561 = vpack.c.b16 %v530, %v529
      %v562 = vpack.c.b16 %v532, %v531
      %v563 = vpack.c.b16 %v534, %v533
      %v564 = vpack.c.b16 %v536, %v535
      %v565 = vpack.c.b16 %v538, %v537
      %v566 = vpack.c.b16 %v540, %v539
      %v567 = vpack.c.b16 %v542, %v541
      %v568 = vpack.c.b16 %v544, %v543
      %v569 = vpack.c.b16 %v546, %v545
      %v570 = vpack.c.b16 %v548, %v547
      %v571 = vpack.c.b16 %v550, %v549
      %v572 = vpack.c.b16 %v552, %v551
      %v573 = vpack.c.b16 %v554, %v553
      %v574 = vpack.c.b16 %v556, %v555
      %v575 = vpack.c.b16 %v558, %v557
      %v576 = vpack.c.b16 %v560, %v559
      %vm577 = vcmask 64512
      %v579 = vsel %vm577, %v561, 0
      %v582 = vsel %vm577, %v562, 0
      %v585 = vsel %vm577, %v563, 0
      %v588 = vsel %vm577, %v564, 0
      %v591 = vsel %vm577, %v565, 0
      %v594 = vsel %vm577, %v566, 0
      %v597 = vsel %vm577, %v567, 0
      %v600 = vsel %vm577, %v568, 0
      %v603 = vsel %vm577, %v569, 0
      %v606 = vsel %vm577, %v570, 0
      %v609 = vsel %vm577, %v571, 0
      %v612 = vsel %vm577, %v572, 0
      %v615 = vsel %vm577, %v573, 0
      %v618 = vsel %vm577, %v574, 0
      %v621 = vsel %vm577, %v575, 0
      %v624 = vsel %vm577, %v576, 0
      %vm626 = vcmask 1043456
      %v628 = vsel %vm626, %v496, 0
      %630 = vmatprep.subr.bf16.mxu0 0
      %631 = vmatpush1.bf16.msra.mxu0 %v628
      %632 = vmatprep.subr.bf16.mxu0 0
      %633 = vmatpush1.bf16.msra.mxu0 0
      %634 = vmatprep.subr.bf16.mxu0 0
      %635 = vmatpush1.bf16.msra.mxu0 0
      %636 = vmatprep.subr.bf16.mxu0 0
      %637 = vmatpush1.bf16.msra.mxu0 0
      %638 = vmatprep.subr.bf16.mxu0 0
      %639 = vmatpush1.bf16.msra.mxu0 0
      %640 = vmatprep.subr.bf16.mxu0 0
      %641 = vmatpush1.bf16.msra.mxu0 0
      %642 = vmatprep.subr.bf16.mxu0 0
      %643 = vmatpush1.bf16.msra.mxu0 0
      %644 = vmatprep.subr.bf16.mxu0 0
      %645 = vmatpush1.bf16.msra.mxu0 0
      %646 = vmatprep.subr.bf16.mxu0 0
      %647 = vmatpush1.bf16.msra.mxu0 0
      %648 = vmatprep.subr.bf16.mxu0 0
      %649 = vmatpush1.bf16.msra.mxu0 0
      %650 = vmatprep.subr.bf16.mxu0 0
      %651 = vmatpush1.bf16.msra.mxu0 0
      %652 = vmatprep.subr.bf16.mxu0 0
      %653 = vmatpush1.bf16.msra.mxu0 0
      %654 = vmatprep.subr.bf16.mxu0 0
      %655 = vmatpush1.bf16.msra.mxu0 0
      %656 = vmatprep.subr.bf16.mxu0 0
      %657 = vmatpush1.bf16.msra.mxu0 0
      %658 = vmatprep.subr.bf16.mxu0 0
      %659 = vmatpush1.bf16.msra.mxu0 0
      %660 = vmatprep.subr.bf16.mxu0 0
      %661 = vmatpush1.bf16.msra.mxu0 0
      %662 = vmatprep.mubr.bf16.mxu0 0
      %663 = vmatmul.mubr.bf16.gmra.mrb[0].mxu0 %v579
      %v664 = vpop.f32.mrb[0].mxu0
      %v665 = vadd.f32 0.0, %v664
      %v666 = vpop.f32.mrb[0].mxu0
      %v667 = vpop.f32.mrb[0].mxu0
      %v668 = vadd.f32 0.0, %v667
      %v669 = vpop.f32.mrb[0].mxu0
      %670 = vmatprep.mubr.bf16.mxu0 0
      %671 = vmatmul.mubr.bf16.gmra.mrb[0].mxu0 %v582
      %v672 = vpop.f32.mrb[0].mxu0
      %v673 = vadd.f32 0.0, %v672
      %v674 = vpop.f32.mrb[0].mxu0
      %v675 = vpop.f32.mrb[0].mxu0
      %v676 = vadd.f32 0.0, %v675
      %v677 = vpop.f32.mrb[0].mxu0
      %678 = vmatprep.mubr.bf16.mxu0 0
      %679 = vmatmul.mubr.bf16.gmra.mrb[0].mxu0 %v585
      %v680 = vpop.f32.mrb[0].mxu0
      %v681 = vadd.f32 0.0, %v680
      %v682 = vpop.f32.mrb[0].mxu0
      %v683 = vpop.f32.mrb[0].mxu0
      %v684 = vadd.f32 0.0, %v683
      %v685 = vpop.f32.mrb[0].mxu0
      %686 = vmatprep.mubr.bf16.mxu0 0
      %687 = vmatmul.mubr.bf16.gmra.mrb[0].mxu0 %v588
      %v688 = vpop.f32.mrb[0].mxu0
      %v689 = vadd.f32 0.0, %v688
      %v690 = vpop.f32.mrb[0].mxu0
      %v691 = vpop.f32.mrb[0].mxu0
      %v692 = vadd.f32 0.0, %v691
      %v693 = vpop.f32.mrb[0].mxu0
      %694 = vmatprep.mubr.bf16.mxu0 0
      %695 = vmatmul.mubr.bf16.gmra.mrb[0].mxu0 %v591
      %v696 = vpop.f32.mrb[0].mxu0
      %v697 = vadd.f32 0.0, %v696
      %v698 = vpop.f32.mrb[0].mxu0
      %v699 = vpop.f32.mrb[0].mxu0
      %v700 = vadd.f32 0.0, %v699
      %v701 = vpop.f32.mrb[0].mxu0
      %702 = vmatprep.mubr.bf16.mxu0 0
      %703 = vmatmul.mubr.bf16.gmra.mrb[0].mxu0 %v594
      %v704 = vpop.f32.mrb[0].mxu0
      %v705 = vadd.f32 0.0, %v704
      %v706 = vpop.f32.mrb[0].mxu0
      %v707 = vpop.f32.mrb[0].mxu0
      %v708 = vadd.f32 0.0, %v707
      %v709 = vpop.f32.mrb[0].mxu0
      %710 = vmatprep.mubr.bf16.mxu0 0
      %711 = vmatmul.mubr.bf16.gmra.mrb[0].mxu0 %v597
      %v712 = vpop.f32.mrb[0].mxu0
      %v713 = vadd.f32 0.0, %v712
      %v714 = vpop.f32.mrb[0].mxu0
      %v715 = vpop.f32.mrb[0].mxu0
      %v716 = vadd.f32 0.0, %v715
      %v717 = vpop.f32.mrb[0].mxu0
      %718 = vmatprep.mubr.bf16.mxu0 0
      %719 = vmatmul.mubr.bf16.gmra.mrb[0].mxu0 %v600
      %v720 = vpop.f32.mrb[0].mxu0
      %v721 = vadd.f32 0.0, %v720
      %v722 = vpop.f32.mrb[0].mxu0
      %v723 = vpop.f32.mrb[0].mxu0
      %v724 = vadd.f32 0.0, %v723
      %v725 = vpop.f32.mrb[0].mxu0
      %726 = vmatprep.mubr.bf16.mxu0 0
      %727 = vmatmul.mubr.bf16.gmra.mrb[0].mxu0 %v603
      %v728 = vpop.f32.mrb[0].mxu0
      %v729 = vadd.f32 0.0, %v728
      %v730 = vpop.f32.mrb[0].mxu0
      %v731 = vpop.f32.mrb[0].mxu0
      %v732 = vadd.f32 0.0, %v731
      %v733 = vpop.f32.mrb[0].mxu0
      %734 = vmatprep.mubr.bf16.mxu0 0
      %735 = vmatmul.mubr.bf16.gmra.mrb[0].mxu0 %v606
      %v736 = vpop.f32.mrb[0].mxu0
      %v737 = vadd.f32 0.0, %v736
      %v738 = vpop.f32.mrb[0].mxu0
      %v739 = vpop.f32.mrb[0].mxu0
      %v740 = vadd.f32 0.0, %v739
      %v741 = vpop.f32.mrb[0].mxu0
      %742 = vmatprep.mubr.bf16.mxu0 0
      %743 = vmatmul.mubr.bf16.gmra.mrb[0].mxu0 %v609
      %v744 = vpop.f32.mrb[0].mxu0
      %v745 = vadd.f32 0.0, %v744
      %v746 = vpop.f32.mrb[0].mxu0
      %v747 = vpop.f32.mrb[0].mxu0
      %v748 = vadd.f32 0.0, %v747
      %v749 = vpop.f32.mrb[0].mxu0
      %750 = vmatprep.mubr.bf16.mxu0 0
      %751 = vmatmul.mubr.bf16.gmra.mrb[0].mxu0 %v612
      %v752 = vpop.f32.mrb[0].mxu0
      %v753 = vadd.f32 0.0, %v752
      %v754 = vpop.f32.mrb[0].mxu0
      %v755 = vpop.f32.mrb[0].mxu0
      %v756 = vadd.f32 0.0, %v755
      %v757 = vpop.f32.mrb[0].mxu0
      %758 = vmatprep.mubr.bf16.mxu0 0
      %759 = vmatmul.mubr.bf16.gmra.mrb[0].mxu0 %v615
      %v760 = vpop.f32.mrb[0].mxu0
      %v761 = vadd.f32 0.0, %v760
      %v762 = vpop.f32.mrb[0].mxu0
      %v763 = vpop.f32.mrb[0].mxu0
      %v764 = vadd.f32 0.0, %v763
      %v765 = vpop.f32.mrb[0].mxu0
      %766 = vmatprep.mubr.bf16.mxu0 0
      %767 = vmatmul.mubr.bf16.gmra.mrb[0].mxu0 %v618
      %v768 = vpop.f32.mrb[0].mxu0
      %v769 = vadd.f32 0.0, %v768
      %v770 = vpop.f32.mrb[0].mxu0
      %v771 = vpop.f32.mrb[0].mxu0
      %v772 = vadd.f32 0.0, %v771
      %v773 = vpop.f32.mrb[0].mxu0
      %774 = vmatprep.mubr.bf16.mxu0 0
      %775 = vmatmul.mubr.bf16.gmra.mrb[0].mxu0 %v621
      %v776 = vpop.f32.mrb[0].mxu0
      %v777 = vadd.f32 0.0, %v776
      %v778 = vpop.f32.mrb[0].mxu0
      %v779 = vpop.f32.mrb[0].mxu0
      %v780 = vadd.f32 0.0, %v779
      %v781 = vpop.f32.mrb[0].mxu0
      %782 = vmatprep.mubr.bf16.mxu0 0
      %783 = vmatmul.mubr.bf16.gmra.mrb[0].mxu0 %v624
      %v784 = vpop.f32.mrb[0].mxu0
      %v785 = vadd.f32 0.0, %v784
      %v786 = vpop.f32.mrb[0].mxu0
      %v787 = vpop.f32.mrb[0].mxu0
      %v788 = vadd.f32 0.0, %v787
      %v789 = vpop.f32.mrb[0].mxu0
      %790 = vdwg.mxu0
      %v791 = vadd.f32 %v462, %v665
      %v792 = vadd.f32 %v462, %v668
      %v793 = vadd.f32 %v462, %v673
      %v794 = vadd.f32 %v462, %v676
      %v795 = vadd.f32 %v462, %v681
      %v796 = vadd.f32 %v462, %v684
      %v797 = vadd.f32 %v462, %v689
      %v798 = vadd.f32 %v462, %v692
      %v799 = vadd.f32 %v462, %v697
      %v800 = vadd.f32 %v462, %v700
      %v801 = vadd.f32 %v462, %v705
      %v802 = vadd.f32 %v462, %v708
      %v803 = vadd.f32 %v462, %v713
      %v804 = vadd.f32 %v462, %v716
      %v805 = vadd.f32 %v462, %v721
      %v806 = vadd.f32 %v462, %v724
      %v807 = vadd.f32 %v462, %v729
      %v808 = vadd.f32 %v462, %v732
      %v809 = vadd.f32 %v462, %v737
      %v810 = vadd.f32 %v462, %v740
      %v811 = vadd.f32 %v462, %v745
      %v812 = vadd.f32 %v462, %v748
      %v813 = vadd.f32 %v462, %v753
      %v814 = vadd.f32 %v462, %v756
      %v815 = vadd.f32 %v462, %v761
      %v816 = vadd.f32 %v462, %v764
      %v817 = vadd.f32 %v462, %v769
      %v818 = vadd.f32 %v462, %v772
      %v819 = vadd.f32 %v462, %v777
      %v820 = vadd.f32 %v462, %v780
      %v821 = vadd.f32 %v462, %v785
      %v822 = vadd.f32 %v462, %v788
      %v823 = vld [vmem:[#allocation2] sm:$0xf]
      %v824 = vld [vmem:[#allocation2 + $0x4] sm:$0xf]
      %v825 = vld [vmem:[#allocation2 + $0x8] sm:$0x1]
      %v826 = vld [vmem:[#allocation2 + $0xc] sm:$0xf]
      %v827 = vld [vmem:[#allocation2 + $0x10] sm:$0xf]
      %v828 = vld [vmem:[#allocation2 + $0x14] sm:$0x1]
      %v829 = vld [vmem:[#allocation2 + $0x18] sm:$0xf]
      %v830 = vld [vmem:[#allocation2 + $0x1c] sm:$0xf]
      %v831 = vld [vmem:[#allocation2 + $0x20] sm:$0x1]
      %v832 = vld [vmem:[#allocation2 + $0x24] sm:$0xf]
      %v833 = vld [vmem:[#allocation2 + $0x28] sm:$0xf]
      %v834 = vld [vmem:[#allocation2 + $0x2c] sm:$0x1]
      %v835 = vld [vmem:[#allocation2 + $0x30] sm:$0xf]
      %v836 = vld [vmem:[#allocation2 + $0x34] sm:$0xf]
      %v837 = vld [vmem:[#allocation2 + $0x38] sm:$0x1]
      %v838 = vld [vmem:[#allocation2 + $0x3c] sm:$0xf]
      %v839 = vld [vmem:[#allocation2 + $0x40] sm:$0xf]
      %v840 = vld [vmem:[#allocation2 + $0x44] sm:$0x1]
      %v841 = vld [vmem:[#allocation2 + $0x48] sm:$0xf]
      %v842 = vld [vmem:[#allocation2 + $0x4c] sm:$0xf]
      %v843 = vld [vmem:[#allocation2 + $0x50] sm:$0x1]
      %v844 = vld [vmem:[#allocation2 + $0x54] sm:$0xf]
      %v845 = vld [vmem:[#allocation2 + $0x58] sm:$0xf]
      %v846 = vld [vmem:[#allocation2 + $0x5c] sm:$0x1]
      %v847 = vld [vmem:[#allocation2 + $0x60] sm:$0xf]
      %v848 = vld [vmem:[#allocation2 + $0x64] sm:$0xf]
      %v849 = vld [vmem:[#allocation2 + $0x68] sm:$0x1]
      %v850 = vld [vmem:[#allocation2 + $0x6c] sm:$0xf]
      %v851 = vld [vmem:[#allocation2 + $0x70] sm:$0xf]
      %v852 = vld [vmem:[#allocation2 + $0x74] sm:$0x1]
      %v853 = vld [vmem:[#allocation2 + $0x78] sm:$0xf]
      %v854 = vld [vmem:[#allocation2 + $0x7c] sm:$0xf]
      %v855 = vld [vmem:[#allocation2 + $0x80] sm:$0x1]
      %v856 = vld [vmem:[#allocation2 + $0x84] sm:$0xf]
      %v857 = vld [vmem:[#allocation2 + $0x88] sm:$0xf]
      %v858 = vld [vmem:[#allocation2 + $0x8c] sm:$0x1]
      %v859 = vld [vmem:[#allocation2 + $0x90] sm:$0xf]
      %v860 = vld [vmem:[#allocation2 + $0x94] sm:$0xf]
      %v861 = vld [vmem:[#allocation2 + $0x98] sm:$0x1]
      %v862 = vld [vmem:[#allocation2 + $0x9c] sm:$0xf]
      %v863 = vld [vmem:[#allocation2 + $0xa0] sm:$0xf]
      %v864 = vld [vmem:[#allocation2 + $0xa4] sm:$0x1]
      %v865 = vld [vmem:[#allocation2 + $0xa8] sm:$0xf]
      %v866 = vld [vmem:[#allocation2 + $0xac] sm:$0xf]
      %v867 = vld [vmem:[#allocation2 + $0xb0] sm:$0x1]
      %v868 = vld [vmem:[#allocation2 + $0xb4] sm:$0xf]
      %v869 = vld [vmem:[#allocation2 + $0xb8] sm:$0xf]
      %v870 = vld [vmem:[#allocation2 + $0xbc] sm:$0x1]
      %vm871 = vsmask.f32 3328
      %vm872 = vsmask.f32 7440
      %vm873 = vmor %vm871, %vm872
      %v875 = vshrl.u32 %v823, 16
      %v877 = vrot.slane %v875, 4
      %v878 = vshll.u32 %v823, 16
      %v880 = vrot.slane %v878, 5
      %v881 = vor.u32 %v877, %v880
      %v882 = vrot.slane %v881, 4
      %v884 = vshll.u32 %v824, 16
      %v886 = vrot.slane %v884, 5
      %v887 = vsel %vm873, %v882, %v886
      %v888 = vshrl.u32 %v824, 16
      %v890 = vrot.slane %v888, 4
      %v891 = vor.u32 %v890, %v886
      %v892 = vrot.slane %v891, 4
      %v894 = vshll.u32 %v825, 16
      %v896 = vrot.slane %v894, 5
      %v897 = vsel %vm873, %v892, %v896
      %v899 = vshrl.u32 %v826, 16
      %v901 = vrot.slane %v899, 4
      %v902 = vshll.u32 %v826, 16
      %v904 = vrot.slane %v902, 5
      %v905 = vor.u32 %v901, %v904
      %v906 = vrot.slane %v905, 4
      %v908 = vshll.u32 %v827, 16
      %v910 = vrot.slane %v908, 5
      %v911 = vsel %vm873, %v906, %v910
      %v912 = vshrl.u32 %v827, 16
      %v914 = vrot.slane %v912, 4
      %v915 = vor.u32 %v914, %v910
      %v916 = vrot.slane %v915, 4
      %v918 = vshll.u32 %v828, 16
      %v920 = vrot.slane %v918, 5
      %v921 = vsel %vm873, %v916, %v920
      %v923 = vshrl.u32 %v829, 16
      %v925 = vrot.slane %v923, 4
      %v926 = vshll.u32 %v829, 16
      %v928 = vrot.slane %v926, 5
      %v929 = vor.u32 %v925, %v928
      %v930 = vrot.slane %v929, 4
      %v932 = vshll.u32 %v830, 16
      %v934 = vrot.slane %v932, 5
      %v935 = vsel %vm873, %v930, %v934
      %v936 = vshrl.u32 %v830, 16
      %v938 = vrot.slane %v936, 4
      %v939 = vor.u32 %v938, %v934
      %v940 = vrot.slane %v939, 4
      %v942 = vshll.u32 %v831, 16
      %v944 = vrot.slane %v942, 5
      %v945 = vsel %vm873, %v940, %v944
      %v947 = vshrl.u32 %v832, 16
      %v949 = vrot.slane %v947, 4
      %v950 = vshll.u32 %v832, 16
      %v952 = vrot.slane %v950, 5
      %v953 = vor.u32 %v949, %v952
      %v954 = vrot.slane %v953, 4
      %v956 = vshll.u32 %v833, 16
      %v958 = vrot.slane %v956, 5
      %v959 = vsel %vm873, %v954, %v958
      %v960 = vshrl.u32 %v833, 16
      %v962 = vrot.slane %v960, 4
      %v963 = vor.u32 %v962, %v958
      %v964 = vrot.slane %v963, 4
      %v966 = vshll.u32 %v834, 16
      %v968 = vrot.slane %v966, 5
      %v969 = vsel %vm873, %v964, %v968
      %v971 = vshrl.u32 %v835, 16
      %v973 = vrot.slane %v971, 4
      %v974 = vshll.u32 %v835, 16
      %v976 = vrot.slane %v974, 5
      %v977 = vor.u32 %v973, %v976
      %v978 = vrot.slane %v977, 4
      %v980 = vshll.u32 %v836, 16
      %v982 = vrot.slane %v980, 5
      %v983 = vsel %vm873, %v978, %v982
      %v984 = vshrl.u32 %v836, 16
      %v986 = vrot.slane %v984, 4
      %v987 = vor.u32 %v986, %v982
      %v988 = vrot.slane %v987, 4
      %v990 = vshll.u32 %v837, 16
      %v992 = vrot.slane %v990, 5
      %v993 = vsel %vm873, %v988, %v992
      %v995 = vshrl.u32 %v838, 16
      %v997 = vrot.slane %v995, 4
      %v998 = vshll.u32 %v838, 16
      %v1000 = vrot.slane %v998, 5
      %v1001 = vor.u32 %v997, %v1000
      %v1002 = vrot.slane %v1001, 4
      %v1004 = vshll.u32 %v839, 16
      %v1006 = vrot.slane %v1004, 5
      %v1007 = vsel %vm873, %v1002, %v1006
      %v1008 = vshrl.u32 %v839, 16
      %v1010 = vrot.slane %v1008, 4
      %v1011 = vor.u32 %v1010, %v1006
      %v1012 = vrot.slane %v1011, 4
      %v1014 = vshll.u32 %v840, 16
      %v1016 = vrot.slane %v1014, 5
      %v1017 = vsel %vm873, %v1012, %v1016
      %v1019 = vshrl.u32 %v841, 16
      %v1021 = vrot.slane %v1019, 4
      %v1022 = vshll.u32 %v841, 16
      %v1024 = vrot.slane %v1022, 5
      %v1025 = vor.u32 %v1021, %v1024
      %v1026 = vrot.slane %v1025, 4
      %v1028 = vshll.u32 %v842, 16
      %v1030 = vrot.slane %v1028, 5
      %v1031 = vsel %vm873, %v1026, %v1030
      %v1032 = vshrl.u32 %v842, 16
      %v1034 = vrot.slane %v1032, 4
      %v1035 = vor.u32 %v1034, %v1030
      %v1036 = vrot.slane %v1035, 4
      %v1038 = vshll.u32 %v843, 16
      %v1040 = vrot.slane %v1038, 5
      %v1041 = vsel %vm873, %v1036, %v1040
      %v1043 = vshrl.u32 %v844, 16
      %v1045 = vrot.slane %v1043, 4
      %v1046 = vshll.u32 %v844, 16
      %v1048 = vrot.slane %v1046, 5
      %v1049 = vor.u32 %v1045, %v1048
      %v1050 = vrot.slane %v1049, 4
      %v1052 = vshll.u32 %v845, 16
      %v1054 = vrot.slane %v1052, 5
      %v1055 = vsel %vm873, %v1050, %v1054
      %v1056 = vshrl.u32 %v845, 16
      %v1058 = vrot.slane %v1056, 4
      %v1059 = vor.u32 %v1058, %v1054
      %v1060 = vrot.slane %v1059, 4
      %v1062 = vshll.u32 %v846, 16
      %v1064 = vrot.slane %v1062, 5
      %v1065 = vsel %vm873, %v1060, %v1064
      %v1067 = vshrl.u32 %v847, 16
      %v1069 = vrot.slane %v1067, 4
      %v1070 = vshll.u32 %v847, 16
      %v1072 = vrot.slane %v1070, 5
      %v1073 = vor.u32 %v1069, %v1072
      %v1074 = vrot.slane %v1073, 4
      %v1076 = vshll.u32 %v848, 16
      %v1078 = vrot.slane %v1076, 5
      %v1079 = vsel %vm873, %v1074, %v1078
      %v1080 = vshrl.u32 %v848, 16
      %v1082 = vrot.slane %v1080, 4
      %v1083 = vor.u32 %v1082, %v1078
      %v1084 = vrot.slane %v1083, 4
      %v1086 = vshll.u32 %v849, 16
      %v1088 = vrot.slane %v1086, 5
      %v1089 = vsel %vm873, %v1084, %v1088
      %v1091 = vshrl.u32 %v850, 16
      %v1093 = vrot.slane %v1091, 4
      %v1094 = vshll.u32 %v850, 16
      %v1096 = vrot.slane %v1094, 5
      %v1097 = vor.u32 %v1093, %v1096
      %v1098 = vrot.slane %v1097, 4
      %v1100 = vshll.u32 %v851, 16
      %v1102 = vrot.slane %v1100, 5
      %v1103 = vsel %vm873, %v1098, %v1102
      %v1104 = vshrl.u32 %v851, 16
      %v1106 = vrot.slane %v1104, 4
      %v1107 = vor.u32 %v1106, %v1102
      %v1108 = vrot.slane %v1107, 4
      %v1110 = vshll.u32 %v852, 16
      %v1112 = vrot.slane %v1110, 5
      %v1113 = vsel %vm873, %v1108, %v1112
      %v1115 = vshrl.u32 %v853, 16
      %v1117 = vrot.slane %v1115, 4
      %v1118 = vshll.u32 %v853, 16
      %v1120 = vrot.slane %v1118, 5
      %v1121 = vor.u32 %v1117, %v1120
      %v1122 = vrot.slane %v1121, 4
      %v1124 = vshll.u32 %v854, 16
      %v1126 = vrot.slane %v1124, 5
      %v1127 = vsel %vm873, %v1122, %v1126
      %v1128 = vshrl.u32 %v854, 16
      %v1130 = vrot.slane %v1128, 4
      %v1131 = vor.u32 %v1130, %v1126
      %v1132 = vrot.slane %v1131, 4
      %v1134 = vshll.u32 %v855, 16
      %v1136 = vrot.slane %v1134, 5
      %v1137 = vsel %vm873, %v1132, %v1136
      %v1139 = vshrl.u32 %v856, 16
      %v1141 = vrot.slane %v1139, 4
      %v1142 = vshll.u32 %v856, 16
      %v1144 = vrot.slane %v1142, 5
      %v1145 = vor.u32 %v1141, %v1144
      %v1146 = vrot.slane %v1145, 4
      %v1148 = vshll.u32 %v857, 16
      %v1150 = vrot.slane %v1148, 5
      %v1151 = vsel %vm873, %v1146, %v1150
      %v1152 = vshrl.u32 %v857, 16
      %v1154 = vrot.slane %v1152, 4
      %v1155 = vor.u32 %v1154, %v1150
      %v1156 = vrot.slane %v1155, 4
      %v1158 = vshll.u32 %v858, 16
      %v1160 = vrot.slane %v1158, 5
      %v1161 = vsel %vm873, %v1156, %v1160
      %v1163 = vshrl.u32 %v859, 16
      %v1165 = vrot.slane %v1163, 4
      %v1166 = vshll.u32 %v859, 16
      %v1168 = vrot.slane %v1166, 5
      %v1169 = vor.u32 %v1165, %v1168
      %v1170 = vrot.slane %v1169, 4
      %v1172 = vshll.u32 %v860, 16
      %v1174 = vrot.slane %v1172, 5
      %v1175 = vsel %vm873, %v1170, %v1174
      %v1176 = vshrl.u32 %v860, 16
      %v1178 = vrot.slane %v1176, 4
      %v1179 = vor.u32 %v1178, %v1174
      %v1180 = vrot.slane %v1179, 4
      %v1182 = vshll.u32 %v861, 16
      %v1184 = vrot.slane %v1182, 5
      %v1185 = vsel %vm873, %v1180, %v1184
      %v1187 = vshrl.u32 %v862, 16
      %v1189 = vrot.slane %v1187, 4
      %v1190 = vshll.u32 %v862, 16
      %v1192 = vrot.slane %v1190, 5
      %v1193 = vor.u32 %v1189, %v1192
      %v1194 = vrot.slane %v1193, 4
      %v1196 = vshll.u32 %v863, 16
      %v1198 = vrot.slane %v1196, 5
      %v1199 = vsel %vm873, %v1194, %v1198
      %v1200 = vshrl.u32 %v863, 16
      %v1202 = vrot.slane %v1200, 4
      %v1203 = vor.u32 %v1202, %v1198
      %v1204 = vrot.slane %v1203, 4
      %v1206 = vshll.u32 %v864, 16
      %v1208 = vrot.slane %v1206, 5
      %v1209 = vsel %vm873, %v1204, %v1208
      %v1211 = vshrl.u32 %v865, 16
      %v1213 = vrot.slane %v1211, 4
      %v1214 = vshll.u32 %v865, 16
      %v1216 = vrot.slane %v1214, 5
      %v1217 = vor.u32 %v1213, %v1216
      %v1218 = vrot.slane %v1217, 4
      %v1220 = vshll.u32 %v866, 16
      %v1222 = vrot.slane %v1220, 5
      %v1223 = vsel %vm873, %v1218, %v1222
      %v1224 = vshrl.u32 %v866, 16
      %v1226 = vrot.slane %v1224, 4
      %v1227 = vor.u32 %v1226, %v1222
      %v1228 = vrot.slane %v1227, 4
      %v1230 = vshll.u32 %v867, 16
      %v1232 = vrot.slane %v1230, 5
      %v1233 = vsel %vm873, %v1228, %v1232
      %v1235 = vshrl.u32 %v868, 16
      %v1237 = vrot.slane %v1235, 4
      %v1238 = vshll.u32 %v868, 16
      %v1240 = vrot.slane %v1238, 5
      %v1241 = vor.u32 %v1237, %v1240
      %v1242 = vrot.slane %v1241, 4
      %v1244 = vshll.u32 %v869, 16
      %v1246 = vrot.slane %v1244, 5
      %v1247 = vsel %vm873, %v1242, %v1246
      %v1248 = vshrl.u32 %v869, 16
      %v1250 = vrot.slane %v1248, 4
      %v1251 = vor.u32 %v1250, %v1246
      %v1252 = vrot.slane %v1251, 4
      %v1254 = vshll.u32 %v870, 16
      %v1256 = vrot.slane %v1254, 5
      %v1257 = vsel %vm873, %v1252, %v1256
      %s1258 = scalar_lea.vmem %s2, 4
      %v1259 = vld [vmem:[%s1258] sm:$0xf]
      %v1260 = vunpack.c.l.b16 %v887
      %v1261 = vunpack.c.l.b16 %v897
      %v1262 = vunpack.c.l.b16 %v911
      %v1263 = vunpack.c.l.b16 %v921
      %v1264 = vunpack.c.l.b16 %v935
      %v1265 = vunpack.c.l.b16 %v945
      %v1266 = vunpack.c.l.b16 %v959
      %v1267 = vunpack.c.l.b16 %v969
      %v1268 = vunpack.c.l.b16 %v983
      %v1269 = vunpack.c.l.b16 %v993
      %v1270 = vunpack.c.l.b16 %v1007
      %v1271 = vunpack.c.l.b16 %v1017
      %v1272 = vunpack.c.l.b16 %v1031
      %v1273 = vunpack.c.l.b16 %v1041
      %v1274 = vunpack.c.l.b16 %v1055
      %v1275 = vunpack.c.l.b16 %v1065
      %v1276 = vunpack.c.l.b16 %v1079
      %v1277 = vunpack.c.l.b16 %v1089
      %v1278 = vunpack.c.l.b16 %v1103
      %v1279 = vunpack.c.l.b16 %v1113
      %v1280 = vunpack.c.l.b16 %v1127
      %v1281 = vunpack.c.l.b16 %v1137
      %v1282 = vunpack.c.l.b16 %v1151
      %v1283 = vunpack.c.l.b16 %v1161
      %v1284 = vunpack.c.l.b16 %v1175
      %v1285 = vunpack.c.l.b16 %v1185
      %v1286 = vunpack.c.l.b16 %v1199
      %v1287 = vunpack.c.l.b16 %v1209
      %v1288 = vunpack.c.l.b16 %v1223
      %v1289 = vunpack.c.l.b16 %v1233
      %v1290 = vunpack.c.l.b16 %v1247
      %v1291 = vunpack.c.l.b16 %v1257
      %v1292 = vpack.c.b16 %v1261, %v1260
      %v1293 = vpack.c.b16 %v1263, %v1262
      %v1294 = vpack.c.b16 %v1265, %v1264
      %v1295 = vpack.c.b16 %v1267, %v1266
      %v1296 = vpack.c.b16 %v1269, %v1268
      %v1297 = vpack.c.b16 %v1271, %v1270
      %v1298 = vpack.c.b16 %v1273, %v1272
      %v1299 = vpack.c.b16 %v1275, %v1274
      %v1300 = vpack.c.b16 %v1277, %v1276
      %v1301 = vpack.c.b16 %v1279, %v1278
      %v1302 = vpack.c.b16 %v1281, %v1280
      %v1303 = vpack.c.b16 %v1283, %v1282
      %v1304 = vpack.c.b16 %v1285, %v1284
      %v1305 = vpack.c.b16 %v1287, %v1286
      %v1306 = vpack.c.b16 %v1289, %v1288
      %v1307 = vpack.c.b16 %v1291, %v1290
      %v1309 = vsel %vm577, %v1292, 0
      %v1312 = vsel %vm577, %v1293, 0
      %v1315 = vsel %vm577, %v1294, 0
      %v1318 = vsel %vm577, %v1295, 0
      %v1321 = vsel %vm577, %v1296, 0
      %v1324 = vsel %vm577, %v1297, 0
      %v1327 = vsel %vm577, %v1298, 0
      %v1330 = vsel %vm577, %v1299, 0
      %v1333 = vsel %vm577, %v1300, 0
      %v1336 = vsel %vm577, %v1301, 0
      %v1339 = vsel %vm577, %v1302, 0
      %v1342 = vsel %vm577, %v1303, 0
      %v1345 = vsel %vm577, %v1304, 0
      %v1348 = vsel %vm577, %v1305, 0
      %v1351 = vsel %vm577, %v1306, 0
      %v1354 = vsel %vm577, %v1307, 0
      %v1357 = vsel %vm626, %v1259, 0
      %1359 = vmatprep.subr.bf16.mxu0 0
      %1360 = vmatpush1.bf16.msra.mxu0 %v1357
      %1361 = vmatprep.subr.bf16.mxu0 0
      %1362 = vmatpush1.bf16.msra.mxu0 0
      %1363 = vmatprep.subr.bf16.mxu0 0
      %1364 = vmatpush1.bf16.msra.mxu0 0
      %1365 = vmatprep.subr.bf16.mxu0 0
      %1366 = vmatpush1.bf16.msra.mxu0 0
      %1367 = vmatprep.subr.bf16.mxu0 0
      %1368 = vmatpush1.bf16.msra.mxu0 0
      %1369 = vmatprep.subr.bf16.mxu0 0
      %1370 = vmatpush1.bf16.msra.mxu0 0
      %1371 = vmatprep.subr.bf16.mxu0 0
      %1372 = vmatpush1.bf16.msra.mxu0 0
      %1373 = vmatprep.subr.bf16.mxu0 0
      %1374 = vmatpush1.bf16.msra.mxu0 0
      %1375 = vmatprep.subr.bf16.mxu0 0
      %1376 = vmatpush1.bf16.msra.mxu0 0
      %1377 = vmatprep.subr.bf16.mxu0 0
      %1378 = vmatpush1.bf16.msra.mxu0 0
      %1379 = vmatprep.subr.bf16.mxu0 0
      %1380 = vmatpush1.bf16.msra.mxu0 0
      %1381 = vmatprep.subr.bf16.mxu0 0
      %1382 = vmatpush1.bf16.msra.mxu0 0
      %1383 = vmatprep.subr.bf16.mxu0 0
      %1384 = vmatpush1.bf16.msra.mxu0 0
      %1385 = vmatprep.subr.bf16.mxu0 0
      %1386 = vmatpush1.bf16.msra.mxu0 0
      %1387 = vmatprep.subr.bf16.mxu0 0
      %1388 = vmatpush1.bf16.msra.mxu0 0
      %1389 = vmatprep.subr.bf16.mxu0 0
      %1390 = vmatpush1.bf16.msra.mxu0 0
      %1391 = vmatprep.mubr.bf16.mxu0 0
      %1392 = vmatmul.mubr.bf16.gmra.mrb[0].mxu0 %v1309
      %v1393 = vpop.f32.mrb[0].mxu0
      %v1394 = vadd.f32 0.0, %v1393
      %v1395 = vpop.f32.mrb[0].mxu0
      %v1396 = vpop.f32.mrb[0].mxu0
      %v1397 = vadd.f32 0.0, %v1396
      %v1398 = vpop.f32.mrb[0].mxu0
      %1399 = vmatprep.mubr.bf16.mxu0 0
      %1400 = vmatmul.mubr.bf16.gmra.mrb[0].mxu0 %v1312
      %v1401 = vpop.f32.mrb[0].mxu0
      %v1402 = vadd.f32 0.0, %v1401
      %v1403 = vpop.f32.mrb[0].mxu0
      %v1404 = vpop.f32.mrb[0].mxu0
      %v1405 = vadd.f32 0.0, %v1404
      %v1406 = vpop.f32.mrb[0].mxu0
      %1407 = vmatprep.mubr.bf16.mxu0 0
      %1408 = vmatmul.mubr.bf16.gmra.mrb[0].mxu0 %v1315
      %v1409 = vpop.f32.mrb[0].mxu0
      %v1410 = vadd.f32 0.0, %v1409
      %v1411 = vpop.f32.mrb[0].mxu0
      %v1412 = vpop.f32.mrb[0].mxu0
      %v1413 = vadd.f32 0.0, %v1412
      %v1414 = vpop.f32.mrb[0].mxu0
      %1415 = vmatprep.mubr.bf16.mxu0 0
      %1416 = vmatmul.mubr.bf16.gmra.mrb[0].mxu0 %v1318
      %v1417 = vpop.f32.mrb[0].mxu0
      %v1418 = vadd.f32 0.0, %v1417
      %v1419 = vpop.f32.mrb[0].mxu0
      %v1420 = vpop.f32.mrb[0].mxu0
      %v1421 = vadd.f32 0.0, %v1420
      %v1422 = vpop.f32.mrb[0].mxu0
      %1423 = vmatprep.mubr.bf16.mxu0 0
      %1424 = vmatmul.mubr.bf16.gmra.mrb[0].mxu0 %v1321
      %v1425 = vpop.f32.mrb[0].mxu0
      %v1426 = vadd.f32 0.0, %v1425
      %v1427 = vpop.f32.mrb[0].mxu0
      %v1428 = vpop.f32.mrb[0].mxu0
      %v1429 = vadd.f32 0.0, %v1428
      %v1430 = vpop.f32.mrb[0].mxu0
      %1431 = vmatprep.mubr.bf16.mxu0 0
      %1432 = vmatmul.mubr.bf16.gmra.mrb[0].mxu0 %v1324
      %v1433 = vpop.f32.mrb[0].mxu0
      %v1434 = vadd.f32 0.0, %v1433
      %v1435 = vpop.f32.mrb[0].mxu0
      %v1436 = vpop.f32.mrb[0].mxu0
      %v1437 = vadd.f32 0.0, %v1436
      %v1438 = vpop.f32.mrb[0].mxu0
      %1439 = vmatprep.mubr.bf16.mxu0 0
      %1440 = vmatmul.mubr.bf16.gmra.mrb[0].mxu0 %v1327
      %v1441 = vpop.f32.mrb[0].mxu0
      %v1442 = vadd.f32 0.0, %v1441
      %v1443 = vpop.f32.mrb[0].mxu0
      %v1444 = vpop.f32.mrb[0].mxu0
      %v1445 = vadd.f32 0.0, %v1444
      %v1446 = vpop.f32.mrb[0].mxu0
      %1447 = vmatprep.mubr.bf16.mxu0 0
      %1448 = vmatmul.mubr.bf16.gmra.mrb[0].mxu0 %v1330
      %v1449 = vpop.f32.mrb[0].mxu0
      %v1450 = vadd.f32 0.0, %v1449
      %v1451 = vpop.f32.mrb[0].mxu0
      %v1452 = vpop.f32.mrb[0].mxu0
      %v1453 = vadd.f32 0.0, %v1452
      %v1454 = vpop.f32.mrb[0].mxu0
      %1455 = vmatprep.mubr.bf16.mxu0 0
      %1456 = vmatmul.mubr.bf16.gmra.mrb[0].mxu0 %v1333
      %v1457 = vpop.f32.mrb[0].mxu0
      %v1458 = vadd.f32 0.0, %v1457
      %v1459 = vpop.f32.mrb[0].mxu0
      %v1460 = vpop.f32.mrb[0].mxu0
      %v1461 = vadd.f32 0.0, %v1460
      %v1462 = vpop.f32.mrb[0].mxu0
      %1463 = vmatprep.mubr.bf16.mxu0 0
      %1464 = vmatmul.mubr.bf16.gmra.mrb[0].mxu0 %v1336
      %v1465 = vpop.f32.mrb[0].mxu0
      %v1466 = vadd.f32 0.0, %v1465
      %v1467 = vpop.f32.mrb[0].mxu0
      %v1468 = vpop.f32.mrb[0].mxu0
      %v1469 = vadd.f32 0.0, %v1468
      %v1470 = vpop.f32.mrb[0].mxu0
      %1471 = vmatprep.mubr.bf16.mxu0 0
      %1472 = vmatmul.mubr.bf16.gmra.mrb[0].mxu0 %v1339
      %v1473 = vpop.f32.mrb[0].mxu0
      %v1474 = vadd.f32 0.0, %v1473
      %v1475 = vpop.f32.mrb[0].mxu0
      %v1476 = vpop.f32.mrb[0].mxu0
      %v1477 = vadd.f32 0.0, %v1476
      %v1478 = vpop.f32.mrb[0].mxu0
      %1479 = vmatprep.mubr.bf16.mxu0 0
      %1480 = vmatmul.mubr.bf16.gmra.mrb[0].mxu0 %v1342
      %v1481 = vpop.f32.mrb[0].mxu0
      %v1482 = vadd.f32 0.0, %v1481
      %v1483 = vpop.f32.mrb[0].mxu0
      %v1484 = vpop.f32.mrb[0].mxu0
      %v1485 = vadd.f32 0.0, %v1484
      %v1486 = vpop.f32.mrb[0].mxu0
      %1487 = vmatprep.mubr.bf16.mxu0 0
      %1488 = vmatmul.mubr.bf16.gmra.mrb[0].mxu0 %v1345
      %v1489 = vpop.f32.mrb[0].mxu0
      %v1490 = vadd.f32 0.0, %v1489
      %v1491 = vpop.f32.mrb[0].mxu0
      %v1492 = vpop.f32.mrb[0].mxu0
      %v1493 = vadd.f32 0.0, %v1492
      %v1494 = vpop.f32.mrb[0].mxu0
      %1495 = vmatprep.mubr.bf16.mxu0 0
      %1496 = vmatmul.mubr.bf16.gmra.mrb[0].mxu0 %v1348
      %v1497 = vpop.f32.mrb[0].mxu0
      %v1498 = vadd.f32 0.0, %v1497
      %v1499 = vpop.f32.mrb[0].mxu0
      %v1500 = vpop.f32.mrb[0].mxu0
      %v1501 = vadd.f32 0.0, %v1500
      %v1502 = vpop.f32.mrb[0].mxu0
      %1503 = vmatprep.mubr.bf16.mxu0 0
      %1504 = vmatmul.mubr.bf16.gmra.mrb[0].mxu0 %v1351
      %v1505 = vpop.f32.mrb[0].mxu0
      %v1506 = vadd.f32 0.0, %v1505
      %v1507 = vpop.f32.mrb[0].mxu0
      %v1508 = vpop.f32.mrb[0].mxu0
      %v1509 = vadd.f32 0.0, %v1508
      %v1510 = vpop.f32.mrb[0].mxu0
      %1511 = vmatprep.mubr.bf16.mxu0 0
      %1512 = vmatmul.mubr.bf16.gmra.mrb[0].mxu0 %v1354
      %v1513 = vpop.f32.mrb[0].mxu0
      %v1514 = vadd.f32 0.0, %v1513
      %v1515 = vpop.f32.mrb[0].mxu0
      %v1516 = vpop.f32.mrb[0].mxu0
      %v1517 = vadd.f32 0.0, %v1516
      %v1518 = vpop.f32.mrb[0].mxu0
      %1519 = vdwg.mxu0
      %v1520 = vadd.f32 %v791, %v1394
      %v1521 = vadd.f32 %v792, %v1397
      %v1522 = vadd.f32 %v793, %v1402
      %v1523 = vadd.f32 %v794, %v1405
      %v1524 = vadd.f32 %v795, %v1410
      %v1525 = vadd.f32 %v796, %v1413
      %v1526 = vadd.f32 %v797, %v1418
      %v1527 = vadd.f32 %v798, %v1421
      %v1528 = vadd.f32 %v799, %v1426
      %v1529 = vadd.f32 %v800, %v1429
      %v1530 = vadd.f32 %v801, %v1434
      %v1531 = vadd.f32 %v802, %v1437
      %v1532 = vadd.f32 %v803, %v1442
      %v1533 = vadd.f32 %v804, %v1445
      %v1534 = vadd.f32 %v805, %v1450
      %v1535 = vadd.f32 %v806, %v1453
      %v1536 = vadd.f32 %v807, %v1458
      %v1537 = vadd.f32 %v808, %v1461
      %v1538 = vadd.f32 %v809, %v1466
      %v1539 = vadd.f32 %v810, %v1469
      %v1540 = vadd.f32 %v811, %v1474
      %v1541 = vadd.f32 %v812, %v1477
      %v1542 = vadd.f32 %v813, %v1482
      %v1543 = vadd.f32 %v814, %v1485
      %v1544 = vadd.f32 %v815, %v1490
      %v1545 = vadd.f32 %v816, %v1493
      %v1546 = vadd.f32 %v817, %v1498
      %v1547 = vadd.f32 %v818, %v1501
      %v1548 = vadd.f32 %v819, %v1506
      %v1549 = vadd.f32 %v820, %v1509
      %v1550 = vadd.f32 %v821, %v1514
      %v1551 = vadd.f32 %v822, %v1517
      %s1552 = scalar_lea.vmem [#allocation2], 12
      %v1553 = vld [vmem:[%s1552] sm:$0xf]
      %v1554 = vld [vmem:[%s1552 + $0x4] sm:$0xf]
      %v1555 = vld [vmem:[%s1552 + $0xc] sm:$0xf]
      %v1556 = vld [vmem:[%s1552 + $0x10] sm:$0xf]
      %v1557 = vld [vmem:[%s1552 + $0x18] sm:$0xf]
      %v1558 = vld [vmem:[%s1552 + $0x1c] sm:$0xf]
      %v1559 = vld [vmem:[%s1552 + $0x24] sm:$0xf]
      %v1560 = vld [vmem:[%s1552 + $0x28] sm:$0xf]
      %v1561 = vld [vmem:[%s1552 + $0x30] sm:$0xf]
      %v1562 = vld [vmem:[%s1552 + $0x34] sm:$0xf]
      %v1563 = vld [vmem:[%s1552 + $0x3c] sm:$0xf]
      %v1564 = vld [vmem:[%s1552 + $0x40] sm:$0xf]
      %v1565 = vld [vmem:[%s1552 + $0x48] sm:$0xf]
      %v1566 = vld [vmem:[%s1552 + $0x4c] sm:$0xf]
      %v1567 = vld [vmem:[%s1552 + $0x54] sm:$0xf]
      %v1568 = vld [vmem:[%s1552 + $0x58] sm:$0xf]
      %v1569 = vld [vmem:[%s1552 + $0x60] sm:$0xf]
      %v1570 = vld [vmem:[%s1552 + $0x64] sm:$0xf]
      %v1571 = vld [vmem:[%s1552 + $0x6c] sm:$0xf]
      %v1572 = vld [vmem:[%s1552 + $0x70] sm:$0xf]
      %v1573 = vld [vmem:[%s1552 + $0x78] sm:$0xf]
      %v1574 = vld [vmem:[%s1552 + $0x7c] sm:$0xf]
      %v1575 = vld [vmem:[%s1552 + $0x84] sm:$0xf]
      %v1576 = vld [vmem:[%s1552 + $0x88] sm:$0xf]
      %v1577 = vld [vmem:[%s1552 + $0x90] sm:$0xf]
      %v1578 = vld [vmem:[%s1552 + $0x94] sm:$0xf]
      %v1579 = vld [vmem:[%s1552 + $0x9c] sm:$0xf]
      %v1580 = vld [vmem:[%s1552 + $0xa0] sm:$0xf]
      %v1581 = vld [vmem:[%s1552 + $0xa8] sm:$0xf]
      %v1582 = vld [vmem:[%s1552 + $0xac] sm:$0xf]
      %v1583 = vld [vmem:[%s1552 + $0xb4] sm:$0xf]
      %v1584 = vld [vmem:[%s1552 + $0xb8] sm:$0xf]
      %s1585 = scalar_lea.vmem %s2, 8
      %v1586 = vld [vmem:[%s1585] sm:$0xf]
      %v1619 = vunpack.c.l.b16 %v1553
      %v1620 = vunpack.c.l.b16 %v1554
      %v1621 = vunpack.c.l.b16 %v1555
      %v1622 = vunpack.c.l.b16 %v1556
      %v1623 = vunpack.c.l.b16 %v1557
      %v1624 = vunpack.c.l.b16 %v1558
      %v1625 = vunpack.c.l.b16 %v1559
      %v1626 = vunpack.c.l.b16 %v1560
      %v1627 = vunpack.c.l.b16 %v1561
      %v1628 = vunpack.c.l.b16 %v1562
      %v1629 = vunpack.c.l.b16 %v1563
      %v1630 = vunpack.c.l.b16 %v1564
      %v1631 = vunpack.c.l.b16 %v1565
      %v1632 = vunpack.c.l.b16 %v1566
      %v1633 = vunpack.c.l.b16 %v1567
      %v1634 = vunpack.c.l.b16 %v1568
      %v1635 = vunpack.c.l.b16 %v1569
      %v1636 = vunpack.c.l.b16 %v1570
      %v1637 = vunpack.c.l.b16 %v1571
      %v1638 = vunpack.c.l.b16 %v1572
      %v1639 = vunpack.c.l.b16 %v1573
      %v1640 = vunpack.c.l.b16 %v1574
      %v1641 = vunpack.c.l.b16 %v1575
      %v1642 = vunpack.c.l.b16 %v1576
      %v1643 = vunpack.c.l.b16 %v1577
      %v1644 = vunpack.c.l.b16 %v1578
      %v1645 = vunpack.c.l.b16 %v1579
      %v1646 = vunpack.c.l.b16 %v1580
      %v1647 = vunpack.c.l.b16 %v1581
      %v1648 = vunpack.c.l.b16 %v1582
      %v1649 = vunpack.c.l.b16 %v1583
      %v1650 = vunpack.c.l.b16 %v1584
      %v1651 = vpack.c.b16 %v1620, %v1619
      %v1652 = vpack.c.b16 %v1622, %v1621
      %v1653 = vpack.c.b16 %v1624, %v1623
      %v1654 = vpack.c.b16 %v1626, %v1625
      %v1655 = vpack.c.b16 %v1628, %v1627
      %v1656 = vpack.c.b16 %v1630, %v1629
      %v1657 = vpack.c.b16 %v1632, %v1631
      %v1658 = vpack.c.b16 %v1634, %v1633
      %v1659 = vpack.c.b16 %v1636, %v1635
      %v1660 = vpack.c.b16 %v1638, %v1637
      %v1661 = vpack.c.b16 %v1640, %v1639
      %v1662 = vpack.c.b16 %v1642, %v1641
      %v1663 = vpack.c.b16 %v1644, %v1643
      %v1664 = vpack.c.b16 %v1646, %v1645
      %v1665 = vpack.c.b16 %v1648, %v1647
      %v1666 = vpack.c.b16 %v1650, %v1649
      %v1668 = vsel %vm577, %v1651, 0
      %v1671 = vsel %vm577, %v1652, 0
      %v1674 = vsel %vm577, %v1653, 0
      %v1677 = vsel %vm577, %v1654, 0
      %v1680 = vsel %vm577, %v1655, 0
      %v1683 = vsel %vm577, %v1656, 0
      %v1686 = vsel %vm577, %v1657, 0
      %v1689 = vsel %vm577, %v1658, 0
      %v1692 = vsel %vm577, %v1659, 0
      %v1695 = vsel %vm577, %v1660, 0
      %v1698 = vsel %vm577, %v1661, 0
      %v1701 = vsel %vm577, %v1662, 0
      %v1704 = vsel %vm577, %v1663, 0
      %v1707 = vsel %vm577, %v1664, 0
      %v1710 = vsel %vm577, %v1665, 0
      %v1713 = vsel %vm577, %v1666, 0
      %v1716 = vsel %vm626, %v1586, 0
      %1718 = vmatprep.subr.bf16.mxu0 0
      %1719 = vmatpush1.bf16.msra.mxu0 %v1716
      %1720 = vmatprep.subr.bf16.mxu0 0
      %1721 = vmatpush1.bf16.msra.mxu0 0
      %1722 = vmatprep.subr.bf16.mxu0 0
      %1723 = vmatpush1.bf16.msra.mxu0 0
      %1724 = vmatprep.subr.bf16.mxu0 0
      %1725 = vmatpush1.bf16.msra.mxu0 0
      %1726 = vmatprep.subr.bf16.mxu0 0
      %1727 = vmatpush1.bf16.msra.mxu0 0
      %1728 = vmatprep.subr.bf16.mxu0 0
      %1729 = vmatpush1.bf16.msra.mxu0 0
      %1730 = vmatprep.subr.bf16.mxu0 0
      %1731 = vmatpush1.bf16.msra.mxu0 0
      %1732 = vmatprep.subr.bf16.mxu0 0
      %1733 = vmatpush1.bf16.msra.mxu0 0
      %1734 = vmatprep.subr.bf16.mxu0 0
      %1735 = vmatpush1.bf16.msra.mxu0 0
      %1736 = vmatprep.subr.bf16.mxu0 0
      %1737 = vmatpush1.bf16.msra.mxu0 0
      %1738 = vmatprep.subr.bf16.mxu0 0
      %1739 = vmatpush1.bf16.msra.mxu0 0
      %1740 = vmatprep.subr.bf16.mxu0 0
      %1741 = vmatpush1.bf16.msra.mxu0 0
      %1742 = vmatprep.subr.bf16.mxu0 0
      %1743 = vmatpush1.bf16.msra.mxu0 0
      %1744 = vmatprep.subr.bf16.mxu0 0
      %1745 = vmatpush1.bf16.msra.mxu0 0
      %1746 = vmatprep.subr.bf16.mxu0 0
      %1747 = vmatpush1.bf16.msra.mxu0 0
      %1748 = vmatprep.subr.bf16.mxu0 0
      %1749 = vmatpush1.bf16.msra.mxu0 0
      %1750 = vmatprep.mubr.bf16.mxu0 0
      %1751 = vmatmul.mubr.bf16.gmra.mrb[0].mxu0 %v1668
      %v1752 = vpop.f32.mrb[0].mxu0
      %v1753 = vadd.f32 0.0, %v1752
      %v1754 = vpop.f32.mrb[0].mxu0
      %v1755 = vpop.f32.mrb[0].mxu0
      %v1756 = vadd.f32 0.0, %v1755
      %v1757 = vpop.f32.mrb[0].mxu0
      %1758 = vmatprep.mubr.bf16.mxu0 0
      %1759 = vmatmul.mubr.bf16.gmra.mrb[0].mxu0 %v1671
      %v1760 = vpop.f32.mrb[0].mxu0
      %v1761 = vadd.f32 0.0, %v1760
      %v1762 = vpop.f32.mrb[0].mxu0
      %v1763 = vpop.f32.mrb[0].mxu0
      %v1764 = vadd.f32 0.0, %v1763
      %v1765 = vpop.f32.mrb[0].mxu0
      %1766 = vmatprep.mubr.bf16.mxu0 0
      %1767 = vmatmul.mubr.bf16.gmra.mrb[0].mxu0 %v1674
      %v1768 = vpop.f32.mrb[0].mxu0
      %v1769 = vadd.f32 0.0, %v1768
      %v1770 = vpop.f32.mrb[0].mxu0
      %v1771 = vpop.f32.mrb[0].mxu0
      %v1772 = vadd.f32 0.0, %v1771
      %v1773 = vpop.f32.mrb[0].mxu0
      %1774 = vmatprep.mubr.bf16.mxu0 0
      %1775 = vmatmul.mubr.bf16.gmra.mrb[0].mxu0 %v1677
      %v1776 = vpop.f32.mrb[0].mxu0
      %v1777 = vadd.f32 0.0, %v1776
      %v1778 = vpop.f32.mrb[0].mxu0
      %v1779 = vpop.f32.mrb[0].mxu0
      %v1780 = vadd.f32 0.0, %v1779
      %v1781 = vpop.f32.mrb[0].mxu0
      %1782 = vmatprep.mubr.bf16.mxu0 0
      %1783 = vmatmul.mubr.bf16.gmra.mrb[0].mxu0 %v1680
      %v1784 = vpop.f32.mrb[0].mxu0
      %v1785 = vadd.f32 0.0, %v1784
      %v1786 = vpop.f32.mrb[0].mxu0
      %v1787 = vpop.f32.mrb[0].mxu0
      %v1788 = vadd.f32 0.0, %v1787
      %v1789 = vpop.f32.mrb[0].mxu0
      %1790 = vmatprep.mubr.bf16.mxu0 0
      %1791 = vmatmul.mubr.bf16.gmra.mrb[0].mxu0 %v1683
      %v1792 = vpop.f32.mrb[0].mxu0
      %v1793 = vadd.f32 0.0, %v1792
      %v1794 = vpop.f32.mrb[0].mxu0
      %v1795 = vpop.f32.mrb[0].mxu0
      %v1796 = vadd.f32 0.0, %v1795
      %v1797 = vpop.f32.mrb[0].mxu0
      %1798 = vmatprep.mubr.bf16.mxu0 0
      %1799 = vmatmul.mubr.bf16.gmra.mrb[0].mxu0 %v1686
      %v1800 = vpop.f32.mrb[0].mxu0
      %v1801 = vadd.f32 0.0, %v1800
      %v1802 = vpop.f32.mrb[0].mxu0
      %v1803 = vpop.f32.mrb[0].mxu0
      %v1804 = vadd.f32 0.0, %v1803
      %v1805 = vpop.f32.mrb[0].mxu0
      %1806 = vmatprep.mubr.bf16.mxu0 0
      %1807 = vmatmul.mubr.bf16.gmra.mrb[0].mxu0 %v1689
      %v1808 = vpop.f32.mrb[0].mxu0
      %v1809 = vadd.f32 0.0, %v1808
      %v1810 = vpop.f32.mrb[0].mxu0
      %v1811 = vpop.f32.mrb[0].mxu0
      %v1812 = vadd.f32 0.0, %v1811
      %v1813 = vpop.f32.mrb[0].mxu0
      %1814 = vmatprep.mubr.bf16.mxu0 0
      %1815 = vmatmul.mubr.bf16.gmra.mrb[0].mxu0 %v1692
      %v1816 = vpop.f32.mrb[0].mxu0
      %v1817 = vadd.f32 0.0, %v1816
      %v1818 = vpop.f32.mrb[0].mxu0
      %v1819 = vpop.f32.mrb[0].mxu0
      %v1820 = vadd.f32 0.0, %v1819
      %v1821 = vpop.f32.mrb[0].mxu0
      %1822 = vmatprep.mubr.bf16.mxu0 0
      %1823 = vmatmul.mubr.bf16.gmra.mrb[0].mxu0 %v1695
      %v1824 = vpop.f32.mrb[0].mxu0
      %v1825 = vadd.f32 0.0, %v1824
      %v1826 = vpop.f32.mrb[0].mxu0
      %v1827 = vpop.f32.mrb[0].mxu0
      %v1828 = vadd.f32 0.0, %v1827
      %v1829 = vpop.f32.mrb[0].mxu0
      %1830 = vmatprep.mubr.bf16.mxu0 0
      %1831 = vmatmul.mubr.bf16.gmra.mrb[0].mxu0 %v1698
      %v1832 = vpop.f32.mrb[0].mxu0
      %v1833 = vadd.f32 0.0, %v1832
      %v1834 = vpop.f32.mrb[0].mxu0
      %v1835 = vpop.f32.mrb[0].mxu0
      %v1836 = vadd.f32 0.0, %v1835
      %v1837 = vpop.f32.mrb[0].mxu0
      %1838 = vmatprep.mubr.bf16.mxu0 0
      %1839 = vmatmul.mubr.bf16.gmra.mrb[0].mxu0 %v1701
      %v1840 = vpop.f32.mrb[0].mxu0
      %v1841 = vadd.f32 0.0, %v1840
      %v1842 = vpop.f32.mrb[0].mxu0
      %v1843 = vpop.f32.mrb[0].mxu0
      %v1844 = vadd.f32 0.0, %v1843
      %v1845 = vpop.f32.mrb[0].mxu0
      %1846 = vmatprep.mubr.bf16.mxu0 0
      %1847 = vmatmul.mubr.bf16.gmra.mrb[0].mxu0 %v1704
      %v1848 = vpop.f32.mrb[0].mxu0
      %v1849 = vadd.f32 0.0, %v1848
      %v1850 = vpop.f32.mrb[0].mxu0
      %v1851 = vpop.f32.mrb[0].mxu0
      %v1852 = vadd.f32 0.0, %v1851
      %v1853 = vpop.f32.mrb[0].mxu0
      %1854 = vmatprep.mubr.bf16.mxu0 0
      %1855 = vmatmul.mubr.bf16.gmra.mrb[0].mxu0 %v1707
      %v1856 = vpop.f32.mrb[0].mxu0
      %v1857 = vadd.f32 0.0, %v1856
      %v1858 = vpop.f32.mrb[0].mxu0
      %v1859 = vpop.f32.mrb[0].mxu0
      %v1860 = vadd.f32 0.0, %v1859
      %v1861 = vpop.f32.mrb[0].mxu0
      %1862 = vmatprep.mubr.bf16.mxu0 0
      %1863 = vmatmul.mubr.bf16.gmra.mrb[0].mxu0 %v1710
      %v1864 = vpop.f32.mrb[0].mxu0
      %v1865 = vadd.f32 0.0, %v1864
      %v1866 = vpop.f32.mrb[0].mxu0
      %v1867 = vpop.f32.mrb[0].mxu0
      %v1868 = vadd.f32 0.0, %v1867
      %v1869 = vpop.f32.mrb[0].mxu0
      %1870 = vmatprep.mubr.bf16.mxu0 0
      %1871 = vmatmul.mubr.bf16.gmra.mrb[0].mxu0 %v1713
      %v1872 = vpop.f32.mrb[0].mxu0
      %v1873 = vadd.f32 0.0, %v1872
      %v1874 = vpop.f32.mrb[0].mxu0
      %v1875 = vpop.f32.mrb[0].mxu0
      %v1876 = vadd.f32 0.0, %v1875
      %v1877 = vpop.f32.mrb[0].mxu0
      %1878 = vdwg.mxu0
      %v1879 = vadd.f32 %v1520, %v1753
      %v1880 = vadd.f32 %v1521, %v1756
      %v1881 = vadd.f32 %v1522, %v1761
      %v1882 = vadd.f32 %v1523, %v1764
      %v1883 = vadd.f32 %v1524, %v1769
      %v1884 = vadd.f32 %v1525, %v1772
      %v1885 = vadd.f32 %v1526, %v1777
      %v1886 = vadd.f32 %v1527, %v1780
      %v1887 = vadd.f32 %v1528, %v1785
      %v1888 = vadd.f32 %v1529, %v1788
      %v1889 = vadd.f32 %v1530, %v1793
      %v1890 = vadd.f32 %v1531, %v1796
      %v1891 = vadd.f32 %v1532, %v1801
      %v1892 = vadd.f32 %v1533, %v1804
      %v1893 = vadd.f32 %v1534, %v1809
      %v1894 = vadd.f32 %v1535, %v1812
      %v1895 = vadd.f32 %v1536, %v1817
      %v1896 = vadd.f32 %v1537, %v1820
      %v1897 = vadd.f32 %v1538, %v1825
      %v1898 = vadd.f32 %v1539, %v1828
      %v1899 = vadd.f32 %v1540, %v1833
      %v1900 = vadd.f32 %v1541, %v1836
      %v1901 = vadd.f32 %v1542, %v1841
      %v1902 = vadd.f32 %v1543, %v1844
      %v1903 = vadd.f32 %v1544, %v1849
      %v1904 = vadd.f32 %v1545, %v1852
      %v1905 = vadd.f32 %v1546, %v1857
      %v1906 = vadd.f32 %v1547, %v1860
      %v1907 = vadd.f32 %v1548, %v1865
      %v1908 = vadd.f32 %v1549, %v1868
      %v1909 = vadd.f32 %v1550, %v1873
      %v1910 = vadd.f32 %v1551, %v1876
      %v1911 = vld [vmem:[%s1552] sm:$0xf]
      %v1912 = vld [vmem:[%s1552 + $0x4] sm:$0xf]
      %v1913 = vld [vmem:[%s1552 + $0x8] sm:$0x1]
      %v1914 = vld [vmem:[%s1552 + $0xc] sm:$0xf]
      %v1915 = vld [vmem:[%s1552 + $0x10] sm:$0xf]
      %v1916 = vld [vmem:[%s1552 + $0x14] sm:$0x1]
      %v1917 = vld [vmem:[%s1552 + $0x18] sm:$0xf]
      %v1918 = vld [vmem:[%s1552 + $0x1c] sm:$0xf]
      %v1919 = vld [vmem:[%s1552 + $0x20] sm:$0x1]
      %v1920 = vld [vmem:[%s1552 + $0x24] sm:$0xf]
      %v1921 = vld [vmem:[%s1552 + $0x28] sm:$0xf]
      %v1922 = vld [vmem:[%s1552 + $0x2c] sm:$0x1]
      %v1923 = vld [vmem:[%s1552 + $0x30] sm:$0xf]
      %v1924 = vld [vmem:[%s1552 + $0x34] sm:$0xf]
      %v1925 = vld [vmem:[%s1552 + $0x38] sm:$0x1]
      %v1926 = vld [vmem:[%s1552 + $0x3c] sm:$0xf]
      %v1927 = vld [vmem:[%s1552 + $0x40] sm:$0xf]
      %v1928 = vld [vmem:[%s1552 + $0x44] sm:$0x1]
      %v1929 = vld [vmem:[%s1552 + $0x48] sm:$0xf]
      %v1930 = vld [vmem:[%s1552 + $0x4c] sm:$0xf]
      %v1931 = vld [vmem:[%s1552 + $0x50] sm:$0x1]
      %v1932 = vld [vmem:[%s1552 + $0x54] sm:$0xf]
      %v1933 = vld [vmem:[%s1552 + $0x58] sm:$0xf]
      %v1934 = vld [vmem:[%s1552 + $0x5c] sm:$0x1]
      %v1935 = vld [vmem:[%s1552 + $0x60] sm:$0xf]
      %v1936 = vld [vmem:[%s1552 + $0x64] sm:$0xf]
      %v1937 = vld [vmem:[%s1552 + $0x68] sm:$0x1]
      %v1938 = vld [vmem:[%s1552 + $0x6c] sm:$0xf]
      %v1939 = vld [vmem:[%s1552 + $0x70] sm:$0xf]
      %v1940 = vld [vmem:[%s1552 + $0x74] sm:$0x1]
      %v1941 = vld [vmem:[%s1552 + $0x78] sm:$0xf]
      %v1942 = vld [vmem:[%s1552 + $0x7c] sm:$0xf]
      %v1943 = vld [vmem:[%s1552 + $0x80] sm:$0x1]
      %v1944 = vld [vmem:[%s1552 + $0x84] sm:$0xf]
      %v1945 = vld [vmem:[%s1552 + $0x88] sm:$0xf]
      %v1946 = vld [vmem:[%s1552 + $0x8c] sm:$0x1]
      %v1947 = vld [vmem:[%s1552 + $0x90] sm:$0xf]
      %v1948 = vld [vmem:[%s1552 + $0x94] sm:$0xf]
      %v1949 = vld [vmem:[%s1552 + $0x98] sm:$0x1]
      %v1950 = vld [vmem:[%s1552 + $0x9c] sm:$0xf]
      %v1951 = vld [vmem:[%s1552 + $0xa0] sm:$0xf]
      %v1952 = vld [vmem:[%s1552 + $0xa4] sm:$0x1]
      %v1953 = vld [vmem:[%s1552 + $0xa8] sm:$0xf]
      %v1954 = vld [vmem:[%s1552 + $0xac] sm:$0xf]
      %v1955 = vld [vmem:[%s1552 + $0xb0] sm:$0x1]
      %v1956 = vld [vmem:[%s1552 + $0xb4] sm:$0xf]
      %v1957 = vld [vmem:[%s1552 + $0xb8] sm:$0xf]
      %v1958 = vld [vmem:[%s1552 + $0xbc] sm:$0x1]
      %v1960 = vshrl.u32 %v1911, 16
      %v1962 = vrot.slane %v1960, 4
      %v1963 = vshll.u32 %v1911, 16
      %v1965 = vrot.slane %v1963, 5
      %v1966 = vor.u32 %v1962, %v1965
      %v1967 = vrot.slane %v1966, 4
      %v1969 = vshll.u32 %v1912, 16
      %v1971 = vrot.slane %v1969, 5
      %v1972 = vsel %vm873, %v1967, %v1971
      %v1973 = vshrl.u32 %v1912, 16
      %v1975 = vrot.slane %v1973, 4
      %v1976 = vor.u32 %v1975, %v1971
      %v1977 = vrot.slane %v1976, 4
      %v1979 = vshll.u32 %v1913, 16
      %v1981 = vrot.slane %v1979, 5
      %v1982 = vsel %vm873, %v1977, %v1981
      %v1984 = vshrl.u32 %v1914, 16
      %v1986 = vrot.slane %v1984, 4
      %v1987 = vshll.u32 %v1914, 16
      %v1989 = vrot.slane %v1987, 5
      %v1990 = vor.u32 %v1986, %v1989
      %v1991 = vrot.slane %v1990, 4
      %v1993 = vshll.u32 %v1915, 16
      %v1995 = vrot.slane %v1993, 5
      %v1996 = vsel %vm873, %v1991, %v1995
      %v1997 = vshrl.u32 %v1915, 16
      %v1999 = vrot.slane %v1997, 4
      %v2000 = vor.u32 %v1999, %v1995
      %v2001 = vrot.slane %v2000, 4
      %v2003 = vshll.u32 %v1916, 16
      %v2005 = vrot.slane %v2003, 5
      %v2006 = vsel %vm873, %v2001, %v2005
      %v2008 = vshrl.u32 %v1917, 16
      %v2010 = vrot.slane %v2008, 4
      %v2011 = vshll.u32 %v1917, 16
      %v2013 = vrot.slane %v2011, 5
      %v2014 = vor.u32 %v2010, %v2013
      %v2015 = vrot.slane %v2014, 4
      %v2017 = vshll.u32 %v1918, 16
      %v2019 = vrot.slane %v2017, 5
      %v2020 = vsel %vm873, %v2015, %v2019
      %v2021 = vshrl.u32 %v1918, 16
      %v2023 = vrot.slane %v2021, 4
      %v2024 = vor.u32 %v2023, %v2019
      %v2025 = vrot.slane %v2024, 4
      %v2027 = vshll.u32 %v1919, 16
      %v2029 = vrot.slane %v2027, 5
      %v2030 = vsel %vm873, %v2025, %v2029
      %v2032 = vshrl.u32 %v1920, 16
      %v2034 = vrot.slane %v2032, 4
      %v2035 = vshll.u32 %v1920, 16
      %v2037 = vrot.slane %v2035, 5
      %v2038 = vor.u32 %v2034, %v2037
      %v2039 = vrot.slane %v2038, 4
      %v2041 = vshll.u32 %v1921, 16
      %v2043 = vrot.slane %v2041, 5
      %v2044 = vsel %vm873, %v2039, %v2043
      %v2045 = vshrl.u32 %v1921, 16
      %v2047 = vrot.slane %v2045, 4
      %v2048 = vor.u32 %v2047, %v2043
      %v2049 = vrot.slane %v2048, 4
      %v2051 = vshll.u32 %v1922, 16
      %v2053 = vrot.slane %v2051, 5
      %v2054 = vsel %vm873, %v2049, %v2053
      %v2056 = vshrl.u32 %v1923, 16
      %v2058 = vrot.slane %v2056, 4
      %v2059 = vshll.u32 %v1923, 16
      %v2061 = vrot.slane %v2059, 5
      %v2062 = vor.u32 %v2058, %v2061
      %v2063 = vrot.slane %v2062, 4
      %v2065 = vshll.u32 %v1924, 16
      %v2067 = vrot.slane %v2065, 5
      %v2068 = vsel %vm873, %v2063, %v2067
      %v2069 = vshrl.u32 %v1924, 16
      %v2071 = vrot.slane %v2069, 4
      %v2072 = vor.u32 %v2071, %v2067
      %v2073 = vrot.slane %v2072, 4
      %v2075 = vshll.u32 %v1925, 16
      %v2077 = vrot.slane %v2075, 5
      %v2078 = vsel %vm873, %v2073, %v2077
      %v2080 = vshrl.u32 %v1926, 16
      %v2082 = vrot.slane %v2080, 4
      %v2083 = vshll.u32 %v1926, 16
      %v2085 = vrot.slane %v2083, 5
      %v2086 = vor.u32 %v2082, %v2085
      %v2087 = vrot.slane %v2086, 4
      %v2089 = vshll.u32 %v1927, 16
      %v2091 = vrot.slane %v2089, 5
      %v2092 = vsel %vm873, %v2087, %v2091
      %v2093 = vshrl.u32 %v1927, 16
      %v2095 = vrot.slane %v2093, 4
      %v2096 = vor.u32 %v2095, %v2091
      %v2097 = vrot.slane %v2096, 4
      %v2099 = vshll.u32 %v1928, 16
      %v2101 = vrot.slane %v2099, 5
      %v2102 = vsel %vm873, %v2097, %v2101
      %v2104 = vshrl.u32 %v1929, 16
      %v2106 = vrot.slane %v2104, 4
      %v2107 = vshll.u32 %v1929, 16
      %v2109 = vrot.slane %v2107, 5
      %v2110 = vor.u32 %v2106, %v2109
      %v2111 = vrot.slane %v2110, 4
      %v2113 = vshll.u32 %v1930, 16
      %v2115 = vrot.slane %v2113, 5
      %v2116 = vsel %vm873, %v2111, %v2115
      %v2117 = vshrl.u32 %v1930, 16
      %v2119 = vrot.slane %v2117, 4
      %v2120 = vor.u32 %v2119, %v2115
      %v2121 = vrot.slane %v2120, 4
      %v2123 = vshll.u32 %v1931, 16
      %v2125 = vrot.slane %v2123, 5
      %v2126 = vsel %vm873, %v2121, %v2125
      %v2128 = vshrl.u32 %v1932, 16
      %v2130 = vrot.slane %v2128, 4
      %v2131 = vshll.u32 %v1932, 16
      %v2133 = vrot.slane %v2131, 5
      %v2134 = vor.u32 %v2130, %v2133
      %v2135 = vrot.slane %v2134, 4
      %v2137 = vshll.u32 %v1933, 16
      %v2139 = vrot.slane %v2137, 5
      %v2140 = vsel %vm873, %v2135, %v2139
      %v2141 = vshrl.u32 %v1933, 16
      %v2143 = vrot.slane %v2141, 4
      %v2144 = vor.u32 %v2143, %v2139
      %v2145 = vrot.slane %v2144, 4
      %v2147 = vshll.u32 %v1934, 16
      %v2149 = vrot.slane %v2147, 5
      %v2150 = vsel %vm873, %v2145, %v2149
      %v2152 = vshrl.u32 %v1935, 16
      %v2154 = vrot.slane %v2152, 4
      %v2155 = vshll.u32 %v1935, 16
      %v2157 = vrot.slane %v2155, 5
      %v2158 = vor.u32 %v2154, %v2157
      %v2159 = vrot.slane %v2158, 4
      %v2161 = vshll.u32 %v1936, 16
      %v2163 = vrot.slane %v2161, 5
      %v2164 = vsel %vm873, %v2159, %v2163
      %v2165 = vshrl.u32 %v1936, 16
      %v2167 = vrot.slane %v2165, 4
      %v2168 = vor.u32 %v2167, %v2163
      %v2169 = vrot.slane %v2168, 4
      %v2171 = vshll.u32 %v1937, 16
      %v2173 = vrot.slane %v2171, 5
      %v2174 = vsel %vm873, %v2169, %v2173
      %v2176 = vshrl.u32 %v1938, 16
      %v2178 = vrot.slane %v2176, 4
      %v2179 = vshll.u32 %v1938, 16
      %v2181 = vrot.slane %v2179, 5
      %v2182 = vor.u32 %v2178, %v2181
      %v2183 = vrot.slane %v2182, 4
      %v2185 = vshll.u32 %v1939, 16
      %v2187 = vrot.slane %v2185, 5
      %v2188 = vsel %vm873, %v2183, %v2187
      %v2189 = vshrl.u32 %v1939, 16
      %v2191 = vrot.slane %v2189, 4
      %v2192 = vor.u32 %v2191, %v2187
      %v2193 = vrot.slane %v2192, 4
      %v2195 = vshll.u32 %v1940, 16
      %v2197 = vrot.slane %v2195, 5
      %v2198 = vsel %vm873, %v2193, %v2197
      %v2200 = vshrl.u32 %v1941, 16
      %v2202 = vrot.slane %v2200, 4
      %v2203 = vshll.u32 %v1941, 16
      %v2205 = vrot.slane %v2203, 5
      %v2206 = vor.u32 %v2202, %v2205
      %v2207 = vrot.slane %v2206, 4
      %v2209 = vshll.u32 %v1942, 16
      %v2211 = vrot.slane %v2209, 5
      %v2212 = vsel %vm873, %v2207, %v2211
      %v2213 = vshrl.u32 %v1942, 16
      %v2215 = vrot.slane %v2213, 4
      %v2216 = vor.u32 %v2215, %v2211
      %v2217 = vrot.slane %v2216, 4
      %v2219 = vshll.u32 %v1943, 16
      %v2221 = vrot.slane %v2219, 5
      %v2222 = vsel %vm873, %v2217, %v2221
      %v2224 = vshrl.u32 %v1944, 16
      %v2226 = vrot.slane %v2224, 4
      %v2227 = vshll.u32 %v1944, 16
      %v2229 = vrot.slane %v2227, 5
      %v2230 = vor.u32 %v2226, %v2229
      %v2231 = vrot.slane %v2230, 4
      %v2233 = vshll.u32 %v1945, 16
      %v2235 = vrot.slane %v2233, 5
      %v2236 = vsel %vm873, %v2231, %v2235
      %v2237 = vshrl.u32 %v1945, 16
      %v2239 = vrot.slane %v2237, 4
      %v2240 = vor.u32 %v2239, %v2235
      %v2241 = vrot.slane %v2240, 4
      %v2243 = vshll.u32 %v1946, 16
      %v2245 = vrot.slane %v2243, 5
      %v2246 = vsel %vm873, %v2241, %v2245
      %v2248 = vshrl.u32 %v1947, 16
      %v2250 = vrot.slane %v2248, 4
      %v2251 = vshll.u32 %v1947, 16
      %v2253 = vrot.slane %v2251, 5
      %v2254 = vor.u32 %v2250, %v2253
      %v2255 = vrot.slane %v2254, 4
      %v2257 = vshll.u32 %v1948, 16
      %v2259 = vrot.slane %v2257, 5
      %v2260 = vsel %vm873, %v2255, %v2259
      %v2261 = vshrl.u32 %v1948, 16
      %v2263 = vrot.slane %v2261, 4
      %v2264 = vor.u32 %v2263, %v2259
      %v2265 = vrot.slane %v2264, 4
      %v2267 = vshll.u32 %v1949, 16
      %v2269 = vrot.slane %v2267, 5
      %v2270 = vsel %vm873, %v2265, %v2269
      %v2272 = vshrl.u32 %v1950, 16
      %v2274 = vrot.slane %v2272, 4
      %v2275 = vshll.u32 %v1950, 16
      %v2277 = vrot.slane %v2275, 5
      %v2278 = vor.u32 %v2274, %v2277
      %v2279 = vrot.slane %v2278, 4
      %v2281 = vshll.u32 %v1951, 16
      %v2283 = vrot.slane %v2281, 5
      %v2284 = vsel %vm873, %v2279, %v2283
      %v2285 = vshrl.u32 %v1951, 16
      %v2287 = vrot.slane %v2285, 4
      %v2288 = vor.u32 %v2287, %v2283
      %v2289 = vrot.slane %v2288, 4
      %v2291 = vshll.u32 %v1952, 16
      %v2293 = vrot.slane %v2291, 5
      %v2294 = vsel %vm873, %v2289, %v2293
      %v2296 = vshrl.u32 %v1953, 16
      %v2298 = vrot.slane %v2296, 4
      %v2299 = vshll.u32 %v1953, 16
      %v2301 = vrot.slane %v2299, 5
      %v2302 = vor.u32 %v2298, %v2301
      %v2303 = vrot.slane %v2302, 4
      %v2305 = vshll.u32 %v1954, 16
      %v2307 = vrot.slane %v2305, 5
      %v2308 = vsel %vm873, %v2303, %v2307
      %v2309 = vshrl.u32 %v1954, 16
      %v2311 = vrot.slane %v2309, 4
      %v2312 = vor.u32 %v2311, %v2307
      %v2313 = vrot.slane %v2312, 4
      %v2315 = vshll.u32 %v1955, 16
      %v2317 = vrot.slane %v2315, 5
      %v2318 = vsel %vm873, %v2313, %v2317
      %v2320 = vshrl.u32 %v1956, 16
      %v2322 = vrot.slane %v2320, 4
      %v2323 = vshll.u32 %v1956, 16
      %v2325 = vrot.slane %v2323, 5
      %v2326 = vor.u32 %v2322, %v2325
      %v2327 = vrot.slane %v2326, 4
      %v2329 = vshll.u32 %v1957, 16
      %v2331 = vrot.slane %v2329, 5
      %v2332 = vsel %vm873, %v2327, %v2331
      %v2333 = vshrl.u32 %v1957, 16
      %v2335 = vrot.slane %v2333, 4
      %v2336 = vor.u32 %v2335, %v2331
      %v2337 = vrot.slane %v2336, 4
      %v2339 = vshll.u32 %v1958, 16
      %v2341 = vrot.slane %v2339, 5
      %v2342 = vsel %vm873, %v2337, %v2341
      %s2343 = scalar_lea.vmem %s2, 12
      %v2344 = vld [vmem:[%s2343] sm:$0xf]
      %v2345 = vunpack.c.l.b16 %v1972
      %v2346 = vunpack.c.l.b16 %v1982
      %v2347 = vunpack.c.l.b16 %v1996
      %v2348 = vunpack.c.l.b16 %v2006
      %v2349 = vunpack.c.l.b16 %v2020
      %v2350 = vunpack.c.l.b16 %v2030
      %v2351 = vunpack.c.l.b16 %v2044
      %v2352 = vunpack.c.l.b16 %v2054
      %v2353 = vunpack.c.l.b16 %v2068
      %v2354 = vunpack.c.l.b16 %v2078
      %v2355 = vunpack.c.l.b16 %v2092
      %v2356 = vunpack.c.l.b16 %v2102
      %v2357 = vunpack.c.l.b16 %v2116
      %v2358 = vunpack.c.l.b16 %v2126
      %v2359 = vunpack.c.l.b16 %v2140
      %v2360 = vunpack.c.l.b16 %v2150
      %v2361 = vunpack.c.l.b16 %v2164
      %v2362 = vunpack.c.l.b16 %v2174
      %v2363 = vunpack.c.l.b16 %v2188
      %v2364 = vunpack.c.l.b16 %v2198
      %v2365 = vunpack.c.l.b16 %v2212
      %v2366 = vunpack.c.l.b16 %v2222
      %v2367 = vunpack.c.l.b16 %v2236
      %v2368 = vunpack.c.l.b16 %v2246
      %v2369 = vunpack.c.l.b16 %v2260
      %v2370 = vunpack.c.l.b16 %v2270
      %v2371 = vunpack.c.l.b16 %v2284
      %v2372 = vunpack.c.l.b16 %v2294
      %v2373 = vunpack.c.l.b16 %v2308
      %v2374 = vunpack.c.l.b16 %v2318
      %v2375 = vunpack.c.l.b16 %v2332
      %v2376 = vunpack.c.l.b16 %v2342
      %v2377 = vpack.c.b16 %v2346, %v2345
      %v2378 = vpack.c.b16 %v2348, %v2347
      %v2379 = vpack.c.b16 %v2350, %v2349
      %v2380 = vpack.c.b16 %v2352, %v2351
      %v2381 = vpack.c.b16 %v2354, %v2353
      %v2382 = vpack.c.b16 %v2356, %v2355
      %v2383 = vpack.c.b16 %v2358, %v2357
      %v2384 = vpack.c.b16 %v2360, %v2359
      %v2385 = vpack.c.b16 %v2362, %v2361
      %v2386 = vpack.c.b16 %v2364, %v2363
      %v2387 = vpack.c.b16 %v2366, %v2365
      %v2388 = vpack.c.b16 %v2368, %v2367
      %v2389 = vpack.c.b16 %v2370, %v2369
      %v2390 = vpack.c.b16 %v2372, %v2371
      %v2391 = vpack.c.b16 %v2374, %v2373
      %v2392 = vpack.c.b16 %v2376, %v2375
      %v2394 = vsel %vm577, %v2377, 0
      %v2397 = vsel %vm577, %v2378, 0
      %v2400 = vsel %vm577, %v2379, 0
      %v2403 = vsel %vm577, %v2380, 0
      %v2406 = vsel %vm577, %v2381, 0
      %v2409 = vsel %vm577, %v2382, 0
      %v2412 = vsel %vm577, %v2383, 0
      %v2415 = vsel %vm577, %v2384, 0
      %v2418 = vsel %vm577, %v2385, 0
      %v2421 = vsel %vm577, %v2386, 0
      %v2424 = vsel %vm577, %v2387, 0
      %v2427 = vsel %vm577, %v2388, 0
      %v2430 = vsel %vm577, %v2389, 0
      %v2433 = vsel %vm577, %v2390, 0
      %v2436 = vsel %vm577, %v2391, 0
      %v2439 = vsel %vm577, %v2392, 0
      %v2442 = vsel %vm626, %v2344, 0
      %2444 = vmatprep.subr.bf16.mxu0 0
      %2445 = vmatpush1.bf16.msra.mxu0 %v2442
      %2446 = vmatprep.subr.bf16.mxu0 0
      %2447 = vmatpush1.bf16.msra.mxu0 0
      %2448 = vmatprep.subr.bf16.mxu0 0
      %2449 = vmatpush1.bf16.msra.mxu0 0
      %2450 = vmatprep.subr.bf16.mxu0 0
      %2451 = vmatpush1.bf16.msra.mxu0 0
      %2452 = vmatprep.subr.bf16.mxu0 0
      %2453 = vmatpush1.bf16.msra.mxu0 0
      %2454 = vmatprep.subr.bf16.mxu0 0
      %2455 = vmatpush1.bf16.msra.mxu0 0
      %2456 = vmatprep.subr.bf16.mxu0 0
      %2457 = vmatpush1.bf16.msra.mxu0 0
      %2458 = vmatprep.subr.bf16.mxu0 0
      %2459 = vmatpush1.bf16.msra.mxu0 0
      %2460 = vmatprep.subr.bf16.mxu0 0
      %2461 = vmatpush1.bf16.msra.mxu0 0
      %2462 = vmatprep.subr.bf16.mxu0 0
      %2463 = vmatpush1.bf16.msra.mxu0 0
      %2464 = vmatprep.subr.bf16.mxu0 0
      %2465 = vmatpush1.bf16.msra.mxu0 0
      %2466 = vmatprep.subr.bf16.mxu0 0
      %2467 = vmatpush1.bf16.msra.mxu0 0
      %2468 = vmatprep.subr.bf16.mxu0 0
      %2469 = vmatpush1.bf16.msra.mxu0 0
      %2470 = vmatprep.subr.bf16.mxu0 0
      %2471 = vmatpush1.bf16.msra.mxu0 0
      %2472 = vmatprep.subr.bf16.mxu0 0
      %2473 = vmatpush1.bf16.msra.mxu0 0
      %2474 = vmatprep.subr.bf16.mxu0 0
      %2475 = vmatpush1.bf16.msra.mxu0 0
      %2476 = vmatprep.mubr.bf16.mxu0 0
      %2477 = vmatmul.mubr.bf16.gmra.mrb[0].mxu0 %v2394
      %v2478 = vpop.f32.mrb[0].mxu0
      %v2479 = vadd.f32 0.0, %v2478
      %v2480 = vpop.f32.mrb[0].mxu0
      %v2481 = vpop.f32.mrb[0].mxu0
      %v2482 = vadd.f32 0.0, %v2481
      %v2483 = vpop.f32.mrb[0].mxu0
      %2484 = vmatprep.mubr.bf16.mxu0 0
      %2485 = vmatmul.mubr.bf16.gmra.mrb[0].mxu0 %v2397
      %v2486 = vpop.f32.mrb[0].mxu0
      %v2487 = vadd.f32 0.0, %v2486
      %v2488 = vpop.f32.mrb[0].mxu0
      %v2489 = vpop.f32.mrb[0].mxu0
      %v2490 = vadd.f32 0.0, %v2489
      %v2491 = vpop.f32.mrb[0].mxu0
      %2492 = vmatprep.mubr.bf16.mxu0 0
      %2493 = vmatmul.mubr.bf16.gmra.mrb[0].mxu0 %v2400
      %v2494 = vpop.f32.mrb[0].mxu0
      %v2495 = vadd.f32 0.0, %v2494
      %v2496 = vpop.f32.mrb[0].mxu0
      %v2497 = vpop.f32.mrb[0].mxu0
      %v2498 = vadd.f32 0.0, %v2497
      %v2499 = vpop.f32.mrb[0].mxu0
      %2500 = vmatprep.mubr.bf16.mxu0 0
      %2501 = vmatmul.mubr.bf16.gmra.mrb[0].mxu0 %v2403
      %v2502 = vpop.f32.mrb[0].mxu0
      %v2503 = vadd.f32 0.0, %v2502
      %v2504 = vpop.f32.mrb[0].mxu0
      %v2505 = vpop.f32.mrb[0].mxu0
      %v2506 = vadd.f32 0.0, %v2505
      %v2507 = vpop.f32.mrb[0].mxu0
      %2508 = vmatprep.mubr.bf16.mxu0 0
      %2509 = vmatmul.mubr.bf16.gmra.mrb[0].mxu0 %v2406
      %v2510 = vpop.f32.mrb[0].mxu0
      %v2511 = vadd.f32 0.0, %v2510
      %v2512 = vpop.f32.mrb[0].mxu0
      %v2513 = vpop.f32.mrb[0].mxu0
      %v2514 = vadd.f32 0.0, %v2513
      %v2515 = vpop.f32.mrb[0].mxu0
      %2516 = vmatprep.mubr.bf16.mxu0 0
      %2517 = vmatmul.mubr.bf16.gmra.mrb[0].mxu0 %v2409
      %v2518 = vpop.f32.mrb[0].mxu0
      %v2519 = vadd.f32 0.0, %v2518
      %v2520 = vpop.f32.mrb[0].mxu0
      %v2521 = vpop.f32.mrb[0].mxu0
      %v2522 = vadd.f32 0.0, %v2521
      %v2523 = vpop.f32.mrb[0].mxu0
      %2524 = vmatprep.mubr.bf16.mxu0 0
      %2525 = vmatmul.mubr.bf16.gmra.mrb[0].mxu0 %v2412
      %v2526 = vpop.f32.mrb[0].mxu0
      %v2527 = vadd.f32 0.0, %v2526
      %v2528 = vpop.f32.mrb[0].mxu0
      %v2529 = vpop.f32.mrb[0].mxu0
      %v2530 = vadd.f32 0.0, %v2529
      %v2531 = vpop.f32.mrb[0].mxu0
      %2532 = vmatprep.mubr.bf16.mxu0 0
      %2533 = vmatmul.mubr.bf16.gmra.mrb[0].mxu0 %v2415
      %v2534 = vpop.f32.mrb[0].mxu0
      %v2535 = vadd.f32 0.0, %v2534
      %v2536 = vpop.f32.mrb[0].mxu0
      %v2537 = vpop.f32.mrb[0].mxu0
      %v2538 = vadd.f32 0.0, %v2537
      %v2539 = vpop.f32.mrb[0].mxu0
      %2540 = vmatprep.mubr.bf16.mxu0 0
      %2541 = vmatmul.mubr.bf16.gmra.mrb[0].mxu0 %v2418
      %v2542 = vpop.f32.mrb[0].mxu0
      %v2543 = vadd.f32 0.0, %v2542
      %v2544 = vpop.f32.mrb[0].mxu0
      %v2545 = vpop.f32.mrb[0].mxu0
      %v2546 = vadd.f32 0.0, %v2545
      %v2547 = vpop.f32.mrb[0].mxu0
      %2548 = vmatprep.mubr.bf16.mxu0 0
      %2549 = vmatmul.mubr.bf16.gmra.mrb[0].mxu0 %v2421
      %v2550 = vpop.f32.mrb[0].mxu0
      %v2551 = vadd.f32 0.0, %v2550
      %v2552 = vpop.f32.mrb[0].mxu0
      %v2553 = vpop.f32.mrb[0].mxu0
      %v2554 = vadd.f32 0.0, %v2553
      %v2555 = vpop.f32.mrb[0].mxu0
      %2556 = vmatprep.mubr.bf16.mxu0 0
      %2557 = vmatmul.mubr.bf16.gmra.mrb[0].mxu0 %v2424
      %v2558 = vpop.f32.mrb[0].mxu0
      %v2559 = vadd.f32 0.0, %v2558
      %v2560 = vpop.f32.mrb[0].mxu0
      %v2561 = vpop.f32.mrb[0].mxu0
      %v2562 = vadd.f32 0.0, %v2561
      %v2563 = vpop.f32.mrb[0].mxu0
      %2564 = vmatprep.mubr.bf16.mxu0 0
      %2565 = vmatmul.mubr.bf16.gmra.mrb[0].mxu0 %v2427
      %v2566 = vpop.f32.mrb[0].mxu0
      %v2567 = vadd.f32 0.0, %v2566
      %v2568 = vpop.f32.mrb[0].mxu0
      %v2569 = vpop.f32.mrb[0].mxu0
      %v2570 = vadd.f32 0.0, %v2569
      %v2571 = vpop.f32.mrb[0].mxu0
      %2572 = vmatprep.mubr.bf16.mxu0 0
      %2573 = vmatmul.mubr.bf16.gmra.mrb[0].mxu0 %v2430
      %v2574 = vpop.f32.mrb[0].mxu0
      %v2575 = vadd.f32 0.0, %v2574
      %v2576 = vpop.f32.mrb[0].mxu0
      %v2577 = vpop.f32.mrb[0].mxu0
      %v2578 = vadd.f32 0.0, %v2577
      %v2579 = vpop.f32.mrb[0].mxu0
      %2580 = vmatprep.mubr.bf16.mxu0 0
      %2581 = vmatmul.mubr.bf16.gmra.mrb[0].mxu0 %v2433
      %v2582 = vpop.f32.mrb[0].mxu0
      %v2583 = vadd.f32 0.0, %v2582
      %v2584 = vpop.f32.mrb[0].mxu0
      %v2585 = vpop.f32.mrb[0].mxu0
      %v2586 = vadd.f32 0.0, %v2585
      %v2587 = vpop.f32.mrb[0].mxu0
      %2588 = vmatprep.mubr.bf16.mxu0 0
      %2589 = vmatmul.mubr.bf16.gmra.mrb[0].mxu0 %v2436
      %v2590 = vpop.f32.mrb[0].mxu0
      %v2591 = vadd.f32 0.0, %v2590
      %v2592 = vpop.f32.mrb[0].mxu0
      %v2593 = vpop.f32.mrb[0].mxu0
      %v2594 = vadd.f32 0.0, %v2593
      %v2595 = vpop.f32.mrb[0].mxu0
      %2596 = vmatprep.mubr.bf16.mxu0 0
      %2597 = vmatmul.mubr.bf16.gmra.mrb[0].mxu0 %v2439
      %v2598 = vpop.f32.mrb[0].mxu0
      %v2599 = vadd.f32 0.0, %v2598
      %v2600 = vpop.f32.mrb[0].mxu0
      %v2601 = vpop.f32.mrb[0].mxu0
      %v2602 = vadd.f32 0.0, %v2601
      %v2603 = vpop.f32.mrb[0].mxu0
      %2604 = vdwg.mxu0
      %v2605 = vadd.f32 %v1879, %v2479
      %v2606 = vadd.f32 %v1880, %v2482
      %v2607 = vadd.f32 %v1881, %v2487
      %v2608 = vadd.f32 %v1882, %v2490
      %v2609 = vadd.f32 %v1883, %v2495
      %v2610 = vadd.f32 %v1884, %v2498
      %v2611 = vadd.f32 %v1885, %v2503
      %v2612 = vadd.f32 %v1886, %v2506
      %v2613 = vadd.f32 %v1887, %v2511
      %v2614 = vadd.f32 %v1888, %v2514
      %v2615 = vadd.f32 %v1889, %v2519
      %v2616 = vadd.f32 %v1890, %v2522
      %v2617 = vadd.f32 %v1891, %v2527
      %v2618 = vadd.f32 %v1892, %v2530
      %v2619 = vadd.f32 %v1893, %v2535
      %v2620 = vadd.f32 %v1894, %v2538
      %v2621 = vadd.f32 %v1895, %v2543
      %v2622 = vadd.f32 %v1896, %v2546
      %v2623 = vadd.f32 %v1897, %v2551
      %v2624 = vadd.f32 %v1898, %v2554
      %v2625 = vadd.f32 %v1899, %v2559
      %v2626 = vadd.f32 %v1900, %v2562
      %v2627 = vadd.f32 %v1901, %v2567
      %v2628 = vadd.f32 %v1902, %v2570
      %v2629 = vadd.f32 %v1903, %v2575
      %v2630 = vadd.f32 %v1904, %v2578
      %v2631 = vadd.f32 %v1905, %v2583
      %v2632 = vadd.f32 %v1906, %v2586
      %v2633 = vadd.f32 %v1907, %v2591
      %v2634 = vadd.f32 %v1908, %v2594
      %v2635 = vadd.f32 %v1909, %v2599
      %v2636 = vadd.f32 %v1910, %v2602
      %vm2637 = vcmp.ge.f32.partialorder %v2605, 0.0
      %vm2638 = vcmp.ge.f32.partialorder %v2606, 0.0
      %vm2639 = vcmp.ge.f32.partialorder %v2607, 0.0
      %vm2640 = vcmp.ge.f32.partialorder %v2608, 0.0
      %vm2641 = vcmp.ge.f32.partialorder %v2609, 0.0
      %vm2642 = vcmp.ge.f32.partialorder %v2610, 0.0
      %vm2643 = vcmp.ge.f32.partialorder %v2611, 0.0
      %vm2644 = vcmp.ge.f32.partialorder %v2612, 0.0
      %vm2645 = vcmp.ge.f32.partialorder %v2613, 0.0
      %vm2646 = vcmp.ge.f32.partialorder %v2614, 0.0
      %vm2647 = vcmp.ge.f32.partialorder %v2615, 0.0
      %vm2648 = vcmp.ge.f32.partialorder %v2616, 0.0
      %vm2649 = vcmp.ge.f32.partialorder %v2617, 0.0
      %vm2650 = vcmp.ge.f32.partialorder %v2618, 0.0
      %vm2651 = vcmp.ge.f32.partialorder %v2619, 0.0
      %vm2652 = vcmp.ge.f32.partialorder %v2620, 0.0
      %vm2653 = vcmp.ge.f32.partialorder %v2621, 0.0
      %vm2654 = vcmp.ge.f32.partialorder %v2622, 0.0
      %vm2655 = vcmp.ge.f32.partialorder %v2623, 0.0
      %vm2656 = vcmp.ge.f32.partialorder %v2624, 0.0
      %vm2657 = vcmp.ge.f32.partialorder %v2625, 0.0
      %vm2658 = vcmp.ge.f32.partialorder %v2626, 0.0
      %vm2659 = vcmp.ge.f32.partialorder %v2627, 0.0
      %vm2660 = vcmp.ge.f32.partialorder %v2628, 0.0
      %vm2661 = vcmp.ge.f32.partialorder %v2629, 0.0
      %vm2662 = vcmp.ge.f32.partialorder %v2630, 0.0
      %vm2663 = vcmp.ge.f32.partialorder %v2631, 0.0
      %vm2664 = vcmp.ge.f32.partialorder %v2632, 0.0
      %vm2665 = vcmp.ge.f32.partialorder %v2633, 0.0
      %vm2666 = vcmp.ge.f32.partialorder %v2634, 0.0
      %vm2667 = vcmp.ge.f32.partialorder %v2635, 0.0
      %vm2668 = vcmp.ge.f32.partialorder %v2636, 0.0
      %v2669 = vmul.f32 %v2605, 0.2
      %v2670 = vmul.f32 %v2606, 0.2
      %v2671 = vmul.f32 %v2607, 0.2
      %v2672 = vmul.f32 %v2608, 0.2
      %v2673 = vmul.f32 %v2609, 0.2
      %v2674 = vmul.f32 %v2610, 0.2
      %v2675 = vmul.f32 %v2611, 0.2
      %v2676 = vmul.f32 %v2612, 0.2
      %v2677 = vmul.f32 %v2613, 0.2
      %v2678 = vmul.f32 %v2614, 0.2
      %v2679 = vmul.f32 %v2615, 0.2
      %v2680 = vmul.f32 %v2616, 0.2
      %v2681 = vmul.f32 %v2617, 0.2
      %v2682 = vmul.f32 %v2618, 0.2
      %v2683 = vmul.f32 %v2619, 0.2
      %v2684 = vmul.f32 %v2620, 0.2
      %v2685 = vmul.f32 %v2621, 0.2
      %v2686 = vmul.f32 %v2622, 0.2
      %v2687 = vmul.f32 %v2623, 0.2
      %v2688 = vmul.f32 %v2624, 0.2
      %v2689 = vmul.f32 %v2625, 0.2
      %v2690 = vmul.f32 %v2626, 0.2
      %v2691 = vmul.f32 %v2627, 0.2
      %v2692 = vmul.f32 %v2628, 0.2
      %v2693 = vmul.f32 %v2629, 0.2
      %v2694 = vmul.f32 %v2630, 0.2
      %v2695 = vmul.f32 %v2631, 0.2
      %v2696 = vmul.f32 %v2632, 0.2
      %v2697 = vmul.f32 %v2633, 0.2
      %v2698 = vmul.f32 %v2634, 0.2
      %v2699 = vmul.f32 %v2635, 0.2
      %v2700 = vmul.f32 %v2636, 0.2
      %v2701 = vsel %vm2637, %v2605, %v2669
      %v2702 = vsel %vm2638, %v2606, %v2670
      %v2703 = vsel %vm2639, %v2607, %v2671
      %v2704 = vsel %vm2640, %v2608, %v2672
      %v2705 = vsel %vm2641, %v2609, %v2673
      %v2706 = vsel %vm2642, %v2610, %v2674
      %v2707 = vsel %vm2643, %v2611, %v2675
      %v2708 = vsel %vm2644, %v2612, %v2676
      %v2709 = vsel %vm2645, %v2613, %v2677
      %v2710 = vsel %vm2646, %v2614, %v2678
      %v2711 = vsel %vm2647, %v2615, %v2679
      %v2712 = vsel %vm2648, %v2616, %v2680
      %v2713 = vsel %vm2649, %v2617, %v2681
      %v2714 = vsel %vm2650, %v2618, %v2682
      %v2715 = vsel %vm2651, %v2619, %v2683
      %v2716 = vsel %vm2652, %v2620, %v2684
      %v2717 = vsel %vm2653, %v2621, %v2685
      %v2718 = vsel %vm2654, %v2622, %v2686
      %v2719 = vsel %vm2655, %v2623, %v2687
      %v2720 = vsel %vm2656, %v2624, %v2688
      %v2721 = vsel %vm2657, %v2625, %v2689
      %v2722 = vsel %vm2658, %v2626, %v2690
      %v2723 = vsel %vm2659, %v2627, %v2691
      %v2724 = vsel %vm2660, %v2628, %v2692
      %v2725 = vsel %vm2661, %v2629, %v2693
      %v2726 = vsel %vm2662, %v2630, %v2694
      %v2727 = vsel %vm2663, %v2631, %v2695
      %v2728 = vsel %vm2664, %v2632, %v2696
      %v2729 = vsel %vm2665, %v2633, %v2697
      %v2730 = vsel %vm2666, %v2634, %v2698
      %v2731 = vsel %vm2667, %v2635, %v2699
      %v2732 = vsel %vm2668, %v2636, %v2700
      %v2733 = vpack.c.bf16 %v2702, %v2701
      %v2734 = vpack.c.bf16 %v2704, %v2703
      %v2735 = vpack.c.bf16 %v2706, %v2705
      %v2736 = vpack.c.bf16 %v2708, %v2707
      %v2737 = vpack.c.bf16 %v2710, %v2709
      %v2738 = vpack.c.bf16 %v2712, %v2711
      %v2739 = vpack.c.bf16 %v2714, %v2713
      %v2740 = vpack.c.bf16 %v2716, %v2715
      %v2741 = vpack.c.bf16 %v2718, %v2717
      %v2742 = vpack.c.bf16 %v2720, %v2719
      %v2743 = vpack.c.bf16 %v2722, %v2721
      %v2744 = vpack.c.bf16 %v2724, %v2723
      %v2745 = vpack.c.bf16 %v2726, %v2725
      %v2746 = vpack.c.bf16 %v2728, %v2727
      %v2747 = vpack.c.bf16 %v2730, %v2729
      %v2748 = vpack.c.bf16 %v2732, %v2731
      %v2765 = vunpack.c.l.b16 %v2733
      %v2766 = vunpack.c.h.b16 %v2733
      %v2767 = vunpack.c.l.b16 %v2734
      %v2768 = vunpack.c.h.b16 %v2734
      %v2769 = vunpack.c.l.b16 %v2735
      %v2770 = vunpack.c.h.b16 %v2735
      %v2771 = vunpack.c.l.b16 %v2736
      %v2772 = vunpack.c.h.b16 %v2736
      %v2773 = vunpack.c.l.b16 %v2737
      %v2774 = vunpack.c.h.b16 %v2737
      %v2775 = vunpack.c.l.b16 %v2738
      %v2776 = vunpack.c.h.b16 %v2738
      %v2777 = vunpack.c.l.b16 %v2739
      %v2778 = vunpack.c.h.b16 %v2739
      %v2779 = vunpack.c.l.b16 %v2740
      %v2780 = vunpack.c.h.b16 %v2740
      %v2781 = vunpack.c.l.b16 %v2741
      %v2782 = vunpack.c.h.b16 %v2741
      %v2783 = vunpack.c.l.b16 %v2742
      %v2784 = vunpack.c.h.b16 %v2742
      %v2785 = vunpack.c.l.b16 %v2743
      %v2786 = vunpack.c.h.b16 %v2743
      %v2787 = vunpack.c.l.b16 %v2744
      %v2788 = vunpack.c.h.b16 %v2744
      %v2789 = vunpack.c.l.b16 %v2745
      %v2790 = vunpack.c.h.b16 %v2745
      %v2791 = vunpack.c.l.b16 %v2746
      %v2792 = vunpack.c.h.b16 %v2746
      %v2793 = vunpack.c.l.b16 %v2747
      %v2794 = vunpack.c.h.b16 %v2747
      %v2795 = vunpack.c.l.b16 %v2748
      %v2796 = vunpack.c.h.b16 %v2748
      %v2797 = vpack.c.b16 %v2765, %v2765
      %v2798 = vpack.c.b16 %v2766, %v2766
      %v2799 = vpack.c.b16 %v2767, %v2767
      %v2800 = vpack.c.b16 %v2768, %v2768
      %v2801 = vpack.c.b16 %v2769, %v2769
      %v2802 = vpack.c.b16 %v2770, %v2770
      %v2803 = vpack.c.b16 %v2771, %v2771
      %v2804 = vpack.c.b16 %v2772, %v2772
      %v2805 = vpack.c.b16 %v2773, %v2773
      %v2806 = vpack.c.b16 %v2774, %v2774
      %v2807 = vpack.c.b16 %v2775, %v2775
      %v2808 = vpack.c.b16 %v2776, %v2776
      %v2809 = vpack.c.b16 %v2777, %v2777
      %v2810 = vpack.c.b16 %v2778, %v2778
      %v2811 = vpack.c.b16 %v2779, %v2779
      %v2812 = vpack.c.b16 %v2780, %v2780
      %v2813 = vpack.c.b16 %v2781, %v2781
      %v2814 = vpack.c.b16 %v2782, %v2782
      %v2815 = vpack.c.b16 %v2783, %v2783
      %v2816 = vpack.c.b16 %v2784, %v2784
      %v2817 = vpack.c.b16 %v2785, %v2785
      %v2818 = vpack.c.b16 %v2786, %v2786
      %v2819 = vpack.c.b16 %v2787, %v2787
      %v2820 = vpack.c.b16 %v2788, %v2788
      %v2821 = vpack.c.b16 %v2789, %v2789
      %v2822 = vpack.c.b16 %v2790, %v2790
      %v2823 = vpack.c.b16 %v2791, %v2791
      %v2824 = vpack.c.b16 %v2792, %v2792
      %v2825 = vpack.c.b16 %v2793, %v2793
      %v2826 = vpack.c.b16 %v2794, %v2794
      %v2827 = vpack.c.b16 %v2795, %v2795
      %v2828 = vpack.c.b16 %v2796, %v2796
      %2861 = vst.msk [vmem:[%s313] sm:$0xf] %vm364, %v2797
      %2862 = vst.msk [vmem:[%s313 + $0x4] sm:$0xf] %vm364, %v2798
      %2863 = vst.msk [vmem:[%s313 + $0x8] sm:$0xf] %vm364, %v2799
      %2864 = vst.msk [vmem:[%s313 + $0xc] sm:$0xf] %vm364, %v2800
      %2865 = vst.msk [vmem:[%s313 + $0x10] sm:$0xf] %vm364, %v2801
      %2866 = vst.msk [vmem:[%s313 + $0x14] sm:$0xf] %vm364, %v2802
      %2867 = vst.msk [vmem:[%s313 + $0x18] sm:$0xf] %vm364, %v2803
      %2868 = vst.msk [vmem:[%s313 + $0x1c] sm:$0xf] %vm364, %v2804
      %2869 = vst.msk [vmem:[%s313 + $0x20] sm:$0xf] %vm364, %v2805
      %2870 = vst.msk [vmem:[%s313 + $0x24] sm:$0xf] %vm364, %v2806
      %2871 = vst.msk [vmem:[%s313 + $0x28] sm:$0xf] %vm364, %v2807
      %2872 = vst.msk [vmem:[%s313 + $0x2c] sm:$0xf] %vm364, %v2808
      %2873 = vst.msk [vmem:[%s313 + $0x30] sm:$0xf] %vm364, %v2809
      %2874 = vst.msk [vmem:[%s313 + $0x34] sm:$0xf] %vm364, %v2810
      %2875 = vst.msk [vmem:[%s313 + $0x38] sm:$0xf] %vm364, %v2811
      %2876 = vst.msk [vmem:[%s313 + $0x3c] sm:$0xf] %vm364, %v2812
      %2877 = vst.msk [vmem:[%s313 + $0x40] sm:$0xf] %vm364, %v2813
      %2878 = vst.msk [vmem:[%s313 + $0x44] sm:$0xf] %vm364, %v2814
      %2879 = vst.msk [vmem:[%s313 + $0x48] sm:$0xf] %vm364, %v2815
      %2880 = vst.msk [vmem:[%s313 + $0x4c] sm:$0xf] %vm364, %v2816
      %2881 = vst.msk [vmem:[%s313 + $0x50] sm:$0xf] %vm364, %v2817
      %2882 = vst.msk [vmem:[%s313 + $0x54] sm:$0xf] %vm364, %v2818
      %2883 = vst.msk [vmem:[%s313 + $0x58] sm:$0xf] %vm364, %v2819
      %2884 = vst.msk [vmem:[%s313 + $0x5c] sm:$0xf] %vm364, %v2820
      %2885 = vst.msk [vmem:[%s313 + $0x60] sm:$0xf] %vm364, %v2821
      %2886 = vst.msk [vmem:[%s313 + $0x64] sm:$0xf] %vm364, %v2822
      %2887 = vst.msk [vmem:[%s313 + $0x68] sm:$0xf] %vm364, %v2823
      %2888 = vst.msk [vmem:[%s313 + $0x6c] sm:$0xf] %vm364, %v2824
      %2889 = vst.msk [vmem:[%s313 + $0x70] sm:$0xf] %vm364, %v2825
      %2890 = vst.msk [vmem:[%s313 + $0x74] sm:$0xf] %vm364, %v2826
      %2891 = vst.msk [vmem:[%s313 + $0x78] sm:$0xf] %vm364, %v2827
      %2892 = vst.msk [vmem:[%s313 + $0x7c] sm:$0xf] %vm364, %v2828
      %s2893 = smul.u32 16, %s20
      %p2894 = scmp.lt.s32.totalorder %s19, 1
      %s2895 = scalar_select %p2894, %s19, 1
      %p2896 = scmp.lt.s32.totalorder %s2893, 15
      %s2897 = scalar_select %p2896, %s2893, 15
      %s2898 = smul.addr %s2897, 2
      %s2899 = smul.addr %s2895, 32
      %s2900 = sadd.s32 %s2898, %s2899
      %s2901 = smul.addr %s2900, 4
      %s2902 = scalar_lea.vmem %s4, %s2901
      // Predicated region
      $region37: #{fc_discriminator.5} parent=35 // pred_check
        %p2903 = pneg %p149
      $region38: #{fc_discriminator.5} parent=35 // pred_check_branch
        %2905 = sbr.rel (%p2903) target = $region40
      $region39: #{fc_discriminator.5} parent=35 // pred_region
        %s2906 = smul.u32 16, %s20
      $region40: #{fc_discriminator.5} parent=35 // pred_fallthru
        _
    $region36: #{fc_discriminator.5} parent=5 // pred_fallthru
      _
    %p2907 = scmp.le.s32.totalorder 2, %s10
    // Predicated region
    $region41: #{fc_discriminator.5} parent=5 // pred_check
      %p2908 = pneg %p2907
    $region42: #{fc_discriminator.5} parent=5 // pred_check_branch
      %2910 = sbr.rel (%p2908) target = $region44
    $region43: #{fc_discriminator.5} parent=5 // pred_region
      %s2911 = ssub.s32 %s10, 2
      // Predicated region
      $region45: #{fc_discriminator.5} parent=43 // pred_check
        %p2912 = pneg %p155
      $region46: #{fc_discriminator.5} parent=43 // pred_check_branch
        %2914 = sbr.rel (%p2912) target = $region48
      $region47: #{fc_discriminator.5} parent=43 // pred_region
        %s2915 = smul.u32 16, %s22
        %p2916 = scmp.lt.s32.totalorder %s21, 1
        %s2917 = scalar_select %p2916, %s21, 1
        %p2918 = scmp.lt.s32.totalorder %s2915, 15
        %s2919 = scalar_select %p2918, %s2915, 15
        %s2920 = smul.addr %s2919, 2
        %s2921 = smul.addr %s2917, 32
        %s2922 = sadd.s32 %s2920, %s2921
        %s2923 = smul.addr %s2922, 4
        %s2924 = scalar_lea.vmem %s4, %s2923
      $region48: #{fc_discriminator.5} parent=43 // pred_fallthru
        _
    $region44: #{fc_discriminator.5} parent=5 // pred_fallthru
      _
  $region6: #{fc_discriminator.5} parent=0 // loop_footer
    %s14 = sadd.s32 1, %s10
  $region7: #{fc_discriminator.5} parent=0 // loop_footer_branch
    %9 = sbr.rel target = $region3
  $region8: #{fc_discriminator.5} parent=0 // loop_exit
    _

// kernel: fc_discriminator.6
$region0: #{fc_discriminator.6}
  #allocation0 [shape = 'u32[]', space=smem, size = 0x4, offset = 0x4, fixed_abs, tag = 'smem constant byte address 0x4 - core index']
  #allocation1 [shape = 'u32[144,128]{1,0:T(1,128)}', space=vmem, size = 0x12000, scoped, tag = 'internal scratch']
  #allocation2 [shape = 'bf16[9,9,32]{2,1,0:T(8,128)(2,1)}', space=vmem, size = 0x9000, scoped, tag = 'scratch operand']
  %s0 = inlined_call_operand.vmem [shape: bf16[2,9,9,32], index: 0, kind: input, shape index: {}, may-alias: {0,1}]
  %s1 = inlined_call_operand.vmem [shape: bf16[2,9,9,32], index: 1, kind: input, shape index: {}, may-alias: {0,1}]
  %s2 = inlined_call_operand.vmem [shape: bf16[4,32,16], index: 2, kind: input, shape index: {}]
  %s3 = inlined_call_operand.vmem [shape: f32[1,16], index: 3, kind: input, shape index: {}]
  %s4 = inlined_call_operand.vmem [shape: bf16[2,8,8,16], index: 4, kind: output, shape index: {}]
  %s5 = sld [smem:[#allocation0]]
  $region49: #{fc_discriminator.6} parent=0
    _
  %s7 = ssub.s32 1, %s5
  %s8 = scalar_select 0, %s7, %s5
  loop: start=0, step=1, limit=4
  $region2: #{fc_discriminator.6} parent=0 // loop_pre_header
    _
  $region3: #{fc_discriminator.6} parent=0 // loop_header
    %s10 = sphi 0, %s14
    %p11 = scmp.ge.s32.totalorder %s10, 4
    %s17 = sphi 0, %s29
    %s18 = sphi 0, %s25
    %s19 = sphi 0, %s17
    %s20 = sphi 0, %s18
    %s21 = sphi 0, %s19
    %s22 = sphi 0, %s20
    %s34 = sphi 0, %s36
    %s37 = sphi 0, %s34
    %s38 = sphi 0, %s37
    %s54 = sphi 0, %s38
    %s66 = sphi 0, %s68
    %s69 = sphi 0, %s66
    %s70 = sphi 0, %s69
    %s86 = sphi 0, %s70
    %s90 = sphi 0, %s90
    %s92 = sphi 0, %s90
    %s93 = sphi 0, %s92
    %s107 = sphi 0, %s93
    %s111 = sphi 0, %s111
    %s113 = sphi 0, %s111
    %s114 = sphi 0, %s113
    %s128 = sphi 0, %s114
    %s136 = sphi 0, %s138
    %s139 = sphi 0, %s136
    %s140 = sphi 0, %s139
    %s156 = sphi 0, %s140
  $region4: #{fc_discriminator.6} parent=0 // loop_header_branch
    %13 = sbr.rel (%p11) target = $region8
  $region5: #{fc_discriminator.6} parent=0 // loop_body
    %s15 = ssub.s32 %s10, 1
    %s16 = ssub.s32 %s10, 2
    %s23 = sadd.s32 1, %s18
    %p24 = scmp.ge.s32.totalorder %s23, 1
    %s25 = scalar_select %p24, 0, %s23
    %s26 = sadd.s32 1, %s17
    %s27 = scalar_select %p24, %s26, %s17
    %p28 = scmp.ge.s32.totalorder %s27, 2
    %s29 = scalar_select %p28, 0, %s27
    %s30 = ssub.s32 %s17, %s29
    %s31 = ssub.s32 %s18, %s25
    %s32 = sor.u32 %s30, %s31
    %p33 = scmp.eq.s32.totalorder %s32, 0
    %s35 = sadd.s32 %s34, 1
    %s36 = scalar_select %p33, %s34, %s35
    %p39 = pneg %p33
    %p40 = scmp.eq.s32.totalorder %s10, 1
    %p41 = por %p39, %p40
    %p42 = scmp.ne.s32.totalorder %s34, %s37
    %p43 = scmp.eq.s32.totalorder %s10, 0
    %p44 = por %p42, %p43
    %p45 = scmp.ne.s32.totalorder %s34, %s37
    %p46 = scmp.eq.s32.totalorder %s15, 1
    %p47 = por %p45, %p46
    %p48 = scmp.ne.s32.totalorder %s37, %s38
    %p49 = scmp.eq.s32.totalorder %s15, 0
    %p50 = por %p48, %p49
    %p51 = scmp.ne.s32.totalorder %s37, %s38
    %p52 = scmp.eq.s32.totalorder %s16, 1
    %p53 = por %p51, %p52
    %p55 = scmp.ne.s32.totalorder %s38, %s54
    %p56 = scmp.eq.s32.totalorder %s16, 0
    %p57 = por %p55, %p56
    %s58 = sadd.s32 %s18, 1
    %s59 = smul.u32 %s58, 8
    %s60 = sadd.s32 %s25, 1
    %s61 = smul.u32 %s60, 8
    %s62 = ssub.s32 %s17, %s29
    %s63 = ssub.s32 %s59, %s61
    %s64 = sor.u32 %s62, %s63
    %p65 = scmp.eq.s32.totalorder %s64, 0
    %s67 = sadd.s32 %s66, 1
    %s68 = scalar_select %p65, %s66, %s67
    %p71 = pneg %p65
    %p72 = scmp.eq.s32.totalorder %s10, 1
    %p73 = por %p71, %p72
    %p74 = scmp.ne.s32.totalorder %s66, %s69
    %p75 = scmp.eq.s32.totalorder %s10, 0
    %p76 = por %p74, %p75
    %p77 = scmp.ne.s32.totalorder %s66, %s69
    %p78 = scmp.eq.s32.totalorder %s15, 1
    %p79 = por %p77, %p78
    %p80 = scmp.ne.s32.totalorder %s69, %s70
    %p81 = scmp.eq.s32.totalorder %s15, 0
    %p82 = por %p80, %p81
    %p83 = scmp.ne.s32.totalorder %s69, %s70
    %p84 = scmp.eq.s32.totalorder %s16, 1
    %p85 = por %p83, %p84
    %p87 = scmp.ne.s32.totalorder %s70, %s86
    %p88 = scmp.eq.s32.totalorder %s16, 0
    %p89 = por %p87, %p88
    %s91 = sadd.s32 %s90, 1
    %p94 = scmp.eq.s32.totalorder %s10, 1
    %p95 = scmp.ne.s32.totalorder %s90, %s92
    %p96 = scmp.eq.s32.totalorder %s10, 0
    %p97 = por %p95, %p96
    %p98 = scmp.ne.s32.totalorder %s90, %s92
    %p99 = scmp.eq.s32.totalorder %s15, 1
    %p100 = por %p98, %p99
    %p101 = scmp.ne.s32.totalorder %s92, %s93
    %p102 = scmp.eq.s32.totalorder %s15, 0
    %p103 = por %p101, %p102
    %p104 = scmp.ne.s32.totalorder %s92, %s93
    %p105 = scmp.eq.s32.totalorder %s16, 1
    %p106 = por %p104, %p105
    %p108 = scmp.ne.s32.totalorder %s93, %s107
    %p109 = scmp.eq.s32.totalorder %s16, 0
    %p110 = por %p108, %p109
    %s112 = sadd.s32 %s111, 1
    %p115 = scmp.eq.s32.totalorder %s10, 1
    %p116 = scmp.ne.s32.totalorder %s111, %s113
    %p117 = scmp.eq.s32.totalorder %s10, 0
    %p118 = por %p116, %p117
    %p119 = scmp.ne.s32.totalorder %s111, %s113
    %p120 = scmp.eq.s32.totalorder %s15, 1
    %p121 = por %p119, %p120
    %p122 = scmp.ne.s32.totalorder %s113, %s114
    %p123 = scmp.eq.s32.totalorder %s15, 0
    %p124 = por %p122, %p123
    %p125 = scmp.ne.s32.totalorder %s113, %s114
    %p126 = scmp.eq.s32.totalorder %s16, 1
    %p127 = por %p125, %p126
    %p129 = scmp.ne.s32.totalorder %s114, %s128
    %p130 = scmp.eq.s32.totalorder %s16, 0
    %p131 = por %p129, %p130
    %s132 = ssub.s32 %s17, %s29
    %s133 = ssub.s32 %s18, %s25
    %s134 = sor.u32 %s132, %s133
    %p135 = scmp.eq.s32.totalorder %s134, 0
    %s137 = sadd.s32 %s136, 1
    %s138 = scalar_select %p135, %s136, %s137
    %p141 = pneg %p135
    %p142 = scmp.eq.s32.totalorder %s10, 1
    %p143 = por %p141, %p142
    %p144 = scmp.ne.s32.totalorder %s136, %s139
    %p145 = scmp.eq.s32.totalorder %s10, 0
    %p146 = por %p144, %p145
    %p147 = scmp.ne.s32.totalorder %s136, %s139
    %p148 = scmp.eq.s32.totalorder %s15, 1
    %p149 = por %p147, %p148
    %p150 = scmp.ne.s32.totalorder %s139, %s140
    %p151 = scmp.eq.s32.totalorder %s15, 0
    %p152 = por %p150, %p151
    %p153 = scmp.ne.s32.totalorder %s139, %s140
    %p154 = scmp.eq.s32.totalorder %s16, 1
    %p155 = por %p153, %p154
    %p157 = scmp.ne.s32.totalorder %s140, %s156
    %p158 = scmp.eq.s32.totalorder %s16, 0
    %p159 = por %p157, %p158
    %p160 = scmp.le.s32.totalorder 1, %s10
    %p161 = scmp.lt.s32.totalorder %s10, 3
    %p162 = pnand %p160, %p161
    %p163 = pneg %p162
    // Predicated region
    $region9: #{fc_discriminator.6} parent=5 // pred_check
      _
    $region10: #{fc_discriminator.6} parent=5 // pred_check_branch
      %165 = sbr.rel (%p162) target = $region12
    $region11: #{fc_discriminator.6} parent=5 // pred_region
      %s166 = ssub.s32 %s10, 1
      // Predicated region
      $region13: #{fc_discriminator.6} parent=11 // pred_check
        %p167 = pneg %p103
      $region14: #{fc_discriminator.6} parent=11 // pred_check_branch
        %169 = sbr.rel (%p167) target = $region16
      $region15: #{fc_discriminator.6} parent=11 // pred_region
        _
      $region16: #{fc_discriminator.6} parent=11 // pred_fallthru
        _
      // Predicated region
      $region17: #{fc_discriminator.6} parent=11 // pred_check
        %p170 = pneg %p124
      $region18: #{fc_discriminator.6} parent=11 // pred_check_branch
        %172 = sbr.rel (%p170) target = $region20
      $region19: #{fc_discriminator.6} parent=11 // pred_region
        _
      $region20: #{fc_discriminator.6} parent=11 // pred_fallthru
        _
    $region12: #{fc_discriminator.6} parent=5 // pred_fallthru
      _
    %p173 = scmp.lt.s32.totalorder %s10, 2
    // Predicated region
    $region21: #{fc_discriminator.6} parent=5 // pred_check
      %p174 = pneg %p173
    $region22: #{fc_discriminator.6} parent=5 // pred_check_branch
      %176 = sbr.rel (%p174) target = $region24
    $region23: #{fc_discriminator.6} parent=5 // pred_region
      // Predicated region
      $region25: #{fc_discriminator.6} parent=23 // pred_check
        %p177 = pneg %p44
      $region26: #{fc_discriminator.6} parent=23 // pred_check_branch
        %179 = sbr.rel (%p177) target = $region28
      $region27: #{fc_discriminator.6} parent=23 // pred_region
        %s180 = smul.u32 8, %s18
        %s181 = ssub.s32 9, %s180
        %p182 = scmp.lt.s32.totalorder %s181, 8
        %s183 = scalar_select %p182, %s181, 8
        %s184 = smul.u32 64, %s183
        %s185 = smul.u32 %s184, 2
        %p186 = scmp.lt.s32.totalorder %s17, 1
        %s187 = scalar_select %p186, %s17, 1
        %p188 = scmp.lt.s32.totalorder %s180, 8
        %s189 = scalar_select %p188, %s180, 8
        %s190 = smul.addr %s189, 2
        %s191 = smul.addr %s187, 18
        %s192 = sadd.s32 %s190, %s191
        %s193 = smul.addr %s192, 4
        %s194 = scalar_lea.vmem %s0, %s193
        %s195 = smul.u32 8, %s18
        %s196 = ssub.s32 9, %s195
        %p197 = scmp.lt.s32.totalorder %s196, 8
        %s198 = scalar_select %p197, %s196, 8
        %s199 = smul.u32 64, %s198
        %s200 = smul.u32 %s199, 2
      $region28: #{fc_discriminator.6} parent=23 // pred_fallthru
        _
      // Predicated region
      $region29: #{fc_discriminator.6} parent=23 // pred_check
        %p201 = pneg %p76
      $region30: #{fc_discriminator.6} parent=23 // pred_check_branch
        %203 = sbr.rel (%p201) target = $region32
      $region31: #{fc_discriminator.6} parent=23 // pred_region
        %s204 = sadd.s32 %s18, 1
        %s205 = smul.u32 %s204, 8
        %p206 = scmp.lt.s32.totalorder %s17, 1
        %s207 = scalar_select %p206, %s17, 1
        %p208 = scmp.lt.s32.totalorder %s205, 8
        %s209 = scalar_select %p208, %s205, 8
        %s210 = smul.addr %s209, 2
        %s211 = smul.addr %s207, 18
        %s212 = sadd.s32 %s210, %s211
        %s213 = smul.addr %s212, 4
        %s214 = scalar_lea.vmem %s1, %s213
        %s215 = sadd.s32 %s18, 1
        %s216 = smul.u32 %s215, 8
      $region32: #{fc_discriminator.6} parent=23 // pred_fallthru
        _
    $region24: #{fc_discriminator.6} parent=5 // pred_fallthru
      _
    %p217 = scmp.le.s32.totalorder 1, %s10
    %p218 = scmp.lt.s32.totalorder %s10, 3
    %p219 = pnand %p217, %p218
    %p220 = pneg %p219
    // Predicated region
    $region33: #{fc_discriminator.6} parent=5 // pred_check
      _
    $region34: #{fc_discriminator.6} parent=5 // pred_check_branch
      %222 = sbr.rel (%p219) target = $region36
    $region35: #{fc_discriminator.6} parent=5 // pred_region
      %s223 = ssub.s32 %s10, 1
      %s224 = smul.u32 8, %s20
      %s225 = ssub.s32 9, %s224
      %p226 = scmp.lt.s32.totalorder %s225, 8
      %s227 = scalar_select %p226, %s225, 8
      %s228 = smul.u32 64, %s227
      %s229 = smul.u32 %s228, 2
      %p230 = scmp.lt.s32.totalorder %s19, 1
      %s231 = scalar_select %p230, %s19, 1
      %p232 = scmp.lt.s32.totalorder %s224, 8
      %s233 = scalar_select %p232, %s224, 8
      %s234 = smul.addr %s233, 2
      %s235 = smul.addr %s231, 18
      %s236 = sadd.s32 %s234, %s235
      %s237 = smul.addr %s236, 4
      %s238 = scalar_lea.vmem %s0, %s237
      %p239 = pneg %p50
      %p240 = pneg %p47
      %s241 = sadd.s32 %s20, 1
      %s242 = smul.u32 %s241, 8
      %p243 = scmp.lt.s32.totalorder %s19, 1
      %s244 = scalar_select %p243, %s19, 1
      %p245 = scmp.lt.s32.totalorder %s242, 8
      %s246 = scalar_select %p245, %s242, 8
      %s247 = smul.addr %s246, 2
      %s248 = smul.addr %s244, 18
      %s249 = sadd.s32 %s247, %s248
      %s250 = smul.addr %s249, 4
      %s251 = scalar_lea.vmem %s1, %s250
      %p252 = pneg %p82
      %p253 = pneg %p79
      %p254 = pneg %p103
      %p255 = pneg %p100
      %p256 = pneg %p124
      %p257 = pneg %p121
      %p258 = pneg %p152
      %p259 = pneg %p149
      %s260 = smul.u32 8, %s20
      %p261 = scmp.lt.s32.totalorder %s19, 1
      %s262 = scalar_select %p261, %s19, 1
      %p263 = scmp.lt.s32.totalorder %s260, 7
      %s264 = scalar_select %p263, %s260, 7
      %s265 = smul.addr %s262, 8
      %s266 = sadd.s32 %s264, %s265
      %s267 = smul.addr %s266, 4
      %s268 = scalar_lea.vmem %s4, %s267
      %s269 = smul.u32 8, %s20
      %s270 = ssub.s32 9, %s269
      %p271 = scmp.lt.s32.totalorder %s270, 8
      %s272 = scalar_select %p271, %s270, 8
      %s273 = smul.u32 64, %s272
      %s274 = smul.u32 %s273, 2
      %p275 = scmp.lt.s32.totalorder %s19, 1
      %s276 = scalar_select %p275, %s19, 1
      %p277 = scmp.lt.s32.totalorder %s269, 8
      %s278 = scalar_select %p277, %s269, 8
      %s279 = smul.addr %s278, 2
      %s280 = smul.addr %s276, 18
      %s281 = sadd.s32 %s279, %s280
      %s282 = smul.addr %s281, 4
      %s283 = scalar_lea.vmem %s0, %s282
      %s284 = smul.u32 8, %s20
      %s285 = ssub.s32 9, %s284
      %p286 = scmp.lt.s32.totalorder %s285, 8
      %s287 = scalar_select %p286, %s285, 8
      %s288 = smul.u32 64, %s287
      %s289 = smul.u32 %s288, 2
      %s290 = sadd.s32 %s20, 1
      %s291 = smul.u32 %s290, 8
      %p292 = scmp.lt.s32.totalorder %s19, 1
      %s293 = scalar_select %p292, %s19, 1
      %p294 = scmp.lt.s32.totalorder %s291, 8
      %s295 = scalar_select %p294, %s291, 8
      %s296 = smul.addr %s295, 2
      %s297 = smul.addr %s293, 18
      %s298 = sadd.s32 %s296, %s297
      %s299 = smul.addr %s298, 4
      %s300 = scalar_lea.vmem %s1, %s299
      %s301 = sadd.s32 %s20, 1
      %s302 = smul.u32 %s301, 8
      %s303 = smul.u32 8, %s20
      %p304 = scmp.lt.s32.totalorder %s19, 1
      %s305 = scalar_select %p304, %s19, 1
      %p306 = scmp.lt.s32.totalorder %s303, 7
      %s307 = scalar_select %p306, %s303, 7
      %s308 = smul.addr %s305, 8
      %s309 = sadd.s32 %s307, %s308
      %s310 = smul.addr %s309, 4
      %s311 = scalar_lea.vmem %s4, %s310
      %s312 = smul.u32 8, %s20
      %v314 = vld [vmem:[%s283] sm:$0xf]
      %v315 = vld [vmem:[%s283 + $0x4] sm:$0x1]
      %v316 = vld [vmem:[%s283 + $0x8] sm:$0xf]
      %v317 = vld [vmem:[%s283 + $0xc] sm:$0x1]
      %v318 = vld [vmem:[%s283 + $0x10] sm:$0xf]
      %v319 = vld [vmem:[%s283 + $0x14] sm:$0x1]
      %v320 = vld [vmem:[%s283 + $0x18] sm:$0xf]
      %v321 = vld [vmem:[%s283 + $0x1c] sm:$0x1]
      %v322 = vld [vmem:[%s283 + $0x20] sm:$0xf]
      %v323 = vld [vmem:[%s283 + $0x24] sm:$0x1]
      %v324 = vld [vmem:[%s283 + $0x28] sm:$0xf]
      %v325 = vld [vmem:[%s283 + $0x2c] sm:$0x1]
      %v326 = vld [vmem:[%s283 + $0x30] sm:$0xf]
      %v327 = vld [vmem:[%s283 + $0x34] sm:$0x1]
      %v328 = vld [vmem:[%s283 + $0x38] sm:$0xf]
      %v329 = vld [vmem:[%s283 + $0x3c] sm:$0x1]
      %vm330 = vcmask 257024
      %331 = vst.msk [vmem:[#allocation2] sm:$0xf] %vm330, %v314
      %vm332 = vcmask 253952
      %vm333 = vsmask.f32 256
      %vm334 = vmand %vm332, %vm333
      %v335 = vld [vmem:[#allocation2 + $0x4] sm:$0x1]
      %v336 = vsel %vm334, %v315, %v335
      %337 = vst [vmem:[#allocation2 + $0x4] sm:$0x1] %v336
      %338 = vst.msk [vmem:[#allocation2 + $0x8] sm:$0xf] %vm330, %v316
      %v339 = vld [vmem:[#allocation2 + $0xc] sm:$0x1]
      %v340 = vsel %vm334, %v317, %v339
      %341 = vst [vmem:[#allocation2 + $0xc] sm:$0x1] %v340
      %342 = vst.msk [vmem:[#allocation2 + $0x10] sm:$0xf] %vm330, %v318
      %v343 = vld [vmem:[#allocation2 + $0x14] sm:$0x1]
      %v344 = vsel %vm334, %v319, %v343
      %345 = vst [vmem:[#allocation2 + $0x14] sm:$0x1] %v344
      %346 = vst.msk [vmem:[#allocation2 + $0x18] sm:$0xf] %vm330, %v320
      %v347 = vld [vmem:[#allocation2 + $0x1c] sm:$0x1]
      %v348 = vsel %vm334, %v321, %v347
      %349 = vst [vmem:[#allocation2 + $0x1c] sm:$0x1] %v348
      %350 = vst.msk [vmem:[#allocation2 + $0x20] sm:$0xf] %vm330, %v322
      %v351 = vld [vmem:[#allocation2 + $0x24] sm:$0x1]
      %v352 = vsel %vm334, %v323, %v351
      %353 = vst [vmem:[#allocation2 + $0x24] sm:$0x1] %v352
      %354 = vst.msk [vmem:[#allocation2 + $0x28] sm:$0xf] %vm330, %v324
      %v355 = vld [vmem:[#allocation2 + $0x2c] sm:$0x1]
      %v356 = vsel %vm334, %v325, %v355
      %357 = vst [vmem:[#allocation2 + $0x2c] sm:$0x1] %v356
      %358 = vst.msk [vmem:[#allocation2 + $0x30] sm:$0xf] %vm330, %v326
      %v359 = vld [vmem:[#allocation2 + $0x34] sm:$0x1]
      %v360 = vsel %vm334, %v327, %v359
      %361 = vst [vmem:[#allocation2 + $0x34] sm:$0x1] %v360
      %362 = vst.msk [vmem:[#allocation2 + $0x38] sm:$0xf] %vm330, %v328
      %v363 = vld [vmem:[#allocation2 + $0x3c] sm:$0x1]
      %v364 = vsel %vm334, %v329, %v363
      %365 = vst [vmem:[#allocation2 + $0x3c] sm:$0x1] %v364
      %v366 = vld [vmem:[%s300] sm:$0xf]
      %v367 = vld [vmem:[%s300 + $0x4] sm:$0x1]
      %s368 = scalar_lea.vmem [#allocation2], 64
      %369 = vst.msk [vmem:[%s368] sm:$0xf] %vm330, %v366
      %v370 = vld [vmem:[%s368 + $0x4] sm:$0x1]
      %v371 = vsel %vm334, %v367, %v370
      %372 = vst [vmem:[%s368 + $0x4] sm:$0x1] %v371
      %v373 = vld [vmem:[%s3] sm:$0x1]
      %v375 = vlaneseq
      %v376 = vshrl.u32 %v375, 7
      %v377 = vsub.s32 0, %v376
      %v378 = vrot.slane %v373, %v377
      %v380 = vld [vmem:[#allocation2] sm:$0xf]
      %v381 = vld [vmem:[#allocation2 + $0x8] sm:$0xf]
      %v382 = vld [vmem:[#allocation2 + $0x10] sm:$0xf]
      %v383 = vld [vmem:[#allocation2 + $0x18] sm:$0xf]
      %v384 = vld [vmem:[#allocation2 + $0x20] sm:$0xf]
      %v385 = vld [vmem:[#allocation2 + $0x28] sm:$0xf]
      %v386 = vld [vmem:[#allocation2 + $0x30] sm:$0xf]
      %v387 = vld [vmem:[#allocation2 + $0x38] sm:$0xf]
      %v388 = vld [vmem:[%s2] sm:$0xf]
      %v389 = vld [vmem:[%s2 + $0x4] sm:$0xf]
      %v390 = vld [vmem:[%s2 + $0x8] sm:$0xf]
      %v391 = vld [vmem:[%s2 + $0xc] sm:$0xf]
      %v400 = vunpack.c.l.b16 %v380
      %v401 = vunpack.c.l.b16 %v381
      %v402 = vunpack.c.l.b16 %v382
      %v403 = vunpack.c.l.b16 %v383
      %v404 = vunpack.c.l.b16 %v384
      %v405 = vunpack.c.l.b16 %v385
      %v406 = vunpack.c.l.b16 %v386
      %v407 = vunpack.c.l.b16 %v387
      %v408 = vpack.c.b16 %v401, %v400
      %v409 = vpack.c.b16 %v403, %v402
      %v410 = vpack.c.b16 %v405, %v404
      %v411 = vpack.c.b16 %v407, %v406
      %v416 = vunpack.c.l.b16 %v388
      %v417 = vunpack.c.l.b16 %v389
      %v418 = vunpack.c.l.b16 %v390
      %v419 = vunpack.c.l.b16 %v391
      %v420 = vpack.c.b16 %v417, %v416
      %v421 = vpack.c.b16 %v419, %v418
      %vm424 = vcmask 261120
      %v426 = vsel %vm424, %v408, 0
      %v429 = vsel %vm424, %v409, 0
      %v432 = vsel %vm424, %v410, 0
      %v435 = vsel %vm424, %v411, 0
      %437 = vmatprep.subr.bf16.mxu0 0
      %438 = vmatpush1.bf16.msra.mxu0 %v420
      %439 = vmatprep.subr.bf16.mxu0 0
      %440 = vmatpush1.bf16.msra.mxu0 %v421
      %441 = vmatprep.subr.bf16.mxu0 0
      %442 = vmatpush1.bf16.msra.mxu0 0
      %443 = vmatprep.subr.bf16.mxu0 0
      %444 = vmatpush1.bf16.msra.mxu0 0
      %445 = vmatprep.subr.bf16.mxu0 0
      %446 = vmatpush1.bf16.msra.mxu0 0
      %447 = vmatprep.subr.bf16.mxu0 0
      %448 = vmatpush1.bf16.msra.mxu0 0
      %449 = vmatprep.subr.bf16.mxu0 0
      %450 = vmatpush1.bf16.msra.mxu0 0
      %451 = vmatprep.subr.bf16.mxu0 0
      %452 = vmatpush1.bf16.msra.mxu0 0
      %453 = vmatprep.subr.bf16.mxu0 0
      %454 = vmatpush1.bf16.msra.mxu0 0
      %455 = vmatprep.subr.bf16.mxu0 0
      %456 = vmatpush1.bf16.msra.mxu0 0
      %457 = vmatprep.subr.bf16.mxu0 0
      %458 = vmatpush1.bf16.msra.mxu0 0
      %459 = vmatprep.subr.bf16.mxu0 0
      %460 = vmatpush1.bf16.msra.mxu0 0
      %461 = vmatprep.subr.bf16.mxu0 0
      %462 = vmatpush1.bf16.msra.mxu0 0
      %463 = vmatprep.subr.bf16.mxu0 0
      %464 = vmatpush1.bf16.msra.mxu0 0
      %465 = vmatprep.subr.bf16.mxu0 0
      %466 = vmatpush1.bf16.msra.mxu0 0
      %467 = vmatprep.subr.bf16.mxu0 0
      %468 = vmatpush1.bf16.msra.mxu0 0
      %469 = vmatprep.mubr.bf16.mxu0 0
      %470 = vmatmul.mubr.bf16.gmra.mrb[0].mxu0 %v426
      %v471 = vpop.f32.mrb[0].mxu0
      %v472 = vadd.f32 0.0, %v471
      %v473 = vpop.f32.mrb[0].mxu0
      %v474 = vpop.f32.mrb[0].mxu0
      %v475 = vadd.f32 0.0, %v474
      %v476 = vpop.f32.mrb[0].mxu0
      %477 = vmatprep.mubr.bf16.mxu0 0
      %478 = vmatmul.mubr.bf16.gmra.mrb[0].mxu0 %v429
      %v479 = vpop.f32.mrb[0].mxu0
      %v480 = vadd.f32 0.0, %v479
      %v481 = vpop.f32.mrb[0].mxu0
      %v482 = vpop.f32.mrb[0].mxu0
      %v483 = vadd.f32 0.0, %v482
      %v484 = vpop.f32.mrb[0].mxu0
      %485 = vmatprep.mubr.bf16.mxu0 0
      %486 = vmatmul.mubr.bf16.gmra.mrb[0].mxu0 %v432
      %v487 = vpop.f32.mrb[0].mxu0
      %v488 = vadd.f32 0.0, %v487
      %v489 = vpop.f32.mrb[0].mxu0
      %v490 = vpop.f32.mrb[0].mxu0
      %v491 = vadd.f32 0.0, %v490
      %v492 = vpop.f32.mrb[0].mxu0
      %493 = vmatprep.mubr.bf16.mxu0 0
      %494 = vmatmul.mubr.bf16.gmra.mrb[0].mxu0 %v435
      %v495 = vpop.f32.mrb[0].mxu0
      %v496 = vadd.f32 0.0, %v495
      %v497 = vpop.f32.mrb[0].mxu0
      %v498 = vpop.f32.mrb[0].mxu0
      %v499 = vadd.f32 0.0, %v498
      %v500 = vpop.f32.mrb[0].mxu0
      %501 = vdwg.mxu0
      %v502 = vadd.f32 %v378, %v472
      %v503 = vadd.f32 %v378, %v475
      %v504 = vadd.f32 %v378, %v480
      %v505 = vadd.f32 %v378, %v483
      %v506 = vadd.f32 %v378, %v488
      %v507 = vadd.f32 %v378, %v491
      %v508 = vadd.f32 %v378, %v496
      %v509 = vadd.f32 %v378, %v499
      %v510 = vld [vmem:[#allocation2] sm:$0xf]
      %v511 = vld [vmem:[#allocation2 + $0x4] sm:$0x1]
      %v512 = vld [vmem:[#allocation2 + $0x8] sm:$0xf]
      %v513 = vld [vmem:[#allocation2 + $0xc] sm:$0x1]
      %v514 = vld [vmem:[#allocation2 + $0x10] sm:$0xf]
      %v515 = vld [vmem:[#allocation2 + $0x14] sm:$0x1]
      %v516 = vld [vmem:[#allocation2 + $0x18] sm:$0xf]
      %v517 = vld [vmem:[#allocation2 + $0x1c] sm:$0x1]
      %v518 = vld [vmem:[#allocation2 + $0x20] sm:$0xf]
      %v519 = vld [vmem:[#allocation2 + $0x24] sm:$0x1]
      %v520 = vld [vmem:[#allocation2 + $0x28] sm:$0xf]
      %v521 = vld [vmem:[#allocation2 + $0x2c] sm:$0x1]
      %v522 = vld [vmem:[#allocation2 + $0x30] sm:$0xf]
      %v523 = vld [vmem:[#allocation2 + $0x34] sm:$0x1]
      %v524 = vld [vmem:[#allocation2 + $0x38] sm:$0xf]
      %v525 = vld [vmem:[#allocation2 + $0x3c] sm:$0x1]
      %vm526 = vsmask.f32 3328
      %vm527 = vsmask.f32 7440
      %vm528 = vmor %vm526, %vm527
      %v530 = vshrl.u32 %v510, 16
      %v532 = vrot.slane %v530, 4
      %v533 = vshll.u32 %v510, 16
      %v535 = vrot.slane %v533, 5
      %v536 = vor.u32 %v532, %v535
      %v537 = vrot.slane %v536, 4
      %v539 = vshll.u32 %v511, 16
      %v541 = vrot.slane %v539, 5
      %v542 = vsel %vm528, %v537, %v541
      %v544 = vshrl.u32 %v512, 16
      %v546 = vrot.slane %v544, 4
      %v547 = vshll.u32 %v512, 16
      %v549 = vrot.slane %v547, 5
      %v550 = vor.u32 %v546, %v549
      %v551 = vrot.slane %v550, 4
      %v553 = vshll.u32 %v513, 16
      %v555 = vrot.slane %v553, 5
      %v556 = vsel %vm528, %v551, %v555
      %v558 = vshrl.u32 %v514, 16
      %v560 = vrot.slane %v558, 4
      %v561 = vshll.u32 %v514, 16
      %v563 = vrot.slane %v561, 5
      %v564 = vor.u32 %v560, %v563
      %v565 = vrot.slane %v564, 4
      %v567 = vshll.u32 %v515, 16
      %v569 = vrot.slane %v567, 5
      %v570 = vsel %vm528, %v565, %v569
      %v572 = vshrl.u32 %v516, 16
      %v574 = vrot.slane %v572, 4
      %v575 = vshll.u32 %v516, 16
      %v577 = vrot.slane %v575, 5
      %v578 = vor.u32 %v574, %v577
      %v579 = vrot.slane %v578, 4
      %v581 = vshll.u32 %v517, 16
      %v583 = vrot.slane %v581, 5
      %v584 = vsel %vm528, %v579, %v583
      %v586 = vshrl.u32 %v518, 16
      %v588 = vrot.slane %v586, 4
      %v589 = vshll.u32 %v518, 16
      %v591 = vrot.slane %v589, 5
      %v592 = vor.u32 %v588, %v591
      %v593 = vrot.slane %v592, 4
      %v595 = vshll.u32 %v519, 16
      %v597 = vrot.slane %v595, 5
      %v598 = vsel %vm528, %v593, %v597
      %v600 = vshrl.u32 %v520, 16
      %v602 = vrot.slane %v600, 4
      %v603 = vshll.u32 %v520, 16
      %v605 = vrot.slane %v603, 5
      %v606 = vor.u32 %v602, %v605
      %v607 = vrot.slane %v606, 4
      %v609 = vshll.u32 %v521, 16
      %v611 = vrot.slane %v609, 5
      %v612 = vsel %vm528, %v607, %v611
      %v614 = vshrl.u32 %v522, 16
      %v616 = vrot.slane %v614, 4
      %v617 = vshll.u32 %v522, 16
      %v619 = vrot.slane %v617, 5
      %v620 = vor.u32 %v616, %v619
      %v621 = vrot.slane %v620, 4
      %v623 = vshll.u32 %v523, 16
      %v625 = vrot.slane %v623, 5
      %v626 = vsel %vm528, %v621, %v625
      %v628 = vshrl.u32 %v524, 16
      %v630 = vrot.slane %v628, 4
      %v631 = vshll.u32 %v524, 16
      %v633 = vrot.slane %v631, 5
      %v634 = vor.u32 %v630, %v633
      %v635 = vrot.slane %v634, 4
      %v637 = vshll.u32 %v525, 16
      %v639 = vrot.slane %v637, 5
      %v640 = vsel %vm528, %v635, %v639
      %s641 = scalar_lea.vmem %s2, 16
      %v642 = vld [vmem:[%s641] sm:$0xf]
      %v643 = vld [vmem:[%s641 + $0x4] sm:$0xf]
      %v644 = vld [vmem:[%s641 + $0x8] sm:$0xf]
      %v645 = vld [vmem:[%s641 + $0xc] sm:$0xf]
      %v646 = vunpack.c.l.b16 %v542
      %v647 = vunpack.c.l.b16 %v556
      %v648 = vunpack.c.l.b16 %v570
      %v649 = vunpack.c.l.b16 %v584
      %v650 = vunpack.c.l.b16 %v598
      %v651 = vunpack.c.l.b16 %v612
      %v652 = vunpack.c.l.b16 %v626
      %v653 = vunpack.c.l.b16 %v640
      %v654 = vpack.c.b16 %v647, %v646
      %v655 = vpack.c.b16 %v649, %v648
      %v656 = vpack.c.b16 %v651, %v650
      %v657 = vpack.c.b16 %v653, %v652
      %v662 = vunpack.c.l.b16 %v642
      %v663 = vunpack.c.l.b16 %v643
      %v664 = vunpack.c.l.b16 %v644
      %v665 = vunpack.c.l.b16 %v645
      %v666 = vpack.c.b16 %v663, %v662
      %v667 = vpack.c.b16 %v665, %v664
      %v671 = vsel %vm424, %v654, 0
      %v674 = vsel %vm424, %v655, 0
      %v677 = vsel %vm424, %v656, 0
      %v680 = vsel %vm424, %v657, 0
      %682 = vmatprep.subr.bf16.mxu0 0
      %683 = vmatpush1.bf16.msra.mxu0 %v666
      %684 = vmatprep.subr.bf16.mxu0 0
      %685 = vmatpush1.bf16.msra.mxu0 %v667
      %686 = vmatprep.subr.bf16.mxu0 0
      %687 = vmatpush1.bf16.msra.mxu0 0
      %688 = vmatprep.subr.bf16.mxu0 0
      %689 = vmatpush1.bf16.msra.mxu0 0
      %690 = vmatprep.subr.bf16.mxu0 0
      %691 = vmatpush1.bf16.msra.mxu0 0
      %692 = vmatprep.subr.bf16.mxu0 0
      %693 = vmatpush1.bf16.msra.mxu0 0
      %694 = vmatprep.subr.bf16.mxu0 0
      %695 = vmatpush1.bf16.msra.mxu0 0
      %696 = vmatprep.subr.bf16.mxu0 0
      %697 = vmatpush1.bf16.msra.mxu0 0
      %698 = vmatprep.subr.bf16.mxu0 0
      %699 = vmatpush1.bf16.msra.mxu0 0
      %700 = vmatprep.subr.bf16.mxu0 0
      %701 = vmatpush1.bf16.msra.mxu0 0
      %702 = vmatprep.subr.bf16.mxu0 0
      %703 = vmatpush1.bf16.msra.mxu0 0
      %704 = vmatprep.subr.bf16.mxu0 0
      %705 = vmatpush1.bf16.msra.mxu0 0
      %706 = vmatprep.subr.bf16.mxu0 0
      %707 = vmatpush1.bf16.msra.mxu0 0
      %708 = vmatprep.subr.bf16.mxu0 0
      %709 = vmatpush1.bf16.msra.mxu0 0
      %710 = vmatprep.subr.bf16.mxu0 0
      %711 = vmatpush1.bf16.msra.mxu0 0
      %712 = vmatprep.subr.bf16.mxu0 0
      %713 = vmatpush1.bf16.msra.mxu0 0
      %714 = vmatprep.mubr.bf16.mxu0 0
      %715 = vmatmul.mubr.bf16.gmra.mrb[0].mxu0 %v671
      %v716 = vpop.f32.mrb[0].mxu0
      %v717 = vadd.f32 0.0, %v716
      %v718 = vpop.f32.mrb[0].mxu0
      %v719 = vpop.f32.mrb[0].mxu0
      %v720 = vadd.f32 0.0, %v719
      %v721 = vpop.f32.mrb[0].mxu0
      %722 = vmatprep.mubr.bf16.mxu0 0
      %723 = vmatmul.mubr.bf16.gmra.mrb[0].mxu0 %v674
      %v724 = vpop.f32.mrb[0].mxu0
      %v725 = vadd.f32 0.0, %v724
      %v726 = vpop.f32.mrb[0].mxu0
      %v727 = vpop.f32.mrb[0].mxu0
      %v728 = vadd.f32 0.0, %v727
      %v729 = vpop.f32.mrb[0].mxu0
      %730 = vmatprep.mubr.bf16.mxu0 0
      %731 = vmatmul.mubr.bf16.gmra.mrb[0].mxu0 %v677
      %v732 = vpop.f32.mrb[0].mxu0
      %v733 = vadd.f32 0.0, %v732
      %v734 = vpop.f32.mrb[0].mxu0
      %v735 = vpop.f32.mrb[0].mxu0
      %v736 = vadd.f32 0.0, %v735
      %v737 = vpop.f32.mrb[0].mxu0
      %738 = vmatprep.mubr.bf16.mxu0 0
      %739 = vmatmul.mubr.bf16.gmra.mrb[0].mxu0 %v680
      %v740 = vpop.f32.mrb[0].mxu0
      %v741 = vadd.f32 0.0, %v740
      %v742 = vpop.f32.mrb[0].mxu0
      %v743 = vpop.f32.mrb[0].mxu0
      %v744 = vadd.f32 0.0, %v743
      %v745 = vpop.f32.mrb[0].mxu0
      %746 = vdwg.mxu0
      %v747 = vadd.f32 %v502, %v717
      %v748 = vadd.f32 %v503, %v720
      %v749 = vadd.f32 %v504, %v725
      %v750 = vadd.f32 %v505, %v728
      %v751 = vadd.f32 %v506, %v733
      %v752 = vadd.f32 %v507, %v736
      %v753 = vadd.f32 %v508, %v741
      %v754 = vadd.f32 %v509, %v744
      %s755 = scalar_lea.vmem [#allocation2], 8
      %v756 = vld [vmem:[%s755] sm:$0xf]
      %v757 = vld [vmem:[%s755 + $0x8] sm:$0xf]
      %v758 = vld [vmem:[%s755 + $0x10] sm:$0xf]
      %v759 = vld [vmem:[%s755 + $0x18] sm:$0xf]
      %v760 = vld [vmem:[%s755 + $0x20] sm:$0xf]
      %v761 = vld [vmem:[%s755 + $0x28] sm:$0xf]
      %v762 = vld [vmem:[%s755 + $0x30] sm:$0xf]
      %v763 = vld [vmem:[%s755 + $0x38] sm:$0xf]
      %s764 = scalar_lea.vmem %s2, 32
      %v765 = vld [vmem:[%s764] sm:$0xf]
      %v766 = vld [vmem:[%s764 + $0x4] sm:$0xf]
      %v767 = vld [vmem:[%s764 + $0x8] sm:$0xf]
      %v768 = vld [vmem:[%s764 + $0xc] sm:$0xf]
      %v777 = vunpack.c.l.b16 %v756
      %v778 = vunpack.c.l.b16 %v757
      %v779 = vunpack.c.l.b16 %v758
      %v780 = vunpack.c.l.b16 %v759
      %v781 = vunpack.c.l.b16 %v760
      %v782 = vunpack.c.l.b16 %v761
      %v783 = vunpack.c.l.b16 %v762
      %v784 = vunpack.c.l.b16 %v763
      %v785 = vpack.c.b16 %v778, %v777
      %v786 = vpack.c.b16 %v780, %v779
      %v787 = vpack.c.b16 %v782, %v781
      %v788 = vpack.c.b16 %v784, %v783
      %v793 = vunpack.c.l.b16 %v765
      %v794 = vunpack.c.l.b16 %v766
      %v795 = vunpack.c.l.b16 %v767
      %v796 = vunpack.c.l.b16 %v768
      %v797 = vpack.c.b16 %v794, %v793
      %v798 = vpack.c.b16 %v796, %v795
      %v802 = vsel %vm424, %v785, 0
      %v805 = vsel %vm424, %v786, 0
      %v808 = vsel %vm424, %v787, 0
      %v811 = vsel %vm424, %v788, 0
      %813 = vmatprep.subr.bf16.mxu0 0
      %814 = vmatpush1.bf16.msra.mxu0 %v797
      %815 = vmatprep.subr.bf16.mxu0 0
      %816 = vmatpush1.bf16.msra.mxu0 %v798
      %817 = vmatprep.subr.bf16.mxu0 0
      %818 = vmatpush1.bf16.msra.mxu0 0
      %819 = vmatprep.subr.bf16.mxu0 0
      %820 = vmatpush1.bf16.msra.mxu0 0
      %821 = vmatprep.subr.bf16.mxu0 0
      %822 = vmatpush1.bf16.msra.mxu0 0
      %823 = vmatprep.subr.bf16.mxu0 0
      %824 = vmatpush1.bf16.msra.mxu0 0
      %825 = vmatprep.subr.bf16.mxu0 0
      %826 = vmatpush1.bf16.msra.mxu0 0
      %827 = vmatprep.subr.bf16.mxu0 0
      %828 = vmatpush1.bf16.msra.mxu0 0
      %829 = vmatprep.subr.bf16.mxu0 0
      %830 = vmatpush1.bf16.msra.mxu0 0
      %831 = vmatprep.subr.bf16.mxu0 0
      %832 = vmatpush1.bf16.msra.mxu0 0
      %833 = vmatprep.subr.bf16.mxu0 0
      %834 = vmatpush1.bf16.msra.mxu0 0
      %835 = vmatprep.subr.bf16.mxu0 0
      %836 = vmatpush1.bf16.msra.mxu0 0
      %837 = vmatprep.subr.bf16.mxu0 0
      %838 = vmatpush1.bf16.msra.mxu0 0
      %839 = vmatprep.subr.bf16.mxu0 0
      %840 = vmatpush1.bf16.msra.mxu0 0
      %841 = vmatprep.subr.bf16.mxu0 0
      %842 = vmatpush1.bf16.msra.mxu0 0
      %843 = vmatprep.subr.bf16.mxu0 0
      %844 = vmatpush1.bf16.msra.mxu0 0
      %845 = vmatprep.mubr.bf16.mxu0 0
      %846 = vmatmul.mubr.bf16.gmra.mrb[0].mxu0 %v802
      %v847 = vpop.f32.mrb[0].mxu0
      %v848 = vadd.f32 0.0, %v847
      %v849 = vpop.f32.mrb[0].mxu0
      %v850 = vpop.f32.mrb[0].mxu0
      %v851 = vadd.f32 0.0, %v850
      %v852 = vpop.f32.mrb[0].mxu0
      %853 = vmatprep.mubr.bf16.mxu0 0
      %854 = vmatmul.mubr.bf16.gmra.mrb[0].mxu0 %v805
      %v855 = vpop.f32.mrb[0].mxu0
      %v856 = vadd.f32 0.0, %v855
      %v857 = vpop.f32.mrb[0].mxu0
      %v858 = vpop.f32.mrb[0].mxu0
      %v859 = vadd.f32 0.0, %v858
      %v860 = vpop.f32.mrb[0].mxu0
      %861 = vmatprep.mubr.bf16.mxu0 0
      %862 = vmatmul.mubr.bf16.gmra.mrb[0].mxu0 %v808
      %v863 = vpop.f32.mrb[0].mxu0
      %v864 = vadd.f32 0.0, %v863
      %v865 = vpop.f32.mrb[0].mxu0
      %v866 = vpop.f32.mrb[0].mxu0
      %v867 = vadd.f32 0.0, %v866
      %v868 = vpop.f32.mrb[0].mxu0
      %869 = vmatprep.mubr.bf16.mxu0 0
      %870 = vmatmul.mubr.bf16.gmra.mrb[0].mxu0 %v811
      %v871 = vpop.f32.mrb[0].mxu0
      %v872 = vadd.f32 0.0, %v871
      %v873 = vpop.f32.mrb[0].mxu0
      %v874 = vpop.f32.mrb[0].mxu0
      %v875 = vadd.f32 0.0, %v874
      %v876 = vpop.f32.mrb[0].mxu0
      %877 = vdwg.mxu0
      %v878 = vadd.f32 %v747, %v848
      %v879 = vadd.f32 %v748, %v851
      %v880 = vadd.f32 %v749, %v856
      %v881 = vadd.f32 %v750, %v859
      %v882 = vadd.f32 %v751, %v864
      %v883 = vadd.f32 %v752, %v867
      %v884 = vadd.f32 %v753, %v872
      %v885 = vadd.f32 %v754, %v875
      %v886 = vld [vmem:[%s755] sm:$0xf]
      %v887 = vld [vmem:[%s755 + $0x4] sm:$0x1]
      %v888 = vld [vmem:[%s755 + $0x8] sm:$0xf]
      %v889 = vld [vmem:[%s755 + $0xc] sm:$0x1]
      %v890 = vld [vmem:[%s755 + $0x10] sm:$0xf]
      %v891 = vld [vmem:[%s755 + $0x14] sm:$0x1]
      %v892 = vld [vmem:[%s755 + $0x18] sm:$0xf]
      %v893 = vld [vmem:[%s755 + $0x1c] sm:$0x1]
      %v894 = vld [vmem:[%s755 + $0x20] sm:$0xf]
      %v895 = vld [vmem:[%s755 + $0x24] sm:$0x1]
      %v896 = vld [vmem:[%s755 + $0x28] sm:$0xf]
      %v897 = vld [vmem:[%s755 + $0x2c] sm:$0x1]
      %v898 = vld [vmem:[%s755 + $0x30] sm:$0xf]
      %v899 = vld [vmem:[%s755 + $0x34] sm:$0x1]
      %v900 = vld [vmem:[%s755 + $0x38] sm:$0xf]
      %v901 = vld [vmem:[%s755 + $0x3c] sm:$0x1]
      %v903 = vshrl.u32 %v886, 16
      %v905 = vrot.slane %v903, 4
      %v906 = vshll.u32 %v886, 16
      %v908 = vrot.slane %v906, 5
      %v909 = vor.u32 %v905, %v908
      %v910 = vrot.slane %v909, 4
      %v912 = vshll.u32 %v887, 16
      %v914 = vrot.slane %v912, 5
      %v915 = vsel %vm528, %v910, %v914
      %v917 = vshrl.u32 %v888, 16
      %v919 = vrot.slane %v917, 4
      %v920 = vshll.u32 %v888, 16
      %v922 = vrot.slane %v920, 5
      %v923 = vor.u32 %v919, %v922
      %v924 = vrot.slane %v923, 4
      %v926 = vshll.u32 %v889, 16
      %v928 = vrot.slane %v926, 5
      %v929 = vsel %vm528, %v924, %v928
      %v931 = vshrl.u32 %v890, 16
      %v933 = vrot.slane %v931, 4
      %v934 = vshll.u32 %v890, 16
      %v936 = vrot.slane %v934, 5
      %v937 = vor.u32 %v933, %v936
      %v938 = vrot.slane %v937, 4
      %v940 = vshll.u32 %v891, 16
      %v942 = vrot.slane %v940, 5
      %v943 = vsel %vm528, %v938, %v942
      %v945 = vshrl.u32 %v892, 16
      %v947 = vrot.slane %v945, 4
      %v948 = vshll.u32 %v892, 16
      %v950 = vrot.slane %v948, 5
      %v951 = vor.u32 %v947, %v950
      %v952 = vrot.slane %v951, 4
      %v954 = vshll.u32 %v893, 16
      %v956 = vrot.slane %v954, 5
      %v957 = vsel %vm528, %v952, %v956
      %v959 = vshrl.u32 %v894, 16
      %v961 = vrot.slane %v959, 4
      %v962 = vshll.u32 %v894, 16
      %v964 = vrot.slane %v962, 5
      %v965 = vor.u32 %v961, %v964
      %v966 = vrot.slane %v965, 4
      %v968 = vshll.u32 %v895, 16
      %v970 = vrot.slane %v968, 5
      %v971 = vsel %vm528, %v966, %v970
      %v973 = vshrl.u32 %v896, 16
      %v975 = vrot.slane %v973, 4
      %v976 = vshll.u32 %v896, 16
      %v978 = vrot.slane %v976, 5
      %v979 = vor.u32 %v975, %v978
      %v980 = vrot.slane %v979, 4
      %v982 = vshll.u32 %v897, 16
      %v984 = vrot.slane %v982, 5
      %v985 = vsel %vm528, %v980, %v984
      %v987 = vshrl.u32 %v898, 16
      %v989 = vrot.slane %v987, 4
      %v990 = vshll.u32 %v898, 16
      %v992 = vrot.slane %v990, 5
      %v993 = vor.u32 %v989, %v992
      %v994 = vrot.slane %v993, 4
      %v996 = vshll.u32 %v899, 16
      %v998 = vrot.slane %v996, 5
      %v999 = vsel %vm528, %v994, %v998
      %v1001 = vshrl.u32 %v900, 16
      %v1003 = vrot.slane %v1001, 4
      %v1004 = vshll.u32 %v900, 16
      %v1006 = vrot.slane %v1004, 5
      %v1007 = vor.u32 %v1003, %v1006
      %v1008 = vrot.slane %v1007, 4
      %v1010 = vshll.u32 %v901, 16
      %v1012 = vrot.slane %v1010, 5
      %v1013 = vsel %vm528, %v1008, %v1012
      %s1014 = scalar_lea.vmem %s2, 48
      %v1015 = vld [vmem:[%s1014] sm:$0xf]
      %v1016 = vld [vmem:[%s1014 + $0x4] sm:$0xf]
      %v1017 = vld [vmem:[%s1014 + $0x8] sm:$0xf]
      %v1018 = vld [vmem:[%s1014 + $0xc] sm:$0xf]
      %v1019 = vunpack.c.l.b16 %v915
      %v1020 = vunpack.c.l.b16 %v929
      %v1021 = vunpack.c.l.b16 %v943
      %v1022 = vunpack.c.l.b16 %v957
      %v1023 = vunpack.c.l.b16 %v971
      %v1024 = vunpack.c.l.b16 %v985
      %v1025 = vunpack.c.l.b16 %v999
      %v1026 = vunpack.c.l.b16 %v1013
      %v1027 = vpack.c.b16 %v1020, %v1019
      %v1028 = vpack.c.b16 %v1022, %v1021
      %v1029 = vpack.c.b16 %v1024, %v1023
      %v1030 = vpack.c.b16 %v1026, %v1025
      %v1035 = vunpack.c.l.b16 %v1015
      %v1036 = vunpack.c.l.b16 %v1016
      %v1037 = vunpack.c.l.b16 %v1017
      %v1038 = vunpack.c.l.b16 %v1018
      %v1039 = vpack.c.b16 %v1036, %v1035
      %v1040 = vpack.c.b16 %v1038, %v1037
      %v1044 = vsel %vm424, %v1027, 0
      %v1047 = vsel %vm424, %v1028, 0
      %v1050 = vsel %vm424, %v1029, 0
      %v1053 = vsel %vm424, %v1030, 0
      %1055 = vmatprep.subr.bf16.mxu0 0
      %1056 = vmatpush1.bf16.msra.mxu0 %v1039
      %1057 = vmatprep.subr.bf16.mxu0 0
      %1058 = vmatpush1.bf16.msra.mxu0 %v1040
      %1059 = vmatprep.subr.bf16.mxu0 0
      %1060 = vmatpush1.bf16.msra.mxu0 0
      %1061 = vmatprep.subr.bf16.mxu0 0
      %1062 = vmatpush1.bf16.msra.mxu0 0
      %1063 = vmatprep.subr.bf16.mxu0 0
      %1064 = vmatpush1.bf16.msra.mxu0 0
      %1065 = vmatprep.subr.bf16.mxu0 0
      %1066 = vmatpush1.bf16.msra.mxu0 0
      %1067 = vmatprep.subr.bf16.mxu0 0
      %1068 = vmatpush1.bf16.msra.mxu0 0
      %1069 = vmatprep.subr.bf16.mxu0 0
      %1070 = vmatpush1.bf16.msra.mxu0 0
      %1071 = vmatprep.subr.bf16.mxu0 0
      %1072 = vmatpush1.bf16.msra.mxu0 0
      %1073 = vmatprep.subr.bf16.mxu0 0
      %1074 = vmatpush1.bf16.msra.mxu0 0
      %1075 = vmatprep.subr.bf16.mxu0 0
      %1076 = vmatpush1.bf16.msra.mxu0 0
      %1077 = vmatprep.subr.bf16.mxu0 0
      %1078 = vmatpush1.bf16.msra.mxu0 0
      %1079 = vmatprep.subr.bf16.mxu0 0
      %1080 = vmatpush1.bf16.msra.mxu0 0
      %1081 = vmatprep.subr.bf16.mxu0 0
      %1082 = vmatpush1.bf16.msra.mxu0 0
      %1083 = vmatprep.subr.bf16.mxu0 0
      %1084 = vmatpush1.bf16.msra.mxu0 0
      %1085 = vmatprep.subr.bf16.mxu0 0
      %1086 = vmatpush1.bf16.msra.mxu0 0
      %1087 = vmatprep.mubr.bf16.mxu0 0
      %1088 = vmatmul.mubr.bf16.gmra.mrb[0].mxu0 %v1044
      %v1089 = vpop.f32.mrb[0].mxu0
      %v1090 = vadd.f32 0.0, %v1089
      %v1091 = vpop.f32.mrb[0].mxu0
      %v1092 = vpop.f32.mrb[0].mxu0
      %v1093 = vadd.f32 0.0, %v1092
      %v1094 = vpop.f32.mrb[0].mxu0
      %1095 = vmatprep.mubr.bf16.mxu0 0
      %1096 = vmatmul.mubr.bf16.gmra.mrb[0].mxu0 %v1047
      %v1097 = vpop.f32.mrb[0].mxu0
      %v1098 = vadd.f32 0.0, %v1097
      %v1099 = vpop.f32.mrb[0].mxu0
      %v1100 = vpop.f32.mrb[0].mxu0
      %v1101 = vadd.f32 0.0, %v1100
      %v1102 = vpop.f32.mrb[0].mxu0
      %1103 = vmatprep.mubr.bf16.mxu0 0
      %1104 = vmatmul.mubr.bf16.gmra.mrb[0].mxu0 %v1050
      %v1105 = vpop.f32.mrb[0].mxu0
      %v1106 = vadd.f32 0.0, %v1105
      %v1107 = vpop.f32.mrb[0].mxu0
      %v1108 = vpop.f32.mrb[0].mxu0
      %v1109 = vadd.f32 0.0, %v1108
      %v1110 = vpop.f32.mrb[0].mxu0
      %1111 = vmatprep.mubr.bf16.mxu0 0
      %1112 = vmatmul.mubr.bf16.gmra.mrb[0].mxu0 %v1053
      %v1113 = vpop.f32.mrb[0].mxu0
      %v1114 = vadd.f32 0.0, %v1113
      %v1115 = vpop.f32.mrb[0].mxu0
      %v1116 = vpop.f32.mrb[0].mxu0
      %v1117 = vadd.f32 0.0, %v1116
      %v1118 = vpop.f32.mrb[0].mxu0
      %1119 = vdwg.mxu0
      %v1120 = vadd.f32 %v878, %v1090
      %v1121 = vadd.f32 %v879, %v1093
      %v1122 = vadd.f32 %v880, %v1098
      %v1123 = vadd.f32 %v881, %v1101
      %v1124 = vadd.f32 %v882, %v1106
      %v1125 = vadd.f32 %v883, %v1109
      %v1126 = vadd.f32 %v884, %v1114
      %v1127 = vadd.f32 %v885, %v1117
      %vm1128 = vcmp.ge.f32.partialorder %v1120, 0.0
      %vm1129 = vcmp.ge.f32.partialorder %v1121, 0.0
      %vm1130 = vcmp.ge.f32.partialorder %v1122, 0.0
      %vm1131 = vcmp.ge.f32.partialorder %v1123, 0.0
      %vm1132 = vcmp.ge.f32.partialorder %v1124, 0.0
      %vm1133 = vcmp.ge.f32.partialorder %v1125, 0.0
      %vm1134 = vcmp.ge.f32.partialorder %v1126, 0.0
      %vm1135 = vcmp.ge.f32.partialorder %v1127, 0.0
      %v1136 = vmul.f32 %v1120, 0.2
      %v1137 = vmul.f32 %v1121, 0.2
      %v1138 = vmul.f32 %v1122, 0.2
      %v1139 = vmul.f32 %v1123, 0.2
      %v1140 = vmul.f32 %v1124, 0.2
      %v1141 = vmul.f32 %v1125, 0.2
      %v1142 = vmul.f32 %v1126, 0.2
      %v1143 = vmul.f32 %v1127, 0.2
      %v1144 = vsel %vm1128, %v1120, %v1136
      %v1145 = vsel %vm1129, %v1121, %v1137
      %v1146 = vsel %vm1130, %v1122, %v1138
      %v1147 = vsel %vm1131, %v1123, %v1139
      %v1148 = vsel %vm1132, %v1124, %v1140
      %v1149 = vsel %vm1133, %v1125, %v1141
      %v1150 = vsel %vm1134, %v1126, %v1142
      %v1151 = vsel %vm1135, %v1127, %v1143
      %v1152 = vpack.c.bf16 %v1144, %v1144
      %v1153 = vpack.c.bf16 %v1145, %v1145
      %v1154 = vpack.c.bf16 %v1146, %v1146
      %v1155 = vpack.c.bf16 %v1147, %v1147
      %v1156 = vpack.c.bf16 %v1148, %v1148
      %v1157 = vpack.c.bf16 %v1149, %v1149
      %v1158 = vpack.c.bf16 %v1150, %v1150
      %v1159 = vpack.c.bf16 %v1151, %v1151
      %vm1160 = vcmask 125952
      %1161 = vst.msk [vmem:[%s311] sm:$0xf] %vm1160, %v1152
      %1162 = vst.msk [vmem:[%s311 + $0x4] sm:$0xf] %vm1160, %v1153
      %1163 = vst.msk [vmem:[%s311 + $0x8] sm:$0xf] %vm1160, %v1154
      %1164 = vst.msk [vmem:[%s311 + $0xc] sm:$0xf] %vm1160, %v1155
      %1165 = vst.msk [vmem:[%s311 + $0x10] sm:$0xf] %vm1160, %v1156
      %1166 = vst.msk [vmem:[%s311 + $0x14] sm:$0xf] %vm1160, %v1157
      %1167 = vst.msk [vmem:[%s311 + $0x18] sm:$0xf] %vm1160, %v1158
      %1168 = vst.msk [vmem:[%s311 + $0x1c] sm:$0xf] %vm1160, %v1159
      %s1169 = smul.u32 8, %s20
      %p1170 = scmp.lt.s32.totalorder %s19, 1
      %s1171 = scalar_select %p1170, %s19, 1
      %p1172 = scmp.lt.s32.totalorder %s1169, 7
      %s1173 = scalar_select %p1172, %s1169, 7
      %s1174 = smul.addr %s1171, 8
      %s1175 = sadd.s32 %s1173, %s1174
      %s1176 = smul.addr %s1175, 4
      %s1177 = scalar_lea.vmem %s4, %s1176
      // Predicated region
      $region37: #{fc_discriminator.6} parent=35 // pred_check
        %p1178 = pneg %p149
      $region38: #{fc_discriminator.6} parent=35 // pred_check_branch
        %1180 = sbr.rel (%p1178) target = $region40
      $region39: #{fc_discriminator.6} parent=35 // pred_region
        %s1181 = smul.u32 8, %s20
      $region40: #{fc_discriminator.6} parent=35 // pred_fallthru
        _
    $region36: #{fc_discriminator.6} parent=5 // pred_fallthru
      _
    %p1182 = scmp.le.s32.totalorder 2, %s10
    // Predicated region
    $region41: #{fc_discriminator.6} parent=5 // pred_check
      %p1183 = pneg %p1182
    $region42: #{fc_discriminator.6} parent=5 // pred_check_branch
      %1185 = sbr.rel (%p1183) target = $region44
    $region43: #{fc_discriminator.6} parent=5 // pred_region
      %s1186 = ssub.s32 %s10, 2
      // Predicated region
      $region45: #{fc_discriminator.6} parent=43 // pred_check
        %p1187 = pneg %p155
      $region46: #{fc_discriminator.6} parent=43 // pred_check_branch
        %1189 = sbr.rel (%p1187) target = $region48
      $region47: #{fc_discriminator.6} parent=43 // pred_region
        %s1190 = smul.u32 8, %s22
        %p1191 = scmp.lt.s32.totalorder %s21, 1
        %s1192 = scalar_select %p1191, %s21, 1
        %p1193 = scmp.lt.s32.totalorder %s1190, 7
        %s1194 = scalar_select %p1193, %s1190, 7
        %s1195 = smul.addr %s1192, 8
        %s1196 = sadd.s32 %s1194, %s1195
        %s1197 = smul.addr %s1196, 4
        %s1198 = scalar_lea.vmem %s4, %s1197
      $region48: #{fc_discriminator.6} parent=43 // pred_fallthru
        _
    $region44: #{fc_discriminator.6} parent=5 // pred_fallthru
      _
  $region6: #{fc_discriminator.6} parent=0 // loop_footer
    %s14 = sadd.s32 1, %s10
  $region7: #{fc_discriminator.6} parent=0 // loop_footer_branch
    %9 = sbr.rel target = $region3
  $region8: #{fc_discriminator.6} parent=0 // loop_exit
    _

// kernel: fc_discriminator.7
$region0: #{fc_discriminator.7}
  #allocation0 [shape = 'u32[]', space=smem, size = 0x4, offset = 0x4, fixed_abs, tag = 'smem constant byte address 0x4 - core index']
  #allocation1 [shape = 'u32[144,128]{1,0:T(1,128)}', space=vmem, size = 0x12000, scoped, tag = 'internal scratch']
  #allocation2 [shape = 'bf16[5,9,64]{2,1,0:T(8,128)(2,1)}', space=vmem, size = 0x5000, scoped, tag = 'scratch operand']
  %s0 = inlined_call_operand.vmem [shape: bf16[2,5,9,64], index: 0, kind: input, shape index: {}, may-alias: {0,1}]
  %s1 = inlined_call_operand.vmem [shape: bf16[2,5,9,64], index: 1, kind: input, shape index: {}, may-alias: {0,1}]
  %s2 = inlined_call_operand.vmem [shape: bf16[4,64,32], index: 2, kind: input, shape index: {}]
  %s3 = inlined_call_operand.vmem [shape: f32[1,32], index: 3, kind: input, shape index: {}]
  %s4 = inlined_call_operand.vmem [shape: bf16[2,4,8,32], index: 4, kind: output, shape index: {}]
  %s5 = sld [smem:[#allocation0]]
  $region49: #{fc_discriminator.7} parent=0
    _
  %s7 = ssub.s32 1, %s5
  %s8 = scalar_select 0, %s7, %s5
  loop: start=0, step=1, limit=4
  $region2: #{fc_discriminator.7} parent=0 // loop_pre_header
    _
  $region3: #{fc_discriminator.7} parent=0 // loop_header
    %s10 = sphi 0, %s14
    %p11 = scmp.ge.s32.totalorder %s10, 4
    %s17 = sphi 0, %s29
    %s18 = sphi 0, %s25
    %s19 = sphi 0, %s17
    %s20 = sphi 0, %s18
    %s21 = sphi 0, %s19
    %s22 = sphi 0, %s20
    %s34 = sphi 0, %s36
    %s37 = sphi 0, %s34
    %s38 = sphi 0, %s37
    %s54 = sphi 0, %s38
    %s66 = sphi 0, %s68
    %s69 = sphi 0, %s66
    %s70 = sphi 0, %s69
    %s86 = sphi 0, %s70
    %s90 = sphi 0, %s90
    %s92 = sphi 0, %s90
    %s93 = sphi 0, %s92
    %s107 = sphi 0, %s93
    %s111 = sphi 0, %s111
    %s113 = sphi 0, %s111
    %s114 = sphi 0, %s113
    %s128 = sphi 0, %s114
    %s136 = sphi 0, %s138
    %s139 = sphi 0, %s136
    %s140 = sphi 0, %s139
    %s156 = sphi 0, %s140
  $region4: #{fc_discriminator.7} parent=0 // loop_header_branch
    %13 = sbr.rel (%p11) target = $region8
  $region5: #{fc_discriminator.7} parent=0 // loop_body
    %s15 = ssub.s32 %s10, 1
    %s16 = ssub.s32 %s10, 2
    %s23 = sadd.s32 1, %s18
    %p24 = scmp.ge.s32.totalorder %s23, 1
    %s25 = scalar_select %p24, 0, %s23
    %s26 = sadd.s32 1, %s17
    %s27 = scalar_select %p24, %s26, %s17
    %p28 = scmp.ge.s32.totalorder %s27, 2
    %s29 = scalar_select %p28, 0, %s27
    %s30 = ssub.s32 %s17, %s29
    %s31 = ssub.s32 %s18, %s25
    %s32 = sor.u32 %s30, %s31
    %p33 = scmp.eq.s32.totalorder %s32, 0
    %s35 = sadd.s32 %s34, 1
    %s36 = scalar_select %p33, %s34, %s35
    %p39 = pneg %p33
    %p40 = scmp.eq.s32.totalorder %s10, 1
    %p41 = por %p39, %p40
    %p42 = scmp.ne.s32.totalorder %s34, %s37
    %p43 = scmp.eq.s32.totalorder %s10, 0
    %p44 = por %p42, %p43
    %p45 = scmp.ne.s32.totalorder %s34, %s37
    %p46 = scmp.eq.s32.totalorder %s15, 1
    %p47 = por %p45, %p46
    %p48 = scmp.ne.s32.totalorder %s37, %s38
    %p49 = scmp.eq.s32.totalorder %s15, 0
    %p50 = por %p48, %p49
    %p51 = scmp.ne.s32.totalorder %s37, %s38
    %p52 = scmp.eq.s32.totalorder %s16, 1
    %p53 = por %p51, %p52
    %p55 = scmp.ne.s32.totalorder %s38, %s54
    %p56 = scmp.eq.s32.totalorder %s16, 0
    %p57 = por %p55, %p56
    %s58 = sadd.s32 %s18, 1
    %s59 = smul.u32 %s58, 4
    %s60 = sadd.s32 %s25, 1
    %s61 = smul.u32 %s60, 4
    %s62 = ssub.s32 %s17, %s29
    %s63 = ssub.s32 %s59, %s61
    %s64 = sor.u32 %s62, %s63
    %p65 = scmp.eq.s32.totalorder %s64, 0
    %s67 = sadd.s32 %s66, 1
    %s68 = scalar_select %p65, %s66, %s67
    %p71 = pneg %p65
    %p72 = scmp.eq.s32.totalorder %s10, 1
    %p73 = por %p71, %p72
    %p74 = scmp.ne.s32.totalorder %s66, %s69
    %p75 = scmp.eq.s32.totalorder %s10, 0
    %p76 = por %p74, %p75
    %p77 = scmp.ne.s32.totalorder %s66, %s69
    %p78 = scmp.eq.s32.totalorder %s15, 1
    %p79 = por %p77, %p78
    %p80 = scmp.ne.s32.totalorder %s69, %s70
    %p81 = scmp.eq.s32.totalorder %s15, 0
    %p82 = por %p80, %p81
    %p83 = scmp.ne.s32.totalorder %s69, %s70
    %p84 = scmp.eq.s32.totalorder %s16, 1
    %p85 = por %p83, %p84
    %p87 = scmp.ne.s32.totalorder %s70, %s86
    %p88 = scmp.eq.s32.totalorder %s16, 0
    %p89 = por %p87, %p88
    %s91 = sadd.s32 %s90, 1
    %p94 = scmp.eq.s32.totalorder %s10, 1
    %p95 = scmp.ne.s32.totalorder %s90, %s92
    %p96 = scmp.eq.s32.totalorder %s10, 0
    %p97 = por %p95, %p96
    %p98 = scmp.ne.s32.totalorder %s90, %s92
    %p99 = scmp.eq.s32.totalorder %s15, 1
    %p100 = por %p98, %p99
    %p101 = scmp.ne.s32.totalorder %s92, %s93
    %p102 = scmp.eq.s32.totalorder %s15, 0
    %p103 = por %p101, %p102
    %p104 = scmp.ne.s32.totalorder %s92, %s93
    %p105 = scmp.eq.s32.totalorder %s16, 1
    %p106 = por %p104, %p105
    %p108 = scmp.ne.s32.totalorder %s93, %s107
    %p109 = scmp.eq.s32.totalorder %s16, 0
    %p110 = por %p108, %p109
    %s112 = sadd.s32 %s111, 1
    %p115 = scmp.eq.s32.totalorder %s10, 1
    %p116 = scmp.ne.s32.totalorder %s111, %s113
    %p117 = scmp.eq.s32.totalorder %s10, 0
    %p118 = por %p116, %p117
    %p119 = scmp.ne.s32.totalorder %s111, %s113
    %p120 = scmp.eq.s32.totalorder %s15, 1
    %p121 = por %p119, %p120
    %p122 = scmp.ne.s32.totalorder %s113, %s114
    %p123 = scmp.eq.s32.totalorder %s15, 0
    %p124 = por %p122, %p123
    %p125 = scmp.ne.s32.totalorder %s113, %s114
    %p126 = scmp.eq.s32.totalorder %s16, 1
    %p127 = por %p125, %p126
    %p129 = scmp.ne.s32.totalorder %s114, %s128
    %p130 = scmp.eq.s32.totalorder %s16, 0
    %p131 = por %p129, %p130
    %s132 = ssub.s32 %s17, %s29
    %s133 = ssub.s32 %s18, %s25
    %s134 = sor.u32 %s132, %s133
    %p135 = scmp.eq.s32.totalorder %s134, 0
    %s137 = sadd.s32 %s136, 1
    %s138 = scalar_select %p135, %s136, %s137
    %p141 = pneg %p135
    %p142 = scmp.eq.s32.totalorder %s10, 1
    %p143 = por %p141, %p142
    %p144 = scmp.ne.s32.totalorder %s136, %s139
    %p145 = scmp.eq.s32.totalorder %s10, 0
    %p146 = por %p144, %p145
    %p147 = scmp.ne.s32.totalorder %s136, %s139
    %p148 = scmp.eq.s32.totalorder %s15, 1
    %p149 = por %p147, %p148
    %p150 = scmp.ne.s32.totalorder %s139, %s140
    %p151 = scmp.eq.s32.totalorder %s15, 0
    %p152 = por %p150, %p151
    %p153 = scmp.ne.s32.totalorder %s139, %s140
    %p154 = scmp.eq.s32.totalorder %s16, 1
    %p155 = por %p153, %p154
    %p157 = scmp.ne.s32.totalorder %s140, %s156
    %p158 = scmp.eq.s32.totalorder %s16, 0
    %p159 = por %p157, %p158
    %p160 = scmp.le.s32.totalorder 1, %s10
    %p161 = scmp.lt.s32.totalorder %s10, 3
    %p162 = pnand %p160, %p161
    %p163 = pneg %p162
    // Predicated region
    $region9: #{fc_discriminator.7} parent=5 // pred_check
      _
    $region10: #{fc_discriminator.7} parent=5 // pred_check_branch
      %165 = sbr.rel (%p162) target = $region12
    $region11: #{fc_discriminator.7} parent=5 // pred_region
      %s166 = ssub.s32 %s10, 1
      // Predicated region
      $region13: #{fc_discriminator.7} parent=11 // pred_check
        %p167 = pneg %p103
      $region14: #{fc_discriminator.7} parent=11 // pred_check_branch
        %169 = sbr.rel (%p167) target = $region16
      $region15: #{fc_discriminator.7} parent=11 // pred_region
        _
      $region16: #{fc_discriminator.7} parent=11 // pred_fallthru
        _
      // Predicated region
      $region17: #{fc_discriminator.7} parent=11 // pred_check
        %p170 = pneg %p124
      $region18: #{fc_discriminator.7} parent=11 // pred_check_branch
        %172 = sbr.rel (%p170) target = $region20
      $region19: #{fc_discriminator.7} parent=11 // pred_region
        _
      $region20: #{fc_discriminator.7} parent=11 // pred_fallthru
        _
    $region12: #{fc_discriminator.7} parent=5 // pred_fallthru
      _
    %p173 = scmp.lt.s32.totalorder %s10, 2
    // Predicated region
    $region21: #{fc_discriminator.7} parent=5 // pred_check
      %p174 = pneg %p173
    $region22: #{fc_discriminator.7} parent=5 // pred_check_branch
      %176 = sbr.rel (%p174) target = $region24
    $region23: #{fc_discriminator.7} parent=5 // pred_region
      // Predicated region
      $region25: #{fc_discriminator.7} parent=23 // pred_check
        %p177 = pneg %p44
      $region26: #{fc_discriminator.7} parent=23 // pred_check_branch
        %179 = sbr.rel (%p177) target = $region28
      $region27: #{fc_discriminator.7} parent=23 // pred_region
        %s180 = smul.u32 4, %s18
        %s181 = ssub.s32 5, %s180
        %p182 = scmp.lt.s32.totalorder %s181, 4
        %s183 = scalar_select %p182, %s181, 4
        %s184 = smul.u32 64, %s183
        %s185 = smul.u32 %s184, 2
        %p186 = scmp.lt.s32.totalorder %s17, 1
        %s187 = scalar_select %p186, %s17, 1
        %p188 = scmp.lt.s32.totalorder %s180, 4
        %s189 = scalar_select %p188, %s180, 4
        %s190 = smul.addr %s189, 2
        %s191 = smul.addr %s187, 10
        %s192 = sadd.s32 %s190, %s191
        %s193 = smul.addr %s192, 4
        %s194 = scalar_lea.vmem %s0, %s193
        %s195 = smul.u32 4, %s18
        %s196 = ssub.s32 5, %s195
        %p197 = scmp.lt.s32.totalorder %s196, 4
        %s198 = scalar_select %p197, %s196, 4
        %s199 = smul.u32 64, %s198
        %s200 = smul.u32 %s199, 2
      $region28: #{fc_discriminator.7} parent=23 // pred_fallthru
        _
      // Predicated region
      $region29: #{fc_discriminator.7} parent=23 // pred_check
        %p201 = pneg %p76
      $region30: #{fc_discriminator.7} parent=23 // pred_check_branch
        %203 = sbr.rel (%p201) target = $region32
      $region31: #{fc_discriminator.7} parent=23 // pred_region
        %s204 = sadd.s32 %s18, 1
        %s205 = smul.u32 %s204, 4
        %p206 = scmp.lt.s32.totalorder %s17, 1
        %s207 = scalar_select %p206, %s17, 1
        %p208 = scmp.lt.s32.totalorder %s205, 4
        %s209 = scalar_select %p208, %s205, 4
        %s210 = smul.addr %s209, 2
        %s211 = smul.addr %s207, 10
        %s212 = sadd.s32 %s210, %s211
        %s213 = smul.addr %s212, 4
        %s214 = scalar_lea.vmem %s1, %s213
        %s215 = sadd.s32 %s18, 1
        %s216 = smul.u32 %s215, 4
      $region32: #{fc_discriminator.7} parent=23 // pred_fallthru
        _
    $region24: #{fc_discriminator.7} parent=5 // pred_fallthru
      _
    %p217 = scmp.le.s32.totalorder 1, %s10
    %p218 = scmp.lt.s32.totalorder %s10, 3
    %p219 = pnand %p217, %p218
    %p220 = pneg %p219
    // Predicated region
    $region33: #{fc_discriminator.7} parent=5 // pred_check
      _
    $region34: #{fc_discriminator.7} parent=5 // pred_check_branch
      %222 = sbr.rel (%p219) target = $region36
    $region35: #{fc_discriminator.7} parent=5 // pred_region
      %s223 = ssub.s32 %s10, 1
      %s224 = smul.u32 4, %s20
      %s225 = ssub.s32 5, %s224
      %p226 = scmp.lt.s32.totalorder %s225, 4
      %s227 = scalar_select %p226, %s225, 4
      %s228 = smul.u32 64, %s227
      %s229 = smul.u32 %s228, 2
      %p230 = scmp.lt.s32.totalorder %s19, 1
      %s231 = scalar_select %p230, %s19, 1
      %p232 = scmp.lt.s32.totalorder %s224, 4
      %s233 = scalar_select %p232, %s224, 4
      %s234 = smul.addr %s233, 2
      %s235 = smul.addr %s231, 10
      %s236 = sadd.s32 %s234, %s235
      %s237 = smul.addr %s236, 4
      %s238 = scalar_lea.vmem %s0, %s237
      %p239 = pneg %p50
      %p240 = pneg %p47
      %s241 = sadd.s32 %s20, 1
      %s242 = smul.u32 %s241, 4
      %p243 = scmp.lt.s32.totalorder %s19, 1
      %s244 = scalar_select %p243, %s19, 1
      %p245 = scmp.lt.s32.totalorder %s242, 4
      %s246 = scalar_select %p245, %s242, 4
      %s247 = smul.addr %s246, 2
      %s248 = smul.addr %s244, 10
      %s249 = sadd.s32 %s247, %s248
      %s250 = smul.addr %s249, 4
      %s251 = scalar_lea.vmem %s1, %s250
      %p252 = pneg %p82
      %p253 = pneg %p79
      %p254 = pneg %p103
      %p255 = pneg %p100
      %p256 = pneg %p124
      %p257 = pneg %p121
      %p258 = pneg %p152
      %p259 = pneg %p149
      %s260 = smul.u32 4, %s20
      %p261 = scmp.lt.s32.totalorder %s19, 1
      %s262 = scalar_select %p261, %s19, 1
      %p263 = scmp.lt.s32.totalorder %s260, 3
      %s264 = scalar_select %p263, %s260, 3
      %s265 = smul.addr %s262, 4
      %s266 = sadd.s32 %s264, %s265
      %s267 = smul.addr %s266, 4
      %s268 = scalar_lea.vmem %s4, %s267
      %s269 = smul.u32 4, %s20
      %s270 = ssub.s32 5, %s269
      %p271 = scmp.lt.s32.totalorder %s270, 4
      %s272 = scalar_select %p271, %s270, 4
      %s273 = smul.u32 64, %s272
      %s274 = smul.u32 %s273, 2
      %p275 = scmp.lt.s32.totalorder %s19, 1
      %s276 = scalar_select %p275, %s19, 1
      %p277 = scmp.lt.s32.totalorder %s269, 4
      %s278 = scalar_select %p277, %s269, 4
      %s279 = smul.addr %s278, 2
      %s280 = smul.addr %s276, 10
      %s281 = sadd.s32 %s279, %s280
      %s282 = smul.addr %s281, 4
      %s283 = scalar_lea.vmem %s0, %s282
      %s284 = smul.u32 4, %s20
      %s285 = ssub.s32 5, %s284
      %p286 = scmp.lt.s32.totalorder %s285, 4
      %s287 = scalar_select %p286, %s285, 4
      %s288 = smul.u32 64, %s287
      %s289 = smul.u32 %s288, 2
      %s290 = sadd.s32 %s20, 1
      %s291 = smul.u32 %s290, 4
      %p292 = scmp.lt.s32.totalorder %s19, 1
      %s293 = scalar_select %p292, %s19, 1
      %p294 = scmp.lt.s32.totalorder %s291, 4
      %s295 = scalar_select %p294, %s291, 4
      %s296 = smul.addr %s295, 2
      %s297 = smul.addr %s293, 10
      %s298 = sadd.s32 %s296, %s297
      %s299 = smul.addr %s298, 4
      %s300 = scalar_lea.vmem %s1, %s299
      %s301 = sadd.s32 %s20, 1
      %s302 = smul.u32 %s301, 4
      %s303 = smul.u32 4, %s20
      %p304 = scmp.lt.s32.totalorder %s19, 1
      %s305 = scalar_select %p304, %s19, 1
      %p306 = scmp.lt.s32.totalorder %s303, 3
      %s307 = scalar_select %p306, %s303, 3
      %s308 = smul.addr %s305, 4
      %s309 = sadd.s32 %s307, %s308
      %s310 = smul.addr %s309, 4
      %s311 = scalar_lea.vmem %s4, %s310
      %s312 = smul.u32 4, %s20
      %v314 = vld [vmem:[%s283] sm:$0xf]
      %v315 = vld [vmem:[%s283 + $0x4] sm:$0x1]
      %v316 = vld [vmem:[%s283 + $0x8] sm:$0xf]
      %v317 = vld [vmem:[%s283 + $0xc] sm:$0x1]
      %v318 = vld [vmem:[%s283 + $0x10] sm:$0xf]
      %v319 = vld [vmem:[%s283 + $0x14] sm:$0x1]
      %v320 = vld [vmem:[%s283 + $0x18] sm:$0xf]
      %v321 = vld [vmem:[%s283 + $0x1c] sm:$0x1]
      %vm322 = vcmask 519168
      %323 = vst.msk [vmem:[#allocation2] sm:$0xf] %vm322, %v314
      %vm324 = vcmask 516096
      %vm325 = vsmask.f32 256
      %vm326 = vmand %vm324, %vm325
      %v327 = vld [vmem:[#allocation2 + $0x4] sm:$0x1]
      %v328 = vsel %vm326, %v315, %v327
      %329 = vst [vmem:[#allocation2 + $0x4] sm:$0x1] %v328
      %330 = vst.msk [vmem:[#allocation2 + $0x8] sm:$0xf] %vm322, %v316
      %v331 = vld [vmem:[#allocation2 + $0xc] sm:$0x1]
      %v332 = vsel %vm326, %v317, %v331
      %333 = vst [vmem:[#allocation2 + $0xc] sm:$0x1] %v332
      %334 = vst.msk [vmem:[#allocation2 + $0x10] sm:$0xf] %vm322, %v318
      %v335 = vld [vmem:[#allocation2 + $0x14] sm:$0x1]
      %v336 = vsel %vm326, %v319, %v335
      %337 = vst [vmem:[#allocation2 + $0x14] sm:$0x1] %v336
      %338 = vst.msk [vmem:[#allocation2 + $0x18] sm:$0xf] %vm322, %v320
      %v339 = vld [vmem:[#allocation2 + $0x1c] sm:$0x1]
      %v340 = vsel %vm326, %v321, %v339
      %341 = vst [vmem:[#allocation2 + $0x1c] sm:$0x1] %v340
      %v342 = vld [vmem:[%s300] sm:$0xf]
      %v343 = vld [vmem:[%s300 + $0x4] sm:$0x1]
      %s344 = scalar_lea.vmem [#allocation2], 32
      %345 = vst.msk [vmem:[%s344] sm:$0xf] %vm322, %v342
      %v346 = vld [vmem:[%s344 + $0x4] sm:$0x1]
      %v347 = vsel %vm326, %v343, %v346
      %348 = vst [vmem:[%s344 + $0x4] sm:$0x1] %v347
      %v349 = vld [vmem:[%s3] sm:$0x1]
      %v351 = vlaneseq
      %v352 = vshrl.u32 %v351, 7
      %v353 = vsub.s32 0, %v352
      %v354 = vrot.slane %v349, %v353
      %v356 = vld [vmem:[#allocation2] sm:$0xf]
      %v357 = vld [vmem:[#allocation2 + $0x8] sm:$0xf]
      %v358 = vld [vmem:[#allocation2 + $0x10] sm:$0xf]
      %v359 = vld [vmem:[#allocation2 + $0x18] sm:$0xf]
      %v360 = vld [vmem:[%s2] sm:$0xf]
      %v361 = vld [vmem:[%s2 + $0x4] sm:$0xf]
      %v362 = vld [vmem:[%s2 + $0x8] sm:$0xf]
      %v363 = vld [vmem:[%s2 + $0xc] sm:$0xf]
      %v364 = vld [vmem:[%s2 + $0x10] sm:$0xf]
      %v365 = vld [vmem:[%s2 + $0x14] sm:$0xf]
      %v366 = vld [vmem:[%s2 + $0x18] sm:$0xf]
      %v367 = vld [vmem:[%s2 + $0x1c] sm:$0xf]
      %v372 = vunpack.c.l.b16 %v356
      %v373 = vunpack.c.l.b16 %v357
      %v374 = vunpack.c.l.b16 %v358
      %v375 = vunpack.c.l.b16 %v359
      %v376 = vpack.c.b16 %v373, %v372
      %v377 = vpack.c.b16 %v375, %v374
      %v386 = vunpack.c.l.b16 %v360
      %v387 = vunpack.c.l.b16 %v361
      %v388 = vunpack.c.l.b16 %v362
      %v389 = vunpack.c.l.b16 %v363
      %v390 = vunpack.c.l.b16 %v364
      %v391 = vunpack.c.l.b16 %v365
      %v392 = vunpack.c.l.b16 %v366
      %v393 = vunpack.c.l.b16 %v367
      %v394 = vpack.c.b16 %v387, %v386
      %v395 = vpack.c.b16 %v389, %v388
      %v396 = vpack.c.b16 %v391, %v390
      %v397 = vpack.c.b16 %v393, %v392
      %vm402 = vcmask 523264
      %v404 = vsel %vm402, %v376, 0
      %v407 = vsel %vm402, %v377, 0
      %409 = vmatprep.subr.bf16.mxu0 0
      %410 = vmatpush1.bf16.msra.mxu0 %v394
      %411 = vmatprep.subr.bf16.mxu0 0
      %412 = vmatpush1.bf16.msra.mxu0 %v395
      %413 = vmatprep.subr.bf16.mxu0 0
      %414 = vmatpush1.bf16.msra.mxu0 %v396
      %415 = vmatprep.subr.bf16.mxu0 0
      %416 = vmatpush1.bf16.msra.mxu0 %v397
      %417 = vmatprep.subr.bf16.mxu0 0
      %418 = vmatpush1.bf16.msra.mxu0 0
      %419 = vmatprep.subr.bf16.mxu0 0
      %420 = vmatpush1.bf16.msra.mxu0 0
      %421 = vmatprep.subr.bf16.mxu0 0
      %422 = vmatpush1.bf16.msra.mxu0 0
      %423 = vmatprep.subr.bf16.mxu0 0
      %424 = vmatpush1.bf16.msra.mxu0 0
      %425 = vmatprep.subr.bf16.mxu0 0
      %426 = vmatpush1.bf16.msra.mxu0 0
      %427 = vmatprep.subr.bf16.mxu0 0
      %428 = vmatpush1.bf16.msra.mxu0 0
      %429 = vmatprep.subr.bf16.mxu0 0
      %430 = vmatpush1.bf16.msra.mxu0 0
      %431 = vmatprep.subr.bf16.mxu0 0
      %432 = vmatpush1.bf16.msra.mxu0 0
      %433 = vmatprep.subr.bf16.mxu0 0
      %434 = vmatpush1.bf16.msra.mxu0 0
      %435 = vmatprep.subr.bf16.mxu0 0
      %436 = vmatpush1.bf16.msra.mxu0 0
      %437 = vmatprep.subr.bf16.mxu0 0
      %438 = vmatpush1.bf16.msra.mxu0 0
      %439 = vmatprep.subr.bf16.mxu0 0
      %440 = vmatpush1.bf16.msra.mxu0 0
      %441 = vmatprep.mubr.bf16.mxu0 0
      %442 = vmatmul.mubr.bf16.gmra.mrb[0].mxu0 %v404
      %v443 = vpop.f32.mrb[0].mxu0
      %v444 = vadd.f32 0.0, %v443
      %v445 = vpop.f32.mrb[0].mxu0
      %v446 = vpop.f32.mrb[0].mxu0
      %v447 = vadd.f32 0.0, %v446
      %v448 = vpop.f32.mrb[0].mxu0
      %449 = vmatprep.mubr.bf16.mxu0 0
      %450 = vmatmul.mubr.bf16.gmra.mrb[0].mxu0 %v407
      %v451 = vpop.f32.mrb[0].mxu0
      %v452 = vadd.f32 0.0, %v451
      %v453 = vpop.f32.mrb[0].mxu0
      %v454 = vpop.f32.mrb[0].mxu0
      %v455 = vadd.f32 0.0, %v454
      %v456 = vpop.f32.mrb[0].mxu0
      %457 = vdwg.mxu0
      %v458 = vadd.f32 %v354, %v444
      %v459 = vadd.f32 %v354, %v447
      %v460 = vadd.f32 %v354, %v452
      %v461 = vadd.f32 %v354, %v455
      %v462 = vld [vmem:[#allocation2] sm:$0xf]
      %v463 = vld [vmem:[#allocation2 + $0x4] sm:$0x1]
      %v464 = vld [vmem:[#allocation2 + $0x8] sm:$0xf]
      %v465 = vld [vmem:[#allocation2 + $0xc] sm:$0x1]
      %v466 = vld [vmem:[#allocation2 + $0x10] sm:$0xf]
      %v467 = vld [vmem:[#allocation2 + $0x14] sm:$0x1]
      %v468 = vld [vmem:[#allocation2 + $0x18] sm:$0xf]
      %v469 = vld [vmem:[#allocation2 + $0x1c] sm:$0x1]
      %vm470 = vsmask.f32 3328
      %vm471 = vsmask.f32 7440
      %vm472 = vmor %vm470, %vm471
      %v474 = vshrl.u32 %v462, 16
      %v476 = vrot.slane %v474, 4
      %v477 = vshll.u32 %v462, 16
      %v479 = vrot.slane %v477, 5
      %v480 = vor.u32 %v476, %v479
      %v481 = vrot.slane %v480, 4
      %v483 = vshll.u32 %v463, 16
      %v485 = vrot.slane %v483, 5
      %v486 = vsel %vm472, %v481, %v485
      %v488 = vshrl.u32 %v464, 16
      %v490 = vrot.slane %v488, 4
      %v491 = vshll.u32 %v464, 16
      %v493 = vrot.slane %v491, 5
      %v494 = vor.u32 %v490, %v493
      %v495 = vrot.slane %v494, 4
      %v497 = vshll.u32 %v465, 16
      %v499 = vrot.slane %v497, 5
      %v500 = vsel %vm472, %v495, %v499
      %v502 = vshrl.u32 %v466, 16
      %v504 = vrot.slane %v502, 4
      %v505 = vshll.u32 %v466, 16
      %v507 = vrot.slane %v505, 5
      %v508 = vor.u32 %v504, %v507
      %v509 = vrot.slane %v508, 4
      %v511 = vshll.u32 %v467, 16
      %v513 = vrot.slane %v511, 5
      %v514 = vsel %vm472, %v509, %v513
      %v516 = vshrl.u32 %v468, 16
      %v518 = vrot.slane %v516, 4
      %v519 = vshll.u32 %v468, 16
      %v521 = vrot.slane %v519, 5
      %v522 = vor.u32 %v518, %v521
      %v523 = vrot.slane %v522, 4
      %v525 = vshll.u32 %v469, 16
      %v527 = vrot.slane %v525, 5
      %v528 = vsel %vm472, %v523, %v527
      %s529 = scalar_lea.vmem %s2, 32
      %v530 = vld [vmem:[%s529] sm:$0xf]
      %v531 = vld [vmem:[%s529 + $0x4] sm:$0xf]
      %v532 = vld [vmem:[%s529 + $0x8] sm:$0xf]
      %v533 = vld [vmem:[%s529 + $0xc] sm:$0xf]
      %v534 = vld [vmem:[%s529 + $0x10] sm:$0xf]
      %v535 = vld [vmem:[%s529 + $0x14] sm:$0xf]
      %v536 = vld [vmem:[%s529 + $0x18] sm:$0xf]
      %v537 = vld [vmem:[%s529 + $0x1c] sm:$0xf]
      %v538 = vunpack.c.l.b16 %v486
      %v539 = vunpack.c.l.b16 %v500
      %v540 = vunpack.c.l.b16 %v514
      %v541 = vunpack.c.l.b16 %v528
      %v542 = vpack.c.b16 %v539, %v538
      %v543 = vpack.c.b16 %v541, %v540
      %v552 = vunpack.c.l.b16 %v530
      %v553 = vunpack.c.l.b16 %v531
      %v554 = vunpack.c.l.b16 %v532
      %v555 = vunpack.c.l.b16 %v533
      %v556 = vunpack.c.l.b16 %v534
      %v557 = vunpack.c.l.b16 %v535
      %v558 = vunpack.c.l.b16 %v536
      %v559 = vunpack.c.l.b16 %v537
      %v560 = vpack.c.b16 %v553, %v552
      %v561 = vpack.c.b16 %v555, %v554
      %v562 = vpack.c.b16 %v557, %v556
      %v563 = vpack.c.b16 %v559, %v558
      %v569 = vsel %vm402, %v542, 0
      %v572 = vsel %vm402, %v543, 0
      %574 = vmatprep.subr.bf16.mxu0 0
      %575 = vmatpush1.bf16.msra.mxu0 %v560
      %576 = vmatprep.subr.bf16.mxu0 0
      %577 = vmatpush1.bf16.msra.mxu0 %v561
      %578 = vmatprep.subr.bf16.mxu0 0
      %579 = vmatpush1.bf16.msra.mxu0 %v562
      %580 = vmatprep.subr.bf16.mxu0 0
      %581 = vmatpush1.bf16.msra.mxu0 %v563
      %582 = vmatprep.subr.bf16.mxu0 0
      %583 = vmatpush1.bf16.msra.mxu0 0
      %584 = vmatprep.subr.bf16.mxu0 0
      %585 = vmatpush1.bf16.msra.mxu0 0
      %586 = vmatprep.subr.bf16.mxu0 0
      %587 = vmatpush1.bf16.msra.mxu0 0
      %588 = vmatprep.subr.bf16.mxu0 0
      %589 = vmatpush1.bf16.msra.mxu0 0
      %590 = vmatprep.subr.bf16.mxu0 0
      %591 = vmatpush1.bf16.msra.mxu0 0
      %592 = vmatprep.subr.bf16.mxu0 0
      %593 = vmatpush1.bf16.msra.mxu0 0
      %594 = vmatprep.subr.bf16.mxu0 0
      %595 = vmatpush1.bf16.msra.mxu0 0
      %596 = vmatprep.subr.bf16.mxu0 0
      %597 = vmatpush1.bf16.msra.mxu0 0
      %598 = vmatprep.subr.bf16.mxu0 0
      %599 = vmatpush1.bf16.msra.mxu0 0
      %600 = vmatprep.subr.bf16.mxu0 0
      %601 = vmatpush1.bf16.msra.mxu0 0
      %602 = vmatprep.subr.bf16.mxu0 0
      %603 = vmatpush1.bf16.msra.mxu0 0
      %604 = vmatprep.subr.bf16.mxu0 0
      %605 = vmatpush1.bf16.msra.mxu0 0
      %606 = vmatprep.mubr.bf16.mxu0 0
      %607 = vmatmul.mubr.bf16.gmra.mrb[0].mxu0 %v569
      %v608 = vpop.f32.mrb[0].mxu0
      %v609 = vadd.f32 0.0, %v608
      %v610 = vpop.f32.mrb[0].mxu0
      %v611 = vpop.f32.mrb[0].mxu0
      %v612 = vadd.f32 0.0, %v611
      %v613 = vpop.f32.mrb[0].mxu0
      %614 = vmatprep.mubr.bf16.mxu0 0
      %615 = vmatmul.mubr.bf16.gmra.mrb[0].mxu0 %v572
      %v616 = vpop.f32.mrb[0].mxu0
      %v617 = vadd.f32 0.0, %v616
      %v618 = vpop.f32.mrb[0].mxu0
      %v619 = vpop.f32.mrb[0].mxu0
      %v620 = vadd.f32 0.0, %v619
      %v621 = vpop.f32.mrb[0].mxu0
      %622 = vdwg.mxu0
      %v623 = vadd.f32 %v458, %v609
      %v624 = vadd.f32 %v459, %v612
      %v625 = vadd.f32 %v460, %v617
      %v626 = vadd.f32 %v461, %v620
      %s627 = scalar_lea.vmem [#allocation2], 8
      %v628 = vld [vmem:[%s627] sm:$0xf]
      %v629 = vld [vmem:[%s627 + $0x8] sm:$0xf]
      %v630 = vld [vmem:[%s627 + $0x10] sm:$0xf]
      %v631 = vld [vmem:[%s627 + $0x18] sm:$0xf]
      %s632 = scalar_lea.vmem %s2, 64
      %v633 = vld [vmem:[%s632] sm:$0xf]
      %v634 = vld [vmem:[%s632 + $0x4] sm:$0xf]
      %v635 = vld [vmem:[%s632 + $0x8] sm:$0xf]
      %v636 = vld [vmem:[%s632 + $0xc] sm:$0xf]
      %v637 = vld [vmem:[%s632 + $0x10] sm:$0xf]
      %v638 = vld [vmem:[%s632 + $0x14] sm:$0xf]
      %v639 = vld [vmem:[%s632 + $0x18] sm:$0xf]
      %v640 = vld [vmem:[%s632 + $0x1c] sm:$0xf]
      %v645 = vunpack.c.l.b16 %v628
      %v646 = vunpack.c.l.b16 %v629
      %v647 = vunpack.c.l.b16 %v630
      %v648 = vunpack.c.l.b16 %v631
      %v649 = vpack.c.b16 %v646, %v645
      %v650 = vpack.c.b16 %v648, %v647
      %v659 = vunpack.c.l.b16 %v633
      %v660 = vunpack.c.l.b16 %v634
      %v661 = vunpack.c.l.b16 %v635
      %v662 = vunpack.c.l.b16 %v636
      %v663 = vunpack.c.l.b16 %v637
      %v664 = vunpack.c.l.b16 %v638
      %v665 = vunpack.c.l.b16 %v639
      %v666 = vunpack.c.l.b16 %v640
      %v667 = vpack.c.b16 %v660, %v659
      %v668 = vpack.c.b16 %v662, %v661
      %v669 = vpack.c.b16 %v664, %v663
      %v670 = vpack.c.b16 %v666, %v665
      %v676 = vsel %vm402, %v649, 0
      %v679 = vsel %vm402, %v650, 0
      %681 = vmatprep.subr.bf16.mxu0 0
      %682 = vmatpush1.bf16.msra.mxu0 %v667
      %683 = vmatprep.subr.bf16.mxu0 0
      %684 = vmatpush1.bf16.msra.mxu0 %v668
      %685 = vmatprep.subr.bf16.mxu0 0
      %686 = vmatpush1.bf16.msra.mxu0 %v669
      %687 = vmatprep.subr.bf16.mxu0 0
      %688 = vmatpush1.bf16.msra.mxu0 %v670
      %689 = vmatprep.subr.bf16.mxu0 0
      %690 = vmatpush1.bf16.msra.mxu0 0
      %691 = vmatprep.subr.bf16.mxu0 0
      %692 = vmatpush1.bf16.msra.mxu0 0
      %693 = vmatprep.subr.bf16.mxu0 0
      %694 = vmatpush1.bf16.msra.mxu0 0
      %695 = vmatprep.subr.bf16.mxu0 0
      %696 = vmatpush1.bf16.msra.mxu0 0
      %697 = vmatprep.subr.bf16.mxu0 0
      %698 = vmatpush1.bf16.msra.mxu0 0
      %699 = vmatprep.subr.bf16.mxu0 0
      %700 = vmatpush1.bf16.msra.mxu0 0
      %701 = vmatprep.subr.bf16.mxu0 0
      %702 = vmatpush1.bf16.msra.mxu0 0
      %703 = vmatprep.subr.bf16.mxu0 0
      %704 = vmatpush1.bf16.msra.mxu0 0
      %705 = vmatprep.subr.bf16.mxu0 0
      %706 = vmatpush1.bf16.msra.mxu0 0
      %707 = vmatprep.subr.bf16.mxu0 0
      %708 = vmatpush1.bf16.msra.mxu0 0
      %709 = vmatprep.subr.bf16.mxu0 0
      %710 = vmatpush1.bf16.msra.mxu0 0
      %711 = vmatprep.subr.bf16.mxu0 0
      %712 = vmatpush1.bf16.msra.mxu0 0
      %713 = vmatprep.mubr.bf16.mxu0 0
      %714 = vmatmul.mubr.bf16.gmra.mrb[0].mxu0 %v676
      %v715 = vpop.f32.mrb[0].mxu0
      %v716 = vadd.f32 0.0, %v715
      %v717 = vpop.f32.mrb[0].mxu0
      %v718 = vpop.f32.mrb[0].mxu0
      %v719 = vadd.f32 0.0, %v718
      %v720 = vpop.f32.mrb[0].mxu0
      %721 = vmatprep.mubr.bf16.mxu0 0
      %722 = vmatmul.mubr.bf16.gmra.mrb[0].mxu0 %v679
      %v723 = vpop.f32.mrb[0].mxu0
      %v724 = vadd.f32 0.0, %v723
      %v725 = vpop.f32.mrb[0].mxu0
      %v726 = vpop.f32.mrb[0].mxu0
      %v727 = vadd.f32 0.0, %v726
      %v728 = vpop.f32.mrb[0].mxu0
      %729 = vdwg.mxu0
      %v730 = vadd.f32 %v623, %v716
      %v731 = vadd.f32 %v624, %v719
      %v732 = vadd.f32 %v625, %v724
      %v733 = vadd.f32 %v626, %v727
      %v734 = vld [vmem:[%s627] sm:$0xf]
      %v735 = vld [vmem:[%s627 + $0x4] sm:$0x1]
      %v736 = vld [vmem:[%s627 + $0x8] sm:$0xf]
      %v737 = vld [vmem:[%s627 + $0xc] sm:$0x1]
      %v738 = vld [vmem:[%s627 + $0x10] sm:$0xf]
      %v739 = vld [vmem:[%s627 + $0x14] sm:$0x1]
      %v740 = vld [vmem:[%s627 + $0x18] sm:$0xf]
      %v741 = vld [vmem:[%s627 + $0x1c] sm:$0x1]
      %v743 = vshrl.u32 %v734, 16
      %v745 = vrot.slane %v743, 4
      %v746 = vshll.u32 %v734, 16
      %v748 = vrot.slane %v746, 5
      %v749 = vor.u32 %v745, %v748
      %v750 = vrot.slane %v749, 4
      %v752 = vshll.u32 %v735, 16
      %v754 = vrot.slane %v752, 5
      %v755 = vsel %vm472, %v750, %v754
      %v757 = vshrl.u32 %v736, 16
      %v759 = vrot.slane %v757, 4
      %v760 = vshll.u32 %v736, 16
      %v762 = vrot.slane %v760, 5
      %v763 = vor.u32 %v759, %v762
      %v764 = vrot.slane %v763, 4
      %v766 = vshll.u32 %v737, 16
      %v768 = vrot.slane %v766, 5
      %v769 = vsel %vm472, %v764, %v768
      %v771 = vshrl.u32 %v738, 16
      %v773 = vrot.slane %v771, 4
      %v774 = vshll.u32 %v738, 16
      %v776 = vrot.slane %v774, 5
      %v777 = vor.u32 %v773, %v776
      %v778 = vrot.slane %v777, 4
      %v780 = vshll.u32 %v739, 16
      %v782 = vrot.slane %v780, 5
      %v783 = vsel %vm472, %v778, %v782
      %v785 = vshrl.u32 %v740, 16
      %v787 = vrot.slane %v785, 4
      %v788 = vshll.u32 %v740, 16
      %v790 = vrot.slane %v788, 5
      %v791 = vor.u32 %v787, %v790
      %v792 = vrot.slane %v791, 4
      %v794 = vshll.u32 %v741, 16
      %v796 = vrot.slane %v794, 5
      %v797 = vsel %vm472, %v792, %v796
      %s798 = scalar_lea.vmem %s2, 96
      %v799 = vld [vmem:[%s798] sm:$0xf]
      %v800 = vld [vmem:[%s798 + $0x4] sm:$0xf]
      %v801 = vld [vmem:[%s798 + $0x8] sm:$0xf]
      %v802 = vld [vmem:[%s798 + $0xc] sm:$0xf]
      %v803 = vld [vmem:[%s798 + $0x10] sm:$0xf]
      %v804 = vld [vmem:[%s798 + $0x14] sm:$0xf]
      %v805 = vld [vmem:[%s798 + $0x18] sm:$0xf]
      %v806 = vld [vmem:[%s798 + $0x1c] sm:$0xf]
      %v807 = vunpack.c.l.b16 %v755
      %v808 = vunpack.c.l.b16 %v769
      %v809 = vunpack.c.l.b16 %v783
      %v810 = vunpack.c.l.b16 %v797
      %v811 = vpack.c.b16 %v808, %v807
      %v812 = vpack.c.b16 %v810, %v809
      %v821 = vunpack.c.l.b16 %v799
      %v822 = vunpack.c.l.b16 %v800
      %v823 = vunpack.c.l.b16 %v801
      %v824 = vunpack.c.l.b16 %v802
      %v825 = vunpack.c.l.b16 %v803
      %v826 = vunpack.c.l.b16 %v804
      %v827 = vunpack.c.l.b16 %v805
      %v828 = vunpack.c.l.b16 %v806
      %v829 = vpack.c.b16 %v822, %v821
      %v830 = vpack.c.b16 %v824, %v823
      %v831 = vpack.c.b16 %v826, %v825
      %v832 = vpack.c.b16 %v828, %v827
      %v838 = vsel %vm402, %v811, 0
      %v841 = vsel %vm402, %v812, 0
      %843 = vmatprep.subr.bf16.mxu0 0
      %844 = vmatpush1.bf16.msra.mxu0 %v829
      %845 = vmatprep.subr.bf16.mxu0 0
      %846 = vmatpush1.bf16.msra.mxu0 %v830
      %847 = vmatprep.subr.bf16.mxu0 0
      %848 = vmatpush1.bf16.msra.mxu0 %v831
      %849 = vmatprep.subr.bf16.mxu0 0
      %850 = vmatpush1.bf16.msra.mxu0 %v832
      %851 = vmatprep.subr.bf16.mxu0 0
      %852 = vmatpush1.bf16.msra.mxu0 0
      %853 = vmatprep.subr.bf16.mxu0 0
      %854 = vmatpush1.bf16.msra.mxu0 0
      %855 = vmatprep.subr.bf16.mxu0 0
      %856 = vmatpush1.bf16.msra.mxu0 0
      %857 = vmatprep.subr.bf16.mxu0 0
      %858 = vmatpush1.bf16.msra.mxu0 0
      %859 = vmatprep.subr.bf16.mxu0 0
      %860 = vmatpush1.bf16.msra.mxu0 0
      %861 = vmatprep.subr.bf16.mxu0 0
      %862 = vmatpush1.bf16.msra.mxu0 0
      %863 = vmatprep.subr.bf16.mxu0 0
      %864 = vmatpush1.bf16.msra.mxu0 0
      %865 = vmatprep.subr.bf16.mxu0 0
      %866 = vmatpush1.bf16.msra.mxu0 0
      %867 = vmatprep.subr.bf16.mxu0 0
      %868 = vmatpush1.bf16.msra.mxu0 0
      %869 = vmatprep.subr.bf16.mxu0 0
      %870 = vmatpush1.bf16.msra.mxu0 0
      %871 = vmatprep.subr.bf16.mxu0 0
      %872 = vmatpush1.bf16.msra.mxu0 0
      %873 = vmatprep.subr.bf16.mxu0 0
      %874 = vmatpush1.bf16.msra.mxu0 0
      %875 = vmatprep.mubr.bf16.mxu0 0
      %876 = vmatmul.mubr.bf16.gmra.mrb[0].mxu0 %v838
      %v877 = vpop.f32.mrb[0].mxu0
      %v878 = vadd.f32 0.0, %v877
      %v879 = vpop.f32.mrb[0].mxu0
      %v880 = vpop.f32.mrb[0].mxu0
      %v881 = vadd.f32 0.0, %v880
      %v882 = vpop.f32.mrb[0].mxu0
      %883 = vmatprep.mubr.bf16.mxu0 0
      %884 = vmatmul.mubr.bf16.gmra.mrb[0].mxu0 %v841
      %v885 = vpop.f32.mrb[0].mxu0
      %v886 = vadd.f32 0.0, %v885
      %v887 = vpop.f32.mrb[0].mxu0
      %v888 = vpop.f32.mrb[0].mxu0
      %v889 = vadd.f32 0.0, %v888
      %v890 = vpop.f32.mrb[0].mxu0
      %891 = vdwg.mxu0
      %v892 = vadd.f32 %v730, %v878
      %v893 = vadd.f32 %v731, %v881
      %v894 = vadd.f32 %v732, %v886
      %v895 = vadd.f32 %v733, %v889
      %vm896 = vcmp.ge.f32.partialorder %v892, 0.0
      %vm897 = vcmp.ge.f32.partialorder %v893, 0.0
      %vm898 = vcmp.ge.f32.partialorder %v894, 0.0
      %vm899 = vcmp.ge.f32.partialorder %v895, 0.0
      %v900 = vmul.f32 %v892, 0.2
      %v901 = vmul.f32 %v893, 0.2
      %v902 = vmul.f32 %v894, 0.2
      %v903 = vmul.f32 %v895, 0.2
      %v904 = vsel %vm896, %v892, %v900
      %v905 = vsel %vm897, %v893, %v901
      %v906 = vsel %vm898, %v894, %v902
      %v907 = vsel %vm899, %v895, %v903
      %v908 = vpack.c.bf16 %v904, %v904
      %v909 = vpack.c.bf16 %v905, %v905
      %v910 = vpack.c.bf16 %v906, %v906
      %v911 = vpack.c.bf16 %v907, %v907
      %vm912 = vcmask 257024
      %913 = vst.msk [vmem:[%s311] sm:$0xf] %vm912, %v908
      %914 = vst.msk [vmem:[%s311 + $0x4] sm:$0xf] %vm912, %v909
      %915 = vst.msk [vmem:[%s311 + $0x8] sm:$0xf] %vm912, %v910
      %916 = vst.msk [vmem:[%s311 + $0xc] sm:$0xf] %vm912, %v911
      %s917 = smul.u32 4, %s20
      %p918 = scmp.lt.s32.totalorder %s19, 1
      %s919 = scalar_select %p918, %s19, 1
      %p920 = scmp.lt.s32.totalorder %s917, 3
      %s921 = scalar_select %p920, %s917, 3
      %s922 = smul.addr %s919, 4
      %s923 = sadd.s32 %s921, %s922
      %s924 = smul.addr %s923, 4
      %s925 = scalar_lea.vmem %s4, %s924
      // Predicated region
      $region37: #{fc_discriminator.7} parent=35 // pred_check
        %p926 = pneg %p149
      $region38: #{fc_discriminator.7} parent=35 // pred_check_branch
        %928 = sbr.rel (%p926) target = $region40
      $region39: #{fc_discriminator.7} parent=35 // pred_region
        %s929 = smul.u32 4, %s20
      $region40: #{fc_discriminator.7} parent=35 // pred_fallthru
        _
    $region36: #{fc_discriminator.7} parent=5 // pred_fallthru
      _
    %p930 = scmp.le.s32.totalorder 2, %s10
    // Predicated region
    $region41: #{fc_discriminator.7} parent=5 // pred_check
      %p931 = pneg %p930
    $region42: #{fc_discriminator.7} parent=5 // pred_check_branch
      %933 = sbr.rel (%p931) target = $region44
    $region43: #{fc_discriminator.7} parent=5 // pred_region
      %s934 = ssub.s32 %s10, 2
      // Predicated region
      $region45: #{fc_discriminator.7} parent=43 // pred_check
        %p935 = pneg %p155
      $region46: #{fc_discriminator.7} parent=43 // pred_check_branch
        %937 = sbr.rel (%p935) target = $region48
      $region47: #{fc_discriminator.7} parent=43 // pred_region
        %s938 = smul.u32 4, %s22
        %p939 = scmp.lt.s32.totalorder %s21, 1
        %s940 = scalar_select %p939, %s21, 1
        %p941 = scmp.lt.s32.totalorder %s938, 3
        %s942 = scalar_select %p941, %s938, 3
        %s943 = smul.addr %s940, 4
        %s944 = sadd.s32 %s942, %s943
        %s945 = smul.addr %s944, 4
        %s946 = scalar_lea.vmem %s4, %s945
      $region48: #{fc_discriminator.7} parent=43 // pred_fallthru
        _
    $region44: #{fc_discriminator.7} parent=5 // pred_fallthru
      _
  $region6: #{fc_discriminator.7} parent=0 // loop_footer
    %s14 = sadd.s32 1, %s10
  $region7: #{fc_discriminator.7} parent=0 // loop_footer_branch
    %9 = sbr.rel target = $region3
  $region8: #{fc_discriminator.7} parent=0 // loop_exit
    _

// kernel: fc_discriminator.8
$region0: #{fc_discriminator.8}
  #allocation0 [shape = 'u32[]', space=smem, size = 0x4, offset = 0x4, fixed_abs, tag = 'smem constant byte address 0x4 - core index']
  #allocation1 [shape = 'u32[144,128]{1,0:T(1,128)}', space=vmem, size = 0x12000, scoped, tag = 'internal scratch']
  #allocation2 [shape = 'bf16[3,9,128]{2,1,0:T(8,128)(2,1)}', space=vmem, size = 0x3000, scoped, tag = 'scratch operand']
  %s0 = inlined_call_operand.vmem [shape: bf16[2,3,9,128], index: 0, kind: input, shape index: {}, may-alias: {0,1}]
  %s1 = inlined_call_operand.vmem [shape: bf16[2,3,9,128], index: 1, kind: input, shape index: {}, may-alias: {0,1}]
  %s2 = inlined_call_operand.vmem [shape: bf16[4,128,64], index: 2, kind: input, shape index: {}]
  %s3 = inlined_call_operand.vmem [shape: f32[1,64], index: 3, kind: input, shape index: {}]
  %s4 = inlined_call_operand.vmem [shape: bf16[2,2,8,64], index: 4, kind: output, shape index: {}]
  %s5 = sld [smem:[#allocation0]]
  $region49: #{fc_discriminator.8} parent=0
    _
  %s7 = ssub.s32 1, %s5
  %s8 = scalar_select 0, %s7, %s5
  loop: start=0, step=1, limit=4
  $region2: #{fc_discriminator.8} parent=0 // loop_pre_header
    _
  $region3: #{fc_discriminator.8} parent=0 // loop_header
    %s10 = sphi 0, %s14
    %p11 = scmp.ge.s32.totalorder %s10, 4
    %s17 = sphi 0, %s29
    %s18 = sphi 0, %s25
    %s19 = sphi 0, %s17
    %s20 = sphi 0, %s18
    %s21 = sphi 0, %s19
    %s22 = sphi 0, %s20
    %s34 = sphi 0, %s36
    %s37 = sphi 0, %s34
    %s38 = sphi 0, %s37
    %s54 = sphi 0, %s38
    %s66 = sphi 0, %s68
    %s69 = sphi 0, %s66
    %s70 = sphi 0, %s69
    %s86 = sphi 0, %s70
    %s90 = sphi 0, %s90
    %s92 = sphi 0, %s90
    %s93 = sphi 0, %s92
    %s107 = sphi 0, %s93
    %s111 = sphi 0, %s111
    %s113 = sphi 0, %s111
    %s114 = sphi 0, %s113
    %s128 = sphi 0, %s114
    %s136 = sphi 0, %s138
    %s139 = sphi 0, %s136
    %s140 = sphi 0, %s139
    %s156 = sphi 0, %s140
  $region4: #{fc_discriminator.8} parent=0 // loop_header_branch
    %13 = sbr.rel (%p11) target = $region8
  $region5: #{fc_discriminator.8} parent=0 // loop_body
    %s15 = ssub.s32 %s10, 1
    %s16 = ssub.s32 %s10, 2
    %s23 = sadd.s32 1, %s18
    %p24 = scmp.ge.s32.totalorder %s23, 1
    %s25 = scalar_select %p24, 0, %s23
    %s26 = sadd.s32 1, %s17
    %s27 = scalar_select %p24, %s26, %s17
    %p28 = scmp.ge.s32.totalorder %s27, 2
    %s29 = scalar_select %p28, 0, %s27
    %s30 = ssub.s32 %s17, %s29
    %s31 = ssub.s32 %s18, %s25
    %s32 = sor.u32 %s30, %s31
    %p33 = scmp.eq.s32.totalorder %s32, 0
    %s35 = sadd.s32 %s34, 1
    %s36 = scalar_select %p33, %s34, %s35
    %p39 = pneg %p33
    %p40 = scmp.eq.s32.totalorder %s10, 1
    %p41 = por %p39, %p40
    %p42 = scmp.ne.s32.totalorder %s34, %s37
    %p43 = scmp.eq.s32.totalorder %s10, 0
    %p44 = por %p42, %p43
    %p45 = scmp.ne.s32.totalorder %s34, %s37
    %p46 = scmp.eq.s32.totalorder %s15, 1
    %p47 = por %p45, %p46
    %p48 = scmp.ne.s32.totalorder %s37, %s38
    %p49 = scmp.eq.s32.totalorder %s15, 0
    %p50 = por %p48, %p49
    %p51 = scmp.ne.s32.totalorder %s37, %s38
    %p52 = scmp.eq.s32.totalorder %s16, 1
    %p53 = por %p51, %p52
    %p55 = scmp.ne.s32.totalorder %s38, %s54
    %p56 = scmp.eq.s32.totalorder %s16, 0
    %p57 = por %p55, %p56
    %s58 = sadd.s32 %s18, 1
    %s59 = smul.u32 %s58, 2
    %s60 = sadd.s32 %s25, 1
    %s61 = smul.u32 %s60, 2
    %s62 = ssub.s32 %s17, %s29
    %s63 = ssub.s32 %s59, %s61
    %s64 = sor.u32 %s62, %s63
    %p65 = scmp.eq.s32.totalorder %s64, 0
    %s67 = sadd.s32 %s66, 1
    %s68 = scalar_select %p65, %s66, %s67
    %p71 = pneg %p65
    %p72 = scmp.eq.s32.totalorder %s10, 1
    %p73 = por %p71, %p72
    %p74 = scmp.ne.s32.totalorder %s66, %s69
    %p75 = scmp.eq.s32.totalorder %s10, 0
    %p76 = por %p74, %p75
    %p77 = scmp.ne.s32.totalorder %s66, %s69
    %p78 = scmp.eq.s32.totalorder %s15, 1
    %p79 = por %p77, %p78
    %p80 = scmp.ne.s32.totalorder %s69, %s70
    %p81 = scmp.eq.s32.totalorder %s15, 0
    %p82 = por %p80, %p81
    %p83 = scmp.ne.s32.totalorder %s69, %s70
    %p84 = scmp.eq.s32.totalorder %s16, 1
    %p85 = por %p83, %p84
    %p87 = scmp.ne.s32.totalorder %s70, %s86
    %p88 = scmp.eq.s32.totalorder %s16, 0
    %p89 = por %p87, %p88
    %s91 = sadd.s32 %s90, 1
    %p94 = scmp.eq.s32.totalorder %s10, 1
    %p95 = scmp.ne.s32.totalorder %s90, %s92
    %p96 = scmp.eq.s32.totalorder %s10, 0
    %p97 = por %p95, %p96
    %p98 = scmp.ne.s32.totalorder %s90, %s92
    %p99 = scmp.eq.s32.totalorder %s15, 1
    %p100 = por %p98, %p99
    %p101 = scmp.ne.s32.totalorder %s92, %s93
    %p102 = scmp.eq.s32.totalorder %s15, 0
    %p103 = por %p101, %p102
    %p104 = scmp.ne.s32.totalorder %s92, %s93
    %p105 = scmp.eq.s32.totalorder %s16, 1
    %p106 = por %p104, %p105
    %p108 = scmp.ne.s32.totalorder %s93, %s107
    %p109 = scmp.eq.s32.totalorder %s16, 0
    %p110 = por %p108, %p109
    %s112 = sadd.s32 %s111, 1
    %p115 = scmp.eq.s32.totalorder %s10, 1
    %p116 = scmp.ne.s32.totalorder %s111, %s113
    %p117 = scmp.eq.s32.totalorder %s10, 0
    %p118 = por %p116, %p117
    %p119 = scmp.ne.s32.totalorder %s111, %s113
    %p120 = scmp.eq.s32.totalorder %s15, 1
    %p121 = por %p119, %p120
    %p122 = scmp.ne.s32.totalorder %s113, %s114
    %p123 = scmp.eq.s32.totalorder %s15, 0
    %p124 = por %p122, %p123
    %p125 = scmp.ne.s32.totalorder %s113, %s114
    %p126 = scmp.eq.s32.totalorder %s16, 1
    %p127 = por %p125, %p126
    %p129 = scmp.ne.s32.totalorder %s114, %s128
    %p130 = scmp.eq.s32.totalorder %s16, 0
    %p131 = por %p129, %p130
    %s132 = ssub.s32 %s17, %s29
    %s133 = ssub.s32 %s18, %s25
    %s134 = sor.u32 %s132, %s133
    %p135 = scmp.eq.s32.totalorder %s134, 0
    %s137 = sadd.s32 %s136, 1
    %s138 = scalar_select %p135, %s136, %s137
    %p141 = pneg %p135
    %p142 = scmp.eq.s32.totalorder %s10, 1
    %p143 = por %p141, %p142
    %p144 = scmp.ne.s32.totalorder %s136, %s139
    %p145 = scmp.eq.s32.totalorder %s10, 0
    %p146 = por %p144, %p145
    %p147 = scmp.ne.s32.totalorder %s136, %s139
    %p148 = scmp.eq.s32.totalorder %s15, 1
    %p149 = por %p147, %p148
    %p150 = scmp.ne.s32.totalorder %s139, %s140
    %p151 = scmp.eq.s32.totalorder %s15, 0
    %p152 = por %p150, %p151
    %p153 = scmp.ne.s32.totalorder %s139, %s140
    %p154 = scmp.eq.s32.totalorder %s16, 1
    %p155 = por %p153, %p154
    %p157 = scmp.ne.s32.totalorder %s140, %s156
    %p158 = scmp.eq.s32.totalorder %s16, 0
    %p159 = por %p157, %p158
    %p160 = scmp.le.s32.totalorder 1, %s10
    %p161 = scmp.lt.s32.totalorder %s10, 3
    %p162 = pnand %p160, %p161
    %p163 = pneg %p162
    // Predicated region
    $region9: #{fc_discriminator.8} parent=5 // pred_check
      _
    $region10: #{fc_discriminator.8} parent=5 // pred_check_branch
      %165 = sbr.rel (%p162) target = $region12
    $region11: #{fc_discriminator.8} parent=5 // pred_region
      %s166 = ssub.s32 %s10, 1
      // Predicated region
      $region13: #{fc_discriminator.8} parent=11 // pred_check
        %p167 = pneg %p103
      $region14: #{fc_discriminator.8} parent=11 // pred_check_branch
        %169 = sbr.rel (%p167) target = $region16
      $region15: #{fc_discriminator.8} parent=11 // pred_region
        _
      $region16: #{fc_discriminator.8} parent=11 // pred_fallthru
        _
      // Predicated region
      $region17: #{fc_discriminator.8} parent=11 // pred_check
        %p170 = pneg %p124
      $region18: #{fc_discriminator.8} parent=11 // pred_check_branch
        %172 = sbr.rel (%p170) target = $region20
      $region19: #{fc_discriminator.8} parent=11 // pred_region
        _
      $region20: #{fc_discriminator.8} parent=11 // pred_fallthru
        _
    $region12: #{fc_discriminator.8} parent=5 // pred_fallthru
      _
    %p173 = scmp.lt.s32.totalorder %s10, 2
    // Predicated region
    $region21: #{fc_discriminator.8} parent=5 // pred_check
      %p174 = pneg %p173
    $region22: #{fc_discriminator.8} parent=5 // pred_check_branch
      %176 = sbr.rel (%p174) target = $region24
    $region23: #{fc_discriminator.8} parent=5 // pred_region
      // Predicated region
      $region25: #{fc_discriminator.8} parent=23 // pred_check
        %p177 = pneg %p44
      $region26: #{fc_discriminator.8} parent=23 // pred_check_branch
        %179 = sbr.rel (%p177) target = $region28
      $region27: #{fc_discriminator.8} parent=23 // pred_region
        %s180 = smul.u32 2, %s18
        %s181 = ssub.s32 3, %s180
        %p182 = scmp.lt.s32.totalorder %s181, 2
        %s183 = scalar_select %p182, %s181, 2
        %s184 = smul.u32 64, %s183
        %s185 = smul.u32 %s184, 2
        %p186 = scmp.lt.s32.totalorder %s17, 1
        %s187 = scalar_select %p186, %s17, 1
        %p188 = scmp.lt.s32.totalorder %s180, 2
        %s189 = scalar_select %p188, %s180, 2
        %s190 = smul.addr %s189, 2
        %s191 = smul.addr %s187, 6
        %s192 = sadd.s32 %s190, %s191
        %s193 = smul.addr %s192, 4
        %s194 = scalar_lea.vmem %s0, %s193
        %s195 = smul.u32 2, %s18
        %s196 = ssub.s32 3, %s195
        %p197 = scmp.lt.s32.totalorder %s196, 2
        %s198 = scalar_select %p197, %s196, 2
        %s199 = smul.u32 64, %s198
        %s200 = smul.u32 %s199, 2
      $region28: #{fc_discriminator.8} parent=23 // pred_fallthru
        _
      // Predicated region
      $region29: #{fc_discriminator.8} parent=23 // pred_check
        %p201 = pneg %p76
      $region30: #{fc_discriminator.8} parent=23 // pred_check_branch
        %203 = sbr.rel (%p201) target = $region32
      $region31: #{fc_discriminator.8} parent=23 // pred_region
        %s204 = sadd.s32 %s18, 1
        %s205 = smul.u32 %s204, 2
        %p206 = scmp.lt.s32.totalorder %s17, 1
        %s207 = scalar_select %p206, %s17, 1
        %p208 = scmp.lt.s32.totalorder %s205, 2
        %s209 = scalar_select %p208, %s205, 2
        %s210 = smul.addr %s209, 2
        %s211 = smul.addr %s207, 6
        %s212 = sadd.s32 %s210, %s211
        %s213 = smul.addr %s212, 4
        %s214 = scalar_lea.vmem %s1, %s213
        %s215 = sadd.s32 %s18, 1
        %s216 = smul.u32 %s215, 2
      $region32: #{fc_discriminator.8} parent=23 // pred_fallthru
        _
    $region24: #{fc_discriminator.8} parent=5 // pred_fallthru
      _
    %p217 = scmp.le.s32.totalorder 1, %s10
    %p218 = scmp.lt.s32.totalorder %s10, 3
    %p219 = pnand %p217, %p218
    %p220 = pneg %p219
    // Predicated region
    $region33: #{fc_discriminator.8} parent=5 // pred_check
      _
    $region34: #{fc_discriminator.8} parent=5 // pred_check_branch
      %222 = sbr.rel (%p219) target = $region36
    $region35: #{fc_discriminator.8} parent=5 // pred_region
      %s223 = ssub.s32 %s10, 1
      %s224 = smul.u32 2, %s20
      %s225 = ssub.s32 3, %s224
      %p226 = scmp.lt.s32.totalorder %s225, 2
      %s227 = scalar_select %p226, %s225, 2
      %s228 = smul.u32 64, %s227
      %s229 = smul.u32 %s228, 2
      %p230 = scmp.lt.s32.totalorder %s19, 1
      %s231 = scalar_select %p230, %s19, 1
      %p232 = scmp.lt.s32.totalorder %s224, 2
      %s233 = scalar_select %p232, %s224, 2
      %s234 = smul.addr %s233, 2
      %s235 = smul.addr %s231, 6
      %s236 = sadd.s32 %s234, %s235
      %s237 = smul.addr %s236, 4
      %s238 = scalar_lea.vmem %s0, %s237
      %p239 = pneg %p50
      %p240 = pneg %p47
      %s241 = sadd.s32 %s20, 1
      %s242 = smul.u32 %s241, 2
      %p243 = scmp.lt.s32.totalorder %s19, 1
      %s244 = scalar_select %p243, %s19, 1
      %p245 = scmp.lt.s32.totalorder %s242, 2
      %s246 = scalar_select %p245, %s242, 2
      %s247 = smul.addr %s246, 2
      %s248 = smul.addr %s244, 6
      %s249 = sadd.s32 %s247, %s248
      %s250 = smul.addr %s249, 4
      %s251 = scalar_lea.vmem %s1, %s250
      %p252 = pneg %p82
      %p253 = pneg %p79
      %p254 = pneg %p103
      %p255 = pneg %p100
      %p256 = pneg %p124
      %p257 = pneg %p121
      %p258 = pneg %p152
      %p259 = pneg %p149
      %s260 = smul.u32 2, %s20
      %p261 = scmp.lt.s32.totalorder %s19, 1
      %s262 = scalar_select %p261, %s19, 1
      %p263 = scmp.lt.s32.totalorder %s260, 1
      %s264 = scalar_select %p263, %s260, 1
      %s265 = smul.addr %s262, 2
      %s266 = sadd.s32 %s264, %s265
      %s267 = smul.addr %s266, 4
      %s268 = scalar_lea.vmem %s4, %s267
      %s269 = smul.u32 2, %s20
      %s270 = ssub.s32 3, %s269
      %p271 = scmp.lt.s32.totalorder %s270, 2
      %s272 = scalar_select %p271, %s270, 2
      %s273 = smul.u32 64, %s272
      %s274 = smul.u32 %s273, 2
      %p275 = scmp.lt.s32.totalorder %s19, 1
      %s276 = scalar_select %p275, %s19, 1
      %p277 = scmp.lt.s32.totalorder %s269, 2
      %s278 = scalar_select %p277, %s269, 2
      %s279 = smul.addr %s278, 2
      %s280 = smul.addr %s276, 6
      %s281 = sadd.s32 %s279, %s280
      %s282 = smul.addr %s281, 4
      %s283 = scalar_lea.vmem %s0, %s282
      %s284 = smul.u32 2, %s20
      %s285 = ssub.s32 3, %s284
      %p286 = scmp.lt.s32.totalorder %s285, 2
      %s287 = scalar_select %p286, %s285, 2
      %s288 = smul.u32 64, %s287
      %s289 = smul.u32 %s288, 2
      %s290 = sadd.s32 %s20, 1
      %s291 = smul.u32 %s290, 2
      %p292 = scmp.lt.s32.totalorder %s19, 1
      %s293 = scalar_select %p292, %s19, 1
      %p294 = scmp.lt.s32.totalorder %s291, 2
      %s295 = scalar_select %p294, %s291, 2
      %s296 = smul.addr %s295, 2
      %s297 = smul.addr %s293, 6
      %s298 = sadd.s32 %s296, %s297
      %s299 = smul.addr %s298, 4
      %s300 = scalar_lea.vmem %s1, %s299
      %s301 = sadd.s32 %s20, 1
      %s302 = smul.u32 %s301, 2
      %s303 = smul.u32 2, %s20
      %p304 = scmp.lt.s32.totalorder %s19, 1
      %s305 = scalar_select %p304, %s19, 1
      %p306 = scmp.lt.s32.totalorder %s303, 1
      %s307 = scalar_select %p306, %s303, 1
      %s308 = smul.addr %s305, 2
      %s309 = sadd.s32 %s307, %s308
      %s310 = smul.addr %s309, 4
      %s311 = scalar_lea.vmem %s4, %s310
      %s312 = smul.u32 2, %s20
      %v314 = vld [vmem:[%s283] sm:$0xf]
      %v315 = vld [vmem:[%s283 + $0x4] sm:$0x1]
      %v316 = vld [vmem:[%s283 + $0x8] sm:$0xf]
      %v317 = vld [vmem:[%s283 + $0xc] sm:$0x1]
      %318 = vst [vmem:[#allocation2] sm:$0xf] %v314
      %vm319 = vcmask 1040384
      %vm320 = vsmask.f32 256
      %vm321 = vmand %vm319, %vm320
      %v322 = vld [vmem:[#allocation2 + $0x4] sm:$0x1]
      %v323 = vsel %vm321, %v315, %v322
      %324 = vst [vmem:[#allocation2 + $0x4] sm:$0x1] %v323
      %325 = vst [vmem:[#allocation2 + $0x8] sm:$0xf] %v316
      %v326 = vld [vmem:[#allocation2 + $0xc] sm:$0x1]
      %v327 = vsel %vm321, %v317, %v326
      %328 = vst [vmem:[#allocation2 + $0xc] sm:$0x1] %v327
      %v329 = vld [vmem:[%s300] sm:$0xf]
      %v330 = vld [vmem:[%s300 + $0x4] sm:$0x1]
      %s331 = scalar_lea.vmem [#allocation2], 16
      %332 = vst [vmem:[%s331] sm:$0xf] %v329
      %v333 = vld [vmem:[%s331 + $0x4] sm:$0x1]
      %v334 = vsel %vm321, %v330, %v333
      %335 = vst [vmem:[%s331 + $0x4] sm:$0x1] %v334
      %v336 = vld [vmem:[%s3] sm:$0x1]
      %v338 = vlaneseq
      %v339 = vshrl.u32 %v338, 7
      %v340 = vsub.s32 0, %v339
      %v341 = vrot.slane %v336, %v340
      %v343 = vld [vmem:[#allocation2] sm:$0xf]
      %v344 = vld [vmem:[#allocation2 + $0x8] sm:$0xf]
      %v345 = vld [vmem:[%s2] sm:$0xf]
      %v346 = vld [vmem:[%s2 + $0x4] sm:$0xf]
      %v347 = vld [vmem:[%s2 + $0x8] sm:$0xf]
      %v348 = vld [vmem:[%s2 + $0xc] sm:$0xf]
      %v349 = vld [vmem:[%s2 + $0x10] sm:$0xf]
      %v350 = vld [vmem:[%s2 + $0x14] sm:$0xf]
      %v351 = vld [vmem:[%s2 + $0x18] sm:$0xf]
      %v352 = vld [vmem:[%s2 + $0x1c] sm:$0xf]
      %v353 = vld [vmem:[%s2 + $0x20] sm:$0xf]
      %v354 = vld [vmem:[%s2 + $0x24] sm:$0xf]
      %v355 = vld [vmem:[%s2 + $0x28] sm:$0xf]
      %v356 = vld [vmem:[%s2 + $0x2c] sm:$0xf]
      %v357 = vld [vmem:[%s2 + $0x30] sm:$0xf]
      %v358 = vld [vmem:[%s2 + $0x34] sm:$0xf]
      %v359 = vld [vmem:[%s2 + $0x38] sm:$0xf]
      %v360 = vld [vmem:[%s2 + $0x3c] sm:$0xf]
      %v363 = vunpack.c.l.b16 %v343
      %v364 = vunpack.c.l.b16 %v344
      %v365 = vpack.c.b16 %v364, %v363
      %v383 = vunpack.c.l.b16 %v345
      %v384 = vunpack.c.l.b16 %v346
      %v385 = vunpack.c.l.b16 %v347
      %v386 = vunpack.c.l.b16 %v348
      %v387 = vunpack.c.l.b16 %v349
      %v388 = vunpack.c.l.b16 %v350
      %v389 = vunpack.c.l.b16 %v351
      %v390 = vunpack.c.l.b16 %v352
      %v391 = vunpack.c.l.b16 %v353
      %v392 = vunpack.c.l.b16 %v354
      %v393 = vunpack.c.l.b16 %v355
      %v394 = vunpack.c.l.b16 %v356
      %v395 = vunpack.c.l.b16 %v357
      %v396 = vunpack.c.l.b16 %v358
      %v397 = vunpack.c.l.b16 %v359
      %v398 = vunpack.c.l.b16 %v360
      %v399 = vpack.c.b16 %v384, %v383
      %v400 = vpack.c.b16 %v386, %v385
      %v401 = vpack.c.b16 %v388, %v387
      %v402 = vpack.c.b16 %v390, %v389
      %v403 = vpack.c.b16 %v392, %v391
      %v404 = vpack.c.b16 %v394, %v393
      %v405 = vpack.c.b16 %v396, %v395
      %v406 = vpack.c.b16 %v398, %v397
      %415 = vmatprep.subr.bf16.mxu0 0
      %416 = vmatpush1.bf16.msra.mxu0 %v399
      %417 = vmatprep.subr.bf16.mxu0 0
      %418 = vmatpush1.bf16.msra.mxu0 %v400
      %419 = vmatprep.subr.bf16.mxu0 0
      %420 = vmatpush1.bf16.msra.mxu0 %v401
      %421 = vmatprep.subr.bf16.mxu0 0
      %422 = vmatpush1.bf16.msra.mxu0 %v402
      %423 = vmatprep.subr.bf16.mxu0 0
      %424 = vmatpush1.bf16.msra.mxu0 %v403
      %425 = vmatprep.subr.bf16.mxu0 0
      %426 = vmatpush1.bf16.msra.mxu0 %v404
      %427 = vmatprep.subr.bf16.mxu0 0
      %428 = vmatpush1.bf16.msra.mxu0 %v405
      %429 = vmatprep.subr.bf16.mxu0 0
      %430 = vmatpush1.bf16.msra.mxu0 %v406
      %431 = vmatprep.subr.bf16.mxu0 0
      %432 = vmatpush1.bf16.msra.mxu0 0
      %433 = vmatprep.subr.bf16.mxu0 0
      %434 = vmatpush1.bf16.msra.mxu0 0
      %435 = vmatprep.subr.bf16.mxu0 0
      %436 = vmatpush1.bf16.msra.mxu0 0
      %437 = vmatprep.subr.bf16.mxu0 0
      %438 = vmatpush1.bf16.msra.mxu0 0
      %439 = vmatprep.subr.bf16.mxu0 0
      %440 = vmatpush1.bf16.msra.mxu0 0
      %441 = vmatprep.subr.bf16.mxu0 0
      %442 = vmatpush1.bf16.msra.mxu0 0
      %443 = vmatprep.subr.bf16.mxu0 0
      %444 = vmatpush1.bf16.msra.mxu0 0
      %445 = vmatprep.subr.bf16.mxu0 0
      %446 = vmatpush1.bf16.msra.mxu0 0
      %447 = vmatprep.mubr.bf16.mxu0 0
      %448 = vmatmul.mubr.bf16.gmra.mrb[0].mxu0 %v365
      %v449 = vpop.f32.mrb[0].mxu0
      %v450 = vadd.f32 0.0, %v449
      %v451 = vpop.f32.mrb[0].mxu0
      %v452 = vpop.f32.mrb[0].mxu0
      %v453 = vadd.f32 0.0, %v452
      %v454 = vpop.f32.mrb[0].mxu0
      %455 = vdwg.mxu0
      %v456 = vadd.f32 %v341, %v450
      %v457 = vadd.f32 %v341, %v453
      %v458 = vld [vmem:[#allocation2] sm:$0xf]
      %v459 = vld [vmem:[#allocation2 + $0x4] sm:$0x1]
      %v460 = vld [vmem:[#allocation2 + $0x8] sm:$0xf]
      %v461 = vld [vmem:[#allocation2 + $0xc] sm:$0x1]
      %vm462 = vsmask.f32 3328
      %vm463 = vsmask.f32 7440
      %vm464 = vmor %vm462, %vm463
      %v466 = vshrl.u32 %v458, 16
      %v468 = vrot.slane %v466, 4
      %v469 = vshll.u32 %v458, 16
      %v471 = vrot.slane %v469, 5
      %v472 = vor.u32 %v468, %v471
      %v473 = vrot.slane %v472, 4
      %v475 = vshll.u32 %v459, 16
      %v477 = vrot.slane %v475, 5
      %v478 = vsel %vm464, %v473, %v477
      %v480 = vshrl.u32 %v460, 16
      %v482 = vrot.slane %v480, 4
      %v483 = vshll.u32 %v460, 16
      %v485 = vrot.slane %v483, 5
      %v486 = vor.u32 %v482, %v485
      %v487 = vrot.slane %v486, 4
      %v489 = vshll.u32 %v461, 16
      %v491 = vrot.slane %v489, 5
      %v492 = vsel %vm464, %v487, %v491
      %s493 = scalar_lea.vmem %s2, 64
      %v494 = vld [vmem:[%s493] sm:$0xf]
      %v495 = vld [vmem:[%s493 + $0x4] sm:$0xf]
      %v496 = vld [vmem:[%s493 + $0x8] sm:$0xf]
      %v497 = vld [vmem:[%s493 + $0xc] sm:$0xf]
      %v498 = vld [vmem:[%s493 + $0x10] sm:$0xf]
      %v499 = vld [vmem:[%s493 + $0x14] sm:$0xf]
      %v500 = vld [vmem:[%s493 + $0x18] sm:$0xf]
      %v501 = vld [vmem:[%s493 + $0x1c] sm:$0xf]
      %v502 = vld [vmem:[%s493 + $0x20] sm:$0xf]
      %v503 = vld [vmem:[%s493 + $0x24] sm:$0xf]
      %v504 = vld [vmem:[%s493 + $0x28] sm:$0xf]
      %v505 = vld [vmem:[%s493 + $0x2c] sm:$0xf]
      %v506 = vld [vmem:[%s493 + $0x30] sm:$0xf]
      %v507 = vld [vmem:[%s493 + $0x34] sm:$0xf]
      %v508 = vld [vmem:[%s493 + $0x38] sm:$0xf]
      %v509 = vld [vmem:[%s493 + $0x3c] sm:$0xf]
      %v510 = vunpack.c.l.b16 %v478
      %v511 = vunpack.c.l.b16 %v492
      %v512 = vpack.c.b16 %v511, %v510
      %v530 = vunpack.c.l.b16 %v494
      %v531 = vunpack.c.l.b16 %v495
      %v532 = vunpack.c.l.b16 %v496
      %v533 = vunpack.c.l.b16 %v497
      %v534 = vunpack.c.l.b16 %v498
      %v535 = vunpack.c.l.b16 %v499
      %v536 = vunpack.c.l.b16 %v500
      %v537 = vunpack.c.l.b16 %v501
      %v538 = vunpack.c.l.b16 %v502
      %v539 = vunpack.c.l.b16 %v503
      %v540 = vunpack.c.l.b16 %v504
      %v541 = vunpack.c.l.b16 %v505
      %v542 = vunpack.c.l.b16 %v506
      %v543 = vunpack.c.l.b16 %v507
      %v544 = vunpack.c.l.b16 %v508
      %v545 = vunpack.c.l.b16 %v509
      %v546 = vpack.c.b16 %v531, %v530
      %v547 = vpack.c.b16 %v533, %v532
      %v548 = vpack.c.b16 %v535, %v534
      %v549 = vpack.c.b16 %v537, %v536
      %v550 = vpack.c.b16 %v539, %v538
      %v551 = vpack.c.b16 %v541, %v540
      %v552 = vpack.c.b16 %v543, %v542
      %v553 = vpack.c.b16 %v545, %v544
      %562 = vmatprep.subr.bf16.mxu0 0
      %563 = vmatpush1.bf16.msra.mxu0 %v546
      %564 = vmatprep.subr.bf16.mxu0 0
      %565 = vmatpush1.bf16.msra.mxu0 %v547
      %566 = vmatprep.subr.bf16.mxu0 0
      %567 = vmatpush1.bf16.msra.mxu0 %v548
      %568 = vmatprep.subr.bf16.mxu0 0
      %569 = vmatpush1.bf16.msra.mxu0 %v549
      %570 = vmatprep.subr.bf16.mxu0 0
      %571 = vmatpush1.bf16.msra.mxu0 %v550
      %572 = vmatprep.subr.bf16.mxu0 0
      %573 = vmatpush1.bf16.msra.mxu0 %v551
      %574 = vmatprep.subr.bf16.mxu0 0
      %575 = vmatpush1.bf16.msra.mxu0 %v552
      %576 = vmatprep.subr.bf16.mxu0 0
      %577 = vmatpush1.bf16.msra.mxu0 %v553
      %578 = vmatprep.subr.bf16.mxu0 0
      %579 = vmatpush1.bf16.msra.mxu0 0
      %580 = vmatprep.subr.bf16.mxu0 0
      %581 = vmatpush1.bf16.msra.mxu0 0
      %582 = vmatprep.subr.bf16.mxu0 0
      %583 = vmatpush1.bf16.msra.mxu0 0
      %584 = vmatprep.subr.bf16.mxu0 0
      %585 = vmatpush1.bf16.msra.mxu0 0
      %586 = vmatprep.subr.bf16.mxu0 0
      %587 = vmatpush1.bf16.msra.mxu0 0
      %588 = vmatprep.subr.bf16.mxu0 0
      %589 = vmatpush1.bf16.msra.mxu0 0
      %590 = vmatprep.subr.bf16.mxu0 0
      %591 = vmatpush1.bf16.msra.mxu0 0
      %592 = vmatprep.subr.bf16.mxu0 0
      %593 = vmatpush1.bf16.msra.mxu0 0
      %594 = vmatprep.mubr.bf16.mxu0 0
      %595 = vmatmul.mubr.bf16.gmra.mrb[0].mxu0 %v512
      %v596 = vpop.f32.mrb[0].mxu0
      %v597 = vadd.f32 0.0, %v596
      %v598 = vpop.f32.mrb[0].mxu0
      %v599 = vpop.f32.mrb[0].mxu0
      %v600 = vadd.f32 0.0, %v599
      %v601 = vpop.f32.mrb[0].mxu0
      %602 = vdwg.mxu0
      %v603 = vadd.f32 %v456, %v597
      %v604 = vadd.f32 %v457, %v600
      %s605 = scalar_lea.vmem [#allocation2], 8
      %v606 = vld [vmem:[%s605] sm:$0xf]
      %v607 = vld [vmem:[%s605 + $0x8] sm:$0xf]
      %s608 = scalar_lea.vmem %s2, 128
      %v609 = vld [vmem:[%s608] sm:$0xf]
      %v610 = vld [vmem:[%s608 + $0x4] sm:$0xf]
      %v611 = vld [vmem:[%s608 + $0x8] sm:$0xf]
      %v612 = vld [vmem:[%s608 + $0xc] sm:$0xf]
      %v613 = vld [vmem:[%s608 + $0x10] sm:$0xf]
      %v614 = vld [vmem:[%s608 + $0x14] sm:$0xf]
      %v615 = vld [vmem:[%s608 + $0x18] sm:$0xf]
      %v616 = vld [vmem:[%s608 + $0x1c] sm:$0xf]
      %v617 = vld [vmem:[%s608 + $0x20] sm:$0xf]
      %v618 = vld [vmem:[%s608 + $0x24] sm:$0xf]
      %v619 = vld [vmem:[%s608 + $0x28] sm:$0xf]
      %v620 = vld [vmem:[%s608 + $0x2c] sm:$0xf]
      %v621 = vld [vmem:[%s608 + $0x30] sm:$0xf]
      %v622 = vld [vmem:[%s608 + $0x34] sm:$0xf]
      %v623 = vld [vmem:[%s608 + $0x38] sm:$0xf]
      %v624 = vld [vmem:[%s608 + $0x3c] sm:$0xf]
      %v627 = vunpack.c.l.b16 %v606
      %v628 = vunpack.c.l.b16 %v607
      %v629 = vpack.c.b16 %v628, %v627
      %v647 = vunpack.c.l.b16 %v609
      %v648 = vunpack.c.l.b16 %v610
      %v649 = vunpack.c.l.b16 %v611
      %v650 = vunpack.c.l.b16 %v612
      %v651 = vunpack.c.l.b16 %v613
      %v652 = vunpack.c.l.b16 %v614
      %v653 = vunpack.c.l.b16 %v615
      %v654 = vunpack.c.l.b16 %v616
      %v655 = vunpack.c.l.b16 %v617
      %v656 = vunpack.c.l.b16 %v618
      %v657 = vunpack.c.l.b16 %v619
      %v658 = vunpack.c.l.b16 %v620
      %v659 = vunpack.c.l.b16 %v621
      %v660 = vunpack.c.l.b16 %v622
      %v661 = vunpack.c.l.b16 %v623
      %v662 = vunpack.c.l.b16 %v624
      %v663 = vpack.c.b16 %v648, %v647
      %v664 = vpack.c.b16 %v650, %v649
      %v665 = vpack.c.b16 %v652, %v651
      %v666 = vpack.c.b16 %v654, %v653
      %v667 = vpack.c.b16 %v656, %v655
      %v668 = vpack.c.b16 %v658, %v657
      %v669 = vpack.c.b16 %v660, %v659
      %v670 = vpack.c.b16 %v662, %v661
      %679 = vmatprep.subr.bf16.mxu0 0
      %680 = vmatpush1.bf16.msra.mxu0 %v663
      %681 = vmatprep.subr.bf16.mxu0 0
      %682 = vmatpush1.bf16.msra.mxu0 %v664
      %683 = vmatprep.subr.bf16.mxu0 0
      %684 = vmatpush1.bf16.msra.mxu0 %v665
      %685 = vmatprep.subr.bf16.mxu0 0
      %686 = vmatpush1.bf16.msra.mxu0 %v666
      %687 = vmatprep.subr.bf16.mxu0 0
      %688 = vmatpush1.bf16.msra.mxu0 %v667
      %689 = vmatprep.subr.bf16.mxu0 0
      %690 = vmatpush1.bf16.msra.mxu0 %v668
      %691 = vmatprep.subr.bf16.mxu0 0
      %692 = vmatpush1.bf16.msra.mxu0 %v669
      %693 = vmatprep.subr.bf16.mxu0 0
      %694 = vmatpush1.bf16.msra.mxu0 %v670
      %695 = vmatprep.subr.bf16.mxu0 0
      %696 = vmatpush1.bf16.msra.mxu0 0
      %697 = vmatprep.subr.bf16.mxu0 0
      %698 = vmatpush1.bf16.msra.mxu0 0
      %699 = vmatprep.subr.bf16.mxu0 0
      %700 = vmatpush1.bf16.msra.mxu0 0
      %701 = vmatprep.subr.bf16.mxu0 0
      %702 = vmatpush1.bf16.msra.mxu0 0
      %703 = vmatprep.subr.bf16.mxu0 0
      %704 = vmatpush1.bf16.msra.mxu0 0
      %705 = vmatprep.subr.bf16.mxu0 0
      %706 = vmatpush1.bf16.msra.mxu0 0
      %707 = vmatprep.subr.bf16.mxu0 0
      %708 = vmatpush1.bf16.msra.mxu0 0
      %709 = vmatprep.subr.bf16.mxu0 0
      %710 = vmatpush1.bf16.msra.mxu0 0
      %711 = vmatprep.mubr.bf16.mxu0 0
      %712 = vmatmul.mubr.bf16.gmra.mrb[0].mxu0 %v629
      %v713 = vpop.f32.mrb[0].mxu0
      %v714 = vadd.f32 0.0, %v713
      %v715 = vpop.f32.mrb[0].mxu0
      %v716 = vpop.f32.mrb[0].mxu0
      %v717 = vadd.f32 0.0, %v716
      %v718 = vpop.f32.mrb[0].mxu0
      %719 = vdwg.mxu0
      %v720 = vadd.f32 %v603, %v714
      %v721 = vadd.f32 %v604, %v717
      %v722 = vld [vmem:[%s605] sm:$0xf]
      %v723 = vld [vmem:[%s605 + $0x4] sm:$0x1]
      %v724 = vld [vmem:[%s605 + $0x8] sm:$0xf]
      %v725 = vld [vmem:[%s605 + $0xc] sm:$0x1]
      %v727 = vshrl.u32 %v722, 16
      %v729 = vrot.slane %v727, 4
      %v730 = vshll.u32 %v722, 16
      %v732 = vrot.slane %v730, 5
      %v733 = vor.u32 %v729, %v732
      %v734 = vrot.slane %v733, 4
      %v736 = vshll.u32 %v723, 16
      %v738 = vrot.slane %v736, 5
      %v739 = vsel %vm464, %v734, %v738
      %v741 = vshrl.u32 %v724, 16
      %v743 = vrot.slane %v741, 4
      %v744 = vshll.u32 %v724, 16
      %v746 = vrot.slane %v744, 5
      %v747 = vor.u32 %v743, %v746
      %v748 = vrot.slane %v747, 4
      %v750 = vshll.u32 %v725, 16
      %v752 = vrot.slane %v750, 5
      %v753 = vsel %vm464, %v748, %v752
      %s754 = scalar_lea.vmem %s2, 192
      %v755 = vld [vmem:[%s754] sm:$0xf]
      %v756 = vld [vmem:[%s754 + $0x4] sm:$0xf]
      %v757 = vld [vmem:[%s754 + $0x8] sm:$0xf]
      %v758 = vld [vmem:[%s754 + $0xc] sm:$0xf]
      %v759 = vld [vmem:[%s754 + $0x10] sm:$0xf]
      %v760 = vld [vmem:[%s754 + $0x14] sm:$0xf]
      %v761 = vld [vmem:[%s754 + $0x18] sm:$0xf]
      %v762 = vld [vmem:[%s754 + $0x1c] sm:$0xf]
      %v763 = vld [vmem:[%s754 + $0x20] sm:$0xf]
      %v764 = vld [vmem:[%s754 + $0x24] sm:$0xf]
      %v765 = vld [vmem:[%s754 + $0x28] sm:$0xf]
      %v766 = vld [vmem:[%s754 + $0x2c] sm:$0xf]
      %v767 = vld [vmem:[%s754 + $0x30] sm:$0xf]
      %v768 = vld [vmem:[%s754 + $0x34] sm:$0xf]
      %v769 = vld [vmem:[%s754 + $0x38] sm:$0xf]
      %v770 = vld [vmem:[%s754 + $0x3c] sm:$0xf]
      %v771 = vunpack.c.l.b16 %v739
      %v772 = vunpack.c.l.b16 %v753
      %v773 = vpack.c.b16 %v772, %v771
      %v791 = vunpack.c.l.b16 %v755
      %v792 = vunpack.c.l.b16 %v756
      %v793 = vunpack.c.l.b16 %v757
      %v794 = vunpack.c.l.b16 %v758
      %v795 = vunpack.c.l.b16 %v759
      %v796 = vunpack.c.l.b16 %v760
      %v797 = vunpack.c.l.b16 %v761
      %v798 = vunpack.c.l.b16 %v762
      %v799 = vunpack.c.l.b16 %v763
      %v800 = vunpack.c.l.b16 %v764
      %v801 = vunpack.c.l.b16 %v765
      %v802 = vunpack.c.l.b16 %v766
      %v803 = vunpack.c.l.b16 %v767
      %v804 = vunpack.c.l.b16 %v768
      %v805 = vunpack.c.l.b16 %v769
      %v806 = vunpack.c.l.b16 %v770
      %v807 = vpack.c.b16 %v792, %v791
      %v808 = vpack.c.b16 %v794, %v793
      %v809 = vpack.c.b16 %v796, %v795
      %v810 = vpack.c.b16 %v798, %v797
      %v811 = vpack.c.b16 %v800, %v799
      %v812 = vpack.c.b16 %v802, %v801
      %v813 = vpack.c.b16 %v804, %v803
      %v814 = vpack.c.b16 %v806, %v805
      %823 = vmatprep.subr.bf16.mxu0 0
      %824 = vmatpush1.bf16.msra.mxu0 %v807
      %825 = vmatprep.subr.bf16.mxu0 0
      %826 = vmatpush1.bf16.msra.mxu0 %v808
      %827 = vmatprep.subr.bf16.mxu0 0
      %828 = vmatpush1.bf16.msra.mxu0 %v809
      %829 = vmatprep.subr.bf16.mxu0 0
      %830 = vmatpush1.bf16.msra.mxu0 %v810
      %831 = vmatprep.subr.bf16.mxu0 0
      %832 = vmatpush1.bf16.msra.mxu0 %v811
      %833 = vmatprep.subr.bf16.mxu0 0
      %834 = vmatpush1.bf16.msra.mxu0 %v812
      %835 = vmatprep.subr.bf16.mxu0 0
      %836 = vmatpush1.bf16.msra.mxu0 %v813
      %837 = vmatprep.subr.bf16.mxu0 0
      %838 = vmatpush1.bf16.msra.mxu0 %v814
      %839 = vmatprep.subr.bf16.mxu0 0
      %840 = vmatpush1.bf16.msra.mxu0 0
      %841 = vmatprep.subr.bf16.mxu0 0
      %842 = vmatpush1.bf16.msra.mxu0 0
      %843 = vmatprep.subr.bf16.mxu0 0
      %844 = vmatpush1.bf16.msra.mxu0 0
      %845 = vmatprep.subr.bf16.mxu0 0
      %846 = vmatpush1.bf16.msra.mxu0 0
      %847 = vmatprep.subr.bf16.mxu0 0
      %848 = vmatpush1.bf16.msra.mxu0 0
      %849 = vmatprep.subr.bf16.mxu0 0
      %850 = vmatpush1.bf16.msra.mxu0 0
      %851 = vmatprep.subr.bf16.mxu0 0
      %852 = vmatpush1.bf16.msra.mxu0 0
      %853 = vmatprep.subr.bf16.mxu0 0
      %854 = vmatpush1.bf16.msra.mxu0 0
      %855 = vmatprep.mubr.bf16.mxu0 0
      %856 = vmatmul.mubr.bf16.gmra.mrb[0].mxu0 %v773
      %v857 = vpop.f32.mrb[0].mxu0
      %v858 = vadd.f32 0.0, %v857
      %v859 = vpop.f32.mrb[0].mxu0
      %v860 = vpop.f32.mrb[0].mxu0
      %v861 = vadd.f32 0.0, %v860
      %v862 = vpop.f32.mrb[0].mxu0
      %863 = vdwg.mxu0
      %v864 = vadd.f32 %v720, %v858
      %v865 = vadd.f32 %v721, %v861
      %vm866 = vcmp.ge.f32.partialorder %v864, 0.0
      %vm867 = vcmp.ge.f32.partialorder %v865, 0.0
      %v868 = vmul.f32 %v864, 0.2
      %v869 = vmul.f32 %v865, 0.2
      %v870 = vsel %vm866, %v864, %v868
      %v871 = vsel %vm867, %v865, %v869
      %v872 = vpack.c.bf16 %v870, %v870
      %v873 = vpack.c.bf16 %v871, %v871
      %vm874 = vcmask 519168
      %875 = vst.msk [vmem:[%s311] sm:$0xf] %vm874, %v872
      %876 = vst.msk [vmem:[%s311 + $0x4] sm:$0xf] %vm874, %v873
      %s877 = smul.u32 2, %s20
      %p878 = scmp.lt.s32.totalorder %s19, 1
      %s879 = scalar_select %p878, %s19, 1
      %p880 = scmp.lt.s32.totalorder %s877, 1
      %s881 = scalar_select %p880, %s877, 1
      %s882 = smul.addr %s879, 2
      %s883 = sadd.s32 %s881, %s882
      %s884 = smul.addr %s883, 4
      %s885 = scalar_lea.vmem %s4, %s884
      // Predicated region
      $region37: #{fc_discriminator.8} parent=35 // pred_check
        %p886 = pneg %p149
      $region38: #{fc_discriminator.8} parent=35 // pred_check_branch
        %888 = sbr.rel (%p886) target = $region40
      $region39: #{fc_discriminator.8} parent=35 // pred_region
        %s889 = smul.u32 2, %s20
      $region40: #{fc_discriminator.8} parent=35 // pred_fallthru
        _
    $region36: #{fc_discriminator.8} parent=5 // pred_fallthru
      _
    %p890 = scmp.le.s32.totalorder 2, %s10
    // Predicated region
    $region41: #{fc_discriminator.8} parent=5 // pred_check
      %p891 = pneg %p890
    $region42: #{fc_discriminator.8} parent=5 // pred_check_branch
      %893 = sbr.rel (%p891) target = $region44
    $region43: #{fc_discriminator.8} parent=5 // pred_region
      %s894 = ssub.s32 %s10, 2
      // Predicated region
      $region45: #{fc_discriminator.8} parent=43 // pred_check
        %p895 = pneg %p155
      $region46: #{fc_discriminator.8} parent=43 // pred_check_branch
        %897 = sbr.rel (%p895) target = $region48
      $region47: #{fc_discriminator.8} parent=43 // pred_region
        %s898 = smul.u32 2, %s22
        %p899 = scmp.lt.s32.totalorder %s21, 1
        %s900 = scalar_select %p899, %s21, 1
        %p901 = scmp.lt.s32.totalorder %s898, 1
        %s902 = scalar_select %p901, %s898, 1
        %s903 = smul.addr %s900, 2
        %s904 = sadd.s32 %s902, %s903
        %s905 = smul.addr %s904, 4
        %s906 = scalar_lea.vmem %s4, %s905
      $region48: #{fc_discriminator.8} parent=43 // pred_fallthru
        _
    $region44: #{fc_discriminator.8} parent=5 // pred_fallthru
      _
  $region6: #{fc_discriminator.8} parent=0 // loop_footer
    %s14 = sadd.s32 1, %s10
  $region7: #{fc_discriminator.8} parent=0 // loop_footer_branch
    %9 = sbr.rel target = $region3
  $region8: #{fc_discriminator.8} parent=0 // loop_exit
    _

// kernel: fc_discriminator.9
$region0: #{fc_discriminator.9}
  #allocation0 [shape = 'u32[]', space=smem, size = 0x4, offset = 0x4, fixed_abs, tag = 'smem constant byte address 0x4 - core index']
  #allocation1 [shape = 'u32[144,128]{1,0:T(1,128)}', space=vmem, size = 0x12000, scoped, tag = 'internal scratch']
  #allocation2 [shape = 'bf16[2,9,256]{2,1,0:T(8,128)(2,1)}', space=vmem, size = 0x4000, scoped, tag = 'scratch operand']
  #allocation3 [shape = 'f32[1,1]{1,0:T(1,128)S(1)}', space=vmem, size = 0x200, scoped, tag = 'scoped memory for fc_discriminator.9']
  %s0 = inlined_call_operand.vmem [shape: bf16[2,2,9,256], index: 0, kind: input, shape index: {}, may-alias: {0,1}]
  %s1 = inlined_call_operand.vmem [shape: bf16[2,2,9,256], index: 1, kind: input, shape index: {}, may-alias: {0,1}]
  %s2 = inlined_call_operand.vmem [shape: bf16[4,256,1], index: 2, kind: input, shape index: {}]
  %s3 = inlined_call_operand.<no memory space> [shape: f32[1,1], index: 3, kind: input, shape index: {}]
  %s4 = inlined_call_operand.vmem [shape: f32[2,1,8,1], index: 4, kind: output, shape index: {}]
  %s5 = sld [smem:[#allocation0]]
  $region49: #{fc_discriminator.9} parent=0
    _
  %s7 = ssub.s32 1, %s5
  %s8 = scalar_select 0, %s7, %s5
  %v9 = vstv %s3
  %10 = vst [vmem:[#allocation3] sm:$0x1] %v9
  loop: start=0, step=1, limit=4
  $region2: #{fc_discriminator.9} parent=0 // loop_pre_header
    _
  $region3: #{fc_discriminator.9} parent=0 // loop_header
    %s12 = sphi 0, %s16
    %p13 = scmp.ge.s32.totalorder %s12, 4
    %s19 = sphi 0, %s31
    %s20 = sphi 0, %s27
    %s21 = sphi 0, %s19
    %s22 = sphi 0, %s20
    %s23 = sphi 0, %s21
    %s24 = sphi 0, %s22
    %s36 = sphi 0, %s38
    %s39 = sphi 0, %s36
    %s40 = sphi 0, %s39
    %s56 = sphi 0, %s40
    %s66 = sphi 0, %s68
    %s69 = sphi 0, %s66
    %s70 = sphi 0, %s69
    %s86 = sphi 0, %s70
    %s90 = sphi 0, %s90
    %s92 = sphi 0, %s90
    %s93 = sphi 0, %s92
    %s107 = sphi 0, %s93
    %s111 = sphi 0, %s111
    %s113 = sphi 0, %s111
    %s114 = sphi 0, %s113
    %s128 = sphi 0, %s114
    %s136 = sphi 0, %s138
    %s139 = sphi 0, %s136
    %s140 = sphi 0, %s139
    %s156 = sphi 0, %s140
  $region4: #{fc_discriminator.9} parent=0 // loop_header_branch
    %15 = sbr.rel (%p13) target = $region8
  $region5: #{fc_discriminator.9} parent=0 // loop_body
    %s17 = ssub.s32 %s12, 1
    %s18 = ssub.s32 %s12, 2
    %s25 = sadd.s32 1, %s20
    %p26 = scmp.ge.s32.totalorder %s25, 1
    %s27 = scalar_select %p26, 0, %s25
    %s28 = sadd.s32 1, %s19
    %s29 = scalar_select %p26, %s28, %s19
    %p30 = scmp.ge.s32.totalorder %s29, 2
    %s31 = scalar_select %p30, 0, %s29
    %s32 = ssub.s32 %s19, %s31
    %s33 = ssub.s32 %s20, %s27
    %s34 = sor.u32 %s32, %s33
    %p35 = scmp.eq.s32.totalorder %s34, 0
    %s37 = sadd.s32 %s36, 1
    %s38 = scalar_select %p35, %s36, %s37
    %p41 = pneg %p35
    %p42 = scmp.eq.s32.totalorder %s12, 1
    %p43 = por %p41, %p42
    %p44 = scmp.ne.s32.totalorder %s36, %s39
    %p45 = scmp.eq.s32.totalorder %s12, 0
    %p46 = por %p44, %p45
    %p47 = scmp.ne.s32.totalorder %s36, %s39
    %p48 = scmp.eq.s32.totalorder %s17, 1
    %p49 = por %p47, %p48
    %p50 = scmp.ne.s32.totalorder %s39, %s40
    %p51 = scmp.eq.s32.totalorder %s17, 0
    %p52 = por %p50, %p51
    %p53 = scmp.ne.s32.totalorder %s39, %s40
    %p54 = scmp.eq.s32.totalorder %s18, 1
    %p55 = por %p53, %p54
    %p57 = scmp.ne.s32.totalorder %s40, %s56
    %p58 = scmp.eq.s32.totalorder %s18, 0
    %p59 = por %p57, %p58
    %s60 = sadd.s32 %s20, 1
    %s61 = sadd.s32 %s27, 1
    %s62 = ssub.s32 %s19, %s31
    %s63 = ssub.s32 %s60, %s61
    %s64 = sor.u32 %s62, %s63
    %p65 = scmp.eq.s32.totalorder %s64, 0
    %s67 = sadd.s32 %s66, 1
    %s68 = scalar_select %p65, %s66, %s67
    %p71 = pneg %p65
    %p72 = scmp.eq.s32.totalorder %s12, 1
    %p73 = por %p71, %p72
    %p74 = scmp.ne.s32.totalorder %s66, %s69
    %p75 = scmp.eq.s32.totalorder %s12, 0
    %p76 = por %p74, %p75
    %p77 = scmp.ne.s32.totalorder %s66, %s69
    %p78 = scmp.eq.s32.totalorder %s17, 1
    %p79 = por %p77, %p78
    %p80 = scmp.ne.s32.totalorder %s69, %s70
    %p81 = scmp.eq.s32.totalorder %s17, 0
    %p82 = por %p80, %p81
    %p83 = scmp.ne.s32.totalorder %s69, %s70
    %p84 = scmp.eq.s32.totalorder %s18, 1
    %p85 = por %p83, %p84
    %p87 = scmp.ne.s32.totalorder %s70, %s86
    %p88 = scmp.eq.s32.totalorder %s18, 0
    %p89 = por %p87, %p88
    %s91 = sadd.s32 %s90, 1
    %p94 = scmp.eq.s32.totalorder %s12, 1
    %p95 = scmp.ne.s32.totalorder %s90, %s92
    %p96 = scmp.eq.s32.totalorder %s12, 0
    %p97 = por %p95, %p96
    %p98 = scmp.ne.s32.totalorder %s90, %s92
    %p99 = scmp.eq.s32.totalorder %s17, 1
    %p100 = por %p98, %p99
    %p101 = scmp.ne.s32.totalorder %s92, %s93
    %p102 = scmp.eq.s32.totalorder %s17, 0
    %p103 = por %p101, %p102
    %p104 = scmp.ne.s32.totalorder %s92, %s93
    %p105 = scmp.eq.s32.totalorder %s18, 1
    %p106 = por %p104, %p105
    %p108 = scmp.ne.s32.totalorder %s93, %s107
    %p109 = scmp.eq.s32.totalorder %s18, 0
    %p110 = por %p108, %p109
    %s112 = sadd.s32 %s111, 1
    %p115 = scmp.eq.s32.totalorder %s12, 1
    %p116 = scmp.ne.s32.totalorder %s111, %s113
    %p117 = scmp.eq.s32.totalorder %s12, 0
    %p118 = por %p116, %p117
    %p119 = scmp.ne.s32.totalorder %s111, %s113
    %p120 = scmp.eq.s32.totalorder %s17, 1
    %p121 = por %p119, %p120
    %p122 = scmp.ne.s32.totalorder %s113, %s114
    %p123 = scmp.eq.s32.totalorder %s17, 0
    %p124 = por %p122, %p123
    %p125 = scmp.ne.s32.totalorder %s113, %s114
    %p126 = scmp.eq.s32.totalorder %s18, 1
    %p127 = por %p125, %p126
    %p129 = scmp.ne.s32.totalorder %s114, %s128
    %p130 = scmp.eq.s32.totalorder %s18, 0
    %p131 = por %p129, %p130
    %s132 = ssub.s32 %s19, %s31
    %s133 = ssub.s32 %s20, %s27
    %s134 = sor.u32 %s132, %s133
    %p135 = scmp.eq.s32.totalorder %s134, 0
    %s137 = sadd.s32 %s136, 1
    %s138 = scalar_select %p135, %s136, %s137
    %p141 = pneg %p135
    %p142 = scmp.eq.s32.totalorder %s12, 1
    %p143 = por %p141, %p142
    %p144 = scmp.ne.s32.totalorder %s136, %s139
    %p145 = scmp.eq.s32.totalorder %s12, 0
    %p146 = por %p144, %p145
    %p147 = scmp.ne.s32.totalorder %s136, %s139
    %p148 = scmp.eq.s32.totalorder %s17, 1
    %p149 = por %p147, %p148
    %p150 = scmp.ne.s32.totalorder %s139, %s140
    %p151 = scmp.eq.s32.totalorder %s17, 0
    %p152 = por %p150, %p151
    %p153 = scmp.ne.s32.totalorder %s139, %s140
    %p154 = scmp.eq.s32.totalorder %s18, 1
    %p155 = por %p153, %p154
    %p157 = scmp.ne.s32.totalorder %s140, %s156
    %p158 = scmp.eq.s32.totalorder %s18, 0
    %p159 = por %p157, %p158
    %p160 = scmp.le.s32.totalorder 1, %s12
    %p161 = scmp.lt.s32.totalorder %s12, 3
    %p162 = pnand %p160, %p161
    %p163 = pneg %p162
    // Predicated region
    $region9: #{fc_discriminator.9} parent=5 // pred_check
      _
    $region10: #{fc_discriminator.9} parent=5 // pred_check_branch
      %165 = sbr.rel (%p162) target = $region12
    $region11: #{fc_discriminator.9} parent=5 // pred_region
      %s166 = ssub.s32 %s12, 1
      // Predicated region
      $region13: #{fc_discriminator.9} parent=11 // pred_check
        %p167 = pneg %p103
      $region14: #{fc_discriminator.9} parent=11 // pred_check_branch
        %169 = sbr.rel (%p167) target = $region16
      $region15: #{fc_discriminator.9} parent=11 // pred_region
        _
      $region16: #{fc_discriminator.9} parent=11 // pred_fallthru
        _
      // Predicated region
      $region17: #{fc_discriminator.9} parent=11 // pred_check
        %p170 = pneg %p124
      $region18: #{fc_discriminator.9} parent=11 // pred_check_branch
        %172 = sbr.rel (%p170) target = $region20
      $region19: #{fc_discriminator.9} parent=11 // pred_region
        _
      $region20: #{fc_discriminator.9} parent=11 // pred_fallthru
        _
    $region12: #{fc_discriminator.9} parent=5 // pred_fallthru
      _
    %p173 = scmp.lt.s32.totalorder %s12, 2
    // Predicated region
    $region21: #{fc_discriminator.9} parent=5 // pred_check
      %p174 = pneg %p173
    $region22: #{fc_discriminator.9} parent=5 // pred_check_branch
      %176 = sbr.rel (%p174) target = $region24
    $region23: #{fc_discriminator.9} parent=5 // pred_region
      // Predicated region
      $region25: #{fc_discriminator.9} parent=23 // pred_check
        %p177 = pneg %p46
      $region26: #{fc_discriminator.9} parent=23 // pred_check_branch
        %179 = sbr.rel (%p177) target = $region28
      $region27: #{fc_discriminator.9} parent=23 // pred_region
        %p180 = scmp.lt.s32.totalorder %s19, 1
        %s181 = scalar_select %p180, %s19, 1
        %p182 = scmp.lt.s32.totalorder %s20, 1
        %s183 = scalar_select %p182, %s20, 1
        %s184 = smul.addr %s183, 4
        %s185 = smul.addr %s181, 8
        %s186 = sadd.s32 %s184, %s185
        %s187 = smul.addr %s186, 4
        %s188 = scalar_lea.vmem %s0, %s187
      $region28: #{fc_discriminator.9} parent=23 // pred_fallthru
        _
      // Predicated region
      $region29: #{fc_discriminator.9} parent=23 // pred_check
        %p189 = pneg %p76
      $region30: #{fc_discriminator.9} parent=23 // pred_check_branch
        %191 = sbr.rel (%p189) target = $region32
      $region31: #{fc_discriminator.9} parent=23 // pred_region
        %s192 = sadd.s32 %s20, 1
        %p193 = scmp.lt.s32.totalorder %s19, 1
        %s194 = scalar_select %p193, %s19, 1
        %p195 = scmp.lt.s32.totalorder %s192, 1
        %s196 = scalar_select %p195, %s192, 1
        %s197 = smul.addr %s196, 4
        %s198 = smul.addr %s194, 8
        %s199 = sadd.s32 %s197, %s198
        %s200 = smul.addr %s199, 4
        %s201 = scalar_lea.vmem %s1, %s200
        %s202 = sadd.s32 %s20, 1
      $region32: #{fc_discriminator.9} parent=23 // pred_fallthru
        _
    $region24: #{fc_discriminator.9} parent=5 // pred_fallthru
      _
    %p203 = scmp.le.s32.totalorder 1, %s12
    %p204 = scmp.lt.s32.totalorder %s12, 3
    %p205 = pnand %p203, %p204
    %p206 = pneg %p205
    // Predicated region
    $region33: #{fc_discriminator.9} parent=5 // pred_check
      _
    $region34: #{fc_discriminator.9} parent=5 // pred_check_branch
      %208 = sbr.rel (%p205) target = $region36
    $region35: #{fc_discriminator.9} parent=5 // pred_region
      %s209 = ssub.s32 %s12, 1
      %p210 = scmp.lt.s32.totalorder %s21, 1
      %s211 = scalar_select %p210, %s21, 1
      %p212 = scmp.lt.s32.totalorder %s22, 1
      %s213 = scalar_select %p212, %s22, 1
      %s214 = smul.addr %s213, 4
      %s215 = smul.addr %s211, 8
      %s216 = sadd.s32 %s214, %s215
      %s217 = smul.addr %s216, 4
      %s218 = scalar_lea.vmem %s0, %s217
      %p219 = pneg %p52
      %p220 = pneg %p49
      %s221 = sadd.s32 %s22, 1
      %p222 = scmp.lt.s32.totalorder %s21, 1
      %s223 = scalar_select %p222, %s21, 1
      %p224 = scmp.lt.s32.totalorder %s221, 1
      %s225 = scalar_select %p224, %s221, 1
      %s226 = smul.addr %s225, 4
      %s227 = smul.addr %s223, 8
      %s228 = sadd.s32 %s226, %s227
      %s229 = smul.addr %s228, 4
      %s230 = scalar_lea.vmem %s1, %s229
      %p231 = pneg %p82
      %p232 = pneg %p79
      %p233 = pneg %p103
      %p234 = pneg %p100
      %p235 = pneg %p124
      %p236 = pneg %p121
      %p237 = pneg %p152
      %p238 = pneg %p149
      %p239 = scmp.lt.s32.totalorder %s21, 1
      %s240 = scalar_select %p239, %s21, 1
      %p241 = scmp.lt.s32.totalorder %s22, 0
      %s242 = scalar_select %p241, %s22, 0
      %s243 = sadd.s32 %s242, %s240
      %s244 = smul.addr %s243, 8
      %s245 = scalar_lea.vmem %s4, %s244
      %p246 = scmp.lt.s32.totalorder %s21, 1
      %s247 = scalar_select %p246, %s21, 1
      %p248 = scmp.lt.s32.totalorder %s22, 1
      %s249 = scalar_select %p248, %s22, 1
      %s250 = smul.addr %s249, 4
      %s251 = smul.addr %s247, 8
      %s252 = sadd.s32 %s250, %s251
      %s253 = smul.addr %s252, 4
      %s254 = scalar_lea.vmem %s0, %s253
      %s255 = sadd.s32 %s22, 1
      %p256 = scmp.lt.s32.totalorder %s21, 1
      %s257 = scalar_select %p256, %s21, 1
      %p258 = scmp.lt.s32.totalorder %s255, 1
      %s259 = scalar_select %p258, %s255, 1
      %s260 = smul.addr %s259, 4
      %s261 = smul.addr %s257, 8
      %s262 = sadd.s32 %s260, %s261
      %s263 = smul.addr %s262, 4
      %s264 = scalar_lea.vmem %s1, %s263
      %s265 = sadd.s32 %s22, 1
      %p266 = scmp.lt.s32.totalorder %s21, 1
      %s267 = scalar_select %p266, %s21, 1
      %p268 = scmp.lt.s32.totalorder %s22, 0
      %s269 = scalar_select %p268, %s22, 0
      %s270 = sadd.s32 %s269, %s267
      %s271 = smul.addr %s270, 8
      %s272 = scalar_lea.vmem %s4, %s271
      %v274 = vld [vmem:[%s254] sm:$0xff]
      %v275 = vld [vmem:[%s254 + $0x8] sm:$0x11]
      %276 = vst [vmem:[#allocation2] sm:$0xff] %v274
      %vm277 = vcmask 1040384
      %vm278 = vsmask.f32 256
      %vm279 = vmand %vm277, %vm278
      %vm280 = vcmask 1044484
      %vm281 = vsmask.f32 4352
      %vm282 = vmand %vm280, %vm281
      %vm283 = vmor %vm282, %vm279
      %v284 = vld [vmem:[#allocation2 + $0x8] sm:$0x11]
      %v285 = vsel %vm283, %v275, %v284
      %286 = vst [vmem:[#allocation2 + $0x8] sm:$0x11] %v285
      %v287 = vld [vmem:[%s264] sm:$0xff]
      %v288 = vld [vmem:[%s264 + $0x8] sm:$0x11]
      %s289 = scalar_lea.vmem [#allocation2], 16
      %290 = vst [vmem:[%s289] sm:$0xff] %v287
      %v291 = vld [vmem:[%s289 + $0x8] sm:$0x11]
      %v292 = vsel %vm283, %v288, %v291
      %293 = vst [vmem:[%s289 + $0x8] sm:$0x11] %v292
      %v294 = vld [vmem:[#allocation3] sm:$0x1]
      %v296 = vlaneseq
      %v297 = vshrl.u32 %v296, 7
      %v298 = vsub.s32 0, %v297
      %v299 = vrot.slane %v294, %v298
      %v301 = vld [vmem:[#allocation2] sm:$0xff]
      %v302 = vld [vmem:[%s2] sm:$0xf]
      %v303 = vld [vmem:[%s2 + $0x4] sm:$0xf]
      %v304 = vld [vmem:[%s2 + $0x8] sm:$0xf]
      %v305 = vld [vmem:[%s2 + $0xc] sm:$0xf]
      %v306 = vld [vmem:[%s2 + $0x10] sm:$0xf]
      %v307 = vld [vmem:[%s2 + $0x14] sm:$0xf]
      %v308 = vld [vmem:[%s2 + $0x18] sm:$0xf]
      %v309 = vld [vmem:[%s2 + $0x1c] sm:$0xf]
      %v310 = vld [vmem:[%s2 + $0x20] sm:$0xf]
      %v311 = vld [vmem:[%s2 + $0x24] sm:$0xf]
      %v312 = vld [vmem:[%s2 + $0x28] sm:$0xf]
      %v313 = vld [vmem:[%s2 + $0x2c] sm:$0xf]
      %v314 = vld [vmem:[%s2 + $0x30] sm:$0xf]
      %v315 = vld [vmem:[%s2 + $0x34] sm:$0xf]
      %v316 = vld [vmem:[%s2 + $0x38] sm:$0xf]
      %v317 = vld [vmem:[%s2 + $0x3c] sm:$0xf]
      %v318 = vld [vmem:[%s2 + $0x40] sm:$0xf]
      %v319 = vld [vmem:[%s2 + $0x44] sm:$0xf]
      %v320 = vld [vmem:[%s2 + $0x48] sm:$0xf]
      %v321 = vld [vmem:[%s2 + $0x4c] sm:$0xf]
      %v322 = vld [vmem:[%s2 + $0x50] sm:$0xf]
      %v323 = vld [vmem:[%s2 + $0x54] sm:$0xf]
      %v324 = vld [vmem:[%s2 + $0x58] sm:$0xf]
      %v325 = vld [vmem:[%s2 + $0x5c] sm:$0xf]
      %v326 = vld [vmem:[%s2 + $0x60] sm:$0xf]
      %v327 = vld [vmem:[%s2 + $0x64] sm:$0xf]
      %v328 = vld [vmem:[%s2 + $0x68] sm:$0xf]
      %v329 = vld [vmem:[%s2 + $0x6c] sm:$0xf]
      %v330 = vld [vmem:[%s2 + $0x70] sm:$0xf]
      %v331 = vld [vmem:[%s2 + $0x74] sm:$0xf]
      %v332 = vld [vmem:[%s2 + $0x78] sm:$0xf]
      %v333 = vld [vmem:[%s2 + $0x7c] sm:$0xf]
      %v335 = vunpack.c.l.b16 %v301
      %v336 = vunpack.c.h.b16 %v301
      %v337 = vpack.c.b16 %v335, %v335
      %v338 = vpack.c.b16 %v336, %v336
      %v373 = vunpack.c.l.b16 %v302
      %v374 = vunpack.c.l.b16 %v303
      %v375 = vunpack.c.l.b16 %v304
      %v376 = vunpack.c.l.b16 %v305
      %v377 = vunpack.c.l.b16 %v306
      %v378 = vunpack.c.l.b16 %v307
      %v379 = vunpack.c.l.b16 %v308
      %v380 = vunpack.c.l.b16 %v309
      %v381 = vunpack.c.l.b16 %v310
      %v382 = vunpack.c.l.b16 %v311
      %v383 = vunpack.c.l.b16 %v312
      %v384 = vunpack.c.l.b16 %v313
      %v385 = vunpack.c.l.b16 %v314
      %v386 = vunpack.c.l.b16 %v315
      %v387 = vunpack.c.l.b16 %v316
      %v388 = vunpack.c.l.b16 %v317
      %v389 = vunpack.c.l.b16 %v318
      %v390 = vunpack.c.l.b16 %v319
      %v391 = vunpack.c.l.b16 %v320
      %v392 = vunpack.c.l.b16 %v321
      %v393 = vunpack.c.l.b16 %v322
      %v394 = vunpack.c.l.b16 %v323
      %v395 = vunpack.c.l.b16 %v324
      %v396 = vunpack.c.l.b16 %v325
      %v397 = vunpack.c.l.b16 %v326
      %v398 = vunpack.c.l.b16 %v327
      %v399 = vunpack.c.l.b16 %v328
      %v400 = vunpack.c.l.b16 %v329
      %v401 = vunpack.c.l.b16 %v330
      %v402 = vunpack.c.l.b16 %v331
      %v403 = vunpack.c.l.b16 %v332
      %v404 = vunpack.c.l.b16 %v333
      %v405 = vpack.c.b16 %v374, %v373
      %v406 = vpack.c.b16 %v376, %v375
      %v407 = vpack.c.b16 %v378, %v377
      %v408 = vpack.c.b16 %v380, %v379
      %v409 = vpack.c.b16 %v382, %v381
      %v410 = vpack.c.b16 %v384, %v383
      %v411 = vpack.c.b16 %v386, %v385
      %v412 = vpack.c.b16 %v388, %v387
      %v413 = vpack.c.b16 %v390, %v389
      %v414 = vpack.c.b16 %v392, %v391
      %v415 = vpack.c.b16 %v394, %v393
      %v416 = vpack.c.b16 %v396, %v395
      %v417 = vpack.c.b16 %v398, %v397
      %v418 = vpack.c.b16 %v400, %v399
      %v419 = vpack.c.b16 %v402, %v401
      %v420 = vpack.c.b16 %v404, %v403
      %437 = vmatprep.subr.bf16.mxu0 0
      %438 = vmatpush1.bf16.msra.mxu0 %v405
      %439 = vmatprep.subr.bf16.mxu0 0
      %440 = vmatpush1.bf16.msra.mxu0 %v406
      %441 = vmatprep.subr.bf16.mxu0 0
      %442 = vmatpush1.bf16.msra.mxu0 %v407
      %443 = vmatprep.subr.bf16.mxu0 0
      %444 = vmatpush1.bf16.msra.mxu0 %v408
      %445 = vmatprep.subr.bf16.mxu0 0
      %446 = vmatpush1.bf16.msra.mxu0 %v409
      %447 = vmatprep.subr.bf16.mxu0 0
      %448 = vmatpush1.bf16.msra.mxu0 %v410
      %449 = vmatprep.subr.bf16.mxu0 0
      %450 = vmatpush1.bf16.msra.mxu0 %v411
      %451 = vmatprep.subr.bf16.mxu0 0
      %452 = vmatpush1.bf16.msra.mxu0 %v412
      %453 = vmatprep.subr.bf16.mxu0 0
      %454 = vmatpush1.bf16.msra.mxu0 %v413
      %455 = vmatprep.subr.bf16.mxu0 0
      %456 = vmatpush1.bf16.msra.mxu0 %v414
      %457 = vmatprep.subr.bf16.mxu0 0
      %458 = vmatpush1.bf16.msra.mxu0 %v415
      %459 = vmatprep.subr.bf16.mxu0 0
      %460 = vmatpush1.bf16.msra.mxu0 %v416
      %461 = vmatprep.subr.bf16.mxu0 0
      %462 = vmatpush1.bf16.msra.mxu0 %v417
      %463 = vmatprep.subr.bf16.mxu0 0
      %464 = vmatpush1.bf16.msra.mxu0 %v418
      %465 = vmatprep.subr.bf16.mxu0 0
      %466 = vmatpush1.bf16.msra.mxu0 %v419
      %467 = vmatprep.subr.bf16.mxu0 0
      %468 = vmatpush1.bf16.msra.mxu0 %v420
      %469 = vmatprep.mubr.bf16.mxu0 %v338
      %470 = vmatmul.mubr.bf16.gmra.mrb[0].mxu0 %v337
      %v471 = vpop.f32.mrb[0].mxu0
      %v472 = vadd.f32 0.0, %v471
      %v473 = vpop.f32.mrb[0].mxu0
      %v474 = vpop.f32.mrb[0].mxu0
      %v475 = vpop.f32.mrb[0].mxu0
      %476 = vdwg.mxu0
      %v477 = vadd.f32 %v299, %v472
      %v478 = vld [vmem:[#allocation2] sm:$0xff]
      %v479 = vld [vmem:[#allocation2 + $0x8] sm:$0x11]
      %s480 = scalar_lea.vmem %s2, 128
      %v481 = vld [vmem:[%s480] sm:$0xf]
      %v482 = vld [vmem:[%s480 + $0x4] sm:$0xf]
      %v483 = vld [vmem:[%s480 + $0x8] sm:$0xf]
      %v484 = vld [vmem:[%s480 + $0xc] sm:$0xf]
      %v485 = vld [vmem:[%s480 + $0x10] sm:$0xf]
      %v486 = vld [vmem:[%s480 + $0x14] sm:$0xf]
      %v487 = vld [vmem:[%s480 + $0x18] sm:$0xf]
      %v488 = vld [vmem:[%s480 + $0x1c] sm:$0xf]
      %v489 = vld [vmem:[%s480 + $0x20] sm:$0xf]
      %v490 = vld [vmem:[%s480 + $0x24] sm:$0xf]
      %v491 = vld [vmem:[%s480 + $0x28] sm:$0xf]
      %v492 = vld [vmem:[%s480 + $0x2c] sm:$0xf]
      %v493 = vld [vmem:[%s480 + $0x30] sm:$0xf]
      %v494 = vld [vmem:[%s480 + $0x34] sm:$0xf]
      %v495 = vld [vmem:[%s480 + $0x38] sm:$0xf]
      %v496 = vld [vmem:[%s480 + $0x3c] sm:$0xf]
      %v497 = vld [vmem:[%s480 + $0x40] sm:$0xf]
      %v498 = vld [vmem:[%s480 + $0x44] sm:$0xf]
      %v499 = vld [vmem:[%s480 + $0x48] sm:$0xf]
      %v500 = vld [vmem:[%s480 + $0x4c] sm:$0xf]
      %v501 = vld [vmem:[%s480 + $0x50] sm:$0xf]
      %v502 = vld [vmem:[%s480 + $0x54] sm:$0xf]
      %v503 = vld [vmem:[%s480 + $0x58] sm:$0xf]
      %v504 = vld [vmem:[%s480 + $0x5c] sm:$0xf]
      %v505 = vld [vmem:[%s480 + $0x60] sm:$0xf]
      %v506 = vld [vmem:[%s480 + $0x64] sm:$0xf]
      %v507 = vld [vmem:[%s480 + $0x68] sm:$0xf]
      %v508 = vld [vmem:[%s480 + $0x6c] sm:$0xf]
      %v509 = vld [vmem:[%s480 + $0x70] sm:$0xf]
      %v510 = vld [vmem:[%s480 + $0x74] sm:$0xf]
      %v511 = vld [vmem:[%s480 + $0x78] sm:$0xf]
      %v512 = vld [vmem:[%s480 + $0x7c] sm:$0xf]
      %v515 = vunpack.c.l.b16 %v478
      %v516 = vunpack.c.h.b16 %v478
      %v517 = vunpack.c.l.b16 %v479
      %v518 = vunpack.c.h.b16 %v479
      %v519 = vpack.c.b16 %v517, %v515
      %v520 = vpack.c.b16 %v518, %v516
      %v522 = vshrl.u32 %v519, 16
      %v524 = vshll.u32 %v519, 16
      %v526 = vrot.slane %v524, 1
      %v527 = vor.u32 %v522, %v526
      %v529 = vshrl.u32 %v520, 16
      %v531 = vshll.u32 %v520, 16
      %v533 = vrot.slane %v531, 1
      %v534 = vor.u32 %v529, %v533
      %v569 = vunpack.c.l.b16 %v481
      %v570 = vunpack.c.l.b16 %v482
      %v571 = vunpack.c.l.b16 %v483
      %v572 = vunpack.c.l.b16 %v484
      %v573 = vunpack.c.l.b16 %v485
      %v574 = vunpack.c.l.b16 %v486
      %v575 = vunpack.c.l.b16 %v487
      %v576 = vunpack.c.l.b16 %v488
      %v577 = vunpack.c.l.b16 %v489
      %v578 = vunpack.c.l.b16 %v490
      %v579 = vunpack.c.l.b16 %v491
      %v580 = vunpack.c.l.b16 %v492
      %v581 = vunpack.c.l.b16 %v493
      %v582 = vunpack.c.l.b16 %v494
      %v583 = vunpack.c.l.b16 %v495
      %v584 = vunpack.c.l.b16 %v496
      %v585 = vunpack.c.l.b16 %v497
      %v586 = vunpack.c.l.b16 %v498
      %v587 = vunpack.c.l.b16 %v499
      %v588 = vunpack.c.l.b16 %v500
      %v589 = vunpack.c.l.b16 %v501
      %v590 = vunpack.c.l.b16 %v502
      %v591 = vunpack.c.l.b16 %v503
      %v592 = vunpack.c.l.b16 %v504
      %v593 = vunpack.c.l.b16 %v505
      %v594 = vunpack.c.l.b16 %v506
      %v595 = vunpack.c.l.b16 %v507
      %v596 = vunpack.c.l.b16 %v508
      %v597 = vunpack.c.l.b16 %v509
      %v598 = vunpack.c.l.b16 %v510
      %v599 = vunpack.c.l.b16 %v511
      %v600 = vunpack.c.l.b16 %v512
      %v601 = vpack.c.b16 %v570, %v569
      %v602 = vpack.c.b16 %v572, %v571
      %v603 = vpack.c.b16 %v574, %v573
      %v604 = vpack.c.b16 %v576, %v575
      %v605 = vpack.c.b16 %v578, %v577
      %v606 = vpack.c.b16 %v580, %v579
      %v607 = vpack.c.b16 %v582, %v581
      %v608 = vpack.c.b16 %v584, %v583
      %v609 = vpack.c.b16 %v586, %v585
      %v610 = vpack.c.b16 %v588, %v587
      %v611 = vpack.c.b16 %v590, %v589
      %v612 = vpack.c.b16 %v592, %v591
      %v613 = vpack.c.b16 %v594, %v593
      %v614 = vpack.c.b16 %v596, %v595
      %v615 = vpack.c.b16 %v598, %v597
      %v616 = vpack.c.b16 %v600, %v599
      %633 = vmatprep.subr.bf16.mxu0 0
      %634 = vmatpush1.bf16.msra.mxu0 %v601
      %635 = vmatprep.subr.bf16.mxu0 0
      %636 = vmatpush1.bf16.msra.mxu0 %v602
      %637 = vmatprep.subr.bf16.mxu0 0
      %638 = vmatpush1.bf16.msra.mxu0 %v603
      %639 = vmatprep.subr.bf16.mxu0 0
      %640 = vmatpush1.bf16.msra.mxu0 %v604
      %641 = vmatprep.subr.bf16.mxu0 0
      %642 = vmatpush1.bf16.msra.mxu0 %v605
      %643 = vmatprep.subr.bf16.mxu0 0
      %644 = vmatpush1.bf16.msra.mxu0 %v606
      %645 = vmatprep.subr.bf16.mxu0 0
      %646 = vmatpush1.bf16.msra.mxu0 %v607
      %647 = vmatprep.subr.bf16.mxu0 0
      %648 = vmatpush1.bf16.msra.mxu0 %v608
      %649 = vmatprep.subr.bf16.mxu0 0
      %650 = vmatpush1.bf16.msra.mxu0 %v609
      %651 = vmatprep.subr.bf16.mxu0 0
      %652 = vmatpush1.bf16.msra.mxu0 %v610
      %653 = vmatprep.subr.bf16.mxu0 0
      %654 = vmatpush1.bf16.msra.mxu0 %v611
      %655 = vmatprep.subr.bf16.mxu0 0
      %656 = vmatpush1.bf16.msra.mxu0 %v612
      %657 = vmatprep.subr.bf16.mxu0 0
      %658 = vmatpush1.bf16.msra.mxu0 %v613
      %659 = vmatprep.subr.bf16.mxu0 0
      %660 = vmatpush1.bf16.msra.mxu0 %v614
      %661 = vmatprep.subr.bf16.mxu0 0
      %662 = vmatpush1.bf16.msra.mxu0 %v615
      %663 = vmatprep.subr.bf16.mxu0 0
      %664 = vmatpush1.bf16.msra.mxu0 %v616
      %665 = vmatprep.mubr.bf16.mxu0 %v534
      %666 = vmatmul.mubr.bf16.gmra.mrb[0].mxu0 %v527
      %v667 = vpop.f32.mrb[0].mxu0
      %v668 = vadd.f32 0.0, %v667
      %v669 = vpop.f32.mrb[0].mxu0
      %v670 = vpop.f32.mrb[0].mxu0
      %v671 = vpop.f32.mrb[0].mxu0
      %672 = vdwg.mxu0
      %v673 = vadd.f32 %v477, %v668
      %v674 = vld [vmem:[%s289] sm:$0xff]
      %s675 = scalar_lea.vmem %s2, 256
      %v676 = vld [vmem:[%s675] sm:$0xf]
      %v677 = vld [vmem:[%s675 + $0x4] sm:$0xf]
      %v678 = vld [vmem:[%s675 + $0x8] sm:$0xf]
      %v679 = vld [vmem:[%s675 + $0xc] sm:$0xf]
      %v680 = vld [vmem:[%s675 + $0x10] sm:$0xf]
      %v681 = vld [vmem:[%s675 + $0x14] sm:$0xf]
      %v682 = vld [vmem:[%s675 + $0x18] sm:$0xf]
      %v683 = vld [vmem:[%s675 + $0x1c] sm:$0xf]
      %v684 = vld [vmem:[%s675 + $0x20] sm:$0xf]
      %v685 = vld [vmem:[%s675 + $0x24] sm:$0xf]
      %v686 = vld [vmem:[%s675 + $0x28] sm:$0xf]
      %v687 = vld [vmem:[%s675 + $0x2c] sm:$0xf]
      %v688 = vld [vmem:[%s675 + $0x30] sm:$0xf]
      %v689 = vld [vmem:[%s675 + $0x34] sm:$0xf]
      %v690 = vld [vmem:[%s675 + $0x38] sm:$0xf]
      %v691 = vld [vmem:[%s675 + $0x3c] sm:$0xf]
      %v692 = vld [vmem:[%s675 + $0x40] sm:$0xf]
      %v693 = vld [vmem:[%s675 + $0x44] sm:$0xf]
      %v694 = vld [vmem:[%s675 + $0x48] sm:$0xf]
      %v695 = vld [vmem:[%s675 + $0x4c] sm:$0xf]
      %v696 = vld [vmem:[%s675 + $0x50] sm:$0xf]
      %v697 = vld [vmem:[%s675 + $0x54] sm:$0xf]
      %v698 = vld [vmem:[%s675 + $0x58] sm:$0xf]
      %v699 = vld [vmem:[%s675 + $0x5c] sm:$0xf]
      %v700 = vld [vmem:[%s675 + $0x60] sm:$0xf]
      %v701 = vld [vmem:[%s675 + $0x64] sm:$0xf]
      %v702 = vld [vmem:[%s675 + $0x68] sm:$0xf]
      %v703 = vld [vmem:[%s675 + $0x6c] sm:$0xf]
      %v704 = vld [vmem:[%s675 + $0x70] sm:$0xf]
      %v705 = vld [vmem:[%s675 + $0x74] sm:$0xf]
      %v706 = vld [vmem:[%s675 + $0x78] sm:$0xf]
      %v707 = vld [vmem:[%s675 + $0x7c] sm:$0xf]
      %v709 = vunpack.c.l.b16 %v674
      %v710 = vunpack.c.h.b16 %v674
      %v711 = vpack.c.b16 %v709, %v709
      %v712 = vpack.c.b16 %v710, %v710
      %v747 = vunpack.c.l.b16 %v676
      %v748 = vunpack.c.l.b16 %v677
      %v749 = vunpack.c.l.b16 %v678
      %v750 = vunpack.c.l.b16 %v679
      %v751 = vunpack.c.l.b16 %v680
      %v752 = vunpack.c.l.b16 %v681
      %v753 = vunpack.c.l.b16 %v682
      %v754 = vunpack.c.l.b16 %v683
      %v755 = vunpack.c.l.b16 %v684
      %v756 = vunpack.c.l.b16 %v685
      %v757 = vunpack.c.l.b16 %v686
      %v758 = vunpack.c.l.b16 %v687
      %v759 = vunpack.c.l.b16 %v688
      %v760 = vunpack.c.l.b16 %v689
      %v761 = vunpack.c.l.b16 %v690
      %v762 = vunpack.c.l.b16 %v691
      %v763 = vunpack.c.l.b16 %v692
      %v764 = vunpack.c.l.b16 %v693
      %v765 = vunpack.c.l.b16 %v694
      %v766 = vunpack.c.l.b16 %v695
      %v767 = vunpack.c.l.b16 %v696
      %v768 = vunpack.c.l.b16 %v697
      %v769 = vunpack.c.l.b16 %v698
      %v770 = vunpack.c.l.b16 %v699
      %v771 = vunpack.c.l.b16 %v700
      %v772 = vunpack.c.l.b16 %v701
      %v773 = vunpack.c.l.b16 %v702
      %v774 = vunpack.c.l.b16 %v703
      %v775 = vunpack.c.l.b16 %v704
      %v776 = vunpack.c.l.b16 %v705
      %v777 = vunpack.c.l.b16 %v706
      %v778 = vunpack.c.l.b16 %v707
      %v779 = vpack.c.b16 %v748, %v747
      %v780 = vpack.c.b16 %v750, %v749
      %v781 = vpack.c.b16 %v752, %v751
      %v782 = vpack.c.b16 %v754, %v753
      %v783 = vpack.c.b16 %v756, %v755
      %v784 = vpack.c.b16 %v758, %v757
      %v785 = vpack.c.b16 %v760, %v759
      %v786 = vpack.c.b16 %v762, %v761
      %v787 = vpack.c.b16 %v764, %v763
      %v788 = vpack.c.b16 %v766, %v765
      %v789 = vpack.c.b16 %v768, %v767
      %v790 = vpack.c.b16 %v770, %v769
      %v791 = vpack.c.b16 %v772, %v771
      %v792 = vpack.c.b16 %v774, %v773
      %v793 = vpack.c.b16 %v776, %v775
      %v794 = vpack.c.b16 %v778, %v777
      %811 = vmatprep.subr.bf16.mxu0 0
      %812 = vmatpush1.bf16.msra.mxu0 %v779
      %813 = vmatprep.subr.bf16.mxu0 0
      %814 = vmatpush1.bf16.msra.mxu0 %v780
      %815 = vmatprep.subr.bf16.mxu0 0
      %816 = vmatpush1.bf16.msra.mxu0 %v781
      %817 = vmatprep.subr.bf16.mxu0 0
      %818 = vmatpush1.bf16.msra.mxu0 %v782
      %819 = vmatprep.subr.bf16.mxu0 0
      %820 = vmatpush1.bf16.msra.mxu0 %v783
      %821 = vmatprep.subr.bf16.mxu0 0
      %822 = vmatpush1.bf16.msra.mxu0 %v784
      %823 = vmatprep.subr.bf16.mxu0 0
      %824 = vmatpush1.bf16.msra.mxu0 %v785
      %825 = vmatprep.subr.bf16.mxu0 0
      %826 = vmatpush1.bf16.msra.mxu0 %v786
      %827 = vmatprep.subr.bf16.mxu0 0
      %828 = vmatpush1.bf16.msra.mxu0 %v787
      %829 = vmatprep.subr.bf16.mxu0 0
      %830 = vmatpush1.bf16.msra.mxu0 %v788
      %831 = vmatprep.subr.bf16.mxu0 0
      %832 = vmatpush1.bf16.msra.mxu0 %v789
      %833 = vmatprep.subr.bf16.mxu0 0
      %834 = vmatpush1.bf16.msra.mxu0 %v790
      %835 = vmatprep.subr.bf16.mxu0 0
      %836 = vmatpush1.bf16.msra.mxu0 %v791
      %837 = vmatprep.subr.bf16.mxu0 0
      %838 = vmatpush1.bf16.msra.mxu0 %v792
      %839 = vmatprep.subr.bf16.mxu0 0
      %840 = vmatpush1.bf16.msra.mxu0 %v793
      %841 = vmatprep.subr.bf16.mxu0 0
      %842 = vmatpush1.bf16.msra.mxu0 %v794
      %843 = vmatprep.mubr.bf16.mxu0 %v712
      %844 = vmatmul.mubr.bf16.gmra.mrb[0].mxu0 %v711
      %v845 = vpop.f32.mrb[0].mxu0
      %v846 = vadd.f32 0.0, %v845
      %v847 = vpop.f32.mrb[0].mxu0
      %v848 = vpop.f32.mrb[0].mxu0
      %v849 = vpop.f32.mrb[0].mxu0
      %850 = vdwg.mxu0
      %v851 = vadd.f32 %v673, %v846
      %v852 = vld [vmem:[%s289] sm:$0xff]
      %v853 = vld [vmem:[%s289 + $0x8] sm:$0x11]
      %s854 = scalar_lea.vmem %s2, 384
      %v855 = vld [vmem:[%s854] sm:$0xf]
      %v856 = vld [vmem:[%s854 + $0x4] sm:$0xf]
      %v857 = vld [vmem:[%s854 + $0x8] sm:$0xf]
      %v858 = vld [vmem:[%s854 + $0xc] sm:$0xf]
      %v859 = vld [vmem:[%s854 + $0x10] sm:$0xf]
      %v860 = vld [vmem:[%s854 + $0x14] sm:$0xf]
      %v861 = vld [vmem:[%s854 + $0x18] sm:$0xf]
      %v862 = vld [vmem:[%s854 + $0x1c] sm:$0xf]
      %v863 = vld [vmem:[%s854 + $0x20] sm:$0xf]
      %v864 = vld [vmem:[%s854 + $0x24] sm:$0xf]
      %v865 = vld [vmem:[%s854 + $0x28] sm:$0xf]
      %v866 = vld [vmem:[%s854 + $0x2c] sm:$0xf]
      %v867 = vld [vmem:[%s854 + $0x30] sm:$0xf]
      %v868 = vld [vmem:[%s854 + $0x34] sm:$0xf]
      %v869 = vld [vmem:[%s854 + $0x38] sm:$0xf]
      %v870 = vld [vmem:[%s854 + $0x3c] sm:$0xf]
      %v871 = vld [vmem:[%s854 + $0x40] sm:$0xf]
      %v872 = vld [vmem:[%s854 + $0x44] sm:$0xf]
      %v873 = vld [vmem:[%s854 + $0x48] sm:$0xf]
      %v874 = vld [vmem:[%s854 + $0x4c] sm:$0xf]
      %v875 = vld [vmem:[%s854 + $0x50] sm:$0xf]
      %v876 = vld [vmem:[%s854 + $0x54] sm:$0xf]
      %v877 = vld [vmem:[%s854 + $0x58] sm:$0xf]
      %v878 = vld [vmem:[%s854 + $0x5c] sm:$0xf]
      %v879 = vld [vmem:[%s854 + $0x60] sm:$0xf]
      %v880 = vld [vmem:[%s854 + $0x64] sm:$0xf]
      %v881 = vld [vmem:[%s854 + $0x68] sm:$0xf]
      %v882 = vld [vmem:[%s854 + $0x6c] sm:$0xf]
      %v883 = vld [vmem:[%s854 + $0x70] sm:$0xf]
      %v884 = vld [vmem:[%s854 + $0x74] sm:$0xf]
      %v885 = vld [vmem:[%s854 + $0x78] sm:$0xf]
      %v886 = vld [vmem:[%s854 + $0x7c] sm:$0xf]
      %v889 = vunpack.c.l.b16 %v852
      %v890 = vunpack.c.h.b16 %v852
      %v891 = vunpack.c.l.b16 %v853
      %v892 = vunpack.c.h.b16 %v853
      %v893 = vpack.c.b16 %v891, %v889
      %v894 = vpack.c.b16 %v892, %v890
      %v896 = vshrl.u32 %v893, 16
      %v898 = vshll.u32 %v893, 16
      %v900 = vrot.slane %v898, 1
      %v901 = vor.u32 %v896, %v900
      %v903 = vshrl.u32 %v894, 16
      %v905 = vshll.u32 %v894, 16
      %v907 = vrot.slane %v905, 1
      %v908 = vor.u32 %v903, %v907
      %v943 = vunpack.c.l.b16 %v855
      %v944 = vunpack.c.l.b16 %v856
      %v945 = vunpack.c.l.b16 %v857
      %v946 = vunpack.c.l.b16 %v858
      %v947 = vunpack.c.l.b16 %v859
      %v948 = vunpack.c.l.b16 %v860
      %v949 = vunpack.c.l.b16 %v861
      %v950 = vunpack.c.l.b16 %v862
      %v951 = vunpack.c.l.b16 %v863
      %v952 = vunpack.c.l.b16 %v864
      %v953 = vunpack.c.l.b16 %v865
      %v954 = vunpack.c.l.b16 %v866
      %v955 = vunpack.c.l.b16 %v867
      %v956 = vunpack.c.l.b16 %v868
      %v957 = vunpack.c.l.b16 %v869
      %v958 = vunpack.c.l.b16 %v870
      %v959 = vunpack.c.l.b16 %v871
      %v960 = vunpack.c.l.b16 %v872
      %v961 = vunpack.c.l.b16 %v873
      %v962 = vunpack.c.l.b16 %v874
      %v963 = vunpack.c.l.b16 %v875
      %v964 = vunpack.c.l.b16 %v876
      %v965 = vunpack.c.l.b16 %v877
      %v966 = vunpack.c.l.b16 %v878
      %v967 = vunpack.c.l.b16 %v879
      %v968 = vunpack.c.l.b16 %v880
      %v969 = vunpack.c.l.b16 %v881
      %v970 = vunpack.c.l.b16 %v882
      %v971 = vunpack.c.l.b16 %v883
      %v972 = vunpack.c.l.b16 %v884
      %v973 = vunpack.c.l.b16 %v885
      %v974 = vunpack.c.l.b16 %v886
      %v975 = vpack.c.b16 %v944, %v943
      %v976 = vpack.c.b16 %v946, %v945
      %v977 = vpack.c.b16 %v948, %v947
      %v978 = vpack.c.b16 %v950, %v949
      %v979 = vpack.c.b16 %v952, %v951
      %v980 = vpack.c.b16 %v954, %v953
      %v981 = vpack.c.b16 %v956, %v955
      %v982 = vpack.c.b16 %v958, %v957
      %v983 = vpack.c.b16 %v960, %v959
      %v984 = vpack.c.b16 %v962, %v961
      %v985 = vpack.c.b16 %v964, %v963
      %v986 = vpack.c.b16 %v966, %v965
      %v987 = vpack.c.b16 %v968, %v967
      %v988 = vpack.c.b16 %v970, %v969
      %v989 = vpack.c.b16 %v972, %v971
      %v990 = vpack.c.b16 %v974, %v973
      %1007 = vmatprep.subr.bf16.mxu0 0
      %1008 = vmatpush1.bf16.msra.mxu0 %v975
      %1009 = vmatprep.subr.bf16.mxu0 0
      %1010 = vmatpush1.bf16.msra.mxu0 %v976
      %1011 = vmatprep.subr.bf16.mxu0 0
      %1012 = vmatpush1.bf16.msra.mxu0 %v977
      %1013 = vmatprep.subr.bf16.mxu0 0
      %1014 = vmatpush1.bf16.msra.mxu0 %v978
      %1015 = vmatprep.subr.bf16.mxu0 0
      %1016 = vmatpush1.bf16.msra.mxu0 %v979
      %1017 = vmatprep.subr.bf16.mxu0 0
      %1018 = vmatpush1.bf16.msra.mxu0 %v980
      %1019 = vmatprep.subr.bf16.mxu0 0
      %1020 = vmatpush1.bf16.msra.mxu0 %v981
      %1021 = vmatprep.subr.bf16.mxu0 0
      %1022 = vmatpush1.bf16.msra.mxu0 %v982
      %1023 = vmatprep.subr.bf16.mxu0 0
      %1024 = vmatpush1.bf16.msra.mxu0 %v983
      %1025 = vmatprep.subr.bf16.mxu0 0
      %1026 = vmatpush1.bf16.msra.mxu0 %v984
      %1027 = vmatprep.subr.bf16.mxu0 0
      %1028 = vmatpush1.bf16.msra.mxu0 %v985
      %1029 = vmatprep.subr.bf16.mxu0 0
      %1030 = vmatpush1.bf16.msra.mxu0 %v986
      %1031 = vmatprep.subr.bf16.mxu0 0
      %1032 = vmatpush1.bf16.msra.mxu0 %v987
      %1033 = vmatprep.subr.bf16.mxu0 0
      %1034 = vmatpush1.bf16.msra.mxu0 %v988
      %1035 = vmatprep.subr.bf16.mxu0 0
      %1036 = vmatpush1.bf16.msra.mxu0 %v989
      %1037 = vmatprep.subr.bf16.mxu0 0
      %1038 = vmatpush1.bf16.msra.mxu0 %v990
      %1039 = vmatprep.mubr.bf16.mxu0 %v908
      %1040 = vmatmul.mubr.bf16.gmra.mrb[0].mxu0 %v901
      %v1041 = vpop.f32.mrb[0].mxu0
      %v1042 = vadd.f32 0.0, %v1041
      %v1043 = vpop.f32.mrb[0].mxu0
      %v1044 = vpop.f32.mrb[0].mxu0
      %v1045 = vpop.f32.mrb[0].mxu0
      %1046 = vdwg.mxu0
      %v1047 = vadd.f32 %v851, %v1042
      %vm1048 = vcmask 7168
      %1049 = vst.msk [vmem:[%s272] sm:$0xff] %vm1048, %v1047
      %p1050 = scmp.lt.s32.totalorder %s21, 1
      %s1051 = scalar_select %p1050, %s21, 1
      %p1052 = scmp.lt.s32.totalorder %s22, 0
      %s1053 = scalar_select %p1052, %s22, 0
      %s1054 = sadd.s32 %s1053, %s1051
      %s1055 = smul.addr %s1054, 8
      %s1056 = scalar_lea.vmem %s4, %s1055
      // Predicated region
      $region37: #{fc_discriminator.9} parent=35 // pred_check
        %p1057 = pneg %p149
      $region38: #{fc_discriminator.9} parent=35 // pred_check_branch
        %1059 = sbr.rel (%p1057) target = $region40
      $region39: #{fc_discriminator.9} parent=35 // pred_region
        _
      $region40: #{fc_discriminator.9} parent=35 // pred_fallthru
        _
    $region36: #{fc_discriminator.9} parent=5 // pred_fallthru
      _
    %p1060 = scmp.le.s32.totalorder 2, %s12
    // Predicated region
    $region41: #{fc_discriminator.9} parent=5 // pred_check
      %p1061 = pneg %p1060
    $region42: #{fc_discriminator.9} parent=5 // pred_check_branch
      %1063 = sbr.rel (%p1061) target = $region44
    $region43: #{fc_discriminator.9} parent=5 // pred_region
      %s1064 = ssub.s32 %s12, 2
      // Predicated region
      $region45: #{fc_discriminator.9} parent=43 // pred_check
        %p1065 = pneg %p155
      $region46: #{fc_discriminator.9} parent=43 // pred_check_branch
        %1067 = sbr.rel (%p1065) target = $region48
      $region47: #{fc_discriminator.9} parent=43 // pred_region
        %p1068 = scmp.lt.s32.totalorder %s23, 1
        %s1069 = scalar_select %p1068, %s23, 1
        %p1070 = scmp.lt.s32.totalorder %s24, 0
        %s1071 = scalar_select %p1070, %s24, 0
        %s1072 = sadd.s32 %s1071, %s1069
        %s1073 = smul.addr %s1072, 8
        %s1074 = scalar_lea.vmem %s4, %s1073
      $region48: #{fc_discriminator.9} parent=43 // pred_fallthru
        _
    $region44: #{fc_discriminator.9} parent=5 // pred_fallthru
      _
  $region6: #{fc_discriminator.9} parent=0 // loop_footer
    %s16 = sadd.s32 1, %s12
  $region7: #{fc_discriminator.9} parent=0 // loop_footer_branch
    %11 = sbr.rel target = $region3
  $region8: #{fc_discriminator.9} parent=0 // loop_exit
    _

</llo_original>
